<compile_context>
chip_gen: v5e
topology: v5e:2x2
jax: 0.10.0
libtpu: 0.0.40
codegen_flags: <defaults>
</compile_context>

<pallas_src>
import functools

import jax
import jax.numpy as jnp
from jax.experimental import pallas as pl
from jax.experimental.pallas import tpu as pltpu

# ----------------------------- model configuration -----------------------------
IMAGE_CH = 3
FEATURE_CH = 4          # only used by DenseMotionNetwork (not instantiated here)
NUM_KP = 5              # only used by DenseMotionNetwork (not instantiated here)
BE = 8                  # block_expansion
MAXF = 32               # max_features
NUM_DOWN = 2            # num_down_blocks
RESHAPE_CH = 8          # reshape_channel
RESHAPE_D = 4           # reshape_depth  (RESHAPE_CH * RESHAPE_D == MAXF)
NUM_RES = 1             # num_resblocks
IMG = 16                # spatial size
BATCH = 2
BN_EPS = 1e-5


# ----------------------------- in-kernel activation -----------------------------
def _apply_act(y, act):
    if act == "none":
        return y
    if act == "relu":
        return jnp.maximum(y, 0.0)
    if act == "lrelu":                       # nn.LeakyReLU() default slope = 0.01
        return jnp.where(y > 0, y, 0.01 * y)
    if act == "sigmoid":
        return jax.nn.sigmoid(y)
    raise ValueError(act)


# ----------------------------- the single fused Pallas kernel -----------------------------
def _fused_matmul_kernel(*refs, has_bn, has_res, act):
    """im2col'd conv as ONE MXU matmul, with fused bias + (training-mode BatchNorm with
    in-kernel batch statistics) + activation + (residual add) epilogue."""
    it = iter(refs)
    x_ref = next(it)                    # (M, K)   im2col patches, whole batch
    w_ref = next(it)                    # (K, Cout)
    b_ref = next(it)                    # (1, Cout)
    g_ref = next(it) if has_bn else None   # (1, Cout)
    bt_ref = next(it) if has_bn else None  # (1, Cout)
    r_ref = next(it) if has_res else None  # (M, Cout)
    o_ref = next(it)                    # (M, Cout)

    y = jnp.dot(x_ref[...], w_ref[...], preferred_element_type=jnp.float32)
    y = y + b_ref[...]
    if has_bn:
        # Batch statistics over all rows (= N*H*W [*D]) per channel, biased variance.
        mean = jnp.mean(y, axis=0, keepdims=True)
        var = jnp.mean(jnp.square(y - mean), axis=0, keepdims=True)
        scale = g_ref[...] * jax.lax.rsqrt(var + BN_EPS)
        y = (y - mean) * scale + bt_ref[...]
    y = _apply_act(y, act)
    if has_res:
        y = y + r_ref[...]
    o_ref[...] = y.astype(o_ref.dtype)


def _fused_matmul(x_cols, w2, b, gamma=None, beta=None, residual=None, act="none"):
    """Single pallas_call: (M,K)@(K,Cout) + bias [+ BN(batch stats)] [+ act] [+ residual]."""
    M, K = x_cols.shape
    Cout = w2.shape[1]
    has_bn = gamma is not None
    has_res = residual is not None

    operands = [x_cols, w2, b.reshape(1, Cout)]
    in_specs = [
        pl.BlockSpec((M, K), lambda i: (0, 0)),
        pl.BlockSpec((K, Cout), lambda i: (0, 0)),
        pl.BlockSpec((1, Cout), lambda i: (0, 0)),
    ]
    if has_bn:
        operands += [gamma.reshape(1, Cout), beta.reshape(1, Cout)]
        in_specs += [pl.BlockSpec((1, Cout), lambda i: (0, 0)),
                     pl.BlockSpec((1, Cout), lambda i: (0, 0))]
    if has_res:
        operands.append(residual.reshape(M, Cout))
        in_specs.append(pl.BlockSpec((M, Cout), lambda i: (0, 0)))

    kernel = functools.partial(_fused_matmul_kernel, has_bn=has_bn, has_res=has_res, act=act)
    return pl.pallas_call(
        kernel,
        out_shape=jax.ShapeDtypeStruct((M, Cout), jnp.float32),
        grid=(1,),
        in_specs=in_specs,
        out_specs=pl.BlockSpec((M, Cout), lambda i: (0, 0)),
        compiler_params=pltpu.CompilerParams(dimension_semantics=("arbitrary",)),
    )(*operands)


# ----------------------------- im2col (wrapper side, fused by XLA under jit) ------------------
def _im2col2d(x, KH, KW):
    """x: (N,H,W,Cin) -> (N*H*W, KH*KW*Cin), 'same' zero padding, stride 1."""
    N, H, W, Cin = x.shape
    ph, pw = KH // 2, KW // 2
    xp = jnp.pad(x, ((0, 0), (ph, ph), (pw, pw), (0, 0)))
    cols = [xp[:, kh:kh + H, kw:kw + W, :] for kh in range(KH) for kw in range(KW)]
    return jnp.concatenate(cols, axis=-1).reshape(N * H * W, KH * KW * Cin)


def _im2col3d(x, KD, KH, KW):
    """x: (N,D,H,W,Cin) -> (N*D*H*W, KD*KH*KW*Cin), 'same' zero padding, stride 1."""
    N, D, H, W, Cin = x.shape
    pd, ph, pw = KD // 2, KH // 2, KW // 2
    xp = jnp.pad(x, ((0, 0), (pd, pd), (ph, ph), (pw, pw), (0, 0)))
    cols = [xp[:, kd:kd + D, kh:kh + H, kw:kw + W, :]
            for kd in range(KD) for kh in range(KH) for kw in range(KW)]
    return jnp.concatenate(cols, axis=-1).reshape(N * D * H * W, KD * KH * KW * Cin)


# ----------------------------- fused conv wrappers -----------------------------
def conv2d_fused(x, w, b, gamma=None, beta=None, residual=None, act="none"):
    """x NHWC, w (KH,KW,Cin,Cout). Conv(+BN(batch stats)+act)(+residual) in one pallas_call."""
    N, H, W, Cin = x.shape
    KH, KW, _, Cout = w.shape
    x_cols = _im2col2d(x, KH, KW)
    w2 = w.reshape(KH * KW * Cin, Cout)
    res = None if residual is None else residual.reshape(N * H * W, Cout)
    y = _fused_matmul(x_cols, w2, b, gamma, beta, res, act)
    return y.reshape(N, H, W, Cout)


def conv3d_fused(x, w, b, gamma=None, beta=None, residual=None, act="none"):
    """x NDHWC, w (KD,KH,KW,Cin,Cout). Conv3d(+BN+act)(+residual) in one pallas_call."""
    N, D, H, W, Cin = x.shape
    KD, KH, KW, _, Cout = w.shape
    x_cols = _im2col3d(x, KD, KH, KW)
    w2 = w.reshape(KD * KH * KW * Cin, Cout)
    res = None if residual is None else residual.reshape(N * D * H * W, Cout)
    y = _fused_matmul(x_cols, w2, b, gamma, beta, res, act)
    return y.reshape(N, D, H, W, Cout)


def _bn_relu_jax(x, gamma, beta, eps=BN_EPS):
    """Resblock prologue BN+ReLU (input is NOT a conv output); plain JAX, XLA fuses it."""
    C = x.shape[-1]
    xf = x.reshape(-1, C)
    mean = jnp.mean(xf, axis=0)
    var = jnp.mean(jnp.square(xf - mean), axis=0)     # biased var (torch training-mode BN)
    y = (x - mean) * (gamma * jax.lax.rsqrt(var + eps)) + beta
    return jnp.maximum(y, 0.0)


# ----------------------------- building blocks -----------------------------
def same_block2d(x, p, lrelu=False):
    return conv2d_fused(x, p["w"], p["b"], p["gamma"], p["beta"],
                        act="lrelu" if lrelu else "relu")


def down_block2d(x, p):
    y = conv2d_fused(x, p["w"], p["b"], p["gamma"], p["beta"], act="relu")
    N, H, W, C = y.shape
    return y.reshape(N, H // 2, 2, W // 2, 2, C).mean(axis=(2, 4))   # AvgPool2d(2, 2)


def up_block2d(x, p):
    x = jnp.repeat(jnp.repeat(x, 2, axis=1), 2, axis=2)               # nearest x2 upsample
    return conv2d_fused(x, p["w"], p["b"], p["gamma"], p["beta"], act="relu")


def resblock2d(x, p):
    h = _bn_relu_jax(x, p["gamma1"], p["beta1"])                      # norm1 + relu
    h = conv2d_fused(h, p["w1"], p["b1"], p["gamma2"], p["beta2"], act="relu")  # conv1+norm2+relu
    return conv2d_fused(h, p["w2"], p["b2"], residual=x, act="none")  # conv2 + skip


def resblock3d(x, p):
    h = _bn_relu_jax(x, p["gamma1"], p["beta1"])
    h = conv3d_fused(h, p["w1"], p["b1"], p["gamma2"], p["beta2"], act="relu")
    return conv3d_fused(h, p["w2"], p["b2"], residual=x, act="none")


# ----------------------------- parameters -----------------------------
def init_params(key):
    keys = iter(jax.random.split(key, 64))

    def cw(shape):
        return jax.random.normal(next(keys), shape, jnp.float32) * 0.1

    P = {}
    P["first"] = dict(w=cw((7, 7, IMAGE_CH, BE)), b=jnp.zeros((BE,), jnp.float32),
                      gamma=jnp.ones((BE,), jnp.float32), beta=jnp.zeros((BE,), jnp.float32))

    P["down_blocks"] = []
    for i in range(NUM_DOWN):
        cin = min(MAXF, BE * 2 ** i)
        cout = min(MAXF, BE * 2 ** (i + 1))
        P["down_blocks"].append(dict(w=cw((3, 3, cin, cout)), b=jnp.zeros((cout,), jnp.float32),
                                     gamma=jnp.ones((cout,), jnp.float32),
                                     beta=jnp.zeros((cout,), jnp.float32)))
    last_down_out = min(MAXF, BE * 2 ** NUM_DOWN)

    P["second"] = dict(w=cw((1, 1, last_down_out, MAXF)), b=jnp.zeros((MAXF,), jnp.float32))

    P["resblocks_3d"] = []
    for _ in range(NUM_RES):
        c = RESHAPE_CH
        P["resblocks_3d"].append(dict(
            w1=cw((3, 3, 3, c, c)), b1=jnp.zeros((c,), jnp.float32),
            gamma1=jnp.ones((c,), jnp.float32), beta1=jnp.zeros((c,), jnp.float32),
            w2=cw((3, 3, 3, c, c)), b2=jnp.zeros((c,), jnp.float32),
            gamma2=jnp.ones((c,), jnp.float32), beta2=jnp.zeros((c,), jnp.float32)))

    outf = BE * 2 ** NUM_DOWN
    P["resblocks_2d"] = []
    for _ in range(NUM_RES):
        P["resblocks_2d"].append(dict(
            w1=cw((3, 3, outf, outf)), b1=jnp.zeros((outf,), jnp.float32),
            gamma1=jnp.ones((outf,), jnp.float32), beta1=jnp.zeros((outf,), jnp.float32),
            w2=cw((3, 3, outf, outf)), b2=jnp.zeros((outf,), jnp.float32),
            gamma2=jnp.ones((outf,), jnp.float32), beta2=jnp.zeros((outf,), jnp.float32)))

    P["up_blocks"] = []
    for i in range(NUM_DOWN):
        cin = max(BE, BE * 2 ** (NUM_DOWN - i))
        cout = max(BE, BE * 2 ** (NUM_DOWN - i - 1))
        P["up_blocks"].append(dict(w=cw((3, 3, cin, cout)), b=jnp.zeros((cout,), jnp.float32),
                                   gamma=jnp.ones((cout,), jnp.float32),
                                   beta=jnp.zeros((cout,), jnp.float32)))

    P["final"] = dict(w=cw((7, 7, BE, IMAGE_CH)), b=jnp.zeros((IMAGE_CH,), jnp.float32))
    # NOTE: `third` / `fourth` exist in __init__ but are only used inside the
    # dense-motion branch, which is disabled (dense_motion_params=None).
    return P


# ----------------------------- forward -----------------------------
def generator_forward(source_image_nchw, kp_driving, kp_source, params):
    del kp_driving, kp_source  # only consumed by DenseMotionNetwork (disabled here)

    x = jnp.transpose(source_image_nchw, (0, 2, 3, 1))          # NCHW -> NHWC
    out = same_block2d(x, params["first"], lrelu=False)          # self.first
    for p in params["down_blocks"]:                              # self.down_blocks
        out = down_block2d(out, p)
    out = conv2d_fused(out, params["second"]["w"], params["second"]["b"], act="none")  # self.second

    # out.view(bs, reshape_channel, reshape_depth, h, w) on NCHW semantics
    N, h, w, C = out.shape
    out_nchw = jnp.transpose(out, (0, 3, 1, 2))
    f3d = out_nchw.reshape(N, RESHAPE_CH, RESHAPE_D, h, w)
    f3d = jnp.transpose(f3d, (0, 2, 3, 4, 1))                    # NDHWC, channels = RESHAPE_CH
    for p in params["resblocks_3d"]:                             # self.resblocks_3d
        f3d = resblock3d(f3d, p)
    # dense_motion_params=None -> the dense-motion branch is skipped exactly like the
    # PyTorch reference; feature_3d is unused downstream (XLA DCEs it under jit).
    # TODO(synk): DenseMotionNetwork / deform_input (F.grid_sample) / third / fourth /
    # occlusion branch not implemented: disabled in this configuration.

    for p in params["resblocks_2d"]:                             # self.resblocks_2d
        out = resblock2d(out, p)
    for p in params["up_blocks"]:                                # self.up_blocks
        out = up_block2d(out, p)
    out = conv2d_fused(out, params["final"]["w"], params["final"]["b"], act="sigmoid")  # final

    prediction = jnp.transpose(out, (0, 3, 1, 2))                # NHWC -> NCHW (match PyTorch)
    return {"prediction": prediction}


generator_forward_jit = jax.jit(generator_forward)


# ----------------------------- main -----------------------------
if __name__ == "__main__":
    key = jax.random.PRNGKey(0)
    pkey, xkey, dkey, skey = jax.random.split(key, 4)

    params = init_params(pkey)
    source_image = jax.random.uniform(xkey, (BATCH, IMAGE_CH, IMG, IMG), jnp.float32)  # NCHW
    kp_driving = {"value": jax.random.normal(dkey, (BATCH, NUM_KP, 3), jnp.float32)}
    kp_source = {"value": jax.random.normal(skey, (BATCH, NUM_KP, 3), jnp.float32)}

    out = generator_forward_jit(source_image, kp_driving, kp_source, params)
    pred = jax.block_until_ready(out["prediction"])

    assert pred.shape == (BATCH, IMAGE_CH, IMG, IMG)
    assert bool(jnp.all(jnp.isfinite(pred)))
    assert bool(jnp.all((pred >= 0.0) & (pred <= 1.0)))  # sigmoid output range
    print("KERNEL_OK")
</pallas_src>

<mosaic_0001>
module attributes {stable_mosaic.version = 11 : i64} {
  func.func @_fused_matmul_kernel(%arg0: i32, %arg1: memref<512x147xf32, #tpu.memory_space<vmem>>, %arg2: memref<147x8xf32, #tpu.memory_space<vmem>>, %arg3: memref<1x8xf32, #tpu.memory_space<vmem>>, %arg4: memref<1x8xf32, #tpu.memory_space<vmem>>, %arg5: memref<1x8xf32, #tpu.memory_space<vmem>>, %arg6: memref<512x8xf32, #tpu.memory_space<vmem>>) attributes {dimension_semantics = [#tpu.dimension_semantics<arbitrary>], iteration_bounds = array<i64: 1>, scalar_prefetch = 0 : i64, scratch_operands = 0 : i64, tpu.core_type = #tpu.core_type<tc>, window_params = [{pipeline_mode = #tpu.pipeline_mode<synchronous>, transform_indices = @transform_0, window_bounds = array<i64: 512, 147>}, {pipeline_mode = #tpu.pipeline_mode<synchronous>, transform_indices = @transform_1, window_bounds = array<i64: 147, 8>}, {pipeline_mode = #tpu.pipeline_mode<synchronous>, transform_indices = @transform_2, window_bounds = array<i64: 1, 8>}, {pipeline_mode = #tpu.pipeline_mode<synchronous>, transform_indices = @transform_3, window_bounds = array<i64: 1, 8>}, {pipeline_mode = #tpu.pipeline_mode<synchronous>, transform_indices = @transform_4, window_bounds = array<i64: 1, 8>}, {pipeline_mode = #tpu.pipeline_mode<synchronous>, transform_indices = @transform_5, window_bounds = array<i64: 512, 8>}]} {
    %c0 = arith.constant 0 : index
    %c0_0 = arith.constant 0 : index
    %0 = vector.load %arg1[%c0, %c0_0] : memref<512x147xf32, #tpu.memory_space<vmem>>, vector<512x147xf32>
    %c0_1 = arith.constant 0 : index
    %c0_2 = arith.constant 0 : index
    %1 = vector.load %arg2[%c0_1, %c0_2] : memref<147x8xf32, #tpu.memory_space<vmem>>, vector<147x8xf32>
    %cst = arith.constant dense<0.000000e+00> : vector<512x8xf32>
    %2 = tpu.matmul %0, %1, %cst {dimension_numbers = #tpu.dot_dimension_numbers<[1], [0], [0], [1], [0, 0, 1, 1], [], []>} : vector<512x147xf32>, vector<147x8xf32>, vector<512x8xf32> -> vector<512x8xf32>
    %c0_3 = arith.constant 0 : index
    %c0_4 = arith.constant 0 : index
    %3 = vector.load %arg3[%c0_3, %c0_4] : memref<1x8xf32, #tpu.memory_space<vmem>>, vector<1x8xf32>
    %4 = vector.broadcast %3 : vector<1x8xf32> to vector<512x8xf32>
    %5 = arith.addf %2, %4 : vector<512x8xf32>
    %cst_5 = arith.constant dense<0.000000e+00> : vector<8xf32>
    %6 = vector.multi_reduction <add>, %5, %cst_5 [0] : vector<512x8xf32> to vector<8xf32>
    %7 = vector.shape_cast %6 : vector<8xf32> to vector<1x8xf32>
    %cst_6 = arith.constant 5.120000e+02 : f32
    %8 = vector.broadcast %cst_6 : f32 to vector<1x8xf32>
    %9 = arith.divf %7, %8 : vector<1x8xf32>
    %10 = vector.broadcast %9 : vector<1x8xf32> to vector<512x8xf32>
    %11 = arith.subf %5, %10 : vector<512x8xf32>
    %12 = arith.mulf %11, %11 : vector<512x8xf32>
    %cst_7 = arith.constant dense<0.000000e+00> : vector<8xf32>
    %13 = vector.multi_reduction <add>, %12, %cst_7 [0] : vector<512x8xf32> to vector<8xf32>
    %14 = vector.shape_cast %13 : vector<8xf32> to vector<1x8xf32>
    %cst_8 = arith.constant 5.120000e+02 : f32
    %15 = vector.broadcast %cst_8 : f32 to vector<1x8xf32>
    %16 = arith.divf %14, %15 : vector<1x8xf32>
    %c0_9 = arith.constant 0 : index
    %c0_10 = arith.constant 0 : index
    %17 = vector.load %arg4[%c0_9, %c0_10] : memref<1x8xf32, #tpu.memory_space<vmem>>, vector<1x8xf32>
    %cst_11 = arith.constant 9.99999974E-6 : f32
    %18 = vector.broadcast %cst_11 : f32 to vector<1x8xf32>
    %19 = arith.addf %16, %18 : vector<1x8xf32>
    %20 = math.rsqrt %19 : vector<1x8xf32>
    %21 = arith.mulf %17, %20 : vector<1x8xf32>
    %22 = vector.broadcast %9 : vector<1x8xf32> to vector<512x8xf32>
    %23 = arith.subf %5, %22 : vector<512x8xf32>
    %24 = vector.broadcast %21 : vector<1x8xf32> to vector<512x8xf32>
    %25 = arith.mulf %23, %24 : vector<512x8xf32>
    %c0_12 = arith.constant 0 : index
    %c0_13 = arith.constant 0 : index
    %26 = vector.load %arg5[%c0_12, %c0_13] : memref<1x8xf32, #tpu.memory_space<vmem>>, vector<1x8xf32>
    %27 = vector.broadcast %26 : vector<1x8xf32> to vector<512x8xf32>
    %28 = arith.addf %25, %27 : vector<512x8xf32>
    %cst_14 = arith.constant 0.000000e+00 : f32
    %29 = vector.broadcast %cst_14 : f32 to vector<512x8xf32>
    %30 = arith.maximumf %28, %29 : vector<512x8xf32>
    %c0_15 = arith.constant 0 : index
    %c0_16 = arith.constant 0 : index
    %31 = vector.load %arg6[%c0_15, %c0_16] : memref<512x8xf32, #tpu.memory_space<vmem>>, vector<512x8xf32>
    tpu.vector_store %arg6[%c0_15, %c0_16], %30 {strides = array<i32>} : memref<512x8xf32, #tpu.memory_space<vmem>>, vector<512x8xf32>,
    return
  }
  func.func @transform_0(%arg0: i32) -> (i32, i32) {
    %c0_i32 = arith.constant 0 : i32
    %c0_i32_0 = arith.constant 0 : i32
    %c0_i32_1 = arith.constant 0 : i32
    return %c0_i32, %c0_i32_0 : i32, i32
  }
  func.func @transform_1(%arg0: i32) -> (i32, i32) {
    %c0_i32 = arith.constant 0 : i32
    %c0_i32_0 = arith.constant 0 : i32
    %c0_i32_1 = arith.constant 0 : i32
    return %c0_i32, %c0_i32_0 : i32, i32
  }
  func.func @transform_2(%arg0: i32) -> (i32, i32) {
    %c0_i32 = arith.constant 0 : i32
    %c0_i32_0 = arith.constant 0 : i32
    %c0_i32_1 = arith.constant 0 : i32
    return %c0_i32, %c0_i32_0 : i32, i32
  }
  func.func @transform_3(%arg0: i32) -> (i32, i32) {
    %c0_i32 = arith.constant 0 : i32
    %c0_i32_0 = arith.constant 0 : i32
    %c0_i32_1 = arith.constant 0 : i32
    return %c0_i32, %c0_i32_0 : i32, i32
  }
  func.func @transform_4(%arg0: i32) -> (i32, i32) {
    %c0_i32 = arith.constant 0 : i32
    %c0_i32_0 = arith.constant 0 : i32
    %c0_i32_1 = arith.constant 0 : i32
    return %c0_i32, %c0_i32_0 : i32, i32
  }
  func.func @transform_5(%arg0: i32) -> (i32, i32) {
    %c0_i32 = arith.constant 0 : i32
    %c0_i32_0 = arith.constant 0 : i32
    %c0_i32_1 = arith.constant 0 : i32
    return %c0_i32, %c0_i32_0 : i32, i32
  }
}

module attributes {stable_mosaic.version = 11 : i64} {
  func.func @_fused_matmul_kernel(%arg0: i32, %arg1: memref<512x72xf32, #tpu.memory_space<vmem>>, %arg2: memref<72x16xf32, #tpu.memory_space<vmem>>, %arg3: memref<1x16xf32, #tpu.memory_space<vmem>>, %arg4: memref<1x16xf32, #tpu.memory_space<vmem>>, %arg5: memref<1x16xf32, #tpu.memory_space<vmem>>, %arg6: memref<512x16xf32, #tpu.memory_space<vmem>>) attributes {dimension_semantics = [#tpu.dimension_semantics<arbitrary>], iteration_bounds = array<i64: 1>, scalar_prefetch = 0 : i64, scratch_operands = 0 : i64, tpu.core_type = #tpu.core_type<tc>, window_params = [{pipeline_mode = #tpu.pipeline_mode<synchronous>, transform_indices = @transform_0, window_bounds = array<i64: 512, 72>}, {pipeline_mode = #tpu.pipeline_mode<synchronous>, transform_indices = @transform_1, window_bounds = array<i64: 72, 16>}, {pipeline_mode = #tpu.pipeline_mode<synchronous>, transform_indices = @transform_2, window_bounds = array<i64: 1, 16>}, {pipeline_mode = #tpu.pipeline_mode<synchronous>, transform_indices = @transform_3, window_bounds = array<i64: 1, 16>}, {pipeline_mode = #tpu.pipeline_mode<synchronous>, transform_indices = @transform_4, window_bounds = array<i64: 1, 16>}, {pipeline_mode = #tpu.pipeline_mode<synchronous>, transform_indices = @transform_5, window_bounds = array<i64: 512, 16>}]} {
    %c0 = arith.constant 0 : index
    %c0_0 = arith.constant 0 : index
    %0 = vector.load %arg1[%c0, %c0_0] : memref<512x72xf32, #tpu.memory_space<vmem>>, vector<512x72xf32>
    %c0_1 = arith.constant 0 : index
    %c0_2 = arith.constant 0 : index
    %1 = vector.load %arg2[%c0_1, %c0_2] : memref<72x16xf32, #tpu.memory_space<vmem>>, vector<72x16xf32>
    %cst = arith.constant dense<0.000000e+00> : vector<512x16xf32>
    %2 = tpu.matmul %0, %1, %cst {dimension_numbers = #tpu.dot_dimension_numbers<[1], [0], [0], [1], [0, 0, 1, 1], [], []>} : vector<512x72xf32>, vector<72x16xf32>, vector<512x16xf32> -> vector<512x16xf32>
    %c0_3 = arith.constant 0 : index
    %c0_4 = arith.constant 0 : index
    %3 = vector.load %arg3[%c0_3, %c0_4] : memref<1x16xf32, #tpu.memory_space<vmem>>, vector<1x16xf32>
    %4 = vector.broadcast %3 : vector<1x16xf32> to vector<512x16xf32>
    %5 = arith.addf %2, %4 : vector<512x16xf32>
    %cst_5 = arith.constant dense<0.000000e+00> : vector<16xf32>
    %6 = vector.multi_reduction <add>, %5, %cst_5 [0] : vector<512x16xf32> to vector<16xf32>
    %7 = vector.shape_cast %6 : vector<16xf32> to vector<1x16xf32>
    %cst_6 = arith.constant 5.120000e+02 : f32
    %8 = vector.broadcast %cst_6 : f32 to vector<1x16xf32>
    %9 = arith.divf %7, %8 : vector<1x16xf32>
    %10 = vector.broadcast %9 : vector<1x16xf32> to vector<512x16xf32>
    %11 = arith.subf %5, %10 : vector<512x16xf32>
    %12 = arith.mulf %11, %11 : vector<512x16xf32>
    %cst_7 = arith.constant dense<0.000000e+00> : vector<16xf32>
    %13 = vector.multi_reduction <add>, %12, %cst_7 [0] : vector<512x16xf32> to vector<16xf32>
    %14 = vector.shape_cast %13 : vector<16xf32> to vector<1x16xf32>
    %cst_8 = arith.constant 5.120000e+02 : f32
    %15 = vector.broadcast %cst_8 : f32 to vector<1x16xf32>
    %16 = arith.divf %14, %15 : vector<1x16xf32>
    %c0_9 = arith.constant 0 : index
    %c0_10 = arith.constant 0 : index
    %17 = vector.load %arg4[%c0_9, %c0_10] : memref<1x16xf32, #tpu.memory_space<vmem>>, vector<1x16xf32>
    %cst_11 = arith.constant 9.99999974E-6 : f32
    %18 = vector.broadcast %cst_11 : f32 to vector<1x16xf32>
    %19 = arith.addf %16, %18 : vector<1x16xf32>
    %20 = math.rsqrt %19 : vector<1x16xf32>
    %21 = arith.mulf %17, %20 : vector<1x16xf32>
    %22 = vector.broadcast %9 : vector<1x16xf32> to vector<512x16xf32>
    %23 = arith.subf %5, %22 : vector<512x16xf32>
    %24 = vector.broadcast %21 : vector<1x16xf32> to vector<512x16xf32>
    %25 = arith.mulf %23, %24 : vector<512x16xf32>
    %c0_12 = arith.constant 0 : index
    %c0_13 = arith.constant 0 : index
    %26 = vector.load %arg5[%c0_12, %c0_13] : memref<1x16xf32, #tpu.memory_space<vmem>>, vector<1x16xf32>
    %27 = vector.broadcast %26 : vector<1x16xf32> to vector<512x16xf32>
    %28 = arith.addf %25, %27 : vector<512x16xf32>
    %cst_14 = arith.constant 0.000000e+00 : f32
    %29 = vector.broadcast %cst_14 : f32 to vector<512x16xf32>
    %30 = arith.maximumf %28, %29 : vector<512x16xf32>
    %c0_15 = arith.constant 0 : index
    %c0_16 = arith.constant 0 : index
    %31 = vector.load %arg6[%c0_15, %c0_16] : memref<512x16xf32, #tpu.memory_space<vmem>>, vector<512x16xf32>
    tpu.vector_store %arg6[%c0_15, %c0_16], %30 {strides = array<i32>} : memref<512x16xf32, #tpu.memory_space<vmem>>, vector<512x16xf32>,
    return
  }
  func.func @transform_0(%arg0: i32) -> (i32, i32) {
    %c0_i32 = arith.constant 0 : i32
    %c0_i32_0 = arith.constant 0 : i32
    %c0_i32_1 = arith.constant 0 : i32
    return %c0_i32, %c0_i32_0 : i32, i32
  }
  func.func @transform_1(%arg0: i32) -> (i32, i32) {
    %c0_i32 = arith.constant 0 : i32
    %c0_i32_0 = arith.constant 0 : i32
    %c0_i32_1 = arith.constant 0 : i32
    return %c0_i32, %c0_i32_0 : i32, i32
  }
  func.func @transform_2(%arg0: i32) -> (i32, i32) {
    %c0_i32 = arith.constant 0 : i32
    %c0_i32_0 = arith.constant 0 : i32
    %c0_i32_1 = arith.constant 0 : i32
    return %c0_i32, %c0_i32_0 : i32, i32
  }
  func.func @transform_3(%arg0: i32) -> (i32, i32) {
    %c0_i32 = arith.constant 0 : i32
    %c0_i32_0 = arith.constant 0 : i32
    %c0_i32_1 = arith.constant 0 : i32
    return %c0_i32, %c0_i32_0 : i32, i32
  }
  func.func @transform_4(%arg0: i32) -> (i32, i32) {
    %c0_i32 = arith.constant 0 : i32
    %c0_i32_0 = arith.constant 0 : i32
    %c0_i32_1 = arith.constant 0 : i32
    return %c0_i32, %c0_i32_0 : i32, i32
  }
  func.func @transform_5(%arg0: i32) -> (i32, i32) {
    %c0_i32 = arith.constant 0 : i32
    %c0_i32_0 = arith.constant 0 : i32
    %c0_i32_1 = arith.constant 0 : i32
    return %c0_i32, %c0_i32_0 : i32, i32
  }
}

module attributes {stable_mosaic.version = 11 : i64} {
  func.func @_fused_matmul_kernel(%arg0: i32, %arg1: memref<128x144xf32, #tpu.memory_space<vmem>>, %arg2: memref<144x32xf32, #tpu.memory_space<vmem>>, %arg3: memref<1x32xf32, #tpu.memory_space<vmem>>, %arg4: memref<1x32xf32, #tpu.memory_space<vmem>>, %arg5: memref<1x32xf32, #tpu.memory_space<vmem>>, %arg6: memref<128x32xf32, #tpu.memory_space<vmem>>) attributes {dimension_semantics = [#tpu.dimension_semantics<arbitrary>], iteration_bounds = array<i64: 1>, scalar_prefetch = 0 : i64, scratch_operands = 0 : i64, tpu.core_type = #tpu.core_type<tc>, window_params = [{pipeline_mode = #tpu.pipeline_mode<synchronous>, transform_indices = @transform_0, window_bounds = array<i64: 128, 144>}, {pipeline_mode = #tpu.pipeline_mode<synchronous>, transform_indices = @transform_1, window_bounds = array<i64: 144, 32>}, {pipeline_mode = #tpu.pipeline_mode<synchronous>, transform_indices = @transform_2, window_bounds = array<i64: 1, 32>}, {pipeline_mode = #tpu.pipeline_mode<synchronous>, transform_indices = @transform_3, window_bounds = array<i64: 1, 32>}, {pipeline_mode = #tpu.pipeline_mode<synchronous>, transform_indices = @transform_4, window_bounds = array<i64: 1, 32>}, {pipeline_mode = #tpu.pipeline_mode<synchronous>, transform_indices = @transform_5, window_bounds = array<i64: 128, 32>}]} {
    %c0 = arith.constant 0 : index
    %c0_0 = arith.constant 0 : index
    %0 = vector.load %arg1[%c0, %c0_0] : memref<128x144xf32, #tpu.memory_space<vmem>>, vector<128x144xf32>
    %c0_1 = arith.constant 0 : index
    %c0_2 = arith.constant 0 : index
    %1 = vector.load %arg2[%c0_1, %c0_2] : memref<144x32xf32, #tpu.memory_space<vmem>>, vector<144x32xf32>
    %cst = arith.constant dense<0.000000e+00> : vector<128x32xf32>
    %2 = tpu.matmul %0, %1, %cst {dimension_numbers = #tpu.dot_dimension_numbers<[1], [0], [0], [1], [0, 0, 1, 1], [], []>} : vector<128x144xf32>, vector<144x32xf32>, vector<128x32xf32> -> vector<128x32xf32>
    %c0_3 = arith.constant 0 : index
    %c0_4 = arith.constant 0 : index
    %3 = vector.load %arg3[%c0_3, %c0_4] : memref<1x32xf32, #tpu.memory_space<vmem>>, vector<1x32xf32>
    %4 = vector.broadcast %3 : vector<1x32xf32> to vector<128x32xf32>
    %5 = arith.addf %2, %4 : vector<128x32xf32>
    %cst_5 = arith.constant dense<0.000000e+00> : vector<32xf32>
    %6 = vector.multi_reduction <add>, %5, %cst_5 [0] : vector<128x32xf32> to vector<32xf32>
    %7 = vector.shape_cast %6 : vector<32xf32> to vector<1x32xf32>
    %cst_6 = arith.constant 1.280000e+02 : f32
    %8 = vector.broadcast %cst_6 : f32 to vector<1x32xf32>
    %9 = arith.divf %7, %8 : vector<1x32xf32>
    %10 = vector.broadcast %9 : vector<1x32xf32> to vector<128x32xf32>
    %11 = arith.subf %5, %10 : vector<128x32xf32>
    %12 = arith.mulf %11, %11 : vector<128x32xf32>
    %cst_7 = arith.constant dense<0.000000e+00> : vector<32xf32>
    %13 = vector.multi_reduction <add>, %12, %cst_7 [0] : vector<128x32xf32> to vector<32xf32>
    %14 = vector.shape_cast %13 : vector<32xf32> to vector<1x32xf32>
    %cst_8 = arith.constant 1.280000e+02 : f32
    %15 = vector.broadcast %cst_8 : f32 to vector<1x32xf32>
    %16 = arith.divf %14, %15 : vector<1x32xf32>
    %c0_9 = arith.constant 0 : index
    %c0_10 = arith.constant 0 : index
    %17 = vector.load %arg4[%c0_9, %c0_10] : memref<1x32xf32, #tpu.memory_space<vmem>>, vector<1x32xf32>
    %cst_11 = arith.constant 9.99999974E-6 : f32
    %18 = vector.broadcast %cst_11 : f32 to vector<1x32xf32>
    %19 = arith.addf %16, %18 : vector<1x32xf32>
    %20 = math.rsqrt %19 : vector<1x32xf32>
    %21 = arith.mulf %17, %20 : vector<1x32xf32>
    %22 = vector.broadcast %9 : vector<1x32xf32> to vector<128x32xf32>
    %23 = arith.subf %5, %22 : vector<128x32xf32>
    %24 = vector.broadcast %21 : vector<1x32xf32> to vector<128x32xf32>
    %25 = arith.mulf %23, %24 : vector<128x32xf32>
    %c0_12 = arith.constant 0 : index
    %c0_13 = arith.constant 0 : index
    %26 = vector.load %arg5[%c0_12, %c0_13] : memref<1x32xf32, #tpu.memory_space<vmem>>, vector<1x32xf32>
    %27 = vector.broadcast %26 : vector<1x32xf32> to vector<128x32xf32>
    %28 = arith.addf %25, %27 : vector<128x32xf32>
    %cst_14 = arith.constant 0.000000e+00 : f32
    %29 = vector.broadcast %cst_14 : f32 to vector<128x32xf32>
    %30 = arith.maximumf %28, %29 : vector<128x32xf32>
    %c0_15 = arith.constant 0 : index
    %c0_16 = arith.constant 0 : index
    %31 = vector.load %arg6[%c0_15, %c0_16] : memref<128x32xf32, #tpu.memory_space<vmem>>, vector<128x32xf32>
    tpu.vector_store %arg6[%c0_15, %c0_16], %30 {strides = array<i32>} : memref<128x32xf32, #tpu.memory_space<vmem>>, vector<128x32xf32>,
    return
  }
  func.func @transform_0(%arg0: i32) -> (i32, i32) {
    %c0_i32 = arith.constant 0 : i32
    %c0_i32_0 = arith.constant 0 : i32
    %c0_i32_1 = arith.constant 0 : i32
    return %c0_i32, %c0_i32_0 : i32, i32
  }
  func.func @transform_1(%arg0: i32) -> (i32, i32) {
    %c0_i32 = arith.constant 0 : i32
    %c0_i32_0 = arith.constant 0 : i32
    %c0_i32_1 = arith.constant 0 : i32
    return %c0_i32, %c0_i32_0 : i32, i32
  }
  func.func @transform_2(%arg0: i32) -> (i32, i32) {
    %c0_i32 = arith.constant 0 : i32
    %c0_i32_0 = arith.constant 0 : i32
    %c0_i32_1 = arith.constant 0 : i32
    return %c0_i32, %c0_i32_0 : i32, i32
  }
  func.func @transform_3(%arg0: i32) -> (i32, i32) {
    %c0_i32 = arith.constant 0 : i32
    %c0_i32_0 = arith.constant 0 : i32
    %c0_i32_1 = arith.constant 0 : i32
    return %c0_i32, %c0_i32_0 : i32, i32
  }
  func.func @transform_4(%arg0: i32) -> (i32, i32) {
    %c0_i32 = arith.constant 0 : i32
    %c0_i32_0 = arith.constant 0 : i32
    %c0_i32_1 = arith.constant 0 : i32
    return %c0_i32, %c0_i32_0 : i32, i32
  }
  func.func @transform_5(%arg0: i32) -> (i32, i32) {
    %c0_i32 = arith.constant 0 : i32
    %c0_i32_0 = arith.constant 0 : i32
    %c0_i32_1 = arith.constant 0 : i32
    return %c0_i32, %c0_i32_0 : i32, i32
  }
}

module attributes {stable_mosaic.version = 11 : i64} {
  func.func @_fused_matmul_kernel(%arg0: i32, %arg1: memref<32x32xf32, #tpu.memory_space<vmem>>, %arg2: memref<32x32xf32, #tpu.memory_space<vmem>>, %arg3: memref<1x32xf32, #tpu.memory_space<vmem>>, %arg4: memref<32x32xf32, #tpu.memory_space<vmem>>) attributes {dimension_semantics = [#tpu.dimension_semantics<arbitrary>], iteration_bounds = array<i64: 1>, scalar_prefetch = 0 : i64, scratch_operands = 0 : i64, tpu.core_type = #tpu.core_type<tc>, window_params = [{pipeline_mode = #tpu.pipeline_mode<synchronous>, transform_indices = @transform_0, window_bounds = array<i64: 32, 32>}, {pipeline_mode = #tpu.pipeline_mode<synchronous>, transform_indices = @transform_1, window_bounds = array<i64: 32, 32>}, {pipeline_mode = #tpu.pipeline_mode<synchronous>, transform_indices = @transform_2, window_bounds = array<i64: 1, 32>}, {pipeline_mode = #tpu.pipeline_mode<synchronous>, transform_indices = @transform_3, window_bounds = array<i64: 32, 32>}]} {
    %c0 = arith.constant 0 : index
    %c0_0 = arith.constant 0 : index
    %0 = vector.load %arg1[%c0, %c0_0] : memref<32x32xf32, #tpu.memory_space<vmem>>, vector<32x32xf32>
    %c0_1 = arith.constant 0 : index
    %c0_2 = arith.constant 0 : index
    %1 = vector.load %arg2[%c0_1, %c0_2] : memref<32x32xf32, #tpu.memory_space<vmem>>, vector<32x32xf32>
    %cst = arith.constant dense<0.000000e+00> : vector<32x32xf32>
    %2 = tpu.matmul %0, %1, %cst {dimension_numbers = #tpu.dot_dimension_numbers<[1], [0], [0], [1], [0, 0, 1, 1], [], []>} : vector<32x32xf32>, vector<32x32xf32>, vector<32x32xf32> -> vector<32x32xf32>
    %c0_3 = arith.constant 0 : index
    %c0_4 = arith.constant 0 : index
    %3 = vector.load %arg3[%c0_3, %c0_4] : memref<1x32xf32, #tpu.memory_space<vmem>>, vector<1x32xf32>
    %4 = vector.broadcast %3 : vector<1x32xf32> to vector<32x32xf32>
    %5 = arith.addf %2, %4 : vector<32x32xf32>
    %c0_5 = arith.constant 0 : index
    %c0_6 = arith.constant 0 : index
    %6 = vector.load %arg4[%c0_5, %c0_6] : memref<32x32xf32, #tpu.memory_space<vmem>>, vector<32x32xf32>
    tpu.vector_store %arg4[%c0_5, %c0_6], %5 {strides = array<i32>} : memref<32x32xf32, #tpu.memory_space<vmem>>, vector<32x32xf32>,
    return
  }
  func.func @transform_0(%arg0: i32) -> (i32, i32) {
    %c0_i32 = arith.constant 0 : i32
    %c0_i32_0 = arith.constant 0 : i32
    %c0_i32_1 = arith.constant 0 : i32
    return %c0_i32, %c0_i32_0 : i32, i32
  }
  func.func @transform_1(%arg0: i32) -> (i32, i32) {
    %c0_i32 = arith.constant 0 : i32
    %c0_i32_0 = arith.constant 0 : i32
    %c0_i32_1 = arith.constant 0 : i32
    return %c0_i32, %c0_i32_0 : i32, i32
  }
  func.func @transform_2(%arg0: i32) -> (i32, i32) {
    %c0_i32 = arith.constant 0 : i32
    %c0_i32_0 = arith.constant 0 : i32
    %c0_i32_1 = arith.constant 0 : i32
    return %c0_i32, %c0_i32_0 : i32, i32
  }
  func.func @transform_3(%arg0: i32) -> (i32, i32) {
    %c0_i32 = arith.constant 0 : i32
    %c0_i32_0 = arith.constant 0 : i32
    %c0_i32_1 = arith.constant 0 : i32
    return %c0_i32, %c0_i32_0 : i32, i32
  }
}

module attributes {stable_mosaic.version = 11 : i64} {
  func.func @_fused_matmul_kernel(%arg0: i32, %arg1: memref<32x288xf32, #tpu.memory_space<vmem>>, %arg2: memref<288x32xf32, #tpu.memory_space<vmem>>, %arg3: memref<1x32xf32, #tpu.memory_space<vmem>>, %arg4: memref<1x32xf32, #tpu.memory_space<vmem>>, %arg5: memref<1x32xf32, #tpu.memory_space<vmem>>, %arg6: memref<32x32xf32, #tpu.memory_space<vmem>>) attributes {dimension_semantics = [#tpu.dimension_semantics<arbitrary>], iteration_bounds = array<i64: 1>, scalar_prefetch = 0 : i64, scratch_operands = 0 : i64, tpu.core_type = #tpu.core_type<tc>, window_params = [{pipeline_mode = #tpu.pipeline_mode<synchronous>, transform_indices = @transform_0, window_bounds = array<i64: 32, 288>}, {pipeline_mode = #tpu.pipeline_mode<synchronous>, transform_indices = @transform_1, window_bounds = array<i64: 288, 32>}, {pipeline_mode = #tpu.pipeline_mode<synchronous>, transform_indices = @transform_2, window_bounds = array<i64: 1, 32>}, {pipeline_mode = #tpu.pipeline_mode<synchronous>, transform_indices = @transform_3, window_bounds = array<i64: 1, 32>}, {pipeline_mode = #tpu.pipeline_mode<synchronous>, transform_indices = @transform_4, window_bounds = array<i64: 1, 32>}, {pipeline_mode = #tpu.pipeline_mode<synchronous>, transform_indices = @transform_5, window_bounds = array<i64: 32, 32>}]} {
    %c0 = arith.constant 0 : index
    %c0_0 = arith.constant 0 : index
    %0 = vector.load %arg1[%c0, %c0_0] : memref<32x288xf32, #tpu.memory_space<vmem>>, vector<32x288xf32>
    %c0_1 = arith.constant 0 : index
    %c0_2 = arith.constant 0 : index
    %1 = vector.load %arg2[%c0_1, %c0_2] : memref<288x32xf32, #tpu.memory_space<vmem>>, vector<288x32xf32>
    %cst = arith.constant dense<0.000000e+00> : vector<32x32xf32>
    %2 = tpu.matmul %0, %1, %cst {dimension_numbers = #tpu.dot_dimension_numbers<[1], [0], [0], [1], [0, 0, 1, 1], [], []>} : vector<32x288xf32>, vector<288x32xf32>, vector<32x32xf32> -> vector<32x32xf32>
    %c0_3 = arith.constant 0 : index
    %c0_4 = arith.constant 0 : index
    %3 = vector.load %arg3[%c0_3, %c0_4] : memref<1x32xf32, #tpu.memory_space<vmem>>, vector<1x32xf32>
    %4 = vector.broadcast %3 : vector<1x32xf32> to vector<32x32xf32>
    %5 = arith.addf %2, %4 : vector<32x32xf32>
    %cst_5 = arith.constant dense<0.000000e+00> : vector<32xf32>
    %6 = vector.multi_reduction <add>, %5, %cst_5 [0] : vector<32x32xf32> to vector<32xf32>
    %7 = vector.shape_cast %6 : vector<32xf32> to vector<1x32xf32>
    %cst_6 = arith.constant 3.200000e+01 : f32
    %8 = vector.broadcast %cst_6 : f32 to vector<1x32xf32>
    %9 = arith.divf %7, %8 : vector<1x32xf32>
    %10 = vector.broadcast %9 : vector<1x32xf32> to vector<32x32xf32>
    %11 = arith.subf %5, %10 : vector<32x32xf32>
    %12 = arith.mulf %11, %11 : vector<32x32xf32>
    %cst_7 = arith.constant dense<0.000000e+00> : vector<32xf32>
    %13 = vector.multi_reduction <add>, %12, %cst_7 [0] : vector<32x32xf32> to vector<32xf32>
    %14 = vector.shape_cast %13 : vector<32xf32> to vector<1x32xf32>
    %cst_8 = arith.constant 3.200000e+01 : f32
    %15 = vector.broadcast %cst_8 : f32 to vector<1x32xf32>
    %16 = arith.divf %14, %15 : vector<1x32xf32>
    %c0_9 = arith.constant 0 : index
    %c0_10 = arith.constant 0 : index
    %17 = vector.load %arg4[%c0_9, %c0_10] : memref<1x32xf32, #tpu.memory_space<vmem>>, vector<1x32xf32>
    %cst_11 = arith.constant 9.99999974E-6 : f32
    %18 = vector.broadcast %cst_11 : f32 to vector<1x32xf32>
    %19 = arith.addf %16, %18 : vector<1x32xf32>
    %20 = math.rsqrt %19 : vector<1x32xf32>
    %21 = arith.mulf %17, %20 : vector<1x32xf32>
    %22 = vector.broadcast %9 : vector<1x32xf32> to vector<32x32xf32>
    %23 = arith.subf %5, %22 : vector<32x32xf32>
    %24 = vector.broadcast %21 : vector<1x32xf32> to vector<32x32xf32>
    %25 = arith.mulf %23, %24 : vector<32x32xf32>
    %c0_12 = arith.constant 0 : index
    %c0_13 = arith.constant 0 : index
    %26 = vector.load %arg5[%c0_12, %c0_13] : memref<1x32xf32, #tpu.memory_space<vmem>>, vector<1x32xf32>
    %27 = vector.broadcast %26 : vector<1x32xf32> to vector<32x32xf32>
    %28 = arith.addf %25, %27 : vector<32x32xf32>
    %cst_14 = arith.constant 0.000000e+00 : f32
    %29 = vector.broadcast %cst_14 : f32 to vector<32x32xf32>
    %30 = arith.maximumf %28, %29 : vector<32x32xf32>
    %c0_15 = arith.constant 0 : index
    %c0_16 = arith.constant 0 : index
    %31 = vector.load %arg6[%c0_15, %c0_16] : memref<32x32xf32, #tpu.memory_space<vmem>>, vector<32x32xf32>
    tpu.vector_store %arg6[%c0_15, %c0_16], %30 {strides = array<i32>} : memref<32x32xf32, #tpu.memory_space<vmem>>, vector<32x32xf32>,
    return
  }
  func.func @transform_0(%arg0: i32) -> (i32, i32) {
    %c0_i32 = arith.constant 0 : i32
    %c0_i32_0 = arith.constant 0 : i32
    %c0_i32_1 = arith.constant 0 : i32
    return %c0_i32, %c0_i32_0 : i32, i32
  }
  func.func @transform_1(%arg0: i32) -> (i32, i32) {
    %c0_i32 = arith.constant 0 : i32
    %c0_i32_0 = arith.constant 0 : i32
    %c0_i32_1 = arith.constant 0 : i32
    return %c0_i32, %c0_i32_0 : i32, i32
  }
  func.func @transform_2(%arg0: i32) -> (i32, i32) {
    %c0_i32 = arith.constant 0 : i32
    %c0_i32_0 = arith.constant 0 : i32
    %c0_i32_1 = arith.constant 0 : i32
    return %c0_i32, %c0_i32_0 : i32, i32
  }
  func.func @transform_3(%arg0: i32) -> (i32, i32) {
    %c0_i32 = arith.constant 0 : i32
    %c0_i32_0 = arith.constant 0 : i32
    %c0_i32_1 = arith.constant 0 : i32
    return %c0_i32, %c0_i32_0 : i32, i32
  }
  func.func @transform_4(%arg0: i32) -> (i32, i32) {
    %c0_i32 = arith.constant 0 : i32
    %c0_i32_0 = arith.constant 0 : i32
    %c0_i32_1 = arith.constant 0 : i32
    return %c0_i32, %c0_i32_0 : i32, i32
  }
  func.func @transform_5(%arg0: i32) -> (i32, i32) {
    %c0_i32 = arith.constant 0 : i32
    %c0_i32_0 = arith.constant 0 : i32
    %c0_i32_1 = arith.constant 0 : i32
    return %c0_i32, %c0_i32_0 : i32, i32
  }
}

module attributes {stable_mosaic.version = 11 : i64} {
  func.func @_fused_matmul_kernel(%arg0: i32, %arg1: memref<32x288xf32, #tpu.memory_space<vmem>>, %arg2: memref<288x32xf32, #tpu.memory_space<vmem>>, %arg3: memref<1x32xf32, #tpu.memory_space<vmem>>, %arg4: memref<32x32xf32, #tpu.memory_space<vmem>>, %arg5: memref<32x32xf32, #tpu.memory_space<vmem>>) attributes {dimension_semantics = [#tpu.dimension_semantics<arbitrary>], iteration_bounds = array<i64: 1>, scalar_prefetch = 0 : i64, scratch_operands = 0 : i64, tpu.core_type = #tpu.core_type<tc>, window_params = [{pipeline_mode = #tpu.pipeline_mode<synchronous>, transform_indices = @transform_0, window_bounds = array<i64: 32, 288>}, {pipeline_mode = #tpu.pipeline_mode<synchronous>, transform_indices = @transform_1, window_bounds = array<i64: 288, 32>}, {pipeline_mode = #tpu.pipeline_mode<synchronous>, transform_indices = @transform_2, window_bounds = array<i64: 1, 32>}, {pipeline_mode = #tpu.pipeline_mode<synchronous>, transform_indices = @transform_3, window_bounds = array<i64: 32, 32>}, {pipeline_mode = #tpu.pipeline_mode<synchronous>, transform_indices = @transform_4, window_bounds = array<i64: 32, 32>}]} {
    %c0 = arith.constant 0 : index
    %c0_0 = arith.constant 0 : index
    %0 = vector.load %arg1[%c0, %c0_0] : memref<32x288xf32, #tpu.memory_space<vmem>>, vector<32x288xf32>
    %c0_1 = arith.constant 0 : index
    %c0_2 = arith.constant 0 : index
    %1 = vector.load %arg2[%c0_1, %c0_2] : memref<288x32xf32, #tpu.memory_space<vmem>>, vector<288x32xf32>
    %cst = arith.constant dense<0.000000e+00> : vector<32x32xf32>
    %2 = tpu.matmul %0, %1, %cst {dimension_numbers = #tpu.dot_dimension_numbers<[1], [0], [0], [1], [0, 0, 1, 1], [], []>} : vector<32x288xf32>, vector<288x32xf32>, vector<32x32xf32> -> vector<32x32xf32>
    %c0_3 = arith.constant 0 : index
    %c0_4 = arith.constant 0 : index
    %3 = vector.load %arg3[%c0_3, %c0_4] : memref<1x32xf32, #tpu.memory_space<vmem>>, vector<1x32xf32>
    %4 = vector.broadcast %3 : vector<1x32xf32> to vector<32x32xf32>
    %5 = arith.addf %2, %4 : vector<32x32xf32>
    %c0_5 = arith.constant 0 : index
    %c0_6 = arith.constant 0 : index
    %6 = vector.load %arg4[%c0_5, %c0_6] : memref<32x32xf32, #tpu.memory_space<vmem>>, vector<32x32xf32>
    %7 = arith.addf %5, %6 : vector<32x32xf32>
    %c0_7 = arith.constant 0 : index
    %c0_8 = arith.constant 0 : index
    %8 = vector.load %arg5[%c0_7, %c0_8] : memref<32x32xf32, #tpu.memory_space<vmem>>, vector<32x32xf32>
    tpu.vector_store %arg5[%c0_7, %c0_8], %7 {strides = array<i32>} : memref<32x32xf32, #tpu.memory_space<vmem>>, vector<32x32xf32>,
    return
  }
  func.func @transform_0(%arg0: i32) -> (i32, i32) {
    %c0_i32 = arith.constant 0 : i32
    %c0_i32_0 = arith.constant 0 : i32
    %c0_i32_1 = arith.constant 0 : i32
    return %c0_i32, %c0_i32_0 : i32, i32
  }
  func.func @transform_1(%arg0: i32) -> (i32, i32) {
    %c0_i32 = arith.constant 0 : i32
    %c0_i32_0 = arith.constant 0 : i32
    %c0_i32_1 = arith.constant 0 : i32
    return %c0_i32, %c0_i32_0 : i32, i32
  }
  func.func @transform_2(%arg0: i32) -> (i32, i32) {
    %c0_i32 = arith.constant 0 : i32
    %c0_i32_0 = arith.constant 0 : i32
    %c0_i32_1 = arith.constant 0 : i32
    return %c0_i32, %c0_i32_0 : i32, i32
  }
  func.func @transform_3(%arg0: i32) -> (i32, i32) {
    %c0_i32 = arith.constant 0 : i32
    %c0_i32_0 = arith.constant 0 : i32
    %c0_i32_1 = arith.constant 0 : i32
    return %c0_i32, %c0_i32_0 : i32, i32
  }
  func.func @transform_4(%arg0: i32) -> (i32, i32) {
    %c0_i32 = arith.constant 0 : i32
    %c0_i32_0 = arith.constant 0 : i32
    %c0_i32_1 = arith.constant 0 : i32
    return %c0_i32, %c0_i32_0 : i32, i32
  }
}

module attributes {stable_mosaic.version = 11 : i64} {
  func.func @_fused_matmul_kernel(%arg0: i32, %arg1: memref<128x288xf32, #tpu.memory_space<vmem>>, %arg2: memref<288x16xf32, #tpu.memory_space<vmem>>, %arg3: memref<1x16xf32, #tpu.memory_space<vmem>>, %arg4: memref<1x16xf32, #tpu.memory_space<vmem>>, %arg5: memref<1x16xf32, #tpu.memory_space<vmem>>, %arg6: memref<128x16xf32, #tpu.memory_space<vmem>>) attributes {dimension_semantics = [#tpu.dimension_semantics<arbitrary>], iteration_bounds = array<i64: 1>, scalar_prefetch = 0 : i64, scratch_operands = 0 : i64, tpu.core_type = #tpu.core_type<tc>, window_params = [{pipeline_mode = #tpu.pipeline_mode<synchronous>, transform_indices = @transform_0, window_bounds = array<i64: 128, 288>}, {pipeline_mode = #tpu.pipeline_mode<synchronous>, transform_indices = @transform_1, window_bounds = array<i64: 288, 16>}, {pipeline_mode = #tpu.pipeline_mode<synchronous>, transform_indices = @transform_2, window_bounds = array<i64: 1, 16>}, {pipeline_mode = #tpu.pipeline_mode<synchronous>, transform_indices = @transform_3, window_bounds = array<i64: 1, 16>}, {pipeline_mode = #tpu.pipeline_mode<synchronous>, transform_indices = @transform_4, window_bounds = array<i64: 1, 16>}, {pipeline_mode = #tpu.pipeline_mode<synchronous>, transform_indices = @transform_5, window_bounds = array<i64: 128, 16>}]} {
    %c0 = arith.constant 0 : index
    %c0_0 = arith.constant 0 : index
    %0 = vector.load %arg1[%c0, %c0_0] : memref<128x288xf32, #tpu.memory_space<vmem>>, vector<128x288xf32>
    %c0_1 = arith.constant 0 : index
    %c0_2 = arith.constant 0 : index
    %1 = vector.load %arg2[%c0_1, %c0_2] : memref<288x16xf32, #tpu.memory_space<vmem>>, vector<288x16xf32>
    %cst = arith.constant dense<0.000000e+00> : vector<128x16xf32>
    %2 = tpu.matmul %0, %1, %cst {dimension_numbers = #tpu.dot_dimension_numbers<[1], [0], [0], [1], [0, 0, 1, 1], [], []>} : vector<128x288xf32>, vector<288x16xf32>, vector<128x16xf32> -> vector<128x16xf32>
    %c0_3 = arith.constant 0 : index
    %c0_4 = arith.constant 0 : index
    %3 = vector.load %arg3[%c0_3, %c0_4] : memref<1x16xf32, #tpu.memory_space<vmem>>, vector<1x16xf32>
    %4 = vector.broadcast %3 : vector<1x16xf32> to vector<128x16xf32>
    %5 = arith.addf %2, %4 : vector<128x16xf32>
    %cst_5 = arith.constant dense<0.000000e+00> : vector<16xf32>
    %6 = vector.multi_reduction <add>, %5, %cst_5 [0] : vector<128x16xf32> to vector<16xf32>
    %7 = vector.shape_cast %6 : vector<16xf32> to vector<1x16xf32>
    %cst_6 = arith.constant 1.280000e+02 : f32
    %8 = vector.broadcast %cst_6 : f32 to vector<1x16xf32>
    %9 = arith.divf %7, %8 : vector<1x16xf32>
    %10 = vector.broadcast %9 : vector<1x16xf32> to vector<128x16xf32>
    %11 = arith.subf %5, %10 : vector<128x16xf32>
    %12 = arith.mulf %11, %11 : vector<128x16xf32>
    %cst_7 = arith.constant dense<0.000000e+00> : vector<16xf32>
    %13 = vector.multi_reduction <add>, %12, %cst_7 [0] : vector<128x16xf32> to vector<16xf32>
    %14 = vector.shape_cast %13 : vector<16xf32> to vector<1x16xf32>
    %cst_8 = arith.constant 1.280000e+02 : f32
    %15 = vector.broadcast %cst_8 : f32 to vector<1x16xf32>
    %16 = arith.divf %14, %15 : vector<1x16xf32>
    %c0_9 = arith.constant 0 : index
    %c0_10 = arith.constant 0 : index
    %17 = vector.load %arg4[%c0_9, %c0_10] : memref<1x16xf32, #tpu.memory_space<vmem>>, vector<1x16xf32>
    %cst_11 = arith.constant 9.99999974E-6 : f32
    %18 = vector.broadcast %cst_11 : f32 to vector<1x16xf32>
    %19 = arith.addf %16, %18 : vector<1x16xf32>
    %20 = math.rsqrt %19 : vector<1x16xf32>
    %21 = arith.mulf %17, %20 : vector<1x16xf32>
    %22 = vector.broadcast %9 : vector<1x16xf32> to vector<128x16xf32>
    %23 = arith.subf %5, %22 : vector<128x16xf32>
    %24 = vector.broadcast %21 : vector<1x16xf32> to vector<128x16xf32>
    %25 = arith.mulf %23, %24 : vector<128x16xf32>
    %c0_12 = arith.constant 0 : index
    %c0_13 = arith.constant 0 : index
    %26 = vector.load %arg5[%c0_12, %c0_13] : memref<1x16xf32, #tpu.memory_space<vmem>>, vector<1x16xf32>
    %27 = vector.broadcast %26 : vector<1x16xf32> to vector<128x16xf32>
    %28 = arith.addf %25, %27 : vector<128x16xf32>
    %cst_14 = arith.constant 0.000000e+00 : f32
    %29 = vector.broadcast %cst_14 : f32 to vector<128x16xf32>
    %30 = arith.maximumf %28, %29 : vector<128x16xf32>
    %c0_15 = arith.constant 0 : index
    %c0_16 = arith.constant 0 : index
    %31 = vector.load %arg6[%c0_15, %c0_16] : memref<128x16xf32, #tpu.memory_space<vmem>>, vector<128x16xf32>
    tpu.vector_store %arg6[%c0_15, %c0_16], %30 {strides = array<i32>} : memref<128x16xf32, #tpu.memory_space<vmem>>, vector<128x16xf32>,
    return
  }
  func.func @transform_0(%arg0: i32) -> (i32, i32) {
    %c0_i32 = arith.constant 0 : i32
    %c0_i32_0 = arith.constant 0 : i32
    %c0_i32_1 = arith.constant 0 : i32
    return %c0_i32, %c0_i32_0 : i32, i32
  }
  func.func @transform_1(%arg0: i32) -> (i32, i32) {
    %c0_i32 = arith.constant 0 : i32
    %c0_i32_0 = arith.constant 0 : i32
    %c0_i32_1 = arith.constant 0 : i32
    return %c0_i32, %c0_i32_0 : i32, i32
  }
  func.func @transform_2(%arg0: i32) -> (i32, i32) {
    %c0_i32 = arith.constant 0 : i32
    %c0_i32_0 = arith.constant 0 : i32
    %c0_i32_1 = arith.constant 0 : i32
    return %c0_i32, %c0_i32_0 : i32, i32
  }
  func.func @transform_3(%arg0: i32) -> (i32, i32) {
    %c0_i32 = arith.constant 0 : i32
    %c0_i32_0 = arith.constant 0 : i32
    %c0_i32_1 = arith.constant 0 : i32
    return %c0_i32, %c0_i32_0 : i32, i32
  }
  func.func @transform_4(%arg0: i32) -> (i32, i32) {
    %c0_i32 = arith.constant 0 : i32
    %c0_i32_0 = arith.constant 0 : i32
    %c0_i32_1 = arith.constant 0 : i32
    return %c0_i32, %c0_i32_0 : i32, i32
  }
  func.func @transform_5(%arg0: i32) -> (i32, i32) {
    %c0_i32 = arith.constant 0 : i32
    %c0_i32_0 = arith.constant 0 : i32
    %c0_i32_1 = arith.constant 0 : i32
    return %c0_i32, %c0_i32_0 : i32, i32
  }
}

module attributes {stable_mosaic.version = 11 : i64} {
  func.func @_fused_matmul_kernel(%arg0: i32, %arg1: memref<512x144xf32, #tpu.memory_space<vmem>>, %arg2: memref<144x8xf32, #tpu.memory_space<vmem>>, %arg3: memref<1x8xf32, #tpu.memory_space<vmem>>, %arg4: memref<1x8xf32, #tpu.memory_space<vmem>>, %arg5: memref<1x8xf32, #tpu.memory_space<vmem>>, %arg6: memref<512x8xf32, #tpu.memory_space<vmem>>) attributes {dimension_semantics = [#tpu.dimension_semantics<arbitrary>], iteration_bounds = array<i64: 1>, scalar_prefetch = 0 : i64, scratch_operands = 0 : i64, tpu.core_type = #tpu.core_type<tc>, window_params = [{pipeline_mode = #tpu.pipeline_mode<synchronous>, transform_indices = @transform_0, window_bounds = array<i64: 512, 144>}, {pipeline_mode = #tpu.pipeline_mode<synchronous>, transform_indices = @transform_1, window_bounds = array<i64: 144, 8>}, {pipeline_mode = #tpu.pipeline_mode<synchronous>, transform_indices = @transform_2, window_bounds = array<i64: 1, 8>}, {pipeline_mode = #tpu.pipeline_mode<synchronous>, transform_indices = @transform_3, window_bounds = array<i64: 1, 8>}, {pipeline_mode = #tpu.pipeline_mode<synchronous>, transform_indices = @transform_4, window_bounds = array<i64: 1, 8>}, {pipeline_mode = #tpu.pipeline_mode<synchronous>, transform_indices = @transform_5, window_bounds = array<i64: 512, 8>}]} {
    %c0 = arith.constant 0 : index
    %c0_0 = arith.constant 0 : index
    %0 = vector.load %arg1[%c0, %c0_0] : memref<512x144xf32, #tpu.memory_space<vmem>>, vector<512x144xf32>
    %c0_1 = arith.constant 0 : index
    %c0_2 = arith.constant 0 : index
    %1 = vector.load %arg2[%c0_1, %c0_2] : memref<144x8xf32, #tpu.memory_space<vmem>>, vector<144x8xf32>
    %cst = arith.constant dense<0.000000e+00> : vector<512x8xf32>
    %2 = tpu.matmul %0, %1, %cst {dimension_numbers = #tpu.dot_dimension_numbers<[1], [0], [0], [1], [0, 0, 1, 1], [], []>} : vector<512x144xf32>, vector<144x8xf32>, vector<512x8xf32> -> vector<512x8xf32>
    %c0_3 = arith.constant 0 : index
    %c0_4 = arith.constant 0 : index
    %3 = vector.load %arg3[%c0_3, %c0_4] : memref<1x8xf32, #tpu.memory_space<vmem>>, vector<1x8xf32>
    %4 = vector.broadcast %3 : vector<1x8xf32> to vector<512x8xf32>
    %5 = arith.addf %2, %4 : vector<512x8xf32>
    %cst_5 = arith.constant dense<0.000000e+00> : vector<8xf32>
    %6 = vector.multi_reduction <add>, %5, %cst_5 [0] : vector<512x8xf32> to vector<8xf32>
    %7 = vector.shape_cast %6 : vector<8xf32> to vector<1x8xf32>
    %cst_6 = arith.constant 5.120000e+02 : f32
    %8 = vector.broadcast %cst_6 : f32 to vector<1x8xf32>
    %9 = arith.divf %7, %8 : vector<1x8xf32>
    %10 = vector.broadcast %9 : vector<1x8xf32> to vector<512x8xf32>
    %11 = arith.subf %5, %10 : vector<512x8xf32>
    %12 = arith.mulf %11, %11 : vector<512x8xf32>
    %cst_7 = arith.constant dense<0.000000e+00> : vector<8xf32>
    %13 = vector.multi_reduction <add>, %12, %cst_7 [0] : vector<512x8xf32> to vector<8xf32>
    %14 = vector.shape_cast %13 : vector<8xf32> to vector<1x8xf32>
    %cst_8 = arith.constant 5.120000e+02 : f32
    %15 = vector.broadcast %cst_8 : f32 to vector<1x8xf32>
    %16 = arith.divf %14, %15 : vector<1x8xf32>
    %c0_9 = arith.constant 0 : index
    %c0_10 = arith.constant 0 : index
    %17 = vector.load %arg4[%c0_9, %c0_10] : memref<1x8xf32, #tpu.memory_space<vmem>>, vector<1x8xf32>
    %cst_11 = arith.constant 9.99999974E-6 : f32
    %18 = vector.broadcast %cst_11 : f32 to vector<1x8xf32>
    %19 = arith.addf %16, %18 : vector<1x8xf32>
    %20 = math.rsqrt %19 : vector<1x8xf32>
    %21 = arith.mulf %17, %20 : vector<1x8xf32>
    %22 = vector.broadcast %9 : vector<1x8xf32> to vector<512x8xf32>
    %23 = arith.subf %5, %22 : vector<512x8xf32>
    %24 = vector.broadcast %21 : vector<1x8xf32> to vector<512x8xf32>
    %25 = arith.mulf %23, %24 : vector<512x8xf32>
    %c0_12 = arith.constant 0 : index
    %c0_13 = arith.constant 0 : index
    %26 = vector.load %arg5[%c0_12, %c0_13] : memref<1x8xf32, #tpu.memory_space<vmem>>, vector<1x8xf32>
    %27 = vector.broadcast %26 : vector<1x8xf32> to vector<512x8xf32>
    %28 = arith.addf %25, %27 : vector<512x8xf32>
    %cst_14 = arith.constant 0.000000e+00 : f32
    %29 = vector.broadcast %cst_14 : f32 to vector<512x8xf32>
    %30 = arith.maximumf %28, %29 : vector<512x8xf32>
    %c0_15 = arith.constant 0 : index
    %c0_16 = arith.constant 0 : index
    %31 = vector.load %arg6[%c0_15, %c0_16] : memref<512x8xf32, #tpu.memory_space<vmem>>, vector<512x8xf32>
    tpu.vector_store %arg6[%c0_15, %c0_16], %30 {strides = array<i32>} : memref<512x8xf32, #tpu.memory_space<vmem>>, vector<512x8xf32>,
    return
  }
  func.func @transform_0(%arg0: i32) -> (i32, i32) {
    %c0_i32 = arith.constant 0 : i32
    %c0_i32_0 = arith.constant 0 : i32
    %c0_i32_1 = arith.constant 0 : i32
    return %c0_i32, %c0_i32_0 : i32, i32
  }
  func.func @transform_1(%arg0: i32) -> (i32, i32) {
    %c0_i32 = arith.constant 0 : i32
    %c0_i32_0 = arith.constant 0 : i32
    %c0_i32_1 = arith.constant 0 : i32
    return %c0_i32, %c0_i32_0 : i32, i32
  }
  func.func @transform_2(%arg0: i32) -> (i32, i32) {
    %c0_i32 = arith.constant 0 : i32
    %c0_i32_0 = arith.constant 0 : i32
    %c0_i32_1 = arith.constant 0 : i32
    return %c0_i32, %c0_i32_0 : i32, i32
  }
  func.func @transform_3(%arg0: i32) -> (i32, i32) {
    %c0_i32 = arith.constant 0 : i32
    %c0_i32_0 = arith.constant 0 : i32
    %c0_i32_1 = arith.constant 0 : i32
    return %c0_i32, %c0_i32_0 : i32, i32
  }
  func.func @transform_4(%arg0: i32) -> (i32, i32) {
    %c0_i32 = arith.constant 0 : i32
    %c0_i32_0 = arith.constant 0 : i32
    %c0_i32_1 = arith.constant 0 : i32
    return %c0_i32, %c0_i32_0 : i32, i32
  }
  func.func @transform_5(%arg0: i32) -> (i32, i32) {
    %c0_i32 = arith.constant 0 : i32
    %c0_i32_0 = arith.constant 0 : i32
    %c0_i32_1 = arith.constant 0 : i32
    return %c0_i32, %c0_i32_0 : i32, i32
  }
}

module attributes {stable_mosaic.version = 11 : i64} {
  func.func @_fused_matmul_kernel(%arg0: i32, %arg1: memref<512x392xf32, #tpu.memory_space<vmem>>, %arg2: memref<392x3xf32, #tpu.memory_space<vmem>>, %arg3: memref<1x3xf32, #tpu.memory_space<vmem>>, %arg4: memref<512x3xf32, #tpu.memory_space<vmem>>) attributes {dimension_semantics = [#tpu.dimension_semantics<arbitrary>], iteration_bounds = array<i64: 1>, scalar_prefetch = 0 : i64, scratch_operands = 0 : i64, tpu.core_type = #tpu.core_type<tc>, window_params = [{pipeline_mode = #tpu.pipeline_mode<synchronous>, transform_indices = @transform_0, window_bounds = array<i64: 512, 392>}, {pipeline_mode = #tpu.pipeline_mode<synchronous>, transform_indices = @transform_1, window_bounds = array<i64: 392, 3>}, {pipeline_mode = #tpu.pipeline_mode<synchronous>, transform_indices = @transform_2, window_bounds = array<i64: 1, 3>}, {pipeline_mode = #tpu.pipeline_mode<synchronous>, transform_indices = @transform_3, window_bounds = array<i64: 512, 3>}]} {
    %c0 = arith.constant 0 : index
    %c0_0 = arith.constant 0 : index
    %0 = vector.load %arg1[%c0, %c0_0] : memref<512x392xf32, #tpu.memory_space<vmem>>, vector<512x392xf32>
    %c0_1 = arith.constant 0 : index
    %c0_2 = arith.constant 0 : index
    %1 = vector.load %arg2[%c0_1, %c0_2] : memref<392x3xf32, #tpu.memory_space<vmem>>, vector<392x3xf32>
    %cst = arith.constant dense<0.000000e+00> : vector<512x3xf32>
    %2 = tpu.matmul %0, %1, %cst {dimension_numbers = #tpu.dot_dimension_numbers<[1], [0], [0], [1], [0, 0, 1, 1], [], []>} : vector<512x392xf32>, vector<392x3xf32>, vector<512x3xf32> -> vector<512x3xf32>
    %c0_3 = arith.constant 0 : index
    %c0_4 = arith.constant 0 : index
    %3 = vector.load %arg3[%c0_3, %c0_4] : memref<1x3xf32, #tpu.memory_space<vmem>>, vector<1x3xf32>
    %4 = vector.broadcast %3 : vector<1x3xf32> to vector<512x3xf32>
    %5 = arith.addf %2, %4 : vector<512x3xf32>
    %6 = arith.negf %5 : vector<512x3xf32>
    %7 = math.exp %6 : vector<512x3xf32>
    %cst_5 = arith.constant 1.000000e+00 : f32
    %8 = vector.broadcast %cst_5 : f32 to vector<512x3xf32>
    %9 = arith.addf %8, %7 : vector<512x3xf32>
    %10 = arith.divf %8, %9 : vector<512x3xf32>
    %c0_6 = arith.constant 0 : index
    %c0_7 = arith.constant 0 : index
    %11 = vector.load %arg4[%c0_6, %c0_7] : memref<512x3xf32, #tpu.memory_space<vmem>>, vector<512x3xf32>
    tpu.vector_store %arg4[%c0_6, %c0_7], %10 {strides = array<i32>} : memref<512x3xf32, #tpu.memory_space<vmem>>, vector<512x3xf32>,
    return
  }
  func.func @transform_0(%arg0: i32) -> (i32, i32) {
    %c0_i32 = arith.constant 0 : i32
    %c0_i32_0 = arith.constant 0 : i32
    %c0_i32_1 = arith.constant 0 : i32
    return %c0_i32, %c0_i32_0 : i32, i32
  }
  func.func @transform_1(%arg0: i32) -> (i32, i32) {
    %c0_i32 = arith.constant 0 : i32
    %c0_i32_0 = arith.constant 0 : i32
    %c0_i32_1 = arith.constant 0 : i32
    return %c0_i32, %c0_i32_0 : i32, i32
  }
  func.func @transform_2(%arg0: i32) -> (i32, i32) {
    %c0_i32 = arith.constant 0 : i32
    %c0_i32_0 = arith.constant 0 : i32
    %c0_i32_1 = arith.constant 0 : i32
    return %c0_i32, %c0_i32_0 : i32, i32
  }
  func.func @transform_3(%arg0: i32) -> (i32, i32) {
    %c0_i32 = arith.constant 0 : i32
    %c0_i32_0 = arith.constant 0 : i32
    %c0_i32_1 = arith.constant 0 : i32
    return %c0_i32, %c0_i32_0 : i32, i32
  }
}

</mosaic_0001>

<llo_original>
// kernel: generator_forward.10
$region0: #{generator_forward.10}
  #allocation0 [shape = 'u32[]', space=smem, size = 0x4, offset = 0x4, fixed_abs, tag = 'smem constant byte address 0x4 - core index']
  #allocation1 [shape = 'u32[72,128]{1,0:T(1,128)}', space=vmem, size = 0x9000, scoped, tag = 'internal scratch']
  %s0 = inlined_call_operand.vmem [shape: f32[512,72], index: 0, kind: input, shape index: {}]
  %s1 = inlined_call_operand.vmem [shape: f32[72,16], index: 1, kind: input, shape index: {}]
  %s2 = inlined_call_operand.vmem [shape: f32[1,16], index: 2, kind: input, shape index: {}]
  %s3 = inlined_call_operand.vmem [shape: f32[1,16], index: 3, kind: input, shape index: {}]
  %s4 = inlined_call_operand.vmem [shape: f32[1,16], index: 4, kind: input, shape index: {}]
  %s5 = inlined_call_operand.vmem [shape: f32[512,16], index: 5, kind: output, shape index: {}]
  %s6 = sld [smem:[#allocation0]]
  $region30: #{generator_forward.10} parent=0
    _
  %s8 = ssub.s32 1, %s6
  %s9 = scalar_select 0, %s8, %s6
  // Predicated region
  $region2: #{generator_forward.10} parent=0 // pred_check
    _
  $region3: #{generator_forward.10} parent=0 // pred_check_branch
    %11 = sbr.rel (0) target = $region5
  $region4: #{generator_forward.10} parent=0 // pred_region
    _
  $region5: #{generator_forward.10} parent=0 // pred_fallthru
    _
  // Predicated region
  $region6: #{generator_forward.10} parent=0 // pred_check
    _
  $region7: #{generator_forward.10} parent=0 // pred_check_branch
    %13 = sbr.rel (0) target = $region9
  $region8: #{generator_forward.10} parent=0 // pred_region
    _
  $region9: #{generator_forward.10} parent=0 // pred_fallthru
    _
  // Predicated region
  $region10: #{generator_forward.10} parent=0 // pred_check
    _
  $region11: #{generator_forward.10} parent=0 // pred_check_branch
    %15 = sbr.rel (0) target = $region13
  $region12: #{generator_forward.10} parent=0 // pred_region
    _
  $region13: #{generator_forward.10} parent=0 // pred_fallthru
    _
  // Predicated region
  $region14: #{generator_forward.10} parent=0 // pred_check
    _
  $region15: #{generator_forward.10} parent=0 // pred_check_branch
    %17 = sbr.rel (0) target = $region17
  $region16: #{generator_forward.10} parent=0 // pred_region
    _
  $region17: #{generator_forward.10} parent=0 // pred_fallthru
    _
  // Predicated region
  $region18: #{generator_forward.10} parent=0 // pred_check
    _
  $region19: #{generator_forward.10} parent=0 // pred_check_branch
    %19 = sbr.rel (0) target = $region21
  $region20: #{generator_forward.10} parent=0 // pred_region
    _
  $region21: #{generator_forward.10} parent=0 // pred_fallthru
    _
  %v20 = vld [vmem:[%s0] sm:$0xff]
  %v21 = vld [vmem:[%s0 + $0x8] sm:$0xff]
  %v22 = vld [vmem:[%s0 + $0x10] sm:$0xff]
  %v23 = vld [vmem:[%s0 + $0x18] sm:$0xff]
  %v24 = vld [vmem:[%s0 + $0x20] sm:$0xff]
  %v25 = vld [vmem:[%s0 + $0x28] sm:$0xff]
  %v26 = vld [vmem:[%s0 + $0x30] sm:$0xff]
  %v27 = vld [vmem:[%s0 + $0x38] sm:$0xff]
  %v28 = vld [vmem:[%s0 + $0x40] sm:$0xff]
  %v29 = vld [vmem:[%s0 + $0x48] sm:$0xff]
  %v30 = vld [vmem:[%s0 + $0x50] sm:$0xff]
  %v31 = vld [vmem:[%s0 + $0x58] sm:$0xff]
  %v32 = vld [vmem:[%s0 + $0x60] sm:$0xff]
  %v33 = vld [vmem:[%s0 + $0x68] sm:$0xff]
  %v34 = vld [vmem:[%s0 + $0x70] sm:$0xff]
  %v35 = vld [vmem:[%s0 + $0x78] sm:$0xff]
  %v36 = vld [vmem:[%s0 + $0x80] sm:$0xff]
  %v37 = vld [vmem:[%s0 + $0x88] sm:$0xff]
  %v38 = vld [vmem:[%s0 + $0x90] sm:$0xff]
  %v39 = vld [vmem:[%s0 + $0x98] sm:$0xff]
  %v40 = vld [vmem:[%s0 + $0xa0] sm:$0xff]
  %v41 = vld [vmem:[%s0 + $0xa8] sm:$0xff]
  %v42 = vld [vmem:[%s0 + $0xb0] sm:$0xff]
  %v43 = vld [vmem:[%s0 + $0xb8] sm:$0xff]
  %v44 = vld [vmem:[%s0 + $0xc0] sm:$0xff]
  %v45 = vld [vmem:[%s0 + $0xc8] sm:$0xff]
  %v46 = vld [vmem:[%s0 + $0xd0] sm:$0xff]
  %v47 = vld [vmem:[%s0 + $0xd8] sm:$0xff]
  %v48 = vld [vmem:[%s0 + $0xe0] sm:$0xff]
  %v49 = vld [vmem:[%s0 + $0xe8] sm:$0xff]
  %v50 = vld [vmem:[%s0 + $0xf0] sm:$0xff]
  %v51 = vld [vmem:[%s0 + $0xf8] sm:$0xff]
  %v52 = vld [vmem:[%s0 + $0x100] sm:$0xff]
  %v53 = vld [vmem:[%s0 + $0x108] sm:$0xff]
  %v54 = vld [vmem:[%s0 + $0x110] sm:$0xff]
  %v55 = vld [vmem:[%s0 + $0x118] sm:$0xff]
  %v56 = vld [vmem:[%s0 + $0x120] sm:$0xff]
  %v57 = vld [vmem:[%s0 + $0x128] sm:$0xff]
  %v58 = vld [vmem:[%s0 + $0x130] sm:$0xff]
  %v59 = vld [vmem:[%s0 + $0x138] sm:$0xff]
  %v60 = vld [vmem:[%s0 + $0x140] sm:$0xff]
  %v61 = vld [vmem:[%s0 + $0x148] sm:$0xff]
  %v62 = vld [vmem:[%s0 + $0x150] sm:$0xff]
  %v63 = vld [vmem:[%s0 + $0x158] sm:$0xff]
  %v64 = vld [vmem:[%s0 + $0x160] sm:$0xff]
  %v65 = vld [vmem:[%s0 + $0x168] sm:$0xff]
  %v66 = vld [vmem:[%s0 + $0x170] sm:$0xff]
  %v67 = vld [vmem:[%s0 + $0x178] sm:$0xff]
  %v68 = vld [vmem:[%s0 + $0x180] sm:$0xff]
  %v69 = vld [vmem:[%s0 + $0x188] sm:$0xff]
  %v70 = vld [vmem:[%s0 + $0x190] sm:$0xff]
  %v71 = vld [vmem:[%s0 + $0x198] sm:$0xff]
  %v72 = vld [vmem:[%s0 + $0x1a0] sm:$0xff]
  %v73 = vld [vmem:[%s0 + $0x1a8] sm:$0xff]
  %v74 = vld [vmem:[%s0 + $0x1b0] sm:$0xff]
  %v75 = vld [vmem:[%s0 + $0x1b8] sm:$0xff]
  %v76 = vld [vmem:[%s0 + $0x1c0] sm:$0xff]
  %v77 = vld [vmem:[%s0 + $0x1c8] sm:$0xff]
  %v78 = vld [vmem:[%s0 + $0x1d0] sm:$0xff]
  %v79 = vld [vmem:[%s0 + $0x1d8] sm:$0xff]
  %v80 = vld [vmem:[%s0 + $0x1e0] sm:$0xff]
  %v81 = vld [vmem:[%s0 + $0x1e8] sm:$0xff]
  %v82 = vld [vmem:[%s0 + $0x1f0] sm:$0xff]
  %v83 = vld [vmem:[%s0 + $0x1f8] sm:$0xff]
  %v84 = vld [vmem:[%s1] sm:$0xff]
  %v85 = vld [vmem:[%s1 + $0x8] sm:$0xff]
  %v86 = vld [vmem:[%s1 + $0x10] sm:$0xff]
  %v87 = vld [vmem:[%s1 + $0x18] sm:$0xff]
  %v88 = vld [vmem:[%s1 + $0x20] sm:$0xff]
  %v89 = vld [vmem:[%s1 + $0x28] sm:$0xff]
  %v90 = vld [vmem:[%s1 + $0x30] sm:$0xff]
  %v91 = vld [vmem:[%s1 + $0x38] sm:$0xff]
  %v92 = vld [vmem:[%s1 + $0x40] sm:$0xff]
  %v93 = vld [vmem:[%s2] sm:$0x1]
  %v95 = vperm.slane %v93, 0
  %vm97 = vcmask 588800
  %v99 = vsel %vm97, %v20, 0
  %v102 = vsel %vm97, %v21, 0
  %v105 = vsel %vm97, %v22, 0
  %v108 = vsel %vm97, %v23, 0
  %v111 = vsel %vm97, %v24, 0
  %v114 = vsel %vm97, %v25, 0
  %v117 = vsel %vm97, %v26, 0
  %v120 = vsel %vm97, %v27, 0
  %v123 = vsel %vm97, %v28, 0
  %v126 = vsel %vm97, %v29, 0
  %v129 = vsel %vm97, %v30, 0
  %v132 = vsel %vm97, %v31, 0
  %v135 = vsel %vm97, %v32, 0
  %v138 = vsel %vm97, %v33, 0
  %v141 = vsel %vm97, %v34, 0
  %v144 = vsel %vm97, %v35, 0
  %v147 = vsel %vm97, %v36, 0
  %v150 = vsel %vm97, %v37, 0
  %v153 = vsel %vm97, %v38, 0
  %v156 = vsel %vm97, %v39, 0
  %v159 = vsel %vm97, %v40, 0
  %v162 = vsel %vm97, %v41, 0
  %v165 = vsel %vm97, %v42, 0
  %v168 = vsel %vm97, %v43, 0
  %v171 = vsel %vm97, %v44, 0
  %v174 = vsel %vm97, %v45, 0
  %v177 = vsel %vm97, %v46, 0
  %v180 = vsel %vm97, %v47, 0
  %v183 = vsel %vm97, %v48, 0
  %v186 = vsel %vm97, %v49, 0
  %v189 = vsel %vm97, %v50, 0
  %v192 = vsel %vm97, %v51, 0
  %v195 = vsel %vm97, %v52, 0
  %v198 = vsel %vm97, %v53, 0
  %v201 = vsel %vm97, %v54, 0
  %v204 = vsel %vm97, %v55, 0
  %v207 = vsel %vm97, %v56, 0
  %v210 = vsel %vm97, %v57, 0
  %v213 = vsel %vm97, %v58, 0
  %v216 = vsel %vm97, %v59, 0
  %v219 = vsel %vm97, %v60, 0
  %v222 = vsel %vm97, %v61, 0
  %v225 = vsel %vm97, %v62, 0
  %v228 = vsel %vm97, %v63, 0
  %v231 = vsel %vm97, %v64, 0
  %v234 = vsel %vm97, %v65, 0
  %v237 = vsel %vm97, %v66, 0
  %v240 = vsel %vm97, %v67, 0
  %v243 = vsel %vm97, %v68, 0
  %v246 = vsel %vm97, %v69, 0
  %v249 = vsel %vm97, %v70, 0
  %v252 = vsel %vm97, %v71, 0
  %v255 = vsel %vm97, %v72, 0
  %v258 = vsel %vm97, %v73, 0
  %v261 = vsel %vm97, %v74, 0
  %v264 = vsel %vm97, %v75, 0
  %v267 = vsel %vm97, %v76, 0
  %v270 = vsel %vm97, %v77, 0
  %v273 = vsel %vm97, %v78, 0
  %v276 = vsel %vm97, %v79, 0
  %v279 = vsel %vm97, %v80, 0
  %v282 = vsel %vm97, %v81, 0
  %v285 = vsel %vm97, %v82, 0
  %v288 = vsel %vm97, %v83, 0
  %290 = vmatpush.msra.mxu0 0.0
  %291 = vmatpush.msra.mxu0 0.0
  %292 = vmatpush.msra.mxu0 0.0
  %293 = vmatpush.msra.mxu0 0.0
  %294 = vmatpush.msra.mxu0 0.0
  %295 = vmatpush.msra.mxu0 0.0
  %296 = vmatpush.msra.mxu0 0.0
  %297 = vmatpush.msra.mxu0 %v92
  %298 = vmatpush.msra.mxu0 %v91
  %299 = vmatpush.msra.mxu0 %v90
  %300 = vmatpush.msra.mxu0 %v89
  %301 = vmatpush.msra.mxu0 %v88
  %302 = vmatpush.msra.mxu0 %v87
  %303 = vmatpush.msra.mxu0 %v86
  %304 = vmatpush.msra.mxu0 %v85
  %305 = vmatpush.msra.mxu0 %v84
  %306 = vmatmul.f32.gmra.mxu0 %v99
  %v307 = vpop.f32.mrf.mxu0
  %v308 = vadd.f32 %v95, %v307
  %309 = vmatmul.f32.gmra.mxu0 %v102
  %v310 = vpop.f32.mrf.mxu0
  %v311 = vadd.f32 %v95, %v310
  %312 = vmatmul.f32.gmra.mxu0 %v105
  %v313 = vpop.f32.mrf.mxu0
  %v314 = vadd.f32 %v95, %v313
  %315 = vmatmul.f32.gmra.mxu0 %v108
  %v316 = vpop.f32.mrf.mxu0
  %v317 = vadd.f32 %v95, %v316
  %318 = vmatmul.f32.gmra.mxu0 %v111
  %v319 = vpop.f32.mrf.mxu0
  %v320 = vadd.f32 %v95, %v319
  %321 = vmatmul.f32.gmra.mxu0 %v114
  %v322 = vpop.f32.mrf.mxu0
  %v323 = vadd.f32 %v95, %v322
  %324 = vmatmul.f32.gmra.mxu0 %v117
  %v325 = vpop.f32.mrf.mxu0
  %v326 = vadd.f32 %v95, %v325
  %327 = vmatmul.f32.gmra.mxu0 %v120
  %v328 = vpop.f32.mrf.mxu0
  %v329 = vadd.f32 %v95, %v328
  %330 = vmatmul.f32.gmra.mxu0 %v123
  %v331 = vpop.f32.mrf.mxu0
  %v332 = vadd.f32 %v95, %v331
  %333 = vmatmul.f32.gmra.mxu0 %v126
  %v334 = vpop.f32.mrf.mxu0
  %v335 = vadd.f32 %v95, %v334
  %336 = vmatmul.f32.gmra.mxu0 %v129
  %v337 = vpop.f32.mrf.mxu0
  %v338 = vadd.f32 %v95, %v337
  %339 = vmatmul.f32.gmra.mxu0 %v132
  %v340 = vpop.f32.mrf.mxu0
  %v341 = vadd.f32 %v95, %v340
  %342 = vmatmul.f32.gmra.mxu0 %v135
  %v343 = vpop.f32.mrf.mxu0
  %v344 = vadd.f32 %v95, %v343
  %345 = vmatmul.f32.gmra.mxu0 %v138
  %v346 = vpop.f32.mrf.mxu0
  %v347 = vadd.f32 %v95, %v346
  %348 = vmatmul.f32.gmra.mxu0 %v141
  %v349 = vpop.f32.mrf.mxu0
  %v350 = vadd.f32 %v95, %v349
  %351 = vmatmul.f32.gmra.mxu0 %v144
  %v352 = vpop.f32.mrf.mxu0
  %v353 = vadd.f32 %v95, %v352
  %354 = vmatmul.f32.gmra.mxu0 %v147
  %v355 = vpop.f32.mrf.mxu0
  %v356 = vadd.f32 %v95, %v355
  %357 = vmatmul.f32.gmra.mxu0 %v150
  %v358 = vpop.f32.mrf.mxu0
  %v359 = vadd.f32 %v95, %v358
  %360 = vmatmul.f32.gmra.mxu0 %v153
  %v361 = vpop.f32.mrf.mxu0
  %v362 = vadd.f32 %v95, %v361
  %363 = vmatmul.f32.gmra.mxu0 %v156
  %v364 = vpop.f32.mrf.mxu0
  %v365 = vadd.f32 %v95, %v364
  %366 = vmatmul.f32.gmra.mxu0 %v159
  %v367 = vpop.f32.mrf.mxu0
  %v368 = vadd.f32 %v95, %v367
  %369 = vmatmul.f32.gmra.mxu0 %v162
  %v370 = vpop.f32.mrf.mxu0
  %v371 = vadd.f32 %v95, %v370
  %372 = vmatmul.f32.gmra.mxu0 %v165
  %v373 = vpop.f32.mrf.mxu0
  %v374 = vadd.f32 %v95, %v373
  %375 = vmatmul.f32.gmra.mxu0 %v168
  %v376 = vpop.f32.mrf.mxu0
  %v377 = vadd.f32 %v95, %v376
  %378 = vmatmul.f32.gmra.mxu0 %v171
  %v379 = vpop.f32.mrf.mxu0
  %v380 = vadd.f32 %v95, %v379
  %381 = vmatmul.f32.gmra.mxu0 %v174
  %v382 = vpop.f32.mrf.mxu0
  %v383 = vadd.f32 %v95, %v382
  %384 = vmatmul.f32.gmra.mxu0 %v177
  %v385 = vpop.f32.mrf.mxu0
  %v386 = vadd.f32 %v95, %v385
  %387 = vmatmul.f32.gmra.mxu0 %v180
  %v388 = vpop.f32.mrf.mxu0
  %v389 = vadd.f32 %v95, %v388
  %390 = vmatmul.f32.gmra.mxu0 %v183
  %v391 = vpop.f32.mrf.mxu0
  %v392 = vadd.f32 %v95, %v391
  %393 = vmatmul.f32.gmra.mxu0 %v186
  %v394 = vpop.f32.mrf.mxu0
  %v395 = vadd.f32 %v95, %v394
  %396 = vmatmul.f32.gmra.mxu0 %v189
  %v397 = vpop.f32.mrf.mxu0
  %v398 = vadd.f32 %v95, %v397
  %399 = vmatmul.f32.gmra.mxu0 %v192
  %v400 = vpop.f32.mrf.mxu0
  %v401 = vadd.f32 %v95, %v400
  %402 = vmatmul.f32.gmra.mxu0 %v195
  %v403 = vpop.f32.mrf.mxu0
  %v404 = vadd.f32 %v95, %v403
  %405 = vmatmul.f32.gmra.mxu0 %v198
  %v406 = vpop.f32.mrf.mxu0
  %v407 = vadd.f32 %v95, %v406
  %408 = vmatmul.f32.gmra.mxu0 %v201
  %v409 = vpop.f32.mrf.mxu0
  %v410 = vadd.f32 %v95, %v409
  %411 = vmatmul.f32.gmra.mxu0 %v204
  %v412 = vpop.f32.mrf.mxu0
  %v413 = vadd.f32 %v95, %v412
  %414 = vmatmul.f32.gmra.mxu0 %v207
  %v415 = vpop.f32.mrf.mxu0
  %v416 = vadd.f32 %v95, %v415
  %417 = vmatmul.f32.gmra.mxu0 %v210
  %v418 = vpop.f32.mrf.mxu0
  %v419 = vadd.f32 %v95, %v418
  %420 = vmatmul.f32.gmra.mxu0 %v213
  %v421 = vpop.f32.mrf.mxu0
  %v422 = vadd.f32 %v95, %v421
  %423 = vmatmul.f32.gmra.mxu0 %v216
  %v424 = vpop.f32.mrf.mxu0
  %v425 = vadd.f32 %v95, %v424
  %426 = vmatmul.f32.gmra.mxu0 %v219
  %v427 = vpop.f32.mrf.mxu0
  %v428 = vadd.f32 %v95, %v427
  %429 = vmatmul.f32.gmra.mxu0 %v222
  %v430 = vpop.f32.mrf.mxu0
  %v431 = vadd.f32 %v95, %v430
  %432 = vmatmul.f32.gmra.mxu0 %v225
  %v433 = vpop.f32.mrf.mxu0
  %v434 = vadd.f32 %v95, %v433
  %435 = vmatmul.f32.gmra.mxu0 %v228
  %v436 = vpop.f32.mrf.mxu0
  %v437 = vadd.f32 %v95, %v436
  %438 = vmatmul.f32.gmra.mxu0 %v231
  %v439 = vpop.f32.mrf.mxu0
  %v440 = vadd.f32 %v95, %v439
  %441 = vmatmul.f32.gmra.mxu0 %v234
  %v442 = vpop.f32.mrf.mxu0
  %v443 = vadd.f32 %v95, %v442
  %444 = vmatmul.f32.gmra.mxu0 %v237
  %v445 = vpop.f32.mrf.mxu0
  %v446 = vadd.f32 %v95, %v445
  %447 = vmatmul.f32.gmra.mxu0 %v240
  %v448 = vpop.f32.mrf.mxu0
  %v449 = vadd.f32 %v95, %v448
  %450 = vmatmul.f32.gmra.mxu0 %v243
  %v451 = vpop.f32.mrf.mxu0
  %v452 = vadd.f32 %v95, %v451
  %453 = vmatmul.f32.gmra.mxu0 %v246
  %v454 = vpop.f32.mrf.mxu0
  %v455 = vadd.f32 %v95, %v454
  %456 = vmatmul.f32.gmra.mxu0 %v249
  %v457 = vpop.f32.mrf.mxu0
  %v458 = vadd.f32 %v95, %v457
  %459 = vmatmul.f32.gmra.mxu0 %v252
  %v460 = vpop.f32.mrf.mxu0
  %v461 = vadd.f32 %v95, %v460
  %462 = vmatmul.f32.gmra.mxu0 %v255
  %v463 = vpop.f32.mrf.mxu0
  %v464 = vadd.f32 %v95, %v463
  %465 = vmatmul.f32.gmra.mxu0 %v258
  %v466 = vpop.f32.mrf.mxu0
  %v467 = vadd.f32 %v95, %v466
  %468 = vmatmul.f32.gmra.mxu0 %v261
  %v469 = vpop.f32.mrf.mxu0
  %v470 = vadd.f32 %v95, %v469
  %471 = vmatmul.f32.gmra.mxu0 %v264
  %v472 = vpop.f32.mrf.mxu0
  %v473 = vadd.f32 %v95, %v472
  %474 = vmatmul.f32.gmra.mxu0 %v267
  %v475 = vpop.f32.mrf.mxu0
  %v476 = vadd.f32 %v95, %v475
  %477 = vmatmul.f32.gmra.mxu0 %v270
  %v478 = vpop.f32.mrf.mxu0
  %v479 = vadd.f32 %v95, %v478
  %480 = vmatmul.f32.gmra.mxu0 %v273
  %v481 = vpop.f32.mrf.mxu0
  %v482 = vadd.f32 %v95, %v481
  %483 = vmatmul.f32.gmra.mxu0 %v276
  %v484 = vpop.f32.mrf.mxu0
  %v485 = vadd.f32 %v95, %v484
  %486 = vmatmul.f32.gmra.mxu0 %v279
  %v487 = vpop.f32.mrf.mxu0
  %v488 = vadd.f32 %v95, %v487
  %489 = vmatmul.f32.gmra.mxu0 %v282
  %v490 = vpop.f32.mrf.mxu0
  %v491 = vadd.f32 %v95, %v490
  %492 = vmatmul.f32.gmra.mxu0 %v285
  %v493 = vpop.f32.mrf.mxu0
  %v494 = vadd.f32 %v95, %v493
  %495 = vmatmul.f32.gmra.mxu0 %v288
  %v496 = vpop.f32.mrf.mxu0
  %v497 = vadd.f32 %v95, %v496
  %498 = vdwg.mxu0
  %vm499 = vcmask 130048
  %v500 = vsel %vm499, %v308, 0.0
  %v501 = vsel %vm499, %v311, 0.0
  %v502 = vadd.f32 %v500, %v501
  %v503 = vsel %vm499, %v314, 0.0
  %v504 = vadd.f32 %v502, %v503
  %v505 = vsel %vm499, %v317, 0.0
  %v506 = vadd.f32 %v504, %v505
  %v507 = vsel %vm499, %v320, 0.0
  %v508 = vadd.f32 %v506, %v507
  %v509 = vsel %vm499, %v323, 0.0
  %v510 = vadd.f32 %v508, %v509
  %v511 = vsel %vm499, %v326, 0.0
  %v512 = vadd.f32 %v510, %v511
  %v513 = vsel %vm499, %v329, 0.0
  %v514 = vadd.f32 %v512, %v513
  %v515 = vsel %vm499, %v332, 0.0
  %v516 = vadd.f32 %v514, %v515
  %v517 = vsel %vm499, %v335, 0.0
  %v518 = vadd.f32 %v516, %v517
  %v519 = vsel %vm499, %v338, 0.0
  %v520 = vadd.f32 %v518, %v519
  %v521 = vsel %vm499, %v341, 0.0
  %v522 = vadd.f32 %v520, %v521
  %v523 = vsel %vm499, %v344, 0.0
  %v524 = vadd.f32 %v522, %v523
  %v525 = vsel %vm499, %v347, 0.0
  %v526 = vadd.f32 %v524, %v525
  %v527 = vsel %vm499, %v350, 0.0
  %v528 = vadd.f32 %v526, %v527
  %v529 = vsel %vm499, %v353, 0.0
  %v530 = vadd.f32 %v528, %v529
  %v531 = vsel %vm499, %v356, 0.0
  %v532 = vadd.f32 %v530, %v531
  %v533 = vsel %vm499, %v359, 0.0
  %v534 = vadd.f32 %v532, %v533
  %v535 = vsel %vm499, %v362, 0.0
  %v536 = vadd.f32 %v534, %v535
  %v537 = vsel %vm499, %v365, 0.0
  %v538 = vadd.f32 %v536, %v537
  %v539 = vsel %vm499, %v368, 0.0
  %v540 = vadd.f32 %v538, %v539
  %v541 = vsel %vm499, %v371, 0.0
  %v542 = vadd.f32 %v540, %v541
  %v543 = vsel %vm499, %v374, 0.0
  %v544 = vadd.f32 %v542, %v543
  %v545 = vsel %vm499, %v377, 0.0
  %v546 = vadd.f32 %v544, %v545
  %v547 = vsel %vm499, %v380, 0.0
  %v548 = vadd.f32 %v546, %v547
  %v549 = vsel %vm499, %v383, 0.0
  %v550 = vadd.f32 %v548, %v549
  %v551 = vsel %vm499, %v386, 0.0
  %v552 = vadd.f32 %v550, %v551
  %v553 = vsel %vm499, %v389, 0.0
  %v554 = vadd.f32 %v552, %v553
  %v555 = vsel %vm499, %v392, 0.0
  %v556 = vadd.f32 %v554, %v555
  %v557 = vsel %vm499, %v395, 0.0
  %v558 = vadd.f32 %v556, %v557
  %v559 = vsel %vm499, %v398, 0.0
  %v560 = vadd.f32 %v558, %v559
  %v561 = vsel %vm499, %v401, 0.0
  %v562 = vadd.f32 %v560, %v561
  %v563 = vsel %vm499, %v404, 0.0
  %v564 = vadd.f32 %v562, %v563
  %v565 = vsel %vm499, %v407, 0.0
  %v566 = vadd.f32 %v564, %v565
  %v567 = vsel %vm499, %v410, 0.0
  %v568 = vadd.f32 %v566, %v567
  %v569 = vsel %vm499, %v413, 0.0
  %v570 = vadd.f32 %v568, %v569
  %v571 = vsel %vm499, %v416, 0.0
  %v572 = vadd.f32 %v570, %v571
  %v573 = vsel %vm499, %v419, 0.0
  %v574 = vadd.f32 %v572, %v573
  %v575 = vsel %vm499, %v422, 0.0
  %v576 = vadd.f32 %v574, %v575
  %v577 = vsel %vm499, %v425, 0.0
  %v578 = vadd.f32 %v576, %v577
  %v579 = vsel %vm499, %v428, 0.0
  %v580 = vadd.f32 %v578, %v579
  %v581 = vsel %vm499, %v431, 0.0
  %v582 = vadd.f32 %v580, %v581
  %v583 = vsel %vm499, %v434, 0.0
  %v584 = vadd.f32 %v582, %v583
  %v585 = vsel %vm499, %v437, 0.0
  %v586 = vadd.f32 %v584, %v585
  %v587 = vsel %vm499, %v440, 0.0
  %v588 = vadd.f32 %v586, %v587
  %v589 = vsel %vm499, %v443, 0.0
  %v590 = vadd.f32 %v588, %v589
  %v591 = vsel %vm499, %v446, 0.0
  %v592 = vadd.f32 %v590, %v591
  %v593 = vsel %vm499, %v449, 0.0
  %v594 = vadd.f32 %v592, %v593
  %v595 = vsel %vm499, %v452, 0.0
  %v596 = vadd.f32 %v594, %v595
  %v597 = vsel %vm499, %v455, 0.0
  %v598 = vadd.f32 %v596, %v597
  %v599 = vsel %vm499, %v458, 0.0
  %v600 = vadd.f32 %v598, %v599
  %v601 = vsel %vm499, %v461, 0.0
  %v602 = vadd.f32 %v600, %v601
  %v603 = vsel %vm499, %v464, 0.0
  %v604 = vadd.f32 %v602, %v603
  %v605 = vsel %vm499, %v467, 0.0
  %v606 = vadd.f32 %v604, %v605
  %v607 = vsel %vm499, %v470, 0.0
  %v608 = vadd.f32 %v606, %v607
  %v609 = vsel %vm499, %v473, 0.0
  %v610 = vadd.f32 %v608, %v609
  %v611 = vsel %vm499, %v476, 0.0
  %v612 = vadd.f32 %v610, %v611
  %v613 = vsel %vm499, %v479, 0.0
  %v614 = vadd.f32 %v612, %v613
  %v615 = vsel %vm499, %v482, 0.0
  %v616 = vadd.f32 %v614, %v615
  %v617 = vsel %vm499, %v485, 0.0
  %v618 = vadd.f32 %v616, %v617
  %v619 = vsel %vm499, %v488, 0.0
  %v620 = vadd.f32 %v618, %v619
  %v621 = vsel %vm499, %v491, 0.0
  %v622 = vadd.f32 %v620, %v621
  %v623 = vsel %vm499, %v494, 0.0
  %v624 = vadd.f32 %v622, %v623
  %v625 = vsel %vm499, %v497, 0.0
  %v626 = vadd.f32 %v624, %v625
  %v627 = vrot.slane %v626, 4
  %v628 = vadd.f32 %v626, %v627
  %v629 = vrot.slane %v628, 2
  %v630 = vadd.f32 %v628, %v629
  %v631 = vrot.slane %v630, 1
  %v632 = vadd.f32 %v630, %v631
  %v633 = vrcp.pop 512.0
  %v634 = vmul.f32 512.0, %v633
  %v635 = vsub.f32 1.0, %v634
  %v636 = vmul.f32 %v633, %v635
  %v637 = vadd.f32 %v633, %v636
  %vm638 = vweird.f32 %v633
  %v639 = vsel %vm638, %v633, %v637
  %v640 = vmul.f32 %v632, %v639
  %v641 = vsub.f32 %v308, %v640
  %v642 = vsub.f32 %v311, %v640
  %v643 = vsub.f32 %v314, %v640
  %v644 = vsub.f32 %v317, %v640
  %v645 = vsub.f32 %v320, %v640
  %v646 = vsub.f32 %v323, %v640
  %v647 = vsub.f32 %v326, %v640
  %v648 = vsub.f32 %v329, %v640
  %v649 = vsub.f32 %v332, %v640
  %v650 = vsub.f32 %v335, %v640
  %v651 = vsub.f32 %v338, %v640
  %v652 = vsub.f32 %v341, %v640
  %v653 = vsub.f32 %v344, %v640
  %v654 = vsub.f32 %v347, %v640
  %v655 = vsub.f32 %v350, %v640
  %v656 = vsub.f32 %v353, %v640
  %v657 = vsub.f32 %v356, %v640
  %v658 = vsub.f32 %v359, %v640
  %v659 = vsub.f32 %v362, %v640
  %v660 = vsub.f32 %v365, %v640
  %v661 = vsub.f32 %v368, %v640
  %v662 = vsub.f32 %v371, %v640
  %v663 = vsub.f32 %v374, %v640
  %v664 = vsub.f32 %v377, %v640
  %v665 = vsub.f32 %v380, %v640
  %v666 = vsub.f32 %v383, %v640
  %v667 = vsub.f32 %v386, %v640
  %v668 = vsub.f32 %v389, %v640
  %v669 = vsub.f32 %v392, %v640
  %v670 = vsub.f32 %v395, %v640
  %v671 = vsub.f32 %v398, %v640
  %v672 = vsub.f32 %v401, %v640
  %v673 = vsub.f32 %v404, %v640
  %v674 = vsub.f32 %v407, %v640
  %v675 = vsub.f32 %v410, %v640
  %v676 = vsub.f32 %v413, %v640
  %v677 = vsub.f32 %v416, %v640
  %v678 = vsub.f32 %v419, %v640
  %v679 = vsub.f32 %v422, %v640
  %v680 = vsub.f32 %v425, %v640
  %v681 = vsub.f32 %v428, %v640
  %v682 = vsub.f32 %v431, %v640
  %v683 = vsub.f32 %v434, %v640
  %v684 = vsub.f32 %v437, %v640
  %v685 = vsub.f32 %v440, %v640
  %v686 = vsub.f32 %v443, %v640
  %v687 = vsub.f32 %v446, %v640
  %v688 = vsub.f32 %v449, %v640
  %v689 = vsub.f32 %v452, %v640
  %v690 = vsub.f32 %v455, %v640
  %v691 = vsub.f32 %v458, %v640
  %v692 = vsub.f32 %v461, %v640
  %v693 = vsub.f32 %v464, %v640
  %v694 = vsub.f32 %v467, %v640
  %v695 = vsub.f32 %v470, %v640
  %v696 = vsub.f32 %v473, %v640
  %v697 = vsub.f32 %v476, %v640
  %v698 = vsub.f32 %v479, %v640
  %v699 = vsub.f32 %v482, %v640
  %v700 = vsub.f32 %v485, %v640
  %v701 = vsub.f32 %v488, %v640
  %v702 = vsub.f32 %v491, %v640
  %v703 = vsub.f32 %v494, %v640
  %v704 = vsub.f32 %v497, %v640
  %v705 = vmul.f32 %v641, %v641
  %v706 = vmul.f32 %v642, %v642
  %v707 = vmul.f32 %v643, %v643
  %v708 = vmul.f32 %v644, %v644
  %v709 = vmul.f32 %v645, %v645
  %v710 = vmul.f32 %v646, %v646
  %v711 = vmul.f32 %v647, %v647
  %v712 = vmul.f32 %v648, %v648
  %v713 = vmul.f32 %v649, %v649
  %v714 = vmul.f32 %v650, %v650
  %v715 = vmul.f32 %v651, %v651
  %v716 = vmul.f32 %v652, %v652
  %v717 = vmul.f32 %v653, %v653
  %v718 = vmul.f32 %v654, %v654
  %v719 = vmul.f32 %v655, %v655
  %v720 = vmul.f32 %v656, %v656
  %v721 = vmul.f32 %v657, %v657
  %v722 = vmul.f32 %v658, %v658
  %v723 = vmul.f32 %v659, %v659
  %v724 = vmul.f32 %v660, %v660
  %v725 = vmul.f32 %v661, %v661
  %v726 = vmul.f32 %v662, %v662
  %v727 = vmul.f32 %v663, %v663
  %v728 = vmul.f32 %v664, %v664
  %v729 = vmul.f32 %v665, %v665
  %v730 = vmul.f32 %v666, %v666
  %v731 = vmul.f32 %v667, %v667
  %v732 = vmul.f32 %v668, %v668
  %v733 = vmul.f32 %v669, %v669
  %v734 = vmul.f32 %v670, %v670
  %v735 = vmul.f32 %v671, %v671
  %v736 = vmul.f32 %v672, %v672
  %v737 = vmul.f32 %v673, %v673
  %v738 = vmul.f32 %v674, %v674
  %v739 = vmul.f32 %v675, %v675
  %v740 = vmul.f32 %v676, %v676
  %v741 = vmul.f32 %v677, %v677
  %v742 = vmul.f32 %v678, %v678
  %v743 = vmul.f32 %v679, %v679
  %v744 = vmul.f32 %v680, %v680
  %v745 = vmul.f32 %v681, %v681
  %v746 = vmul.f32 %v682, %v682
  %v747 = vmul.f32 %v683, %v683
  %v748 = vmul.f32 %v684, %v684
  %v749 = vmul.f32 %v685, %v685
  %v750 = vmul.f32 %v686, %v686
  %v751 = vmul.f32 %v687, %v687
  %v752 = vmul.f32 %v688, %v688
  %v753 = vmul.f32 %v689, %v689
  %v754 = vmul.f32 %v690, %v690
  %v755 = vmul.f32 %v691, %v691
  %v756 = vmul.f32 %v692, %v692
  %v757 = vmul.f32 %v693, %v693
  %v758 = vmul.f32 %v694, %v694
  %v759 = vmul.f32 %v695, %v695
  %v760 = vmul.f32 %v696, %v696
  %v761 = vmul.f32 %v697, %v697
  %v762 = vmul.f32 %v698, %v698
  %v763 = vmul.f32 %v699, %v699
  %v764 = vmul.f32 %v700, %v700
  %v765 = vmul.f32 %v701, %v701
  %v766 = vmul.f32 %v702, %v702
  %v767 = vmul.f32 %v703, %v703
  %v768 = vmul.f32 %v704, %v704
  %v769 = vsel %vm499, %v705, 0.0
  %v770 = vsel %vm499, %v706, 0.0
  %v771 = vadd.f32 %v769, %v770
  %v772 = vsel %vm499, %v707, 0.0
  %v773 = vadd.f32 %v771, %v772
  %v774 = vsel %vm499, %v708, 0.0
  %v775 = vadd.f32 %v773, %v774
  %v776 = vsel %vm499, %v709, 0.0
  %v777 = vadd.f32 %v775, %v776
  %v778 = vsel %vm499, %v710, 0.0
  %v779 = vadd.f32 %v777, %v778
  %v780 = vsel %vm499, %v711, 0.0
  %v781 = vadd.f32 %v779, %v780
  %v782 = vsel %vm499, %v712, 0.0
  %v783 = vadd.f32 %v781, %v782
  %v784 = vsel %vm499, %v713, 0.0
  %v785 = vadd.f32 %v783, %v784
  %v786 = vsel %vm499, %v714, 0.0
  %v787 = vadd.f32 %v785, %v786
  %v788 = vsel %vm499, %v715, 0.0
  %v789 = vadd.f32 %v787, %v788
  %v790 = vsel %vm499, %v716, 0.0
  %v791 = vadd.f32 %v789, %v790
  %v792 = vsel %vm499, %v717, 0.0
  %v793 = vadd.f32 %v791, %v792
  %v794 = vsel %vm499, %v718, 0.0
  %v795 = vadd.f32 %v793, %v794
  %v796 = vsel %vm499, %v719, 0.0
  %v797 = vadd.f32 %v795, %v796
  %v798 = vsel %vm499, %v720, 0.0
  %v799 = vadd.f32 %v797, %v798
  %v800 = vsel %vm499, %v721, 0.0
  %v801 = vadd.f32 %v799, %v800
  %v802 = vsel %vm499, %v722, 0.0
  %v803 = vadd.f32 %v801, %v802
  %v804 = vsel %vm499, %v723, 0.0
  %v805 = vadd.f32 %v803, %v804
  %v806 = vsel %vm499, %v724, 0.0
  %v807 = vadd.f32 %v805, %v806
  %v808 = vsel %vm499, %v725, 0.0
  %v809 = vadd.f32 %v807, %v808
  %v810 = vsel %vm499, %v726, 0.0
  %v811 = vadd.f32 %v809, %v810
  %v812 = vsel %vm499, %v727, 0.0
  %v813 = vadd.f32 %v811, %v812
  %v814 = vsel %vm499, %v728, 0.0
  %v815 = vadd.f32 %v813, %v814
  %v816 = vsel %vm499, %v729, 0.0
  %v817 = vadd.f32 %v815, %v816
  %v818 = vsel %vm499, %v730, 0.0
  %v819 = vadd.f32 %v817, %v818
  %v820 = vsel %vm499, %v731, 0.0
  %v821 = vadd.f32 %v819, %v820
  %v822 = vsel %vm499, %v732, 0.0
  %v823 = vadd.f32 %v821, %v822
  %v824 = vsel %vm499, %v733, 0.0
  %v825 = vadd.f32 %v823, %v824
  %v826 = vsel %vm499, %v734, 0.0
  %v827 = vadd.f32 %v825, %v826
  %v828 = vsel %vm499, %v735, 0.0
  %v829 = vadd.f32 %v827, %v828
  %v830 = vsel %vm499, %v736, 0.0
  %v831 = vadd.f32 %v829, %v830
  %v832 = vsel %vm499, %v737, 0.0
  %v833 = vadd.f32 %v831, %v832
  %v834 = vsel %vm499, %v738, 0.0
  %v835 = vadd.f32 %v833, %v834
  %v836 = vsel %vm499, %v739, 0.0
  %v837 = vadd.f32 %v835, %v836
  %v838 = vsel %vm499, %v740, 0.0
  %v839 = vadd.f32 %v837, %v838
  %v840 = vsel %vm499, %v741, 0.0
  %v841 = vadd.f32 %v839, %v840
  %v842 = vsel %vm499, %v742, 0.0
  %v843 = vadd.f32 %v841, %v842
  %v844 = vsel %vm499, %v743, 0.0
  %v845 = vadd.f32 %v843, %v844
  %v846 = vsel %vm499, %v744, 0.0
  %v847 = vadd.f32 %v845, %v846
  %v848 = vsel %vm499, %v745, 0.0
  %v849 = vadd.f32 %v847, %v848
  %v850 = vsel %vm499, %v746, 0.0
  %v851 = vadd.f32 %v849, %v850
  %v852 = vsel %vm499, %v747, 0.0
  %v853 = vadd.f32 %v851, %v852
  %v854 = vsel %vm499, %v748, 0.0
  %v855 = vadd.f32 %v853, %v854
  %v856 = vsel %vm499, %v749, 0.0
  %v857 = vadd.f32 %v855, %v856
  %v858 = vsel %vm499, %v750, 0.0
  %v859 = vadd.f32 %v857, %v858
  %v860 = vsel %vm499, %v751, 0.0
  %v861 = vadd.f32 %v859, %v860
  %v862 = vsel %vm499, %v752, 0.0
  %v863 = vadd.f32 %v861, %v862
  %v864 = vsel %vm499, %v753, 0.0
  %v865 = vadd.f32 %v863, %v864
  %v866 = vsel %vm499, %v754, 0.0
  %v867 = vadd.f32 %v865, %v866
  %v868 = vsel %vm499, %v755, 0.0
  %v869 = vadd.f32 %v867, %v868
  %v870 = vsel %vm499, %v756, 0.0
  %v871 = vadd.f32 %v869, %v870
  %v872 = vsel %vm499, %v757, 0.0
  %v873 = vadd.f32 %v871, %v872
  %v874 = vsel %vm499, %v758, 0.0
  %v875 = vadd.f32 %v873, %v874
  %v876 = vsel %vm499, %v759, 0.0
  %v877 = vadd.f32 %v875, %v876
  %v878 = vsel %vm499, %v760, 0.0
  %v879 = vadd.f32 %v877, %v878
  %v880 = vsel %vm499, %v761, 0.0
  %v881 = vadd.f32 %v879, %v880
  %v882 = vsel %vm499, %v762, 0.0
  %v883 = vadd.f32 %v881, %v882
  %v884 = vsel %vm499, %v763, 0.0
  %v885 = vadd.f32 %v883, %v884
  %v886 = vsel %vm499, %v764, 0.0
  %v887 = vadd.f32 %v885, %v886
  %v888 = vsel %vm499, %v765, 0.0
  %v889 = vadd.f32 %v887, %v888
  %v890 = vsel %vm499, %v766, 0.0
  %v891 = vadd.f32 %v889, %v890
  %v892 = vsel %vm499, %v767, 0.0
  %v893 = vadd.f32 %v891, %v892
  %v894 = vsel %vm499, %v768, 0.0
  %v895 = vadd.f32 %v893, %v894
  %v896 = vrot.slane %v895, 4
  %v897 = vadd.f32 %v895, %v896
  %v898 = vrot.slane %v897, 2
  %v899 = vadd.f32 %v897, %v898
  %v900 = vrot.slane %v899, 1
  %v901 = vadd.f32 %v899, %v900
  %v902 = vmul.f32 %v901, %v639
  %v903 = vld [vmem:[%s3] sm:$0x1]
  %v904 = vadd.f32 %v902, 1e-05
  %v905 = vrsqrt.pop %v904
  %v906 = vmul.f32 %v905, %v904
  %v907 = vmul.f32 %v906, %v905
  %v908 = vmul.f32 0.5, %v907
  %v909 = vsub.f32 1.5, %v908
  %v910 = vmul.f32 %v905, %v909
  %vm911 = vweird.f32 %v904
  %vm912 = vweird.f32 %v905
  %vm913 = vmor %vm911, %vm912
  %v914 = vsel %vm913, %v905, %v910
  %v915 = vmul.f32 %v903, %v914
  %v917 = vperm.slane %v915, 0
  %v919 = vmul.f32 %v641, %v917
  %v920 = vmul.f32 %v642, %v917
  %v921 = vmul.f32 %v643, %v917
  %v922 = vmul.f32 %v644, %v917
  %v923 = vmul.f32 %v645, %v917
  %v924 = vmul.f32 %v646, %v917
  %v925 = vmul.f32 %v647, %v917
  %v926 = vmul.f32 %v648, %v917
  %v927 = vmul.f32 %v649, %v917
  %v928 = vmul.f32 %v650, %v917
  %v929 = vmul.f32 %v651, %v917
  %v930 = vmul.f32 %v652, %v917
  %v931 = vmul.f32 %v653, %v917
  %v932 = vmul.f32 %v654, %v917
  %v933 = vmul.f32 %v655, %v917
  %v934 = vmul.f32 %v656, %v917
  %v935 = vmul.f32 %v657, %v917
  %v936 = vmul.f32 %v658, %v917
  %v937 = vmul.f32 %v659, %v917
  %v938 = vmul.f32 %v660, %v917
  %v939 = vmul.f32 %v661, %v917
  %v940 = vmul.f32 %v662, %v917
  %v941 = vmul.f32 %v663, %v917
  %v942 = vmul.f32 %v664, %v917
  %v943 = vmul.f32 %v665, %v917
  %v944 = vmul.f32 %v666, %v917
  %v945 = vmul.f32 %v667, %v917
  %v946 = vmul.f32 %v668, %v917
  %v947 = vmul.f32 %v669, %v917
  %v948 = vmul.f32 %v670, %v917
  %v949 = vmul.f32 %v671, %v917
  %v950 = vmul.f32 %v672, %v917
  %v951 = vmul.f32 %v673, %v917
  %v952 = vmul.f32 %v674, %v917
  %v953 = vmul.f32 %v675, %v917
  %v954 = vmul.f32 %v676, %v917
  %v955 = vmul.f32 %v677, %v917
  %v956 = vmul.f32 %v678, %v917
  %v957 = vmul.f32 %v679, %v917
  %v958 = vmul.f32 %v680, %v917
  %v959 = vmul.f32 %v681, %v917
  %v960 = vmul.f32 %v682, %v917
  %v961 = vmul.f32 %v683, %v917
  %v962 = vmul.f32 %v684, %v917
  %v963 = vmul.f32 %v685, %v917
  %v964 = vmul.f32 %v686, %v917
  %v965 = vmul.f32 %v687, %v917
  %v966 = vmul.f32 %v688, %v917
  %v967 = vmul.f32 %v689, %v917
  %v968 = vmul.f32 %v690, %v917
  %v969 = vmul.f32 %v691, %v917
  %v970 = vmul.f32 %v692, %v917
  %v971 = vmul.f32 %v693, %v917
  %v972 = vmul.f32 %v694, %v917
  %v973 = vmul.f32 %v695, %v917
  %v974 = vmul.f32 %v696, %v917
  %v975 = vmul.f32 %v697, %v917
  %v976 = vmul.f32 %v698, %v917
  %v977 = vmul.f32 %v699, %v917
  %v978 = vmul.f32 %v700, %v917
  %v979 = vmul.f32 %v701, %v917
  %v980 = vmul.f32 %v702, %v917
  %v981 = vmul.f32 %v703, %v917
  %v982 = vmul.f32 %v704, %v917
  %v983 = vld [vmem:[%s4] sm:$0x1]
  %v985 = vperm.slane %v983, 0
  %v987 = vadd.f32 %v919, %v985
  %v988 = vadd.f32 %v920, %v985
  %v989 = vadd.f32 %v921, %v985
  %v990 = vadd.f32 %v922, %v985
  %v991 = vadd.f32 %v923, %v985
  %v992 = vadd.f32 %v924, %v985
  %v993 = vadd.f32 %v925, %v985
  %v994 = vadd.f32 %v926, %v985
  %v995 = vadd.f32 %v927, %v985
  %v996 = vadd.f32 %v928, %v985
  %v997 = vadd.f32 %v929, %v985
  %v998 = vadd.f32 %v930, %v985
  %v999 = vadd.f32 %v931, %v985
  %v1000 = vadd.f32 %v932, %v985
  %v1001 = vadd.f32 %v933, %v985
  %v1002 = vadd.f32 %v934, %v985
  %v1003 = vadd.f32 %v935, %v985
  %v1004 = vadd.f32 %v936, %v985
  %v1005 = vadd.f32 %v937, %v985
  %v1006 = vadd.f32 %v938, %v985
  %v1007 = vadd.f32 %v939, %v985
  %v1008 = vadd.f32 %v940, %v985
  %v1009 = vadd.f32 %v941, %v985
  %v1010 = vadd.f32 %v942, %v985
  %v1011 = vadd.f32 %v943, %v985
  %v1012 = vadd.f32 %v944, %v985
  %v1013 = vadd.f32 %v945, %v985
  %v1014 = vadd.f32 %v946, %v985
  %v1015 = vadd.f32 %v947, %v985
  %v1016 = vadd.f32 %v948, %v985
  %v1017 = vadd.f32 %v949, %v985
  %v1018 = vadd.f32 %v950, %v985
  %v1019 = vadd.f32 %v951, %v985
  %v1020 = vadd.f32 %v952, %v985
  %v1021 = vadd.f32 %v953, %v985
  %v1022 = vadd.f32 %v954, %v985
  %v1023 = vadd.f32 %v955, %v985
  %v1024 = vadd.f32 %v956, %v985
  %v1025 = vadd.f32 %v957, %v985
  %v1026 = vadd.f32 %v958, %v985
  %v1027 = vadd.f32 %v959, %v985
  %v1028 = vadd.f32 %v960, %v985
  %v1029 = vadd.f32 %v961, %v985
  %v1030 = vadd.f32 %v962, %v985
  %v1031 = vadd.f32 %v963, %v985
  %v1032 = vadd.f32 %v964, %v985
  %v1033 = vadd.f32 %v965, %v985
  %v1034 = vadd.f32 %v966, %v985
  %v1035 = vadd.f32 %v967, %v985
  %v1036 = vadd.f32 %v968, %v985
  %v1037 = vadd.f32 %v969, %v985
  %v1038 = vadd.f32 %v970, %v985
  %v1039 = vadd.f32 %v971, %v985
  %v1040 = vadd.f32 %v972, %v985
  %v1041 = vadd.f32 %v973, %v985
  %v1042 = vadd.f32 %v974, %v985
  %v1043 = vadd.f32 %v975, %v985
  %v1044 = vadd.f32 %v976, %v985
  %v1045 = vadd.f32 %v977, %v985
  %v1046 = vadd.f32 %v978, %v985
  %v1047 = vadd.f32 %v979, %v985
  %v1048 = vadd.f32 %v980, %v985
  %v1049 = vadd.f32 %v981, %v985
  %v1050 = vadd.f32 %v982, %v985
  %v1051 = vmax.f32 %v987, 0.0
  %v1052 = vmax.f32 %v988, 0.0
  %v1053 = vmax.f32 %v989, 0.0
  %v1054 = vmax.f32 %v990, 0.0
  %v1055 = vmax.f32 %v991, 0.0
  %v1056 = vmax.f32 %v992, 0.0
  %v1057 = vmax.f32 %v993, 0.0
  %v1058 = vmax.f32 %v994, 0.0
  %v1059 = vmax.f32 %v995, 0.0
  %v1060 = vmax.f32 %v996, 0.0
  %v1061 = vmax.f32 %v997, 0.0
  %v1062 = vmax.f32 %v998, 0.0
  %v1063 = vmax.f32 %v999, 0.0
  %v1064 = vmax.f32 %v1000, 0.0
  %v1065 = vmax.f32 %v1001, 0.0
  %v1066 = vmax.f32 %v1002, 0.0
  %v1067 = vmax.f32 %v1003, 0.0
  %v1068 = vmax.f32 %v1004, 0.0
  %v1069 = vmax.f32 %v1005, 0.0
  %v1070 = vmax.f32 %v1006, 0.0
  %v1071 = vmax.f32 %v1007, 0.0
  %v1072 = vmax.f32 %v1008, 0.0
  %v1073 = vmax.f32 %v1009, 0.0
  %v1074 = vmax.f32 %v1010, 0.0
  %v1075 = vmax.f32 %v1011, 0.0
  %v1076 = vmax.f32 %v1012, 0.0
  %v1077 = vmax.f32 %v1013, 0.0
  %v1078 = vmax.f32 %v1014, 0.0
  %v1079 = vmax.f32 %v1015, 0.0
  %v1080 = vmax.f32 %v1016, 0.0
  %v1081 = vmax.f32 %v1017, 0.0
  %v1082 = vmax.f32 %v1018, 0.0
  %v1083 = vmax.f32 %v1019, 0.0
  %v1084 = vmax.f32 %v1020, 0.0
  %v1085 = vmax.f32 %v1021, 0.0
  %v1086 = vmax.f32 %v1022, 0.0
  %v1087 = vmax.f32 %v1023, 0.0
  %v1088 = vmax.f32 %v1024, 0.0
  %v1089 = vmax.f32 %v1025, 0.0
  %v1090 = vmax.f32 %v1026, 0.0
  %v1091 = vmax.f32 %v1027, 0.0
  %v1092 = vmax.f32 %v1028, 0.0
  %v1093 = vmax.f32 %v1029, 0.0
  %v1094 = vmax.f32 %v1030, 0.0
  %v1095 = vmax.f32 %v1031, 0.0
  %v1096 = vmax.f32 %v1032, 0.0
  %v1097 = vmax.f32 %v1033, 0.0
  %v1098 = vmax.f32 %v1034, 0.0
  %v1099 = vmax.f32 %v1035, 0.0
  %v1100 = vmax.f32 %v1036, 0.0
  %v1101 = vmax.f32 %v1037, 0.0
  %v1102 = vmax.f32 %v1038, 0.0
  %v1103 = vmax.f32 %v1039, 0.0
  %v1104 = vmax.f32 %v1040, 0.0
  %v1105 = vmax.f32 %v1041, 0.0
  %v1106 = vmax.f32 %v1042, 0.0
  %v1107 = vmax.f32 %v1043, 0.0
  %v1108 = vmax.f32 %v1044, 0.0
  %v1109 = vmax.f32 %v1045, 0.0
  %v1110 = vmax.f32 %v1046, 0.0
  %v1111 = vmax.f32 %v1047, 0.0
  %v1112 = vmax.f32 %v1048, 0.0
  %v1113 = vmax.f32 %v1049, 0.0
  %v1114 = vmax.f32 %v1050, 0.0
  %1115 = vst.msk [vmem:[%s5] sm:$0xff] %vm499, %v1051
  %1116 = vst.msk [vmem:[%s5 + $0x8] sm:$0xff] %vm499, %v1052
  %1117 = vst.msk [vmem:[%s5 + $0x10] sm:$0xff] %vm499, %v1053
  %1118 = vst.msk [vmem:[%s5 + $0x18] sm:$0xff] %vm499, %v1054
  %1119 = vst.msk [vmem:[%s5 + $0x20] sm:$0xff] %vm499, %v1055
  %1120 = vst.msk [vmem:[%s5 + $0x28] sm:$0xff] %vm499, %v1056
  %1121 = vst.msk [vmem:[%s5 + $0x30] sm:$0xff] %vm499, %v1057
  %1122 = vst.msk [vmem:[%s5 + $0x38] sm:$0xff] %vm499, %v1058
  %1123 = vst.msk [vmem:[%s5 + $0x40] sm:$0xff] %vm499, %v1059
  %1124 = vst.msk [vmem:[%s5 + $0x48] sm:$0xff] %vm499, %v1060
  %1125 = vst.msk [vmem:[%s5 + $0x50] sm:$0xff] %vm499, %v1061
  %1126 = vst.msk [vmem:[%s5 + $0x58] sm:$0xff] %vm499, %v1062
  %1127 = vst.msk [vmem:[%s5 + $0x60] sm:$0xff] %vm499, %v1063
  %1128 = vst.msk [vmem:[%s5 + $0x68] sm:$0xff] %vm499, %v1064
  %1129 = vst.msk [vmem:[%s5 + $0x70] sm:$0xff] %vm499, %v1065
  %1130 = vst.msk [vmem:[%s5 + $0x78] sm:$0xff] %vm499, %v1066
  %1131 = vst.msk [vmem:[%s5 + $0x80] sm:$0xff] %vm499, %v1067
  %1132 = vst.msk [vmem:[%s5 + $0x88] sm:$0xff] %vm499, %v1068
  %1133 = vst.msk [vmem:[%s5 + $0x90] sm:$0xff] %vm499, %v1069
  %1134 = vst.msk [vmem:[%s5 + $0x98] sm:$0xff] %vm499, %v1070
  %1135 = vst.msk [vmem:[%s5 + $0xa0] sm:$0xff] %vm499, %v1071
  %1136 = vst.msk [vmem:[%s5 + $0xa8] sm:$0xff] %vm499, %v1072
  %1137 = vst.msk [vmem:[%s5 + $0xb0] sm:$0xff] %vm499, %v1073
  %1138 = vst.msk [vmem:[%s5 + $0xb8] sm:$0xff] %vm499, %v1074
  %1139 = vst.msk [vmem:[%s5 + $0xc0] sm:$0xff] %vm499, %v1075
  %1140 = vst.msk [vmem:[%s5 + $0xc8] sm:$0xff] %vm499, %v1076
  %1141 = vst.msk [vmem:[%s5 + $0xd0] sm:$0xff] %vm499, %v1077
  %1142 = vst.msk [vmem:[%s5 + $0xd8] sm:$0xff] %vm499, %v1078
  %1143 = vst.msk [vmem:[%s5 + $0xe0] sm:$0xff] %vm499, %v1079
  %1144 = vst.msk [vmem:[%s5 + $0xe8] sm:$0xff] %vm499, %v1080
  %1145 = vst.msk [vmem:[%s5 + $0xf0] sm:$0xff] %vm499, %v1081
  %1146 = vst.msk [vmem:[%s5 + $0xf8] sm:$0xff] %vm499, %v1082
  %1147 = vst.msk [vmem:[%s5 + $0x100] sm:$0xff] %vm499, %v1083
  %1148 = vst.msk [vmem:[%s5 + $0x108] sm:$0xff] %vm499, %v1084
  %1149 = vst.msk [vmem:[%s5 + $0x110] sm:$0xff] %vm499, %v1085
  %1150 = vst.msk [vmem:[%s5 + $0x118] sm:$0xff] %vm499, %v1086
  %1151 = vst.msk [vmem:[%s5 + $0x120] sm:$0xff] %vm499, %v1087
  %1152 = vst.msk [vmem:[%s5 + $0x128] sm:$0xff] %vm499, %v1088
  %1153 = vst.msk [vmem:[%s5 + $0x130] sm:$0xff] %vm499, %v1089
  %1154 = vst.msk [vmem:[%s5 + $0x138] sm:$0xff] %vm499, %v1090
  %1155 = vst.msk [vmem:[%s5 + $0x140] sm:$0xff] %vm499, %v1091
  %1156 = vst.msk [vmem:[%s5 + $0x148] sm:$0xff] %vm499, %v1092
  %1157 = vst.msk [vmem:[%s5 + $0x150] sm:$0xff] %vm499, %v1093
  %1158 = vst.msk [vmem:[%s5 + $0x158] sm:$0xff] %vm499, %v1094
  %1159 = vst.msk [vmem:[%s5 + $0x160] sm:$0xff] %vm499, %v1095
  %1160 = vst.msk [vmem:[%s5 + $0x168] sm:$0xff] %vm499, %v1096
  %1161 = vst.msk [vmem:[%s5 + $0x170] sm:$0xff] %vm499, %v1097
  %1162 = vst.msk [vmem:[%s5 + $0x178] sm:$0xff] %vm499, %v1098
  %1163 = vst.msk [vmem:[%s5 + $0x180] sm:$0xff] %vm499, %v1099
  %1164 = vst.msk [vmem:[%s5 + $0x188] sm:$0xff] %vm499, %v1100
  %1165 = vst.msk [vmem:[%s5 + $0x190] sm:$0xff] %vm499, %v1101
  %1166 = vst.msk [vmem:[%s5 + $0x198] sm:$0xff] %vm499, %v1102
  %1167 = vst.msk [vmem:[%s5 + $0x1a0] sm:$0xff] %vm499, %v1103
  %1168 = vst.msk [vmem:[%s5 + $0x1a8] sm:$0xff] %vm499, %v1104
  %1169 = vst.msk [vmem:[%s5 + $0x1b0] sm:$0xff] %vm499, %v1105
  %1170 = vst.msk [vmem:[%s5 + $0x1b8] sm:$0xff] %vm499, %v1106
  %1171 = vst.msk [vmem:[%s5 + $0x1c0] sm:$0xff] %vm499, %v1107
  %1172 = vst.msk [vmem:[%s5 + $0x1c8] sm:$0xff] %vm499, %v1108
  %1173 = vst.msk [vmem:[%s5 + $0x1d0] sm:$0xff] %vm499, %v1109
  %1174 = vst.msk [vmem:[%s5 + $0x1d8] sm:$0xff] %vm499, %v1110
  %1175 = vst.msk [vmem:[%s5 + $0x1e0] sm:$0xff] %vm499, %v1111
  %1176 = vst.msk [vmem:[%s5 + $0x1e8] sm:$0xff] %vm499, %v1112
  %1177 = vst.msk [vmem:[%s5 + $0x1f0] sm:$0xff] %vm499, %v1113
  %1178 = vst.msk [vmem:[%s5 + $0x1f8] sm:$0xff] %vm499, %v1114
  // Predicated region
  $region22: #{generator_forward.10} parent=0 // pred_check
    _
  $region23: #{generator_forward.10} parent=0 // pred_check_branch
    %1180 = sbr.rel (0) target = $region25
  $region24: #{generator_forward.10} parent=0 // pred_region
    _
  $region25: #{generator_forward.10} parent=0 // pred_fallthru
    _
  // Predicated region
  $region26: #{generator_forward.10} parent=0 // pred_check
    _
  $region27: #{generator_forward.10} parent=0 // pred_check_branch
    %1182 = sbr.rel (0) target = $region29
  $region28: #{generator_forward.10} parent=0 // pred_region
    _
  $region29: #{generator_forward.10} parent=0 // pred_fallthru
    _

// kernel: generator_forward.9
$region0: #{generator_forward.9}
  #allocation0 [shape = 'u32[]', space=smem, size = 0x4, offset = 0x4, fixed_abs, tag = 'smem constant byte address 0x4 - core index']
  #allocation1 [shape = 'u32[72,128]{1,0:T(1,128)}', space=vmem, size = 0x9000, scoped, tag = 'internal scratch']
  %s0 = inlined_call_operand.vmem [shape: f32[512,147], index: 0, kind: input, shape index: {}]
  %s1 = inlined_call_operand.vmem [shape: f32[147,8], index: 1, kind: input, shape index: {}]
  %s2 = inlined_call_operand.vmem [shape: f32[1,8], index: 2, kind: input, shape index: {}]
  %s3 = inlined_call_operand.vmem [shape: f32[1,8], index: 3, kind: input, shape index: {}]
  %s4 = inlined_call_operand.vmem [shape: f32[1,8], index: 4, kind: input, shape index: {}]
  %s5 = inlined_call_operand.vmem [shape: f32[512,8], index: 5, kind: output, shape index: {}]
  %s6 = sld [smem:[#allocation0]]
  $region30: #{generator_forward.9} parent=0
    _
  %s8 = ssub.s32 1, %s6
  %s9 = scalar_select 0, %s8, %s6
  // Predicated region
  $region2: #{generator_forward.9} parent=0 // pred_check
    _
  $region3: #{generator_forward.9} parent=0 // pred_check_branch
    %11 = sbr.rel (0) target = $region5
  $region4: #{generator_forward.9} parent=0 // pred_region
    _
  $region5: #{generator_forward.9} parent=0 // pred_fallthru
    _
  // Predicated region
  $region6: #{generator_forward.9} parent=0 // pred_check
    _
  $region7: #{generator_forward.9} parent=0 // pred_check_branch
    %13 = sbr.rel (0) target = $region9
  $region8: #{generator_forward.9} parent=0 // pred_region
    _
  $region9: #{generator_forward.9} parent=0 // pred_fallthru
    _
  // Predicated region
  $region10: #{generator_forward.9} parent=0 // pred_check
    _
  $region11: #{generator_forward.9} parent=0 // pred_check_branch
    %15 = sbr.rel (0) target = $region13
  $region12: #{generator_forward.9} parent=0 // pred_region
    _
  $region13: #{generator_forward.9} parent=0 // pred_fallthru
    _
  // Predicated region
  $region14: #{generator_forward.9} parent=0 // pred_check
    _
  $region15: #{generator_forward.9} parent=0 // pred_check_branch
    %17 = sbr.rel (0) target = $region17
  $region16: #{generator_forward.9} parent=0 // pred_region
    _
  $region17: #{generator_forward.9} parent=0 // pred_fallthru
    _
  // Predicated region
  $region18: #{generator_forward.9} parent=0 // pred_check
    _
  $region19: #{generator_forward.9} parent=0 // pred_check_branch
    %19 = sbr.rel (0) target = $region21
  $region20: #{generator_forward.9} parent=0 // pred_region
    _
  $region21: #{generator_forward.9} parent=0 // pred_fallthru
    _
  %v20 = vld [vmem:[%s0] sm:$0xff]
  %v21 = vld [vmem:[%s0 + $0x8] sm:$0xff]
  %v22 = vld [vmem:[%s0 + $0x10] sm:$0xff]
  %v23 = vld [vmem:[%s0 + $0x18] sm:$0xff]
  %v24 = vld [vmem:[%s0 + $0x20] sm:$0xff]
  %v25 = vld [vmem:[%s0 + $0x28] sm:$0xff]
  %v26 = vld [vmem:[%s0 + $0x30] sm:$0xff]
  %v27 = vld [vmem:[%s0 + $0x38] sm:$0xff]
  %v28 = vld [vmem:[%s0 + $0x40] sm:$0xff]
  %v29 = vld [vmem:[%s0 + $0x48] sm:$0xff]
  %v30 = vld [vmem:[%s0 + $0x50] sm:$0xff]
  %v31 = vld [vmem:[%s0 + $0x58] sm:$0xff]
  %v32 = vld [vmem:[%s0 + $0x60] sm:$0xff]
  %v33 = vld [vmem:[%s0 + $0x68] sm:$0xff]
  %v34 = vld [vmem:[%s0 + $0x70] sm:$0xff]
  %v35 = vld [vmem:[%s0 + $0x78] sm:$0xff]
  %v36 = vld [vmem:[%s0 + $0x80] sm:$0xff]
  %v37 = vld [vmem:[%s0 + $0x88] sm:$0xff]
  %v38 = vld [vmem:[%s0 + $0x90] sm:$0xff]
  %v39 = vld [vmem:[%s0 + $0x98] sm:$0xff]
  %v40 = vld [vmem:[%s0 + $0xa0] sm:$0xff]
  %v41 = vld [vmem:[%s0 + $0xa8] sm:$0xff]
  %v42 = vld [vmem:[%s0 + $0xb0] sm:$0xff]
  %v43 = vld [vmem:[%s0 + $0xb8] sm:$0xff]
  %v44 = vld [vmem:[%s0 + $0xc0] sm:$0xff]
  %v45 = vld [vmem:[%s0 + $0xc8] sm:$0xff]
  %v46 = vld [vmem:[%s0 + $0xd0] sm:$0xff]
  %v47 = vld [vmem:[%s0 + $0xd8] sm:$0xff]
  %v48 = vld [vmem:[%s0 + $0xe0] sm:$0xff]
  %v49 = vld [vmem:[%s0 + $0xe8] sm:$0xff]
  %v50 = vld [vmem:[%s0 + $0xf0] sm:$0xff]
  %v51 = vld [vmem:[%s0 + $0xf8] sm:$0xff]
  %v52 = vld [vmem:[%s0 + $0x100] sm:$0xff]
  %v53 = vld [vmem:[%s0 + $0x108] sm:$0xff]
  %v54 = vld [vmem:[%s0 + $0x110] sm:$0xff]
  %v55 = vld [vmem:[%s0 + $0x118] sm:$0xff]
  %v56 = vld [vmem:[%s0 + $0x120] sm:$0xff]
  %v57 = vld [vmem:[%s0 + $0x128] sm:$0xff]
  %v58 = vld [vmem:[%s0 + $0x130] sm:$0xff]
  %v59 = vld [vmem:[%s0 + $0x138] sm:$0xff]
  %v60 = vld [vmem:[%s0 + $0x140] sm:$0xff]
  %v61 = vld [vmem:[%s0 + $0x148] sm:$0xff]
  %v62 = vld [vmem:[%s0 + $0x150] sm:$0xff]
  %v63 = vld [vmem:[%s0 + $0x158] sm:$0xff]
  %v64 = vld [vmem:[%s0 + $0x160] sm:$0xff]
  %v65 = vld [vmem:[%s0 + $0x168] sm:$0xff]
  %v66 = vld [vmem:[%s0 + $0x170] sm:$0xff]
  %v67 = vld [vmem:[%s0 + $0x178] sm:$0xff]
  %v68 = vld [vmem:[%s0 + $0x180] sm:$0xff]
  %v69 = vld [vmem:[%s0 + $0x188] sm:$0xff]
  %v70 = vld [vmem:[%s0 + $0x190] sm:$0xff]
  %v71 = vld [vmem:[%s0 + $0x198] sm:$0xff]
  %v72 = vld [vmem:[%s0 + $0x1a0] sm:$0xff]
  %v73 = vld [vmem:[%s0 + $0x1a8] sm:$0xff]
  %v74 = vld [vmem:[%s0 + $0x1b0] sm:$0xff]
  %v75 = vld [vmem:[%s0 + $0x1b8] sm:$0xff]
  %v76 = vld [vmem:[%s0 + $0x1c0] sm:$0xff]
  %v77 = vld [vmem:[%s0 + $0x1c8] sm:$0xff]
  %v78 = vld [vmem:[%s0 + $0x1d0] sm:$0xff]
  %v79 = vld [vmem:[%s0 + $0x1d8] sm:$0xff]
  %v80 = vld [vmem:[%s0 + $0x1e0] sm:$0xff]
  %v81 = vld [vmem:[%s0 + $0x1e8] sm:$0xff]
  %v82 = vld [vmem:[%s0 + $0x1f0] sm:$0xff]
  %v83 = vld [vmem:[%s0 + $0x1f8] sm:$0xff]
  %v84 = vld [vmem:[%s0 + $0x200] sm:$0xff]
  %v85 = vld [vmem:[%s0 + $0x208] sm:$0xff]
  %v86 = vld [vmem:[%s0 + $0x210] sm:$0xff]
  %v87 = vld [vmem:[%s0 + $0x218] sm:$0xff]
  %v88 = vld [vmem:[%s0 + $0x220] sm:$0xff]
  %v89 = vld [vmem:[%s0 + $0x228] sm:$0xff]
  %v90 = vld [vmem:[%s0 + $0x230] sm:$0xff]
  %v91 = vld [vmem:[%s0 + $0x238] sm:$0xff]
  %v92 = vld [vmem:[%s0 + $0x240] sm:$0xff]
  %v93 = vld [vmem:[%s0 + $0x248] sm:$0xff]
  %v94 = vld [vmem:[%s0 + $0x250] sm:$0xff]
  %v95 = vld [vmem:[%s0 + $0x258] sm:$0xff]
  %v96 = vld [vmem:[%s0 + $0x260] sm:$0xff]
  %v97 = vld [vmem:[%s0 + $0x268] sm:$0xff]
  %v98 = vld [vmem:[%s0 + $0x270] sm:$0xff]
  %v99 = vld [vmem:[%s0 + $0x278] sm:$0xff]
  %v100 = vld [vmem:[%s0 + $0x280] sm:$0xff]
  %v101 = vld [vmem:[%s0 + $0x288] sm:$0xff]
  %v102 = vld [vmem:[%s0 + $0x290] sm:$0xff]
  %v103 = vld [vmem:[%s0 + $0x298] sm:$0xff]
  %v104 = vld [vmem:[%s0 + $0x2a0] sm:$0xff]
  %v105 = vld [vmem:[%s0 + $0x2a8] sm:$0xff]
  %v106 = vld [vmem:[%s0 + $0x2b0] sm:$0xff]
  %v107 = vld [vmem:[%s0 + $0x2b8] sm:$0xff]
  %v108 = vld [vmem:[%s0 + $0x2c0] sm:$0xff]
  %v109 = vld [vmem:[%s0 + $0x2c8] sm:$0xff]
  %v110 = vld [vmem:[%s0 + $0x2d0] sm:$0xff]
  %v111 = vld [vmem:[%s0 + $0x2d8] sm:$0xff]
  %v112 = vld [vmem:[%s0 + $0x2e0] sm:$0xff]
  %v113 = vld [vmem:[%s0 + $0x2e8] sm:$0xff]
  %v114 = vld [vmem:[%s0 + $0x2f0] sm:$0xff]
  %v115 = vld [vmem:[%s0 + $0x2f8] sm:$0xff]
  %v116 = vld [vmem:[%s0 + $0x300] sm:$0xff]
  %v117 = vld [vmem:[%s0 + $0x308] sm:$0xff]
  %v118 = vld [vmem:[%s0 + $0x310] sm:$0xff]
  %v119 = vld [vmem:[%s0 + $0x318] sm:$0xff]
  %v120 = vld [vmem:[%s0 + $0x320] sm:$0xff]
  %v121 = vld [vmem:[%s0 + $0x328] sm:$0xff]
  %v122 = vld [vmem:[%s0 + $0x330] sm:$0xff]
  %v123 = vld [vmem:[%s0 + $0x338] sm:$0xff]
  %v124 = vld [vmem:[%s0 + $0x340] sm:$0xff]
  %v125 = vld [vmem:[%s0 + $0x348] sm:$0xff]
  %v126 = vld [vmem:[%s0 + $0x350] sm:$0xff]
  %v127 = vld [vmem:[%s0 + $0x358] sm:$0xff]
  %v128 = vld [vmem:[%s0 + $0x360] sm:$0xff]
  %v129 = vld [vmem:[%s0 + $0x368] sm:$0xff]
  %v130 = vld [vmem:[%s0 + $0x370] sm:$0xff]
  %v131 = vld [vmem:[%s0 + $0x378] sm:$0xff]
  %v132 = vld [vmem:[%s0 + $0x380] sm:$0xff]
  %v133 = vld [vmem:[%s0 + $0x388] sm:$0xff]
  %v134 = vld [vmem:[%s0 + $0x390] sm:$0xff]
  %v135 = vld [vmem:[%s0 + $0x398] sm:$0xff]
  %v136 = vld [vmem:[%s0 + $0x3a0] sm:$0xff]
  %v137 = vld [vmem:[%s0 + $0x3a8] sm:$0xff]
  %v138 = vld [vmem:[%s0 + $0x3b0] sm:$0xff]
  %v139 = vld [vmem:[%s0 + $0x3b8] sm:$0xff]
  %v140 = vld [vmem:[%s0 + $0x3c0] sm:$0xff]
  %v141 = vld [vmem:[%s0 + $0x3c8] sm:$0xff]
  %v142 = vld [vmem:[%s0 + $0x3d0] sm:$0xff]
  %v143 = vld [vmem:[%s0 + $0x3d8] sm:$0xff]
  %v144 = vld [vmem:[%s0 + $0x3e0] sm:$0xff]
  %v145 = vld [vmem:[%s0 + $0x3e8] sm:$0xff]
  %v146 = vld [vmem:[%s0 + $0x3f0] sm:$0xff]
  %v147 = vld [vmem:[%s0 + $0x3f8] sm:$0xff]
  %v148 = vld [vmem:[%s1] sm:$0xff]
  %v149 = vld [vmem:[%s1 + $0x8] sm:$0xff]
  %v150 = vld [vmem:[%s1 + $0x10] sm:$0xff]
  %v151 = vld [vmem:[%s1 + $0x18] sm:$0xff]
  %v152 = vld [vmem:[%s1 + $0x20] sm:$0xff]
  %v153 = vld [vmem:[%s1 + $0x28] sm:$0xff]
  %v154 = vld [vmem:[%s1 + $0x30] sm:$0xff]
  %v155 = vld [vmem:[%s1 + $0x38] sm:$0xff]
  %v156 = vld [vmem:[%s1 + $0x40] sm:$0xff]
  %v157 = vld [vmem:[%s1 + $0x48] sm:$0xff]
  %v158 = vld [vmem:[%s1 + $0x50] sm:$0xff]
  %v159 = vld [vmem:[%s1 + $0x58] sm:$0xff]
  %v160 = vld [vmem:[%s1 + $0x60] sm:$0xff]
  %v161 = vld [vmem:[%s1 + $0x68] sm:$0xff]
  %v162 = vld [vmem:[%s1 + $0x70] sm:$0xff]
  %v163 = vld [vmem:[%s1 + $0x78] sm:$0xff]
  %v164 = vld [vmem:[%s1 + $0x80] sm:$0xff]
  %v165 = vld [vmem:[%s1 + $0x88] sm:$0xff]
  %v166 = vld [vmem:[%s1 + $0x90] sm:$0x7]
  %v167 = vld [vmem:[%s2] sm:$0x1]
  %v169 = vperm.slane %v167, 0
  %vm171 = vcmask 154624
  %v173 = vsel %vm171, %v21, 0
  %v176 = vsel %vm171, %v23, 0
  %v179 = vsel %vm171, %v25, 0
  %v182 = vsel %vm171, %v27, 0
  %v185 = vsel %vm171, %v29, 0
  %v188 = vsel %vm171, %v31, 0
  %v191 = vsel %vm171, %v33, 0
  %v194 = vsel %vm171, %v35, 0
  %v197 = vsel %vm171, %v37, 0
  %v200 = vsel %vm171, %v39, 0
  %v203 = vsel %vm171, %v41, 0
  %v206 = vsel %vm171, %v43, 0
  %v209 = vsel %vm171, %v45, 0
  %v212 = vsel %vm171, %v47, 0
  %v215 = vsel %vm171, %v49, 0
  %v218 = vsel %vm171, %v51, 0
  %v221 = vsel %vm171, %v53, 0
  %v224 = vsel %vm171, %v55, 0
  %v227 = vsel %vm171, %v57, 0
  %v230 = vsel %vm171, %v59, 0
  %v233 = vsel %vm171, %v61, 0
  %v236 = vsel %vm171, %v63, 0
  %v239 = vsel %vm171, %v65, 0
  %v242 = vsel %vm171, %v67, 0
  %v245 = vsel %vm171, %v69, 0
  %v248 = vsel %vm171, %v71, 0
  %v251 = vsel %vm171, %v73, 0
  %v254 = vsel %vm171, %v75, 0
  %v257 = vsel %vm171, %v77, 0
  %v260 = vsel %vm171, %v79, 0
  %v263 = vsel %vm171, %v81, 0
  %v266 = vsel %vm171, %v83, 0
  %v269 = vsel %vm171, %v85, 0
  %v272 = vsel %vm171, %v87, 0
  %v275 = vsel %vm171, %v89, 0
  %v278 = vsel %vm171, %v91, 0
  %v281 = vsel %vm171, %v93, 0
  %v284 = vsel %vm171, %v95, 0
  %v287 = vsel %vm171, %v97, 0
  %v290 = vsel %vm171, %v99, 0
  %v293 = vsel %vm171, %v101, 0
  %v296 = vsel %vm171, %v103, 0
  %v299 = vsel %vm171, %v105, 0
  %v302 = vsel %vm171, %v107, 0
  %v305 = vsel %vm171, %v109, 0
  %v308 = vsel %vm171, %v111, 0
  %v311 = vsel %vm171, %v113, 0
  %v314 = vsel %vm171, %v115, 0
  %v317 = vsel %vm171, %v117, 0
  %v320 = vsel %vm171, %v119, 0
  %v323 = vsel %vm171, %v121, 0
  %v326 = vsel %vm171, %v123, 0
  %v329 = vsel %vm171, %v125, 0
  %v332 = vsel %vm171, %v127, 0
  %v335 = vsel %vm171, %v129, 0
  %v338 = vsel %vm171, %v131, 0
  %v341 = vsel %vm171, %v133, 0
  %v344 = vsel %vm171, %v135, 0
  %v347 = vsel %vm171, %v137, 0
  %v350 = vsel %vm171, %v139, 0
  %v353 = vsel %vm171, %v141, 0
  %v356 = vsel %vm171, %v143, 0
  %v359 = vsel %vm171, %v145, 0
  %v362 = vsel %vm171, %v147, 0
  %vm364 = vcmask 1042432
  %v366 = vsel %vm364, %v166, 0
  %368 = vmatpush.msra.mxu0 %v163
  %369 = vmatpush.msra.mxu0 %v162
  %370 = vmatpush.msra.mxu0 %v161
  %371 = vmatpush.msra.mxu0 %v160
  %372 = vmatpush.msra.mxu0 %v159
  %373 = vmatpush.msra.mxu0 %v158
  %374 = vmatpush.msra.mxu0 %v157
  %375 = vmatpush.msra.mxu0 %v156
  %376 = vmatpush.msra.mxu0 %v155
  %377 = vmatpush.msra.mxu0 %v154
  %378 = vmatpush.msra.mxu0 %v153
  %379 = vmatpush.msra.mxu0 %v152
  %380 = vmatpush.msra.mxu0 %v151
  %381 = vmatpush.msra.mxu0 %v150
  %382 = vmatpush.msra.mxu0 %v149
  %383 = vmatpush.msra.mxu0 %v148
  %384 = vmatmul.f32.gmra.mxu0 %v20
  %v385 = vpop.f32.mrf.mxu0
  %v386 = vadd.f32 %v169, %v385
  %387 = vmatmul.f32.gmra.mxu0 %v22
  %v388 = vpop.f32.mrf.mxu0
  %v389 = vadd.f32 %v169, %v388
  %390 = vmatmul.f32.gmra.mxu0 %v24
  %v391 = vpop.f32.mrf.mxu0
  %v392 = vadd.f32 %v169, %v391
  %393 = vmatmul.f32.gmra.mxu0 %v26
  %v394 = vpop.f32.mrf.mxu0
  %v395 = vadd.f32 %v169, %v394
  %396 = vmatmul.f32.gmra.mxu0 %v28
  %v397 = vpop.f32.mrf.mxu0
  %v398 = vadd.f32 %v169, %v397
  %399 = vmatmul.f32.gmra.mxu0 %v30
  %v400 = vpop.f32.mrf.mxu0
  %v401 = vadd.f32 %v169, %v400
  %402 = vmatmul.f32.gmra.mxu0 %v32
  %v403 = vpop.f32.mrf.mxu0
  %v404 = vadd.f32 %v169, %v403
  %405 = vmatmul.f32.gmra.mxu0 %v34
  %v406 = vpop.f32.mrf.mxu0
  %v407 = vadd.f32 %v169, %v406
  %408 = vmatmul.f32.gmra.mxu0 %v36
  %v409 = vpop.f32.mrf.mxu0
  %v410 = vadd.f32 %v169, %v409
  %411 = vmatmul.f32.gmra.mxu0 %v38
  %v412 = vpop.f32.mrf.mxu0
  %v413 = vadd.f32 %v169, %v412
  %414 = vmatmul.f32.gmra.mxu0 %v40
  %v415 = vpop.f32.mrf.mxu0
  %v416 = vadd.f32 %v169, %v415
  %417 = vmatmul.f32.gmra.mxu0 %v42
  %v418 = vpop.f32.mrf.mxu0
  %v419 = vadd.f32 %v169, %v418
  %420 = vmatmul.f32.gmra.mxu0 %v44
  %v421 = vpop.f32.mrf.mxu0
  %v422 = vadd.f32 %v169, %v421
  %423 = vmatmul.f32.gmra.mxu0 %v46
  %v424 = vpop.f32.mrf.mxu0
  %v425 = vadd.f32 %v169, %v424
  %426 = vmatmul.f32.gmra.mxu0 %v48
  %v427 = vpop.f32.mrf.mxu0
  %v428 = vadd.f32 %v169, %v427
  %429 = vmatmul.f32.gmra.mxu0 %v50
  %v430 = vpop.f32.mrf.mxu0
  %v431 = vadd.f32 %v169, %v430
  %432 = vmatmul.f32.gmra.mxu0 %v52
  %v433 = vpop.f32.mrf.mxu0
  %v434 = vadd.f32 %v169, %v433
  %435 = vmatmul.f32.gmra.mxu0 %v54
  %v436 = vpop.f32.mrf.mxu0
  %v437 = vadd.f32 %v169, %v436
  %438 = vmatmul.f32.gmra.mxu0 %v56
  %v439 = vpop.f32.mrf.mxu0
  %v440 = vadd.f32 %v169, %v439
  %441 = vmatmul.f32.gmra.mxu0 %v58
  %v442 = vpop.f32.mrf.mxu0
  %v443 = vadd.f32 %v169, %v442
  %444 = vmatmul.f32.gmra.mxu0 %v60
  %v445 = vpop.f32.mrf.mxu0
  %v446 = vadd.f32 %v169, %v445
  %447 = vmatmul.f32.gmra.mxu0 %v62
  %v448 = vpop.f32.mrf.mxu0
  %v449 = vadd.f32 %v169, %v448
  %450 = vmatmul.f32.gmra.mxu0 %v64
  %v451 = vpop.f32.mrf.mxu0
  %v452 = vadd.f32 %v169, %v451
  %453 = vmatmul.f32.gmra.mxu0 %v66
  %v454 = vpop.f32.mrf.mxu0
  %v455 = vadd.f32 %v169, %v454
  %456 = vmatmul.f32.gmra.mxu0 %v68
  %v457 = vpop.f32.mrf.mxu0
  %v458 = vadd.f32 %v169, %v457
  %459 = vmatmul.f32.gmra.mxu0 %v70
  %v460 = vpop.f32.mrf.mxu0
  %v461 = vadd.f32 %v169, %v460
  %462 = vmatmul.f32.gmra.mxu0 %v72
  %v463 = vpop.f32.mrf.mxu0
  %v464 = vadd.f32 %v169, %v463
  %465 = vmatmul.f32.gmra.mxu0 %v74
  %v466 = vpop.f32.mrf.mxu0
  %v467 = vadd.f32 %v169, %v466
  %468 = vmatmul.f32.gmra.mxu0 %v76
  %v469 = vpop.f32.mrf.mxu0
  %v470 = vadd.f32 %v169, %v469
  %471 = vmatmul.f32.gmra.mxu0 %v78
  %v472 = vpop.f32.mrf.mxu0
  %v473 = vadd.f32 %v169, %v472
  %474 = vmatmul.f32.gmra.mxu0 %v80
  %v475 = vpop.f32.mrf.mxu0
  %v476 = vadd.f32 %v169, %v475
  %477 = vmatmul.f32.gmra.mxu0 %v82
  %v478 = vpop.f32.mrf.mxu0
  %v479 = vadd.f32 %v169, %v478
  %480 = vmatmul.f32.gmra.mxu0 %v84
  %v481 = vpop.f32.mrf.mxu0
  %v482 = vadd.f32 %v169, %v481
  %483 = vmatmul.f32.gmra.mxu0 %v86
  %v484 = vpop.f32.mrf.mxu0
  %v485 = vadd.f32 %v169, %v484
  %486 = vmatmul.f32.gmra.mxu0 %v88
  %v487 = vpop.f32.mrf.mxu0
  %v488 = vadd.f32 %v169, %v487
  %489 = vmatmul.f32.gmra.mxu0 %v90
  %v490 = vpop.f32.mrf.mxu0
  %v491 = vadd.f32 %v169, %v490
  %492 = vmatmul.f32.gmra.mxu0 %v92
  %v493 = vpop.f32.mrf.mxu0
  %v494 = vadd.f32 %v169, %v493
  %495 = vmatmul.f32.gmra.mxu0 %v94
  %v496 = vpop.f32.mrf.mxu0
  %v497 = vadd.f32 %v169, %v496
  %498 = vmatmul.f32.gmra.mxu0 %v96
  %v499 = vpop.f32.mrf.mxu0
  %v500 = vadd.f32 %v169, %v499
  %501 = vmatmul.f32.gmra.mxu0 %v98
  %v502 = vpop.f32.mrf.mxu0
  %v503 = vadd.f32 %v169, %v502
  %504 = vmatmul.f32.gmra.mxu0 %v100
  %v505 = vpop.f32.mrf.mxu0
  %v506 = vadd.f32 %v169, %v505
  %507 = vmatmul.f32.gmra.mxu0 %v102
  %v508 = vpop.f32.mrf.mxu0
  %v509 = vadd.f32 %v169, %v508
  %510 = vmatmul.f32.gmra.mxu0 %v104
  %v511 = vpop.f32.mrf.mxu0
  %v512 = vadd.f32 %v169, %v511
  %513 = vmatmul.f32.gmra.mxu0 %v106
  %v514 = vpop.f32.mrf.mxu0
  %v515 = vadd.f32 %v169, %v514
  %516 = vmatmul.f32.gmra.mxu0 %v108
  %v517 = vpop.f32.mrf.mxu0
  %v518 = vadd.f32 %v169, %v517
  %519 = vmatmul.f32.gmra.mxu0 %v110
  %v520 = vpop.f32.mrf.mxu0
  %v521 = vadd.f32 %v169, %v520
  %522 = vmatmul.f32.gmra.mxu0 %v112
  %v523 = vpop.f32.mrf.mxu0
  %v524 = vadd.f32 %v169, %v523
  %525 = vmatmul.f32.gmra.mxu0 %v114
  %v526 = vpop.f32.mrf.mxu0
  %v527 = vadd.f32 %v169, %v526
  %528 = vmatmul.f32.gmra.mxu0 %v116
  %v529 = vpop.f32.mrf.mxu0
  %v530 = vadd.f32 %v169, %v529
  %531 = vmatmul.f32.gmra.mxu0 %v118
  %v532 = vpop.f32.mrf.mxu0
  %v533 = vadd.f32 %v169, %v532
  %534 = vmatmul.f32.gmra.mxu0 %v120
  %v535 = vpop.f32.mrf.mxu0
  %v536 = vadd.f32 %v169, %v535
  %537 = vmatmul.f32.gmra.mxu0 %v122
  %v538 = vpop.f32.mrf.mxu0
  %v539 = vadd.f32 %v169, %v538
  %540 = vmatmul.f32.gmra.mxu0 %v124
  %v541 = vpop.f32.mrf.mxu0
  %v542 = vadd.f32 %v169, %v541
  %543 = vmatmul.f32.gmra.mxu0 %v126
  %v544 = vpop.f32.mrf.mxu0
  %v545 = vadd.f32 %v169, %v544
  %546 = vmatmul.f32.gmra.mxu0 %v128
  %v547 = vpop.f32.mrf.mxu0
  %v548 = vadd.f32 %v169, %v547
  %549 = vmatmul.f32.gmra.mxu0 %v130
  %v550 = vpop.f32.mrf.mxu0
  %v551 = vadd.f32 %v169, %v550
  %552 = vmatmul.f32.gmra.mxu0 %v132
  %v553 = vpop.f32.mrf.mxu0
  %v554 = vadd.f32 %v169, %v553
  %555 = vmatmul.f32.gmra.mxu0 %v134
  %v556 = vpop.f32.mrf.mxu0
  %v557 = vadd.f32 %v169, %v556
  %558 = vmatmul.f32.gmra.mxu0 %v136
  %v559 = vpop.f32.mrf.mxu0
  %v560 = vadd.f32 %v169, %v559
  %561 = vmatmul.f32.gmra.mxu0 %v138
  %v562 = vpop.f32.mrf.mxu0
  %v563 = vadd.f32 %v169, %v562
  %564 = vmatmul.f32.gmra.mxu0 %v140
  %v565 = vpop.f32.mrf.mxu0
  %v566 = vadd.f32 %v169, %v565
  %567 = vmatmul.f32.gmra.mxu0 %v142
  %v568 = vpop.f32.mrf.mxu0
  %v569 = vadd.f32 %v169, %v568
  %570 = vmatmul.f32.gmra.mxu0 %v144
  %v571 = vpop.f32.mrf.mxu0
  %v572 = vadd.f32 %v169, %v571
  %573 = vmatmul.f32.gmra.mxu0 %v146
  %v574 = vpop.f32.mrf.mxu0
  %v575 = vadd.f32 %v169, %v574
  %576 = vdwg.mxu0
  %577 = vmatpush.msra.mxu0 0.0
  %578 = vmatpush.msra.mxu0 0.0
  %579 = vmatpush.msra.mxu0 0.0
  %580 = vmatpush.msra.mxu0 0.0
  %581 = vmatpush.msra.mxu0 0.0
  %582 = vmatpush.msra.mxu0 0.0
  %583 = vmatpush.msra.mxu0 0.0
  %584 = vmatpush.msra.mxu0 0.0
  %585 = vmatpush.msra.mxu0 0.0
  %586 = vmatpush.msra.mxu0 0.0
  %587 = vmatpush.msra.mxu0 0.0
  %588 = vmatpush.msra.mxu0 0.0
  %589 = vmatpush.msra.mxu0 0.0
  %590 = vmatpush.msra.mxu0 %v366
  %591 = vmatpush.msra.mxu0 %v165
  %592 = vmatpush.msra.mxu0 %v164
  %593 = vmatmul.f32.gmra.mxu0 %v173
  %v594 = vpop.f32.mrf.mxu0
  %v595 = vadd.f32 %v386, %v594
  %596 = vmatmul.f32.gmra.mxu0 %v176
  %v597 = vpop.f32.mrf.mxu0
  %v598 = vadd.f32 %v389, %v597
  %599 = vmatmul.f32.gmra.mxu0 %v179
  %v600 = vpop.f32.mrf.mxu0
  %v601 = vadd.f32 %v392, %v600
  %602 = vmatmul.f32.gmra.mxu0 %v182
  %v603 = vpop.f32.mrf.mxu0
  %v604 = vadd.f32 %v395, %v603
  %605 = vmatmul.f32.gmra.mxu0 %v185
  %v606 = vpop.f32.mrf.mxu0
  %v607 = vadd.f32 %v398, %v606
  %608 = vmatmul.f32.gmra.mxu0 %v188
  %v609 = vpop.f32.mrf.mxu0
  %v610 = vadd.f32 %v401, %v609
  %611 = vmatmul.f32.gmra.mxu0 %v191
  %v612 = vpop.f32.mrf.mxu0
  %v613 = vadd.f32 %v404, %v612
  %614 = vmatmul.f32.gmra.mxu0 %v194
  %v615 = vpop.f32.mrf.mxu0
  %v616 = vadd.f32 %v407, %v615
  %617 = vmatmul.f32.gmra.mxu0 %v197
  %v618 = vpop.f32.mrf.mxu0
  %v619 = vadd.f32 %v410, %v618
  %620 = vmatmul.f32.gmra.mxu0 %v200
  %v621 = vpop.f32.mrf.mxu0
  %v622 = vadd.f32 %v413, %v621
  %623 = vmatmul.f32.gmra.mxu0 %v203
  %v624 = vpop.f32.mrf.mxu0
  %v625 = vadd.f32 %v416, %v624
  %626 = vmatmul.f32.gmra.mxu0 %v206
  %v627 = vpop.f32.mrf.mxu0
  %v628 = vadd.f32 %v419, %v627
  %629 = vmatmul.f32.gmra.mxu0 %v209
  %v630 = vpop.f32.mrf.mxu0
  %v631 = vadd.f32 %v422, %v630
  %632 = vmatmul.f32.gmra.mxu0 %v212
  %v633 = vpop.f32.mrf.mxu0
  %v634 = vadd.f32 %v425, %v633
  %635 = vmatmul.f32.gmra.mxu0 %v215
  %v636 = vpop.f32.mrf.mxu0
  %v637 = vadd.f32 %v428, %v636
  %638 = vmatmul.f32.gmra.mxu0 %v218
  %v639 = vpop.f32.mrf.mxu0
  %v640 = vadd.f32 %v431, %v639
  %641 = vmatmul.f32.gmra.mxu0 %v221
  %v642 = vpop.f32.mrf.mxu0
  %v643 = vadd.f32 %v434, %v642
  %644 = vmatmul.f32.gmra.mxu0 %v224
  %v645 = vpop.f32.mrf.mxu0
  %v646 = vadd.f32 %v437, %v645
  %647 = vmatmul.f32.gmra.mxu0 %v227
  %v648 = vpop.f32.mrf.mxu0
  %v649 = vadd.f32 %v440, %v648
  %650 = vmatmul.f32.gmra.mxu0 %v230
  %v651 = vpop.f32.mrf.mxu0
  %v652 = vadd.f32 %v443, %v651
  %653 = vmatmul.f32.gmra.mxu0 %v233
  %v654 = vpop.f32.mrf.mxu0
  %v655 = vadd.f32 %v446, %v654
  %656 = vmatmul.f32.gmra.mxu0 %v236
  %v657 = vpop.f32.mrf.mxu0
  %v658 = vadd.f32 %v449, %v657
  %659 = vmatmul.f32.gmra.mxu0 %v239
  %v660 = vpop.f32.mrf.mxu0
  %v661 = vadd.f32 %v452, %v660
  %662 = vmatmul.f32.gmra.mxu0 %v242
  %v663 = vpop.f32.mrf.mxu0
  %v664 = vadd.f32 %v455, %v663
  %665 = vmatmul.f32.gmra.mxu0 %v245
  %v666 = vpop.f32.mrf.mxu0
  %v667 = vadd.f32 %v458, %v666
  %668 = vmatmul.f32.gmra.mxu0 %v248
  %v669 = vpop.f32.mrf.mxu0
  %v670 = vadd.f32 %v461, %v669
  %671 = vmatmul.f32.gmra.mxu0 %v251
  %v672 = vpop.f32.mrf.mxu0
  %v673 = vadd.f32 %v464, %v672
  %674 = vmatmul.f32.gmra.mxu0 %v254
  %v675 = vpop.f32.mrf.mxu0
  %v676 = vadd.f32 %v467, %v675
  %677 = vmatmul.f32.gmra.mxu0 %v257
  %v678 = vpop.f32.mrf.mxu0
  %v679 = vadd.f32 %v470, %v678
  %680 = vmatmul.f32.gmra.mxu0 %v260
  %v681 = vpop.f32.mrf.mxu0
  %v682 = vadd.f32 %v473, %v681
  %683 = vmatmul.f32.gmra.mxu0 %v263
  %v684 = vpop.f32.mrf.mxu0
  %v685 = vadd.f32 %v476, %v684
  %686 = vmatmul.f32.gmra.mxu0 %v266
  %v687 = vpop.f32.mrf.mxu0
  %v688 = vadd.f32 %v479, %v687
  %689 = vmatmul.f32.gmra.mxu0 %v269
  %v690 = vpop.f32.mrf.mxu0
  %v691 = vadd.f32 %v482, %v690
  %692 = vmatmul.f32.gmra.mxu0 %v272
  %v693 = vpop.f32.mrf.mxu0
  %v694 = vadd.f32 %v485, %v693
  %695 = vmatmul.f32.gmra.mxu0 %v275
  %v696 = vpop.f32.mrf.mxu0
  %v697 = vadd.f32 %v488, %v696
  %698 = vmatmul.f32.gmra.mxu0 %v278
  %v699 = vpop.f32.mrf.mxu0
  %v700 = vadd.f32 %v491, %v699
  %701 = vmatmul.f32.gmra.mxu0 %v281
  %v702 = vpop.f32.mrf.mxu0
  %v703 = vadd.f32 %v494, %v702
  %704 = vmatmul.f32.gmra.mxu0 %v284
  %v705 = vpop.f32.mrf.mxu0
  %v706 = vadd.f32 %v497, %v705
  %707 = vmatmul.f32.gmra.mxu0 %v287
  %v708 = vpop.f32.mrf.mxu0
  %v709 = vadd.f32 %v500, %v708
  %710 = vmatmul.f32.gmra.mxu0 %v290
  %v711 = vpop.f32.mrf.mxu0
  %v712 = vadd.f32 %v503, %v711
  %713 = vmatmul.f32.gmra.mxu0 %v293
  %v714 = vpop.f32.mrf.mxu0
  %v715 = vadd.f32 %v506, %v714
  %716 = vmatmul.f32.gmra.mxu0 %v296
  %v717 = vpop.f32.mrf.mxu0
  %v718 = vadd.f32 %v509, %v717
  %719 = vmatmul.f32.gmra.mxu0 %v299
  %v720 = vpop.f32.mrf.mxu0
  %v721 = vadd.f32 %v512, %v720
  %722 = vmatmul.f32.gmra.mxu0 %v302
  %v723 = vpop.f32.mrf.mxu0
  %v724 = vadd.f32 %v515, %v723
  %725 = vmatmul.f32.gmra.mxu0 %v305
  %v726 = vpop.f32.mrf.mxu0
  %v727 = vadd.f32 %v518, %v726
  %728 = vmatmul.f32.gmra.mxu0 %v308
  %v729 = vpop.f32.mrf.mxu0
  %v730 = vadd.f32 %v521, %v729
  %731 = vmatmul.f32.gmra.mxu0 %v311
  %v732 = vpop.f32.mrf.mxu0
  %v733 = vadd.f32 %v524, %v732
  %734 = vmatmul.f32.gmra.mxu0 %v314
  %v735 = vpop.f32.mrf.mxu0
  %v736 = vadd.f32 %v527, %v735
  %737 = vmatmul.f32.gmra.mxu0 %v317
  %v738 = vpop.f32.mrf.mxu0
  %v739 = vadd.f32 %v530, %v738
  %740 = vmatmul.f32.gmra.mxu0 %v320
  %v741 = vpop.f32.mrf.mxu0
  %v742 = vadd.f32 %v533, %v741
  %743 = vmatmul.f32.gmra.mxu0 %v323
  %v744 = vpop.f32.mrf.mxu0
  %v745 = vadd.f32 %v536, %v744
  %746 = vmatmul.f32.gmra.mxu0 %v326
  %v747 = vpop.f32.mrf.mxu0
  %v748 = vadd.f32 %v539, %v747
  %749 = vmatmul.f32.gmra.mxu0 %v329
  %v750 = vpop.f32.mrf.mxu0
  %v751 = vadd.f32 %v542, %v750
  %752 = vmatmul.f32.gmra.mxu0 %v332
  %v753 = vpop.f32.mrf.mxu0
  %v754 = vadd.f32 %v545, %v753
  %755 = vmatmul.f32.gmra.mxu0 %v335
  %v756 = vpop.f32.mrf.mxu0
  %v757 = vadd.f32 %v548, %v756
  %758 = vmatmul.f32.gmra.mxu0 %v338
  %v759 = vpop.f32.mrf.mxu0
  %v760 = vadd.f32 %v551, %v759
  %761 = vmatmul.f32.gmra.mxu0 %v341
  %v762 = vpop.f32.mrf.mxu0
  %v763 = vadd.f32 %v554, %v762
  %764 = vmatmul.f32.gmra.mxu0 %v344
  %v765 = vpop.f32.mrf.mxu0
  %v766 = vadd.f32 %v557, %v765
  %767 = vmatmul.f32.gmra.mxu0 %v347
  %v768 = vpop.f32.mrf.mxu0
  %v769 = vadd.f32 %v560, %v768
  %770 = vmatmul.f32.gmra.mxu0 %v350
  %v771 = vpop.f32.mrf.mxu0
  %v772 = vadd.f32 %v563, %v771
  %773 = vmatmul.f32.gmra.mxu0 %v353
  %v774 = vpop.f32.mrf.mxu0
  %v775 = vadd.f32 %v566, %v774
  %776 = vmatmul.f32.gmra.mxu0 %v356
  %v777 = vpop.f32.mrf.mxu0
  %v778 = vadd.f32 %v569, %v777
  %779 = vmatmul.f32.gmra.mxu0 %v359
  %v780 = vpop.f32.mrf.mxu0
  %v781 = vadd.f32 %v572, %v780
  %782 = vmatmul.f32.gmra.mxu0 %v362
  %v783 = vpop.f32.mrf.mxu0
  %v784 = vadd.f32 %v575, %v783
  %785 = vdwg.mxu0
  %vm786 = vcmask 64512
  %v787 = vsel %vm786, %v595, 0.0
  %v788 = vsel %vm786, %v598, 0.0
  %v789 = vadd.f32 %v787, %v788
  %v790 = vsel %vm786, %v601, 0.0
  %v791 = vadd.f32 %v789, %v790
  %v792 = vsel %vm786, %v604, 0.0
  %v793 = vadd.f32 %v791, %v792
  %v794 = vsel %vm786, %v607, 0.0
  %v795 = vadd.f32 %v793, %v794
  %v796 = vsel %vm786, %v610, 0.0
  %v797 = vadd.f32 %v795, %v796
  %v798 = vsel %vm786, %v613, 0.0
  %v799 = vadd.f32 %v797, %v798
  %v800 = vsel %vm786, %v616, 0.0
  %v801 = vadd.f32 %v799, %v800
  %v802 = vsel %vm786, %v619, 0.0
  %v803 = vadd.f32 %v801, %v802
  %v804 = vsel %vm786, %v622, 0.0
  %v805 = vadd.f32 %v803, %v804
  %v806 = vsel %vm786, %v625, 0.0
  %v807 = vadd.f32 %v805, %v806
  %v808 = vsel %vm786, %v628, 0.0
  %v809 = vadd.f32 %v807, %v808
  %v810 = vsel %vm786, %v631, 0.0
  %v811 = vadd.f32 %v809, %v810
  %v812 = vsel %vm786, %v634, 0.0
  %v813 = vadd.f32 %v811, %v812
  %v814 = vsel %vm786, %v637, 0.0
  %v815 = vadd.f32 %v813, %v814
  %v816 = vsel %vm786, %v640, 0.0
  %v817 = vadd.f32 %v815, %v816
  %v818 = vsel %vm786, %v643, 0.0
  %v819 = vadd.f32 %v817, %v818
  %v820 = vsel %vm786, %v646, 0.0
  %v821 = vadd.f32 %v819, %v820
  %v822 = vsel %vm786, %v649, 0.0
  %v823 = vadd.f32 %v821, %v822
  %v824 = vsel %vm786, %v652, 0.0
  %v825 = vadd.f32 %v823, %v824
  %v826 = vsel %vm786, %v655, 0.0
  %v827 = vadd.f32 %v825, %v826
  %v828 = vsel %vm786, %v658, 0.0
  %v829 = vadd.f32 %v827, %v828
  %v830 = vsel %vm786, %v661, 0.0
  %v831 = vadd.f32 %v829, %v830
  %v832 = vsel %vm786, %v664, 0.0
  %v833 = vadd.f32 %v831, %v832
  %v834 = vsel %vm786, %v667, 0.0
  %v835 = vadd.f32 %v833, %v834
  %v836 = vsel %vm786, %v670, 0.0
  %v837 = vadd.f32 %v835, %v836
  %v838 = vsel %vm786, %v673, 0.0
  %v839 = vadd.f32 %v837, %v838
  %v840 = vsel %vm786, %v676, 0.0
  %v841 = vadd.f32 %v839, %v840
  %v842 = vsel %vm786, %v679, 0.0
  %v843 = vadd.f32 %v841, %v842
  %v844 = vsel %vm786, %v682, 0.0
  %v845 = vadd.f32 %v843, %v844
  %v846 = vsel %vm786, %v685, 0.0
  %v847 = vadd.f32 %v845, %v846
  %v848 = vsel %vm786, %v688, 0.0
  %v849 = vadd.f32 %v847, %v848
  %v850 = vsel %vm786, %v691, 0.0
  %v851 = vadd.f32 %v849, %v850
  %v852 = vsel %vm786, %v694, 0.0
  %v853 = vadd.f32 %v851, %v852
  %v854 = vsel %vm786, %v697, 0.0
  %v855 = vadd.f32 %v853, %v854
  %v856 = vsel %vm786, %v700, 0.0
  %v857 = vadd.f32 %v855, %v856
  %v858 = vsel %vm786, %v703, 0.0
  %v859 = vadd.f32 %v857, %v858
  %v860 = vsel %vm786, %v706, 0.0
  %v861 = vadd.f32 %v859, %v860
  %v862 = vsel %vm786, %v709, 0.0
  %v863 = vadd.f32 %v861, %v862
  %v864 = vsel %vm786, %v712, 0.0
  %v865 = vadd.f32 %v863, %v864
  %v866 = vsel %vm786, %v715, 0.0
  %v867 = vadd.f32 %v865, %v866
  %v868 = vsel %vm786, %v718, 0.0
  %v869 = vadd.f32 %v867, %v868
  %v870 = vsel %vm786, %v721, 0.0
  %v871 = vadd.f32 %v869, %v870
  %v872 = vsel %vm786, %v724, 0.0
  %v873 = vadd.f32 %v871, %v872
  %v874 = vsel %vm786, %v727, 0.0
  %v875 = vadd.f32 %v873, %v874
  %v876 = vsel %vm786, %v730, 0.0
  %v877 = vadd.f32 %v875, %v876
  %v878 = vsel %vm786, %v733, 0.0
  %v879 = vadd.f32 %v877, %v878
  %v880 = vsel %vm786, %v736, 0.0
  %v881 = vadd.f32 %v879, %v880
  %v882 = vsel %vm786, %v739, 0.0
  %v883 = vadd.f32 %v881, %v882
  %v884 = vsel %vm786, %v742, 0.0
  %v885 = vadd.f32 %v883, %v884
  %v886 = vsel %vm786, %v745, 0.0
  %v887 = vadd.f32 %v885, %v886
  %v888 = vsel %vm786, %v748, 0.0
  %v889 = vadd.f32 %v887, %v888
  %v890 = vsel %vm786, %v751, 0.0
  %v891 = vadd.f32 %v889, %v890
  %v892 = vsel %vm786, %v754, 0.0
  %v893 = vadd.f32 %v891, %v892
  %v894 = vsel %vm786, %v757, 0.0
  %v895 = vadd.f32 %v893, %v894
  %v896 = vsel %vm786, %v760, 0.0
  %v897 = vadd.f32 %v895, %v896
  %v898 = vsel %vm786, %v763, 0.0
  %v899 = vadd.f32 %v897, %v898
  %v900 = vsel %vm786, %v766, 0.0
  %v901 = vadd.f32 %v899, %v900
  %v902 = vsel %vm786, %v769, 0.0
  %v903 = vadd.f32 %v901, %v902
  %v904 = vsel %vm786, %v772, 0.0
  %v905 = vadd.f32 %v903, %v904
  %v906 = vsel %vm786, %v775, 0.0
  %v907 = vadd.f32 %v905, %v906
  %v908 = vsel %vm786, %v778, 0.0
  %v909 = vadd.f32 %v907, %v908
  %v910 = vsel %vm786, %v781, 0.0
  %v911 = vadd.f32 %v909, %v910
  %v912 = vsel %vm786, %v784, 0.0
  %v913 = vadd.f32 %v911, %v912
  %v914 = vrot.slane %v913, 4
  %v915 = vadd.f32 %v913, %v914
  %v916 = vrot.slane %v915, 2
  %v917 = vadd.f32 %v915, %v916
  %v918 = vrot.slane %v917, 1
  %v919 = vadd.f32 %v917, %v918
  %v920 = vrcp.pop 512.0
  %v921 = vmul.f32 512.0, %v920
  %v922 = vsub.f32 1.0, %v921
  %v923 = vmul.f32 %v920, %v922
  %v924 = vadd.f32 %v920, %v923
  %vm925 = vweird.f32 %v920
  %v926 = vsel %vm925, %v920, %v924
  %v927 = vmul.f32 %v919, %v926
  %v928 = vsub.f32 %v595, %v927
  %v929 = vsub.f32 %v598, %v927
  %v930 = vsub.f32 %v601, %v927
  %v931 = vsub.f32 %v604, %v927
  %v932 = vsub.f32 %v607, %v927
  %v933 = vsub.f32 %v610, %v927
  %v934 = vsub.f32 %v613, %v927
  %v935 = vsub.f32 %v616, %v927
  %v936 = vsub.f32 %v619, %v927
  %v937 = vsub.f32 %v622, %v927
  %v938 = vsub.f32 %v625, %v927
  %v939 = vsub.f32 %v628, %v927
  %v940 = vsub.f32 %v631, %v927
  %v941 = vsub.f32 %v634, %v927
  %v942 = vsub.f32 %v637, %v927
  %v943 = vsub.f32 %v640, %v927
  %v944 = vsub.f32 %v643, %v927
  %v945 = vsub.f32 %v646, %v927
  %v946 = vsub.f32 %v649, %v927
  %v947 = vsub.f32 %v652, %v927
  %v948 = vsub.f32 %v655, %v927
  %v949 = vsub.f32 %v658, %v927
  %v950 = vsub.f32 %v661, %v927
  %v951 = vsub.f32 %v664, %v927
  %v952 = vsub.f32 %v667, %v927
  %v953 = vsub.f32 %v670, %v927
  %v954 = vsub.f32 %v673, %v927
  %v955 = vsub.f32 %v676, %v927
  %v956 = vsub.f32 %v679, %v927
  %v957 = vsub.f32 %v682, %v927
  %v958 = vsub.f32 %v685, %v927
  %v959 = vsub.f32 %v688, %v927
  %v960 = vsub.f32 %v691, %v927
  %v961 = vsub.f32 %v694, %v927
  %v962 = vsub.f32 %v697, %v927
  %v963 = vsub.f32 %v700, %v927
  %v964 = vsub.f32 %v703, %v927
  %v965 = vsub.f32 %v706, %v927
  %v966 = vsub.f32 %v709, %v927
  %v967 = vsub.f32 %v712, %v927
  %v968 = vsub.f32 %v715, %v927
  %v969 = vsub.f32 %v718, %v927
  %v970 = vsub.f32 %v721, %v927
  %v971 = vsub.f32 %v724, %v927
  %v972 = vsub.f32 %v727, %v927
  %v973 = vsub.f32 %v730, %v927
  %v974 = vsub.f32 %v733, %v927
  %v975 = vsub.f32 %v736, %v927
  %v976 = vsub.f32 %v739, %v927
  %v977 = vsub.f32 %v742, %v927
  %v978 = vsub.f32 %v745, %v927
  %v979 = vsub.f32 %v748, %v927
  %v980 = vsub.f32 %v751, %v927
  %v981 = vsub.f32 %v754, %v927
  %v982 = vsub.f32 %v757, %v927
  %v983 = vsub.f32 %v760, %v927
  %v984 = vsub.f32 %v763, %v927
  %v985 = vsub.f32 %v766, %v927
  %v986 = vsub.f32 %v769, %v927
  %v987 = vsub.f32 %v772, %v927
  %v988 = vsub.f32 %v775, %v927
  %v989 = vsub.f32 %v778, %v927
  %v990 = vsub.f32 %v781, %v927
  %v991 = vsub.f32 %v784, %v927
  %v992 = vmul.f32 %v928, %v928
  %v993 = vmul.f32 %v929, %v929
  %v994 = vmul.f32 %v930, %v930
  %v995 = vmul.f32 %v931, %v931
  %v996 = vmul.f32 %v932, %v932
  %v997 = vmul.f32 %v933, %v933
  %v998 = vmul.f32 %v934, %v934
  %v999 = vmul.f32 %v935, %v935
  %v1000 = vmul.f32 %v936, %v936
  %v1001 = vmul.f32 %v937, %v937
  %v1002 = vmul.f32 %v938, %v938
  %v1003 = vmul.f32 %v939, %v939
  %v1004 = vmul.f32 %v940, %v940
  %v1005 = vmul.f32 %v941, %v941
  %v1006 = vmul.f32 %v942, %v942
  %v1007 = vmul.f32 %v943, %v943
  %v1008 = vmul.f32 %v944, %v944
  %v1009 = vmul.f32 %v945, %v945
  %v1010 = vmul.f32 %v946, %v946
  %v1011 = vmul.f32 %v947, %v947
  %v1012 = vmul.f32 %v948, %v948
  %v1013 = vmul.f32 %v949, %v949
  %v1014 = vmul.f32 %v950, %v950
  %v1015 = vmul.f32 %v951, %v951
  %v1016 = vmul.f32 %v952, %v952
  %v1017 = vmul.f32 %v953, %v953
  %v1018 = vmul.f32 %v954, %v954
  %v1019 = vmul.f32 %v955, %v955
  %v1020 = vmul.f32 %v956, %v956
  %v1021 = vmul.f32 %v957, %v957
  %v1022 = vmul.f32 %v958, %v958
  %v1023 = vmul.f32 %v959, %v959
  %v1024 = vmul.f32 %v960, %v960
  %v1025 = vmul.f32 %v961, %v961
  %v1026 = vmul.f32 %v962, %v962
  %v1027 = vmul.f32 %v963, %v963
  %v1028 = vmul.f32 %v964, %v964
  %v1029 = vmul.f32 %v965, %v965
  %v1030 = vmul.f32 %v966, %v966
  %v1031 = vmul.f32 %v967, %v967
  %v1032 = vmul.f32 %v968, %v968
  %v1033 = vmul.f32 %v969, %v969
  %v1034 = vmul.f32 %v970, %v970
  %v1035 = vmul.f32 %v971, %v971
  %v1036 = vmul.f32 %v972, %v972
  %v1037 = vmul.f32 %v973, %v973
  %v1038 = vmul.f32 %v974, %v974
  %v1039 = vmul.f32 %v975, %v975
  %v1040 = vmul.f32 %v976, %v976
  %v1041 = vmul.f32 %v977, %v977
  %v1042 = vmul.f32 %v978, %v978
  %v1043 = vmul.f32 %v979, %v979
  %v1044 = vmul.f32 %v980, %v980
  %v1045 = vmul.f32 %v981, %v981
  %v1046 = vmul.f32 %v982, %v982
  %v1047 = vmul.f32 %v983, %v983
  %v1048 = vmul.f32 %v984, %v984
  %v1049 = vmul.f32 %v985, %v985
  %v1050 = vmul.f32 %v986, %v986
  %v1051 = vmul.f32 %v987, %v987
  %v1052 = vmul.f32 %v988, %v988
  %v1053 = vmul.f32 %v989, %v989
  %v1054 = vmul.f32 %v990, %v990
  %v1055 = vmul.f32 %v991, %v991
  %v1056 = vsel %vm786, %v992, 0.0
  %v1057 = vsel %vm786, %v993, 0.0
  %v1058 = vadd.f32 %v1056, %v1057
  %v1059 = vsel %vm786, %v994, 0.0
  %v1060 = vadd.f32 %v1058, %v1059
  %v1061 = vsel %vm786, %v995, 0.0
  %v1062 = vadd.f32 %v1060, %v1061
  %v1063 = vsel %vm786, %v996, 0.0
  %v1064 = vadd.f32 %v1062, %v1063
  %v1065 = vsel %vm786, %v997, 0.0
  %v1066 = vadd.f32 %v1064, %v1065
  %v1067 = vsel %vm786, %v998, 0.0
  %v1068 = vadd.f32 %v1066, %v1067
  %v1069 = vsel %vm786, %v999, 0.0
  %v1070 = vadd.f32 %v1068, %v1069
  %v1071 = vsel %vm786, %v1000, 0.0
  %v1072 = vadd.f32 %v1070, %v1071
  %v1073 = vsel %vm786, %v1001, 0.0
  %v1074 = vadd.f32 %v1072, %v1073
  %v1075 = vsel %vm786, %v1002, 0.0
  %v1076 = vadd.f32 %v1074, %v1075
  %v1077 = vsel %vm786, %v1003, 0.0
  %v1078 = vadd.f32 %v1076, %v1077
  %v1079 = vsel %vm786, %v1004, 0.0
  %v1080 = vadd.f32 %v1078, %v1079
  %v1081 = vsel %vm786, %v1005, 0.0
  %v1082 = vadd.f32 %v1080, %v1081
  %v1083 = vsel %vm786, %v1006, 0.0
  %v1084 = vadd.f32 %v1082, %v1083
  %v1085 = vsel %vm786, %v1007, 0.0
  %v1086 = vadd.f32 %v1084, %v1085
  %v1087 = vsel %vm786, %v1008, 0.0
  %v1088 = vadd.f32 %v1086, %v1087
  %v1089 = vsel %vm786, %v1009, 0.0
  %v1090 = vadd.f32 %v1088, %v1089
  %v1091 = vsel %vm786, %v1010, 0.0
  %v1092 = vadd.f32 %v1090, %v1091
  %v1093 = vsel %vm786, %v1011, 0.0
  %v1094 = vadd.f32 %v1092, %v1093
  %v1095 = vsel %vm786, %v1012, 0.0
  %v1096 = vadd.f32 %v1094, %v1095
  %v1097 = vsel %vm786, %v1013, 0.0
  %v1098 = vadd.f32 %v1096, %v1097
  %v1099 = vsel %vm786, %v1014, 0.0
  %v1100 = vadd.f32 %v1098, %v1099
  %v1101 = vsel %vm786, %v1015, 0.0
  %v1102 = vadd.f32 %v1100, %v1101
  %v1103 = vsel %vm786, %v1016, 0.0
  %v1104 = vadd.f32 %v1102, %v1103
  %v1105 = vsel %vm786, %v1017, 0.0
  %v1106 = vadd.f32 %v1104, %v1105
  %v1107 = vsel %vm786, %v1018, 0.0
  %v1108 = vadd.f32 %v1106, %v1107
  %v1109 = vsel %vm786, %v1019, 0.0
  %v1110 = vadd.f32 %v1108, %v1109
  %v1111 = vsel %vm786, %v1020, 0.0
  %v1112 = vadd.f32 %v1110, %v1111
  %v1113 = vsel %vm786, %v1021, 0.0
  %v1114 = vadd.f32 %v1112, %v1113
  %v1115 = vsel %vm786, %v1022, 0.0
  %v1116 = vadd.f32 %v1114, %v1115
  %v1117 = vsel %vm786, %v1023, 0.0
  %v1118 = vadd.f32 %v1116, %v1117
  %v1119 = vsel %vm786, %v1024, 0.0
  %v1120 = vadd.f32 %v1118, %v1119
  %v1121 = vsel %vm786, %v1025, 0.0
  %v1122 = vadd.f32 %v1120, %v1121
  %v1123 = vsel %vm786, %v1026, 0.0
  %v1124 = vadd.f32 %v1122, %v1123
  %v1125 = vsel %vm786, %v1027, 0.0
  %v1126 = vadd.f32 %v1124, %v1125
  %v1127 = vsel %vm786, %v1028, 0.0
  %v1128 = vadd.f32 %v1126, %v1127
  %v1129 = vsel %vm786, %v1029, 0.0
  %v1130 = vadd.f32 %v1128, %v1129
  %v1131 = vsel %vm786, %v1030, 0.0
  %v1132 = vadd.f32 %v1130, %v1131
  %v1133 = vsel %vm786, %v1031, 0.0
  %v1134 = vadd.f32 %v1132, %v1133
  %v1135 = vsel %vm786, %v1032, 0.0
  %v1136 = vadd.f32 %v1134, %v1135
  %v1137 = vsel %vm786, %v1033, 0.0
  %v1138 = vadd.f32 %v1136, %v1137
  %v1139 = vsel %vm786, %v1034, 0.0
  %v1140 = vadd.f32 %v1138, %v1139
  %v1141 = vsel %vm786, %v1035, 0.0
  %v1142 = vadd.f32 %v1140, %v1141
  %v1143 = vsel %vm786, %v1036, 0.0
  %v1144 = vadd.f32 %v1142, %v1143
  %v1145 = vsel %vm786, %v1037, 0.0
  %v1146 = vadd.f32 %v1144, %v1145
  %v1147 = vsel %vm786, %v1038, 0.0
  %v1148 = vadd.f32 %v1146, %v1147
  %v1149 = vsel %vm786, %v1039, 0.0
  %v1150 = vadd.f32 %v1148, %v1149
  %v1151 = vsel %vm786, %v1040, 0.0
  %v1152 = vadd.f32 %v1150, %v1151
  %v1153 = vsel %vm786, %v1041, 0.0
  %v1154 = vadd.f32 %v1152, %v1153
  %v1155 = vsel %vm786, %v1042, 0.0
  %v1156 = vadd.f32 %v1154, %v1155
  %v1157 = vsel %vm786, %v1043, 0.0
  %v1158 = vadd.f32 %v1156, %v1157
  %v1159 = vsel %vm786, %v1044, 0.0
  %v1160 = vadd.f32 %v1158, %v1159
  %v1161 = vsel %vm786, %v1045, 0.0
  %v1162 = vadd.f32 %v1160, %v1161
  %v1163 = vsel %vm786, %v1046, 0.0
  %v1164 = vadd.f32 %v1162, %v1163
  %v1165 = vsel %vm786, %v1047, 0.0
  %v1166 = vadd.f32 %v1164, %v1165
  %v1167 = vsel %vm786, %v1048, 0.0
  %v1168 = vadd.f32 %v1166, %v1167
  %v1169 = vsel %vm786, %v1049, 0.0
  %v1170 = vadd.f32 %v1168, %v1169
  %v1171 = vsel %vm786, %v1050, 0.0
  %v1172 = vadd.f32 %v1170, %v1171
  %v1173 = vsel %vm786, %v1051, 0.0
  %v1174 = vadd.f32 %v1172, %v1173
  %v1175 = vsel %vm786, %v1052, 0.0
  %v1176 = vadd.f32 %v1174, %v1175
  %v1177 = vsel %vm786, %v1053, 0.0
  %v1178 = vadd.f32 %v1176, %v1177
  %v1179 = vsel %vm786, %v1054, 0.0
  %v1180 = vadd.f32 %v1178, %v1179
  %v1181 = vsel %vm786, %v1055, 0.0
  %v1182 = vadd.f32 %v1180, %v1181
  %v1183 = vrot.slane %v1182, 4
  %v1184 = vadd.f32 %v1182, %v1183
  %v1185 = vrot.slane %v1184, 2
  %v1186 = vadd.f32 %v1184, %v1185
  %v1187 = vrot.slane %v1186, 1
  %v1188 = vadd.f32 %v1186, %v1187
  %v1189 = vmul.f32 %v1188, %v926
  %v1190 = vld [vmem:[%s3] sm:$0x1]
  %v1191 = vadd.f32 %v1189, 1e-05
  %v1192 = vrsqrt.pop %v1191
  %v1193 = vmul.f32 %v1192, %v1191
  %v1194 = vmul.f32 %v1193, %v1192
  %v1195 = vmul.f32 0.5, %v1194
  %v1196 = vsub.f32 1.5, %v1195
  %v1197 = vmul.f32 %v1192, %v1196
  %vm1198 = vweird.f32 %v1191
  %vm1199 = vweird.f32 %v1192
  %vm1200 = vmor %vm1198, %vm1199
  %v1201 = vsel %vm1200, %v1192, %v1197
  %v1202 = vmul.f32 %v1190, %v1201
  %v1204 = vperm.slane %v1202, 0
  %v1206 = vmul.f32 %v928, %v1204
  %v1207 = vmul.f32 %v929, %v1204
  %v1208 = vmul.f32 %v930, %v1204
  %v1209 = vmul.f32 %v931, %v1204
  %v1210 = vmul.f32 %v932, %v1204
  %v1211 = vmul.f32 %v933, %v1204
  %v1212 = vmul.f32 %v934, %v1204
  %v1213 = vmul.f32 %v935, %v1204
  %v1214 = vmul.f32 %v936, %v1204
  %v1215 = vmul.f32 %v937, %v1204
  %v1216 = vmul.f32 %v938, %v1204
  %v1217 = vmul.f32 %v939, %v1204
  %v1218 = vmul.f32 %v940, %v1204
  %v1219 = vmul.f32 %v941, %v1204
  %v1220 = vmul.f32 %v942, %v1204
  %v1221 = vmul.f32 %v943, %v1204
  %v1222 = vmul.f32 %v944, %v1204
  %v1223 = vmul.f32 %v945, %v1204
  %v1224 = vmul.f32 %v946, %v1204
  %v1225 = vmul.f32 %v947, %v1204
  %v1226 = vmul.f32 %v948, %v1204
  %v1227 = vmul.f32 %v949, %v1204
  %v1228 = vmul.f32 %v950, %v1204
  %v1229 = vmul.f32 %v951, %v1204
  %v1230 = vmul.f32 %v952, %v1204
  %v1231 = vmul.f32 %v953, %v1204
  %v1232 = vmul.f32 %v954, %v1204
  %v1233 = vmul.f32 %v955, %v1204
  %v1234 = vmul.f32 %v956, %v1204
  %v1235 = vmul.f32 %v957, %v1204
  %v1236 = vmul.f32 %v958, %v1204
  %v1237 = vmul.f32 %v959, %v1204
  %v1238 = vmul.f32 %v960, %v1204
  %v1239 = vmul.f32 %v961, %v1204
  %v1240 = vmul.f32 %v962, %v1204
  %v1241 = vmul.f32 %v963, %v1204
  %v1242 = vmul.f32 %v964, %v1204
  %v1243 = vmul.f32 %v965, %v1204
  %v1244 = vmul.f32 %v966, %v1204
  %v1245 = vmul.f32 %v967, %v1204
  %v1246 = vmul.f32 %v968, %v1204
  %v1247 = vmul.f32 %v969, %v1204
  %v1248 = vmul.f32 %v970, %v1204
  %v1249 = vmul.f32 %v971, %v1204
  %v1250 = vmul.f32 %v972, %v1204
  %v1251 = vmul.f32 %v973, %v1204
  %v1252 = vmul.f32 %v974, %v1204
  %v1253 = vmul.f32 %v975, %v1204
  %v1254 = vmul.f32 %v976, %v1204
  %v1255 = vmul.f32 %v977, %v1204
  %v1256 = vmul.f32 %v978, %v1204
  %v1257 = vmul.f32 %v979, %v1204
  %v1258 = vmul.f32 %v980, %v1204
  %v1259 = vmul.f32 %v981, %v1204
  %v1260 = vmul.f32 %v982, %v1204
  %v1261 = vmul.f32 %v983, %v1204
  %v1262 = vmul.f32 %v984, %v1204
  %v1263 = vmul.f32 %v985, %v1204
  %v1264 = vmul.f32 %v986, %v1204
  %v1265 = vmul.f32 %v987, %v1204
  %v1266 = vmul.f32 %v988, %v1204
  %v1267 = vmul.f32 %v989, %v1204
  %v1268 = vmul.f32 %v990, %v1204
  %v1269 = vmul.f32 %v991, %v1204
  %v1270 = vld [vmem:[%s4] sm:$0x1]
  %v1272 = vperm.slane %v1270, 0
  %v1274 = vadd.f32 %v1206, %v1272
  %v1275 = vadd.f32 %v1207, %v1272
  %v1276 = vadd.f32 %v1208, %v1272
  %v1277 = vadd.f32 %v1209, %v1272
  %v1278 = vadd.f32 %v1210, %v1272
  %v1279 = vadd.f32 %v1211, %v1272
  %v1280 = vadd.f32 %v1212, %v1272
  %v1281 = vadd.f32 %v1213, %v1272
  %v1282 = vadd.f32 %v1214, %v1272
  %v1283 = vadd.f32 %v1215, %v1272
  %v1284 = vadd.f32 %v1216, %v1272
  %v1285 = vadd.f32 %v1217, %v1272
  %v1286 = vadd.f32 %v1218, %v1272
  %v1287 = vadd.f32 %v1219, %v1272
  %v1288 = vadd.f32 %v1220, %v1272
  %v1289 = vadd.f32 %v1221, %v1272
  %v1290 = vadd.f32 %v1222, %v1272
  %v1291 = vadd.f32 %v1223, %v1272
  %v1292 = vadd.f32 %v1224, %v1272
  %v1293 = vadd.f32 %v1225, %v1272
  %v1294 = vadd.f32 %v1226, %v1272
  %v1295 = vadd.f32 %v1227, %v1272
  %v1296 = vadd.f32 %v1228, %v1272
  %v1297 = vadd.f32 %v1229, %v1272
  %v1298 = vadd.f32 %v1230, %v1272
  %v1299 = vadd.f32 %v1231, %v1272
  %v1300 = vadd.f32 %v1232, %v1272
  %v1301 = vadd.f32 %v1233, %v1272
  %v1302 = vadd.f32 %v1234, %v1272
  %v1303 = vadd.f32 %v1235, %v1272
  %v1304 = vadd.f32 %v1236, %v1272
  %v1305 = vadd.f32 %v1237, %v1272
  %v1306 = vadd.f32 %v1238, %v1272
  %v1307 = vadd.f32 %v1239, %v1272
  %v1308 = vadd.f32 %v1240, %v1272
  %v1309 = vadd.f32 %v1241, %v1272
  %v1310 = vadd.f32 %v1242, %v1272
  %v1311 = vadd.f32 %v1243, %v1272
  %v1312 = vadd.f32 %v1244, %v1272
  %v1313 = vadd.f32 %v1245, %v1272
  %v1314 = vadd.f32 %v1246, %v1272
  %v1315 = vadd.f32 %v1247, %v1272
  %v1316 = vadd.f32 %v1248, %v1272
  %v1317 = vadd.f32 %v1249, %v1272
  %v1318 = vadd.f32 %v1250, %v1272
  %v1319 = vadd.f32 %v1251, %v1272
  %v1320 = vadd.f32 %v1252, %v1272
  %v1321 = vadd.f32 %v1253, %v1272
  %v1322 = vadd.f32 %v1254, %v1272
  %v1323 = vadd.f32 %v1255, %v1272
  %v1324 = vadd.f32 %v1256, %v1272
  %v1325 = vadd.f32 %v1257, %v1272
  %v1326 = vadd.f32 %v1258, %v1272
  %v1327 = vadd.f32 %v1259, %v1272
  %v1328 = vadd.f32 %v1260, %v1272
  %v1329 = vadd.f32 %v1261, %v1272
  %v1330 = vadd.f32 %v1262, %v1272
  %v1331 = vadd.f32 %v1263, %v1272
  %v1332 = vadd.f32 %v1264, %v1272
  %v1333 = vadd.f32 %v1265, %v1272
  %v1334 = vadd.f32 %v1266, %v1272
  %v1335 = vadd.f32 %v1267, %v1272
  %v1336 = vadd.f32 %v1268, %v1272
  %v1337 = vadd.f32 %v1269, %v1272
  %v1338 = vmax.f32 %v1274, 0.0
  %v1339 = vmax.f32 %v1275, 0.0
  %v1340 = vmax.f32 %v1276, 0.0
  %v1341 = vmax.f32 %v1277, 0.0
  %v1342 = vmax.f32 %v1278, 0.0
  %v1343 = vmax.f32 %v1279, 0.0
  %v1344 = vmax.f32 %v1280, 0.0
  %v1345 = vmax.f32 %v1281, 0.0
  %v1346 = vmax.f32 %v1282, 0.0
  %v1347 = vmax.f32 %v1283, 0.0
  %v1348 = vmax.f32 %v1284, 0.0
  %v1349 = vmax.f32 %v1285, 0.0
  %v1350 = vmax.f32 %v1286, 0.0
  %v1351 = vmax.f32 %v1287, 0.0
  %v1352 = vmax.f32 %v1288, 0.0
  %v1353 = vmax.f32 %v1289, 0.0
  %v1354 = vmax.f32 %v1290, 0.0
  %v1355 = vmax.f32 %v1291, 0.0
  %v1356 = vmax.f32 %v1292, 0.0
  %v1357 = vmax.f32 %v1293, 0.0
  %v1358 = vmax.f32 %v1294, 0.0
  %v1359 = vmax.f32 %v1295, 0.0
  %v1360 = vmax.f32 %v1296, 0.0
  %v1361 = vmax.f32 %v1297, 0.0
  %v1362 = vmax.f32 %v1298, 0.0
  %v1363 = vmax.f32 %v1299, 0.0
  %v1364 = vmax.f32 %v1300, 0.0
  %v1365 = vmax.f32 %v1301, 0.0
  %v1366 = vmax.f32 %v1302, 0.0
  %v1367 = vmax.f32 %v1303, 0.0
  %v1368 = vmax.f32 %v1304, 0.0
  %v1369 = vmax.f32 %v1305, 0.0
  %v1370 = vmax.f32 %v1306, 0.0
  %v1371 = vmax.f32 %v1307, 0.0
  %v1372 = vmax.f32 %v1308, 0.0
  %v1373 = vmax.f32 %v1309, 0.0
  %v1374 = vmax.f32 %v1310, 0.0
  %v1375 = vmax.f32 %v1311, 0.0
  %v1376 = vmax.f32 %v1312, 0.0
  %v1377 = vmax.f32 %v1313, 0.0
  %v1378 = vmax.f32 %v1314, 0.0
  %v1379 = vmax.f32 %v1315, 0.0
  %v1380 = vmax.f32 %v1316, 0.0
  %v1381 = vmax.f32 %v1317, 0.0
  %v1382 = vmax.f32 %v1318, 0.0
  %v1383 = vmax.f32 %v1319, 0.0
  %v1384 = vmax.f32 %v1320, 0.0
  %v1385 = vmax.f32 %v1321, 0.0
  %v1386 = vmax.f32 %v1322, 0.0
  %v1387 = vmax.f32 %v1323, 0.0
  %v1388 = vmax.f32 %v1324, 0.0
  %v1389 = vmax.f32 %v1325, 0.0
  %v1390 = vmax.f32 %v1326, 0.0
  %v1391 = vmax.f32 %v1327, 0.0
  %v1392 = vmax.f32 %v1328, 0.0
  %v1393 = vmax.f32 %v1329, 0.0
  %v1394 = vmax.f32 %v1330, 0.0
  %v1395 = vmax.f32 %v1331, 0.0
  %v1396 = vmax.f32 %v1332, 0.0
  %v1397 = vmax.f32 %v1333, 0.0
  %v1398 = vmax.f32 %v1334, 0.0
  %v1399 = vmax.f32 %v1335, 0.0
  %v1400 = vmax.f32 %v1336, 0.0
  %v1401 = vmax.f32 %v1337, 0.0
  %1402 = vst.msk [vmem:[%s5] sm:$0xff] %vm786, %v1338
  %1403 = vst.msk [vmem:[%s5 + $0x8] sm:$0xff] %vm786, %v1339
  %1404 = vst.msk [vmem:[%s5 + $0x10] sm:$0xff] %vm786, %v1340
  %1405 = vst.msk [vmem:[%s5 + $0x18] sm:$0xff] %vm786, %v1341
  %1406 = vst.msk [vmem:[%s5 + $0x20] sm:$0xff] %vm786, %v1342
  %1407 = vst.msk [vmem:[%s5 + $0x28] sm:$0xff] %vm786, %v1343
  %1408 = vst.msk [vmem:[%s5 + $0x30] sm:$0xff] %vm786, %v1344
  %1409 = vst.msk [vmem:[%s5 + $0x38] sm:$0xff] %vm786, %v1345
  %1410 = vst.msk [vmem:[%s5 + $0x40] sm:$0xff] %vm786, %v1346
  %1411 = vst.msk [vmem:[%s5 + $0x48] sm:$0xff] %vm786, %v1347
  %1412 = vst.msk [vmem:[%s5 + $0x50] sm:$0xff] %vm786, %v1348
  %1413 = vst.msk [vmem:[%s5 + $0x58] sm:$0xff] %vm786, %v1349
  %1414 = vst.msk [vmem:[%s5 + $0x60] sm:$0xff] %vm786, %v1350
  %1415 = vst.msk [vmem:[%s5 + $0x68] sm:$0xff] %vm786, %v1351
  %1416 = vst.msk [vmem:[%s5 + $0x70] sm:$0xff] %vm786, %v1352
  %1417 = vst.msk [vmem:[%s5 + $0x78] sm:$0xff] %vm786, %v1353
  %1418 = vst.msk [vmem:[%s5 + $0x80] sm:$0xff] %vm786, %v1354
  %1419 = vst.msk [vmem:[%s5 + $0x88] sm:$0xff] %vm786, %v1355
  %1420 = vst.msk [vmem:[%s5 + $0x90] sm:$0xff] %vm786, %v1356
  %1421 = vst.msk [vmem:[%s5 + $0x98] sm:$0xff] %vm786, %v1357
  %1422 = vst.msk [vmem:[%s5 + $0xa0] sm:$0xff] %vm786, %v1358
  %1423 = vst.msk [vmem:[%s5 + $0xa8] sm:$0xff] %vm786, %v1359
  %1424 = vst.msk [vmem:[%s5 + $0xb0] sm:$0xff] %vm786, %v1360
  %1425 = vst.msk [vmem:[%s5 + $0xb8] sm:$0xff] %vm786, %v1361
  %1426 = vst.msk [vmem:[%s5 + $0xc0] sm:$0xff] %vm786, %v1362
  %1427 = vst.msk [vmem:[%s5 + $0xc8] sm:$0xff] %vm786, %v1363
  %1428 = vst.msk [vmem:[%s5 + $0xd0] sm:$0xff] %vm786, %v1364
  %1429 = vst.msk [vmem:[%s5 + $0xd8] sm:$0xff] %vm786, %v1365
  %1430 = vst.msk [vmem:[%s5 + $0xe0] sm:$0xff] %vm786, %v1366
  %1431 = vst.msk [vmem:[%s5 + $0xe8] sm:$0xff] %vm786, %v1367
  %1432 = vst.msk [vmem:[%s5 + $0xf0] sm:$0xff] %vm786, %v1368
  %1433 = vst.msk [vmem:[%s5 + $0xf8] sm:$0xff] %vm786, %v1369
  %1434 = vst.msk [vmem:[%s5 + $0x100] sm:$0xff] %vm786, %v1370
  %1435 = vst.msk [vmem:[%s5 + $0x108] sm:$0xff] %vm786, %v1371
  %1436 = vst.msk [vmem:[%s5 + $0x110] sm:$0xff] %vm786, %v1372
  %1437 = vst.msk [vmem:[%s5 + $0x118] sm:$0xff] %vm786, %v1373
  %1438 = vst.msk [vmem:[%s5 + $0x120] sm:$0xff] %vm786, %v1374
  %1439 = vst.msk [vmem:[%s5 + $0x128] sm:$0xff] %vm786, %v1375
  %1440 = vst.msk [vmem:[%s5 + $0x130] sm:$0xff] %vm786, %v1376
  %1441 = vst.msk [vmem:[%s5 + $0x138] sm:$0xff] %vm786, %v1377
  %1442 = vst.msk [vmem:[%s5 + $0x140] sm:$0xff] %vm786, %v1378
  %1443 = vst.msk [vmem:[%s5 + $0x148] sm:$0xff] %vm786, %v1379
  %1444 = vst.msk [vmem:[%s5 + $0x150] sm:$0xff] %vm786, %v1380
  %1445 = vst.msk [vmem:[%s5 + $0x158] sm:$0xff] %vm786, %v1381
  %1446 = vst.msk [vmem:[%s5 + $0x160] sm:$0xff] %vm786, %v1382
  %1447 = vst.msk [vmem:[%s5 + $0x168] sm:$0xff] %vm786, %v1383
  %1448 = vst.msk [vmem:[%s5 + $0x170] sm:$0xff] %vm786, %v1384
  %1449 = vst.msk [vmem:[%s5 + $0x178] sm:$0xff] %vm786, %v1385
  %1450 = vst.msk [vmem:[%s5 + $0x180] sm:$0xff] %vm786, %v1386
  %1451 = vst.msk [vmem:[%s5 + $0x188] sm:$0xff] %vm786, %v1387
  %1452 = vst.msk [vmem:[%s5 + $0x190] sm:$0xff] %vm786, %v1388
  %1453 = vst.msk [vmem:[%s5 + $0x198] sm:$0xff] %vm786, %v1389
  %1454 = vst.msk [vmem:[%s5 + $0x1a0] sm:$0xff] %vm786, %v1390
  %1455 = vst.msk [vmem:[%s5 + $0x1a8] sm:$0xff] %vm786, %v1391
  %1456 = vst.msk [vmem:[%s5 + $0x1b0] sm:$0xff] %vm786, %v1392
  %1457 = vst.msk [vmem:[%s5 + $0x1b8] sm:$0xff] %vm786, %v1393
  %1458 = vst.msk [vmem:[%s5 + $0x1c0] sm:$0xff] %vm786, %v1394
  %1459 = vst.msk [vmem:[%s5 + $0x1c8] sm:$0xff] %vm786, %v1395
  %1460 = vst.msk [vmem:[%s5 + $0x1d0] sm:$0xff] %vm786, %v1396
  %1461 = vst.msk [vmem:[%s5 + $0x1d8] sm:$0xff] %vm786, %v1397
  %1462 = vst.msk [vmem:[%s5 + $0x1e0] sm:$0xff] %vm786, %v1398
  %1463 = vst.msk [vmem:[%s5 + $0x1e8] sm:$0xff] %vm786, %v1399
  %1464 = vst.msk [vmem:[%s5 + $0x1f0] sm:$0xff] %vm786, %v1400
  %1465 = vst.msk [vmem:[%s5 + $0x1f8] sm:$0xff] %vm786, %v1401
  // Predicated region
  $region22: #{generator_forward.9} parent=0 // pred_check
    _
  $region23: #{generator_forward.9} parent=0 // pred_check_branch
    %1467 = sbr.rel (0) target = $region25
  $region24: #{generator_forward.9} parent=0 // pred_region
    _
  $region25: #{generator_forward.9} parent=0 // pred_fallthru
    _
  // Predicated region
  $region26: #{generator_forward.9} parent=0 // pred_check
    _
  $region27: #{generator_forward.9} parent=0 // pred_check_branch
    %1469 = sbr.rel (0) target = $region29
  $region28: #{generator_forward.9} parent=0 // pred_region
    _
  $region29: #{generator_forward.9} parent=0 // pred_fallthru
    _

// kernel: generator_forward.11
$region0: #{generator_forward.11}
  #allocation0 [shape = 'u32[]', space=smem, size = 0x4, offset = 0x4, fixed_abs, tag = 'smem constant byte address 0x4 - core index']
  #allocation1 [shape = 'u32[72,128]{1,0:T(1,128)}', space=vmem, size = 0x9000, scoped, tag = 'internal scratch']
  %s0 = inlined_call_operand.vmem [shape: f32[128,144], index: 0, kind: input, shape index: {}]
  %s1 = inlined_call_operand.vmem [shape: f32[144,32], index: 1, kind: input, shape index: {}]
  %s2 = inlined_call_operand.vmem [shape: f32[1,32], index: 2, kind: input, shape index: {}]
  %s3 = inlined_call_operand.vmem [shape: f32[1,32], index: 3, kind: input, shape index: {}]
  %s4 = inlined_call_operand.vmem [shape: f32[1,32], index: 4, kind: input, shape index: {}]
  %s5 = inlined_call_operand.vmem [shape: f32[128,32], index: 5, kind: output, shape index: {}]
  %s6 = sld [smem:[#allocation0]]
  $region30: #{generator_forward.11} parent=0
    _
  %s8 = ssub.s32 1, %s6
  %s9 = scalar_select 0, %s8, %s6
  // Predicated region
  $region2: #{generator_forward.11} parent=0 // pred_check
    _
  $region3: #{generator_forward.11} parent=0 // pred_check_branch
    %11 = sbr.rel (0) target = $region5
  $region4: #{generator_forward.11} parent=0 // pred_region
    _
  $region5: #{generator_forward.11} parent=0 // pred_fallthru
    _
  // Predicated region
  $region6: #{generator_forward.11} parent=0 // pred_check
    _
  $region7: #{generator_forward.11} parent=0 // pred_check_branch
    %13 = sbr.rel (0) target = $region9
  $region8: #{generator_forward.11} parent=0 // pred_region
    _
  $region9: #{generator_forward.11} parent=0 // pred_fallthru
    _
  // Predicated region
  $region10: #{generator_forward.11} parent=0 // pred_check
    _
  $region11: #{generator_forward.11} parent=0 // pred_check_branch
    %15 = sbr.rel (0) target = $region13
  $region12: #{generator_forward.11} parent=0 // pred_region
    _
  $region13: #{generator_forward.11} parent=0 // pred_fallthru
    _
  // Predicated region
  $region14: #{generator_forward.11} parent=0 // pred_check
    _
  $region15: #{generator_forward.11} parent=0 // pred_check_branch
    %17 = sbr.rel (0) target = $region17
  $region16: #{generator_forward.11} parent=0 // pred_region
    _
  $region17: #{generator_forward.11} parent=0 // pred_fallthru
    _
  // Predicated region
  $region18: #{generator_forward.11} parent=0 // pred_check
    _
  $region19: #{generator_forward.11} parent=0 // pred_check_branch
    %19 = sbr.rel (0) target = $region21
  $region20: #{generator_forward.11} parent=0 // pred_region
    _
  $region21: #{generator_forward.11} parent=0 // pred_fallthru
    _
  %v20 = vld [vmem:[%s0] sm:$0xff]
  %v21 = vld [vmem:[%s0 + $0x8] sm:$0xff]
  %v22 = vld [vmem:[%s0 + $0x10] sm:$0xff]
  %v23 = vld [vmem:[%s0 + $0x18] sm:$0xff]
  %v24 = vld [vmem:[%s0 + $0x20] sm:$0xff]
  %v25 = vld [vmem:[%s0 + $0x28] sm:$0xff]
  %v26 = vld [vmem:[%s0 + $0x30] sm:$0xff]
  %v27 = vld [vmem:[%s0 + $0x38] sm:$0xff]
  %v28 = vld [vmem:[%s0 + $0x40] sm:$0xff]
  %v29 = vld [vmem:[%s0 + $0x48] sm:$0xff]
  %v30 = vld [vmem:[%s0 + $0x50] sm:$0xff]
  %v31 = vld [vmem:[%s0 + $0x58] sm:$0xff]
  %v32 = vld [vmem:[%s0 + $0x60] sm:$0xff]
  %v33 = vld [vmem:[%s0 + $0x68] sm:$0xff]
  %v34 = vld [vmem:[%s0 + $0x70] sm:$0xff]
  %v35 = vld [vmem:[%s0 + $0x78] sm:$0xff]
  %v36 = vld [vmem:[%s0 + $0x80] sm:$0xff]
  %v37 = vld [vmem:[%s0 + $0x88] sm:$0xff]
  %v38 = vld [vmem:[%s0 + $0x90] sm:$0xff]
  %v39 = vld [vmem:[%s0 + $0x98] sm:$0xff]
  %v40 = vld [vmem:[%s0 + $0xa0] sm:$0xff]
  %v41 = vld [vmem:[%s0 + $0xa8] sm:$0xff]
  %v42 = vld [vmem:[%s0 + $0xb0] sm:$0xff]
  %v43 = vld [vmem:[%s0 + $0xb8] sm:$0xff]
  %v44 = vld [vmem:[%s0 + $0xc0] sm:$0xff]
  %v45 = vld [vmem:[%s0 + $0xc8] sm:$0xff]
  %v46 = vld [vmem:[%s0 + $0xd0] sm:$0xff]
  %v47 = vld [vmem:[%s0 + $0xd8] sm:$0xff]
  %v48 = vld [vmem:[%s0 + $0xe0] sm:$0xff]
  %v49 = vld [vmem:[%s0 + $0xe8] sm:$0xff]
  %v50 = vld [vmem:[%s0 + $0xf0] sm:$0xff]
  %v51 = vld [vmem:[%s0 + $0xf8] sm:$0xff]
  %v52 = vld [vmem:[%s1] sm:$0xff]
  %v53 = vld [vmem:[%s1 + $0x8] sm:$0xff]
  %v54 = vld [vmem:[%s1 + $0x10] sm:$0xff]
  %v55 = vld [vmem:[%s1 + $0x18] sm:$0xff]
  %v56 = vld [vmem:[%s1 + $0x20] sm:$0xff]
  %v57 = vld [vmem:[%s1 + $0x28] sm:$0xff]
  %v58 = vld [vmem:[%s1 + $0x30] sm:$0xff]
  %v59 = vld [vmem:[%s1 + $0x38] sm:$0xff]
  %v60 = vld [vmem:[%s1 + $0x40] sm:$0xff]
  %v61 = vld [vmem:[%s1 + $0x48] sm:$0xff]
  %v62 = vld [vmem:[%s1 + $0x50] sm:$0xff]
  %v63 = vld [vmem:[%s1 + $0x58] sm:$0xff]
  %v64 = vld [vmem:[%s1 + $0x60] sm:$0xff]
  %v65 = vld [vmem:[%s1 + $0x68] sm:$0xff]
  %v66 = vld [vmem:[%s1 + $0x70] sm:$0xff]
  %v67 = vld [vmem:[%s1 + $0x78] sm:$0xff]
  %v68 = vld [vmem:[%s1 + $0x80] sm:$0xff]
  %v69 = vld [vmem:[%s1 + $0x88] sm:$0xff]
  %v70 = vld [vmem:[%s2] sm:$0x1]
  %v72 = vperm.slane %v70, 0
  %vm74 = vcmask 130048
  %v76 = vsel %vm74, %v21, 0
  %v79 = vsel %vm74, %v23, 0
  %v82 = vsel %vm74, %v25, 0
  %v85 = vsel %vm74, %v27, 0
  %v88 = vsel %vm74, %v29, 0
  %v91 = vsel %vm74, %v31, 0
  %v94 = vsel %vm74, %v33, 0
  %v97 = vsel %vm74, %v35, 0
  %v100 = vsel %vm74, %v37, 0
  %v103 = vsel %vm74, %v39, 0
  %v106 = vsel %vm74, %v41, 0
  %v109 = vsel %vm74, %v43, 0
  %v112 = vsel %vm74, %v45, 0
  %v115 = vsel %vm74, %v47, 0
  %v118 = vsel %vm74, %v49, 0
  %v121 = vsel %vm74, %v51, 0
  %123 = vmatpush.msra.mxu0 %v67
  %124 = vmatpush.msra.mxu0 %v66
  %125 = vmatpush.msra.mxu0 %v65
  %126 = vmatpush.msra.mxu0 %v64
  %127 = vmatpush.msra.mxu0 %v63
  %128 = vmatpush.msra.mxu0 %v62
  %129 = vmatpush.msra.mxu0 %v61
  %130 = vmatpush.msra.mxu0 %v60
  %131 = vmatpush.msra.mxu0 %v59
  %132 = vmatpush.msra.mxu0 %v58
  %133 = vmatpush.msra.mxu0 %v57
  %134 = vmatpush.msra.mxu0 %v56
  %135 = vmatpush.msra.mxu0 %v55
  %136 = vmatpush.msra.mxu0 %v54
  %137 = vmatpush.msra.mxu0 %v53
  %138 = vmatpush.msra.mxu0 %v52
  %139 = vmatmul.f32.gmra.mxu0 %v20
  %v140 = vpop.f32.mrf.mxu0
  %v141 = vadd.f32 %v72, %v140
  %142 = vmatmul.f32.gmra.mxu0 %v22
  %v143 = vpop.f32.mrf.mxu0
  %v144 = vadd.f32 %v72, %v143
  %145 = vmatmul.f32.gmra.mxu0 %v24
  %v146 = vpop.f32.mrf.mxu0
  %v147 = vadd.f32 %v72, %v146
  %148 = vmatmul.f32.gmra.mxu0 %v26
  %v149 = vpop.f32.mrf.mxu0
  %v150 = vadd.f32 %v72, %v149
  %151 = vmatmul.f32.gmra.mxu0 %v28
  %v152 = vpop.f32.mrf.mxu0
  %v153 = vadd.f32 %v72, %v152
  %154 = vmatmul.f32.gmra.mxu0 %v30
  %v155 = vpop.f32.mrf.mxu0
  %v156 = vadd.f32 %v72, %v155
  %157 = vmatmul.f32.gmra.mxu0 %v32
  %v158 = vpop.f32.mrf.mxu0
  %v159 = vadd.f32 %v72, %v158
  %160 = vmatmul.f32.gmra.mxu0 %v34
  %v161 = vpop.f32.mrf.mxu0
  %v162 = vadd.f32 %v72, %v161
  %163 = vmatmul.f32.gmra.mxu0 %v36
  %v164 = vpop.f32.mrf.mxu0
  %v165 = vadd.f32 %v72, %v164
  %166 = vmatmul.f32.gmra.mxu0 %v38
  %v167 = vpop.f32.mrf.mxu0
  %v168 = vadd.f32 %v72, %v167
  %169 = vmatmul.f32.gmra.mxu0 %v40
  %v170 = vpop.f32.mrf.mxu0
  %v171 = vadd.f32 %v72, %v170
  %172 = vmatmul.f32.gmra.mxu0 %v42
  %v173 = vpop.f32.mrf.mxu0
  %v174 = vadd.f32 %v72, %v173
  %175 = vmatmul.f32.gmra.mxu0 %v44
  %v176 = vpop.f32.mrf.mxu0
  %v177 = vadd.f32 %v72, %v176
  %178 = vmatmul.f32.gmra.mxu0 %v46
  %v179 = vpop.f32.mrf.mxu0
  %v180 = vadd.f32 %v72, %v179
  %181 = vmatmul.f32.gmra.mxu0 %v48
  %v182 = vpop.f32.mrf.mxu0
  %v183 = vadd.f32 %v72, %v182
  %184 = vmatmul.f32.gmra.mxu0 %v50
  %v185 = vpop.f32.mrf.mxu0
  %v186 = vadd.f32 %v72, %v185
  %187 = vdwg.mxu0
  %188 = vmatpush.msra.mxu0 0.0
  %189 = vmatpush.msra.mxu0 0.0
  %190 = vmatpush.msra.mxu0 0.0
  %191 = vmatpush.msra.mxu0 0.0
  %192 = vmatpush.msra.mxu0 0.0
  %193 = vmatpush.msra.mxu0 0.0
  %194 = vmatpush.msra.mxu0 0.0
  %195 = vmatpush.msra.mxu0 0.0
  %196 = vmatpush.msra.mxu0 0.0
  %197 = vmatpush.msra.mxu0 0.0
  %198 = vmatpush.msra.mxu0 0.0
  %199 = vmatpush.msra.mxu0 0.0
  %200 = vmatpush.msra.mxu0 0.0
  %201 = vmatpush.msra.mxu0 0.0
  %202 = vmatpush.msra.mxu0 %v69
  %203 = vmatpush.msra.mxu0 %v68
  %204 = vmatmul.f32.gmra.mxu0 %v76
  %v205 = vpop.f32.mrf.mxu0
  %v206 = vadd.f32 %v141, %v205
  %207 = vmatmul.f32.gmra.mxu0 %v79
  %v208 = vpop.f32.mrf.mxu0
  %v209 = vadd.f32 %v144, %v208
  %210 = vmatmul.f32.gmra.mxu0 %v82
  %v211 = vpop.f32.mrf.mxu0
  %v212 = vadd.f32 %v147, %v211
  %213 = vmatmul.f32.gmra.mxu0 %v85
  %v214 = vpop.f32.mrf.mxu0
  %v215 = vadd.f32 %v150, %v214
  %216 = vmatmul.f32.gmra.mxu0 %v88
  %v217 = vpop.f32.mrf.mxu0
  %v218 = vadd.f32 %v153, %v217
  %219 = vmatmul.f32.gmra.mxu0 %v91
  %v220 = vpop.f32.mrf.mxu0
  %v221 = vadd.f32 %v156, %v220
  %222 = vmatmul.f32.gmra.mxu0 %v94
  %v223 = vpop.f32.mrf.mxu0
  %v224 = vadd.f32 %v159, %v223
  %225 = vmatmul.f32.gmra.mxu0 %v97
  %v226 = vpop.f32.mrf.mxu0
  %v227 = vadd.f32 %v162, %v226
  %228 = vmatmul.f32.gmra.mxu0 %v100
  %v229 = vpop.f32.mrf.mxu0
  %v230 = vadd.f32 %v165, %v229
  %231 = vmatmul.f32.gmra.mxu0 %v103
  %v232 = vpop.f32.mrf.mxu0
  %v233 = vadd.f32 %v168, %v232
  %234 = vmatmul.f32.gmra.mxu0 %v106
  %v235 = vpop.f32.mrf.mxu0
  %v236 = vadd.f32 %v171, %v235
  %237 = vmatmul.f32.gmra.mxu0 %v109
  %v238 = vpop.f32.mrf.mxu0
  %v239 = vadd.f32 %v174, %v238
  %240 = vmatmul.f32.gmra.mxu0 %v112
  %v241 = vpop.f32.mrf.mxu0
  %v242 = vadd.f32 %v177, %v241
  %243 = vmatmul.f32.gmra.mxu0 %v115
  %v244 = vpop.f32.mrf.mxu0
  %v245 = vadd.f32 %v180, %v244
  %246 = vmatmul.f32.gmra.mxu0 %v118
  %v247 = vpop.f32.mrf.mxu0
  %v248 = vadd.f32 %v183, %v247
  %249 = vmatmul.f32.gmra.mxu0 %v121
  %v250 = vpop.f32.mrf.mxu0
  %v251 = vadd.f32 %v186, %v250
  %252 = vdwg.mxu0
  %vm253 = vcmask 261120
  %v254 = vsel %vm253, %v206, 0.0
  %v255 = vsel %vm253, %v209, 0.0
  %v256 = vadd.f32 %v254, %v255
  %v257 = vsel %vm253, %v212, 0.0
  %v258 = vadd.f32 %v256, %v257
  %v259 = vsel %vm253, %v215, 0.0
  %v260 = vadd.f32 %v258, %v259
  %v261 = vsel %vm253, %v218, 0.0
  %v262 = vadd.f32 %v260, %v261
  %v263 = vsel %vm253, %v221, 0.0
  %v264 = vadd.f32 %v262, %v263
  %v265 = vsel %vm253, %v224, 0.0
  %v266 = vadd.f32 %v264, %v265
  %v267 = vsel %vm253, %v227, 0.0
  %v268 = vadd.f32 %v266, %v267
  %v269 = vsel %vm253, %v230, 0.0
  %v270 = vadd.f32 %v268, %v269
  %v271 = vsel %vm253, %v233, 0.0
  %v272 = vadd.f32 %v270, %v271
  %v273 = vsel %vm253, %v236, 0.0
  %v274 = vadd.f32 %v272, %v273
  %v275 = vsel %vm253, %v239, 0.0
  %v276 = vadd.f32 %v274, %v275
  %v277 = vsel %vm253, %v242, 0.0
  %v278 = vadd.f32 %v276, %v277
  %v279 = vsel %vm253, %v245, 0.0
  %v280 = vadd.f32 %v278, %v279
  %v281 = vsel %vm253, %v248, 0.0
  %v282 = vadd.f32 %v280, %v281
  %v283 = vsel %vm253, %v251, 0.0
  %v284 = vadd.f32 %v282, %v283
  %v285 = vrot.slane %v284, 4
  %v286 = vadd.f32 %v284, %v285
  %v287 = vrot.slane %v286, 2
  %v288 = vadd.f32 %v286, %v287
  %v289 = vrot.slane %v288, 1
  %v290 = vadd.f32 %v288, %v289
  %v291 = vrcp.pop 128.0
  %v292 = vmul.f32 128.0, %v291
  %v293 = vsub.f32 1.0, %v292
  %v294 = vmul.f32 %v291, %v293
  %v295 = vadd.f32 %v291, %v294
  %vm296 = vweird.f32 %v291
  %v297 = vsel %vm296, %v291, %v295
  %v298 = vmul.f32 %v290, %v297
  %v299 = vsub.f32 %v206, %v298
  %v300 = vsub.f32 %v209, %v298
  %v301 = vsub.f32 %v212, %v298
  %v302 = vsub.f32 %v215, %v298
  %v303 = vsub.f32 %v218, %v298
  %v304 = vsub.f32 %v221, %v298
  %v305 = vsub.f32 %v224, %v298
  %v306 = vsub.f32 %v227, %v298
  %v307 = vsub.f32 %v230, %v298
  %v308 = vsub.f32 %v233, %v298
  %v309 = vsub.f32 %v236, %v298
  %v310 = vsub.f32 %v239, %v298
  %v311 = vsub.f32 %v242, %v298
  %v312 = vsub.f32 %v245, %v298
  %v313 = vsub.f32 %v248, %v298
  %v314 = vsub.f32 %v251, %v298
  %v315 = vmul.f32 %v299, %v299
  %v316 = vmul.f32 %v300, %v300
  %v317 = vmul.f32 %v301, %v301
  %v318 = vmul.f32 %v302, %v302
  %v319 = vmul.f32 %v303, %v303
  %v320 = vmul.f32 %v304, %v304
  %v321 = vmul.f32 %v305, %v305
  %v322 = vmul.f32 %v306, %v306
  %v323 = vmul.f32 %v307, %v307
  %v324 = vmul.f32 %v308, %v308
  %v325 = vmul.f32 %v309, %v309
  %v326 = vmul.f32 %v310, %v310
  %v327 = vmul.f32 %v311, %v311
  %v328 = vmul.f32 %v312, %v312
  %v329 = vmul.f32 %v313, %v313
  %v330 = vmul.f32 %v314, %v314
  %v331 = vsel %vm253, %v315, 0.0
  %v332 = vsel %vm253, %v316, 0.0
  %v333 = vadd.f32 %v331, %v332
  %v334 = vsel %vm253, %v317, 0.0
  %v335 = vadd.f32 %v333, %v334
  %v336 = vsel %vm253, %v318, 0.0
  %v337 = vadd.f32 %v335, %v336
  %v338 = vsel %vm253, %v319, 0.0
  %v339 = vadd.f32 %v337, %v338
  %v340 = vsel %vm253, %v320, 0.0
  %v341 = vadd.f32 %v339, %v340
  %v342 = vsel %vm253, %v321, 0.0
  %v343 = vadd.f32 %v341, %v342
  %v344 = vsel %vm253, %v322, 0.0
  %v345 = vadd.f32 %v343, %v344
  %v346 = vsel %vm253, %v323, 0.0
  %v347 = vadd.f32 %v345, %v346
  %v348 = vsel %vm253, %v324, 0.0
  %v349 = vadd.f32 %v347, %v348
  %v350 = vsel %vm253, %v325, 0.0
  %v351 = vadd.f32 %v349, %v350
  %v352 = vsel %vm253, %v326, 0.0
  %v353 = vadd.f32 %v351, %v352
  %v354 = vsel %vm253, %v327, 0.0
  %v355 = vadd.f32 %v353, %v354
  %v356 = vsel %vm253, %v328, 0.0
  %v357 = vadd.f32 %v355, %v356
  %v358 = vsel %vm253, %v329, 0.0
  %v359 = vadd.f32 %v357, %v358
  %v360 = vsel %vm253, %v330, 0.0
  %v361 = vadd.f32 %v359, %v360
  %v362 = vrot.slane %v361, 4
  %v363 = vadd.f32 %v361, %v362
  %v364 = vrot.slane %v363, 2
  %v365 = vadd.f32 %v363, %v364
  %v366 = vrot.slane %v365, 1
  %v367 = vadd.f32 %v365, %v366
  %v368 = vmul.f32 %v367, %v297
  %v369 = vld [vmem:[%s3] sm:$0x1]
  %v370 = vadd.f32 %v368, 1e-05
  %v371 = vrsqrt.pop %v370
  %v372 = vmul.f32 %v371, %v370
  %v373 = vmul.f32 %v372, %v371
  %v374 = vmul.f32 0.5, %v373
  %v375 = vsub.f32 1.5, %v374
  %v376 = vmul.f32 %v371, %v375
  %vm377 = vweird.f32 %v370
  %vm378 = vweird.f32 %v371
  %vm379 = vmor %vm377, %vm378
  %v380 = vsel %vm379, %v371, %v376
  %v381 = vmul.f32 %v369, %v380
  %v383 = vperm.slane %v381, 0
  %v385 = vmul.f32 %v299, %v383
  %v386 = vmul.f32 %v300, %v383
  %v387 = vmul.f32 %v301, %v383
  %v388 = vmul.f32 %v302, %v383
  %v389 = vmul.f32 %v303, %v383
  %v390 = vmul.f32 %v304, %v383
  %v391 = vmul.f32 %v305, %v383
  %v392 = vmul.f32 %v306, %v383
  %v393 = vmul.f32 %v307, %v383
  %v394 = vmul.f32 %v308, %v383
  %v395 = vmul.f32 %v309, %v383
  %v396 = vmul.f32 %v310, %v383
  %v397 = vmul.f32 %v311, %v383
  %v398 = vmul.f32 %v312, %v383
  %v399 = vmul.f32 %v313, %v383
  %v400 = vmul.f32 %v314, %v383
  %v401 = vld [vmem:[%s4] sm:$0x1]
  %v403 = vperm.slane %v401, 0
  %v405 = vadd.f32 %v385, %v403
  %v406 = vadd.f32 %v386, %v403
  %v407 = vadd.f32 %v387, %v403
  %v408 = vadd.f32 %v388, %v403
  %v409 = vadd.f32 %v389, %v403
  %v410 = vadd.f32 %v390, %v403
  %v411 = vadd.f32 %v391, %v403
  %v412 = vadd.f32 %v392, %v403
  %v413 = vadd.f32 %v393, %v403
  %v414 = vadd.f32 %v394, %v403
  %v415 = vadd.f32 %v395, %v403
  %v416 = vadd.f32 %v396, %v403
  %v417 = vadd.f32 %v397, %v403
  %v418 = vadd.f32 %v398, %v403
  %v419 = vadd.f32 %v399, %v403
  %v420 = vadd.f32 %v400, %v403
  %v421 = vmax.f32 %v405, 0.0
  %v422 = vmax.f32 %v406, 0.0
  %v423 = vmax.f32 %v407, 0.0
  %v424 = vmax.f32 %v408, 0.0
  %v425 = vmax.f32 %v409, 0.0
  %v426 = vmax.f32 %v410, 0.0
  %v427 = vmax.f32 %v411, 0.0
  %v428 = vmax.f32 %v412, 0.0
  %v429 = vmax.f32 %v413, 0.0
  %v430 = vmax.f32 %v414, 0.0
  %v431 = vmax.f32 %v415, 0.0
  %v432 = vmax.f32 %v416, 0.0
  %v433 = vmax.f32 %v417, 0.0
  %v434 = vmax.f32 %v418, 0.0
  %v435 = vmax.f32 %v419, 0.0
  %v436 = vmax.f32 %v420, 0.0
  %437 = vst.msk [vmem:[%s5] sm:$0xff] %vm253, %v421
  %438 = vst.msk [vmem:[%s5 + $0x8] sm:$0xff] %vm253, %v422
  %439 = vst.msk [vmem:[%s5 + $0x10] sm:$0xff] %vm253, %v423
  %440 = vst.msk [vmem:[%s5 + $0x18] sm:$0xff] %vm253, %v424
  %441 = vst.msk [vmem:[%s5 + $0x20] sm:$0xff] %vm253, %v425
  %442 = vst.msk [vmem:[%s5 + $0x28] sm:$0xff] %vm253, %v426
  %443 = vst.msk [vmem:[%s5 + $0x30] sm:$0xff] %vm253, %v427
  %444 = vst.msk [vmem:[%s5 + $0x38] sm:$0xff] %vm253, %v428
  %445 = vst.msk [vmem:[%s5 + $0x40] sm:$0xff] %vm253, %v429
  %446 = vst.msk [vmem:[%s5 + $0x48] sm:$0xff] %vm253, %v430
  %447 = vst.msk [vmem:[%s5 + $0x50] sm:$0xff] %vm253, %v431
  %448 = vst.msk [vmem:[%s5 + $0x58] sm:$0xff] %vm253, %v432
  %449 = vst.msk [vmem:[%s5 + $0x60] sm:$0xff] %vm253, %v433
  %450 = vst.msk [vmem:[%s5 + $0x68] sm:$0xff] %vm253, %v434
  %451 = vst.msk [vmem:[%s5 + $0x70] sm:$0xff] %vm253, %v435
  %452 = vst.msk [vmem:[%s5 + $0x78] sm:$0xff] %vm253, %v436
  // Predicated region
  $region22: #{generator_forward.11} parent=0 // pred_check
    _
  $region23: #{generator_forward.11} parent=0 // pred_check_branch
    %454 = sbr.rel (0) target = $region25
  $region24: #{generator_forward.11} parent=0 // pred_region
    _
  $region25: #{generator_forward.11} parent=0 // pred_fallthru
    _
  // Predicated region
  $region26: #{generator_forward.11} parent=0 // pred_check
    _
  $region27: #{generator_forward.11} parent=0 // pred_check_branch
    %456 = sbr.rel (0) target = $region29
  $region28: #{generator_forward.11} parent=0 // pred_region
    _
  $region29: #{generator_forward.11} parent=0 // pred_fallthru
    _

// kernel: generator_forward.12
$region0: #{generator_forward.12}
  #allocation0 [shape = 'u32[]', space=smem, size = 0x4, offset = 0x4, fixed_abs, tag = 'smem constant byte address 0x4 - core index']
  #allocation1 [shape = 'u32[72,128]{1,0:T(1,128)}', space=vmem, size = 0x9000, scoped, tag = 'internal scratch']
  %s0 = inlined_call_operand.vmem [shape: f32[32,32], index: 0, kind: input, shape index: {}]
  %s1 = inlined_call_operand.vmem [shape: f32[32,32], index: 1, kind: input, shape index: {}]
  %s2 = inlined_call_operand.vmem [shape: f32[1,32], index: 2, kind: input, shape index: {}]
  %s3 = inlined_call_operand.vmem [shape: f32[32,32], index: 3, kind: output, shape index: {}]
  %s4 = sld [smem:[#allocation0]]
  $region22: #{generator_forward.12} parent=0
    _
  %s6 = ssub.s32 1, %s4
  %s7 = scalar_select 0, %s6, %s4
  // Predicated region
  $region2: #{generator_forward.12} parent=0 // pred_check
    _
  $region3: #{generator_forward.12} parent=0 // pred_check_branch
    %9 = sbr.rel (0) target = $region5
  $region4: #{generator_forward.12} parent=0 // pred_region
    _
  $region5: #{generator_forward.12} parent=0 // pred_fallthru
    _
  // Predicated region
  $region6: #{generator_forward.12} parent=0 // pred_check
    _
  $region7: #{generator_forward.12} parent=0 // pred_check_branch
    %11 = sbr.rel (0) target = $region9
  $region8: #{generator_forward.12} parent=0 // pred_region
    _
  $region9: #{generator_forward.12} parent=0 // pred_fallthru
    _
  // Predicated region
  $region10: #{generator_forward.12} parent=0 // pred_check
    _
  $region11: #{generator_forward.12} parent=0 // pred_check_branch
    %13 = sbr.rel (0) target = $region13
  $region12: #{generator_forward.12} parent=0 // pred_region
    _
  $region13: #{generator_forward.12} parent=0 // pred_fallthru
    _
  %v14 = vld [vmem:[%s0] sm:$0xff]
  %v15 = vld [vmem:[%s0 + $0x8] sm:$0xff]
  %v16 = vld [vmem:[%s0 + $0x10] sm:$0xff]
  %v17 = vld [vmem:[%s0 + $0x18] sm:$0xff]
  %v18 = vld [vmem:[%s1] sm:$0xff]
  %v19 = vld [vmem:[%s1 + $0x8] sm:$0xff]
  %v20 = vld [vmem:[%s1 + $0x10] sm:$0xff]
  %v21 = vld [vmem:[%s1 + $0x18] sm:$0xff]
  %v22 = vld [vmem:[%s2] sm:$0x1]
  %v24 = vperm.slane %v22, 0
  %vm26 = vcmask 261120
  %v28 = vsel %vm26, %v14, 0
  %v31 = vsel %vm26, %v15, 0
  %v34 = vsel %vm26, %v16, 0
  %v37 = vsel %vm26, %v17, 0
  %39 = vmatpush.msra.mxu0 0.0
  %40 = vmatpush.msra.mxu0 0.0
  %41 = vmatpush.msra.mxu0 0.0
  %42 = vmatpush.msra.mxu0 0.0
  %43 = vmatpush.msra.mxu0 0.0
  %44 = vmatpush.msra.mxu0 0.0
  %45 = vmatpush.msra.mxu0 0.0
  %46 = vmatpush.msra.mxu0 0.0
  %47 = vmatpush.msra.mxu0 0.0
  %48 = vmatpush.msra.mxu0 0.0
  %49 = vmatpush.msra.mxu0 0.0
  %50 = vmatpush.msra.mxu0 0.0
  %51 = vmatpush.msra.mxu0 %v21
  %52 = vmatpush.msra.mxu0 %v20
  %53 = vmatpush.msra.mxu0 %v19
  %54 = vmatpush.msra.mxu0 %v18
  %55 = vmatmul.f32.gmra.mxu0 %v28
  %v56 = vpop.f32.mrf.mxu0
  %v57 = vadd.f32 %v24, %v56
  %58 = vmatmul.f32.gmra.mxu0 %v31
  %v59 = vpop.f32.mrf.mxu0
  %v60 = vadd.f32 %v24, %v59
  %61 = vmatmul.f32.gmra.mxu0 %v34
  %v62 = vpop.f32.mrf.mxu0
  %v63 = vadd.f32 %v24, %v62
  %64 = vmatmul.f32.gmra.mxu0 %v37
  %v65 = vpop.f32.mrf.mxu0
  %v66 = vadd.f32 %v24, %v65
  %67 = vdwg.mxu0
  %68 = vst.msk [vmem:[%s3] sm:$0xff] %vm26, %v57
  %69 = vst.msk [vmem:[%s3 + $0x8] sm:$0xff] %vm26, %v60
  %70 = vst.msk [vmem:[%s3 + $0x10] sm:$0xff] %vm26, %v63
  %71 = vst.msk [vmem:[%s3 + $0x18] sm:$0xff] %vm26, %v66
  // Predicated region
  $region14: #{generator_forward.12} parent=0 // pred_check
    _
  $region15: #{generator_forward.12} parent=0 // pred_check_branch
    %73 = sbr.rel (0) target = $region17
  $region16: #{generator_forward.12} parent=0 // pred_region
    _
  $region17: #{generator_forward.12} parent=0 // pred_fallthru
    _
  // Predicated region
  $region18: #{generator_forward.12} parent=0 // pred_check
    _
  $region19: #{generator_forward.12} parent=0 // pred_check_branch
    %75 = sbr.rel (0) target = $region21
  $region20: #{generator_forward.12} parent=0 // pred_region
    _
  $region21: #{generator_forward.12} parent=0 // pred_fallthru
    _

// kernel: generator_forward.13
$region0: #{generator_forward.13}
  #allocation0 [shape = 'u32[]', space=smem, size = 0x4, offset = 0x4, fixed_abs, tag = 'smem constant byte address 0x4 - core index']
  #allocation1 [shape = 'u32[72,128]{1,0:T(1,128)}', space=vmem, size = 0x9000, scoped, tag = 'internal scratch']
  %s0 = inlined_call_operand.vmem [shape: f32[32,288], index: 0, kind: input, shape index: {}]
  %s1 = inlined_call_operand.vmem [shape: f32[288,32], index: 1, kind: input, shape index: {}]
  %s2 = inlined_call_operand.vmem [shape: f32[1,32], index: 2, kind: input, shape index: {}]
  %s3 = inlined_call_operand.vmem [shape: f32[1,32], index: 3, kind: input, shape index: {}]
  %s4 = inlined_call_operand.vmem [shape: f32[1,32], index: 4, kind: input, shape index: {}]
  %s5 = inlined_call_operand.vmem [shape: f32[32,32], index: 5, kind: output, shape index: {}]
  %s6 = sld [smem:[#allocation0]]
  $region30: #{generator_forward.13} parent=0
    _
  %s8 = ssub.s32 1, %s6
  %s9 = scalar_select 0, %s8, %s6
  // Predicated region
  $region2: #{generator_forward.13} parent=0 // pred_check
    _
  $region3: #{generator_forward.13} parent=0 // pred_check_branch
    %11 = sbr.rel (0) target = $region5
  $region4: #{generator_forward.13} parent=0 // pred_region
    _
  $region5: #{generator_forward.13} parent=0 // pred_fallthru
    _
  // Predicated region
  $region6: #{generator_forward.13} parent=0 // pred_check
    _
  $region7: #{generator_forward.13} parent=0 // pred_check_branch
    %13 = sbr.rel (0) target = $region9
  $region8: #{generator_forward.13} parent=0 // pred_region
    _
  $region9: #{generator_forward.13} parent=0 // pred_fallthru
    _
  // Predicated region
  $region10: #{generator_forward.13} parent=0 // pred_check
    _
  $region11: #{generator_forward.13} parent=0 // pred_check_branch
    %15 = sbr.rel (0) target = $region13
  $region12: #{generator_forward.13} parent=0 // pred_region
    _
  $region13: #{generator_forward.13} parent=0 // pred_fallthru
    _
  // Predicated region
  $region14: #{generator_forward.13} parent=0 // pred_check
    _
  $region15: #{generator_forward.13} parent=0 // pred_check_branch
    %17 = sbr.rel (0) target = $region17
  $region16: #{generator_forward.13} parent=0 // pred_region
    _
  $region17: #{generator_forward.13} parent=0 // pred_fallthru
    _
  // Predicated region
  $region18: #{generator_forward.13} parent=0 // pred_check
    _
  $region19: #{generator_forward.13} parent=0 // pred_check_branch
    %19 = sbr.rel (0) target = $region21
  $region20: #{generator_forward.13} parent=0 // pred_region
    _
  $region21: #{generator_forward.13} parent=0 // pred_fallthru
    _
  %v20 = vld [vmem:[%s0] sm:$0xff]
  %v21 = vld [vmem:[%s0 + $0x8] sm:$0xff]
  %v22 = vld [vmem:[%s0 + $0x10] sm:$0xff]
  %v23 = vld [vmem:[%s0 + $0x18] sm:$0xff]
  %v24 = vld [vmem:[%s0 + $0x20] sm:$0xff]
  %v25 = vld [vmem:[%s0 + $0x28] sm:$0xff]
  %v26 = vld [vmem:[%s0 + $0x30] sm:$0xff]
  %v27 = vld [vmem:[%s0 + $0x38] sm:$0xff]
  %v28 = vld [vmem:[%s0 + $0x40] sm:$0xff]
  %v29 = vld [vmem:[%s0 + $0x48] sm:$0xff]
  %v30 = vld [vmem:[%s0 + $0x50] sm:$0xff]
  %v31 = vld [vmem:[%s0 + $0x58] sm:$0xff]
  %v32 = vld [vmem:[%s1] sm:$0xff]
  %v33 = vld [vmem:[%s1 + $0x8] sm:$0xff]
  %v34 = vld [vmem:[%s1 + $0x10] sm:$0xff]
  %v35 = vld [vmem:[%s1 + $0x18] sm:$0xff]
  %v36 = vld [vmem:[%s1 + $0x20] sm:$0xff]
  %v37 = vld [vmem:[%s1 + $0x28] sm:$0xff]
  %v38 = vld [vmem:[%s1 + $0x30] sm:$0xff]
  %v39 = vld [vmem:[%s1 + $0x38] sm:$0xff]
  %v40 = vld [vmem:[%s1 + $0x40] sm:$0xff]
  %v41 = vld [vmem:[%s1 + $0x48] sm:$0xff]
  %v42 = vld [vmem:[%s1 + $0x50] sm:$0xff]
  %v43 = vld [vmem:[%s1 + $0x58] sm:$0xff]
  %v44 = vld [vmem:[%s1 + $0x60] sm:$0xff]
  %v45 = vld [vmem:[%s1 + $0x68] sm:$0xff]
  %v46 = vld [vmem:[%s1 + $0x70] sm:$0xff]
  %v47 = vld [vmem:[%s1 + $0x78] sm:$0xff]
  %v48 = vld [vmem:[%s1 + $0x80] sm:$0xff]
  %v49 = vld [vmem:[%s1 + $0x88] sm:$0xff]
  %v50 = vld [vmem:[%s1 + $0x90] sm:$0xff]
  %v51 = vld [vmem:[%s1 + $0x98] sm:$0xff]
  %v52 = vld [vmem:[%s1 + $0xa0] sm:$0xff]
  %v53 = vld [vmem:[%s1 + $0xa8] sm:$0xff]
  %v54 = vld [vmem:[%s1 + $0xb0] sm:$0xff]
  %v55 = vld [vmem:[%s1 + $0xb8] sm:$0xff]
  %v56 = vld [vmem:[%s1 + $0xc0] sm:$0xff]
  %v57 = vld [vmem:[%s1 + $0xc8] sm:$0xff]
  %v58 = vld [vmem:[%s1 + $0xd0] sm:$0xff]
  %v59 = vld [vmem:[%s1 + $0xd8] sm:$0xff]
  %v60 = vld [vmem:[%s1 + $0xe0] sm:$0xff]
  %v61 = vld [vmem:[%s1 + $0xe8] sm:$0xff]
  %v62 = vld [vmem:[%s1 + $0xf0] sm:$0xff]
  %v63 = vld [vmem:[%s1 + $0xf8] sm:$0xff]
  %v64 = vld [vmem:[%s1 + $0x100] sm:$0xff]
  %v65 = vld [vmem:[%s1 + $0x108] sm:$0xff]
  %v66 = vld [vmem:[%s1 + $0x110] sm:$0xff]
  %v67 = vld [vmem:[%s1 + $0x118] sm:$0xff]
  %v68 = vld [vmem:[%s2] sm:$0x1]
  %v70 = vperm.slane %v68, 0
  %vm72 = vcmask 261120
  %v74 = vsel %vm72, %v22, 0
  %v77 = vsel %vm72, %v25, 0
  %v80 = vsel %vm72, %v28, 0
  %v83 = vsel %vm72, %v31, 0
  %85 = vmatpush.msra.mxu0 %v47
  %86 = vmatpush.msra.mxu0 %v46
  %87 = vmatpush.msra.mxu0 %v45
  %88 = vmatpush.msra.mxu0 %v44
  %89 = vmatpush.msra.mxu0 %v43
  %90 = vmatpush.msra.mxu0 %v42
  %91 = vmatpush.msra.mxu0 %v41
  %92 = vmatpush.msra.mxu0 %v40
  %93 = vmatpush.msra.mxu0 %v39
  %94 = vmatpush.msra.mxu0 %v38
  %95 = vmatpush.msra.mxu0 %v37
  %96 = vmatpush.msra.mxu0 %v36
  %97 = vmatpush.msra.mxu0 %v35
  %98 = vmatpush.msra.mxu0 %v34
  %99 = vmatpush.msra.mxu0 %v33
  %100 = vmatpush.msra.mxu0 %v32
  %101 = vmatmul.f32.gmra.mxu0 %v20
  %v102 = vpop.f32.mrf.mxu0
  %v103 = vadd.f32 %v70, %v102
  %104 = vmatmul.f32.gmra.mxu0 %v23
  %v105 = vpop.f32.mrf.mxu0
  %v106 = vadd.f32 %v70, %v105
  %107 = vmatmul.f32.gmra.mxu0 %v26
  %v108 = vpop.f32.mrf.mxu0
  %v109 = vadd.f32 %v70, %v108
  %110 = vmatmul.f32.gmra.mxu0 %v29
  %v111 = vpop.f32.mrf.mxu0
  %v112 = vadd.f32 %v70, %v111
  %113 = vdwg.mxu0
  %114 = vmatpush.msra.mxu0 %v63
  %115 = vmatpush.msra.mxu0 %v62
  %116 = vmatpush.msra.mxu0 %v61
  %117 = vmatpush.msra.mxu0 %v60
  %118 = vmatpush.msra.mxu0 %v59
  %119 = vmatpush.msra.mxu0 %v58
  %120 = vmatpush.msra.mxu0 %v57
  %121 = vmatpush.msra.mxu0 %v56
  %122 = vmatpush.msra.mxu0 %v55
  %123 = vmatpush.msra.mxu0 %v54
  %124 = vmatpush.msra.mxu0 %v53
  %125 = vmatpush.msra.mxu0 %v52
  %126 = vmatpush.msra.mxu0 %v51
  %127 = vmatpush.msra.mxu0 %v50
  %128 = vmatpush.msra.mxu0 %v49
  %129 = vmatpush.msra.mxu0 %v48
  %130 = vmatmul.f32.gmra.mxu0 %v21
  %v131 = vpop.f32.mrf.mxu0
  %v132 = vadd.f32 %v103, %v131
  %133 = vmatmul.f32.gmra.mxu0 %v24
  %v134 = vpop.f32.mrf.mxu0
  %v135 = vadd.f32 %v106, %v134
  %136 = vmatmul.f32.gmra.mxu0 %v27
  %v137 = vpop.f32.mrf.mxu0
  %v138 = vadd.f32 %v109, %v137
  %139 = vmatmul.f32.gmra.mxu0 %v30
  %v140 = vpop.f32.mrf.mxu0
  %v141 = vadd.f32 %v112, %v140
  %142 = vdwg.mxu0
  %143 = vmatpush.msra.mxu0 0.0
  %144 = vmatpush.msra.mxu0 0.0
  %145 = vmatpush.msra.mxu0 0.0
  %146 = vmatpush.msra.mxu0 0.0
  %147 = vmatpush.msra.mxu0 0.0
  %148 = vmatpush.msra.mxu0 0.0
  %149 = vmatpush.msra.mxu0 0.0
  %150 = vmatpush.msra.mxu0 0.0
  %151 = vmatpush.msra.mxu0 0.0
  %152 = vmatpush.msra.mxu0 0.0
  %153 = vmatpush.msra.mxu0 0.0
  %154 = vmatpush.msra.mxu0 0.0
  %155 = vmatpush.msra.mxu0 %v67
  %156 = vmatpush.msra.mxu0 %v66
  %157 = vmatpush.msra.mxu0 %v65
  %158 = vmatpush.msra.mxu0 %v64
  %159 = vmatmul.f32.gmra.mxu0 %v74
  %v160 = vpop.f32.mrf.mxu0
  %v161 = vadd.f32 %v132, %v160
  %162 = vmatmul.f32.gmra.mxu0 %v77
  %v163 = vpop.f32.mrf.mxu0
  %v164 = vadd.f32 %v135, %v163
  %165 = vmatmul.f32.gmra.mxu0 %v80
  %v166 = vpop.f32.mrf.mxu0
  %v167 = vadd.f32 %v138, %v166
  %168 = vmatmul.f32.gmra.mxu0 %v83
  %v169 = vpop.f32.mrf.mxu0
  %v170 = vadd.f32 %v141, %v169
  %171 = vdwg.mxu0
  %v172 = vsel %vm72, %v161, 0.0
  %v173 = vsel %vm72, %v164, 0.0
  %v174 = vadd.f32 %v172, %v173
  %v175 = vsel %vm72, %v167, 0.0
  %v176 = vadd.f32 %v174, %v175
  %v177 = vsel %vm72, %v170, 0.0
  %v178 = vadd.f32 %v176, %v177
  %v179 = vrot.slane %v178, 4
  %v180 = vadd.f32 %v178, %v179
  %v181 = vrot.slane %v180, 2
  %v182 = vadd.f32 %v180, %v181
  %v183 = vrot.slane %v182, 1
  %v184 = vadd.f32 %v182, %v183
  %v185 = vrcp.pop 32.0
  %v186 = vmul.f32 32.0, %v185
  %v187 = vsub.f32 1.0, %v186
  %v188 = vmul.f32 %v185, %v187
  %v189 = vadd.f32 %v185, %v188
  %vm190 = vweird.f32 %v185
  %v191 = vsel %vm190, %v185, %v189
  %v192 = vmul.f32 %v184, %v191
  %v193 = vsub.f32 %v161, %v192
  %v194 = vsub.f32 %v164, %v192
  %v195 = vsub.f32 %v167, %v192
  %v196 = vsub.f32 %v170, %v192
  %v197 = vmul.f32 %v193, %v193
  %v198 = vmul.f32 %v194, %v194
  %v199 = vmul.f32 %v195, %v195
  %v200 = vmul.f32 %v196, %v196
  %v201 = vsel %vm72, %v197, 0.0
  %v202 = vsel %vm72, %v198, 0.0
  %v203 = vadd.f32 %v201, %v202
  %v204 = vsel %vm72, %v199, 0.0
  %v205 = vadd.f32 %v203, %v204
  %v206 = vsel %vm72, %v200, 0.0
  %v207 = vadd.f32 %v205, %v206
  %v208 = vrot.slane %v207, 4
  %v209 = vadd.f32 %v207, %v208
  %v210 = vrot.slane %v209, 2
  %v211 = vadd.f32 %v209, %v210
  %v212 = vrot.slane %v211, 1
  %v213 = vadd.f32 %v211, %v212
  %v214 = vmul.f32 %v213, %v191
  %v215 = vld [vmem:[%s3] sm:$0x1]
  %v216 = vadd.f32 %v214, 1e-05
  %v217 = vrsqrt.pop %v216
  %v218 = vmul.f32 %v217, %v216
  %v219 = vmul.f32 %v218, %v217
  %v220 = vmul.f32 0.5, %v219
  %v221 = vsub.f32 1.5, %v220
  %v222 = vmul.f32 %v217, %v221
  %vm223 = vweird.f32 %v216
  %vm224 = vweird.f32 %v217
  %vm225 = vmor %vm223, %vm224
  %v226 = vsel %vm225, %v217, %v222
  %v227 = vmul.f32 %v215, %v226
  %v229 = vperm.slane %v227, 0
  %v231 = vmul.f32 %v193, %v229
  %v232 = vmul.f32 %v194, %v229
  %v233 = vmul.f32 %v195, %v229
  %v234 = vmul.f32 %v196, %v229
  %v235 = vld [vmem:[%s4] sm:$0x1]
  %v237 = vperm.slane %v235, 0
  %v239 = vadd.f32 %v231, %v237
  %v240 = vadd.f32 %v232, %v237
  %v241 = vadd.f32 %v233, %v237
  %v242 = vadd.f32 %v234, %v237
  %v243 = vmax.f32 %v239, 0.0
  %v244 = vmax.f32 %v240, 0.0
  %v245 = vmax.f32 %v241, 0.0
  %v246 = vmax.f32 %v242, 0.0
  %247 = vst.msk [vmem:[%s5] sm:$0xff] %vm72, %v243
  %248 = vst.msk [vmem:[%s5 + $0x8] sm:$0xff] %vm72, %v244
  %249 = vst.msk [vmem:[%s5 + $0x10] sm:$0xff] %vm72, %v245
  %250 = vst.msk [vmem:[%s5 + $0x18] sm:$0xff] %vm72, %v246
  // Predicated region
  $region22: #{generator_forward.13} parent=0 // pred_check
    _
  $region23: #{generator_forward.13} parent=0 // pred_check_branch
    %252 = sbr.rel (0) target = $region25
  $region24: #{generator_forward.13} parent=0 // pred_region
    _
  $region25: #{generator_forward.13} parent=0 // pred_fallthru
    _
  // Predicated region
  $region26: #{generator_forward.13} parent=0 // pred_check
    _
  $region27: #{generator_forward.13} parent=0 // pred_check_branch
    %254 = sbr.rel (0) target = $region29
  $region28: #{generator_forward.13} parent=0 // pred_region
    _
  $region29: #{generator_forward.13} parent=0 // pred_fallthru
    _

// kernel: generator_forward.14
$region0: #{generator_forward.14}
  #allocation0 [shape = 'u32[]', space=smem, size = 0x4, offset = 0x4, fixed_abs, tag = 'smem constant byte address 0x4 - core index']
  #allocation1 [shape = 'u32[72,128]{1,0:T(1,128)}', space=vmem, size = 0x9000, scoped, tag = 'internal scratch']
  %s0 = inlined_call_operand.vmem [shape: f32[32,288], index: 0, kind: input, shape index: {}]
  %s1 = inlined_call_operand.vmem [shape: f32[288,32], index: 1, kind: input, shape index: {}]
  %s2 = inlined_call_operand.vmem [shape: f32[1,32], index: 2, kind: input, shape index: {}]
  %s3 = inlined_call_operand.vmem [shape: f32[32,32], index: 3, kind: input, shape index: {}]
  %s4 = inlined_call_operand.vmem [shape: f32[32,32], index: 4, kind: output, shape index: {}]
  %s5 = sld [smem:[#allocation0]]
  $region26: #{generator_forward.14} parent=0
    _
  %s7 = ssub.s32 1, %s5
  %s8 = scalar_select 0, %s7, %s5
  // Predicated region
  $region2: #{generator_forward.14} parent=0 // pred_check
    _
  $region3: #{generator_forward.14} parent=0 // pred_check_branch
    %10 = sbr.rel (0) target = $region5
  $region4: #{generator_forward.14} parent=0 // pred_region
    _
  $region5: #{generator_forward.14} parent=0 // pred_fallthru
    _
  // Predicated region
  $region6: #{generator_forward.14} parent=0 // pred_check
    _
  $region7: #{generator_forward.14} parent=0 // pred_check_branch
    %12 = sbr.rel (0) target = $region9
  $region8: #{generator_forward.14} parent=0 // pred_region
    _
  $region9: #{generator_forward.14} parent=0 // pred_fallthru
    _
  // Predicated region
  $region10: #{generator_forward.14} parent=0 // pred_check
    _
  $region11: #{generator_forward.14} parent=0 // pred_check_branch
    %14 = sbr.rel (0) target = $region13
  $region12: #{generator_forward.14} parent=0 // pred_region
    _
  $region13: #{generator_forward.14} parent=0 // pred_fallthru
    _
  // Predicated region
  $region14: #{generator_forward.14} parent=0 // pred_check
    _
  $region15: #{generator_forward.14} parent=0 // pred_check_branch
    %16 = sbr.rel (0) target = $region17
  $region16: #{generator_forward.14} parent=0 // pred_region
    _
  $region17: #{generator_forward.14} parent=0 // pred_fallthru
    _
  %v17 = vld [vmem:[%s0] sm:$0xff]
  %v18 = vld [vmem:[%s0 + $0x8] sm:$0xff]
  %v19 = vld [vmem:[%s0 + $0x10] sm:$0xff]
  %v20 = vld [vmem:[%s0 + $0x18] sm:$0xff]
  %v21 = vld [vmem:[%s0 + $0x20] sm:$0xff]
  %v22 = vld [vmem:[%s0 + $0x28] sm:$0xff]
  %v23 = vld [vmem:[%s0 + $0x30] sm:$0xff]
  %v24 = vld [vmem:[%s0 + $0x38] sm:$0xff]
  %v25 = vld [vmem:[%s0 + $0x40] sm:$0xff]
  %v26 = vld [vmem:[%s0 + $0x48] sm:$0xff]
  %v27 = vld [vmem:[%s0 + $0x50] sm:$0xff]
  %v28 = vld [vmem:[%s0 + $0x58] sm:$0xff]
  %v29 = vld [vmem:[%s1] sm:$0xff]
  %v30 = vld [vmem:[%s1 + $0x8] sm:$0xff]
  %v31 = vld [vmem:[%s1 + $0x10] sm:$0xff]
  %v32 = vld [vmem:[%s1 + $0x18] sm:$0xff]
  %v33 = vld [vmem:[%s1 + $0x20] sm:$0xff]
  %v34 = vld [vmem:[%s1 + $0x28] sm:$0xff]
  %v35 = vld [vmem:[%s1 + $0x30] sm:$0xff]
  %v36 = vld [vmem:[%s1 + $0x38] sm:$0xff]
  %v37 = vld [vmem:[%s1 + $0x40] sm:$0xff]
  %v38 = vld [vmem:[%s1 + $0x48] sm:$0xff]
  %v39 = vld [vmem:[%s1 + $0x50] sm:$0xff]
  %v40 = vld [vmem:[%s1 + $0x58] sm:$0xff]
  %v41 = vld [vmem:[%s1 + $0x60] sm:$0xff]
  %v42 = vld [vmem:[%s1 + $0x68] sm:$0xff]
  %v43 = vld [vmem:[%s1 + $0x70] sm:$0xff]
  %v44 = vld [vmem:[%s1 + $0x78] sm:$0xff]
  %v45 = vld [vmem:[%s1 + $0x80] sm:$0xff]
  %v46 = vld [vmem:[%s1 + $0x88] sm:$0xff]
  %v47 = vld [vmem:[%s1 + $0x90] sm:$0xff]
  %v48 = vld [vmem:[%s1 + $0x98] sm:$0xff]
  %v49 = vld [vmem:[%s1 + $0xa0] sm:$0xff]
  %v50 = vld [vmem:[%s1 + $0xa8] sm:$0xff]
  %v51 = vld [vmem:[%s1 + $0xb0] sm:$0xff]
  %v52 = vld [vmem:[%s1 + $0xb8] sm:$0xff]
  %v53 = vld [vmem:[%s1 + $0xc0] sm:$0xff]
  %v54 = vld [vmem:[%s1 + $0xc8] sm:$0xff]
  %v55 = vld [vmem:[%s1 + $0xd0] sm:$0xff]
  %v56 = vld [vmem:[%s1 + $0xd8] sm:$0xff]
  %v57 = vld [vmem:[%s1 + $0xe0] sm:$0xff]
  %v58 = vld [vmem:[%s1 + $0xe8] sm:$0xff]
  %v59 = vld [vmem:[%s1 + $0xf0] sm:$0xff]
  %v60 = vld [vmem:[%s1 + $0xf8] sm:$0xff]
  %v61 = vld [vmem:[%s1 + $0x100] sm:$0xff]
  %v62 = vld [vmem:[%s1 + $0x108] sm:$0xff]
  %v63 = vld [vmem:[%s1 + $0x110] sm:$0xff]
  %v64 = vld [vmem:[%s1 + $0x118] sm:$0xff]
  %v65 = vld [vmem:[%s2] sm:$0x1]
  %v67 = vperm.slane %v65, 0
  %vm69 = vcmask 261120
  %v71 = vsel %vm69, %v19, 0
  %v74 = vsel %vm69, %v22, 0
  %v77 = vsel %vm69, %v25, 0
  %v80 = vsel %vm69, %v28, 0
  %82 = vmatpush.msra.mxu0 %v44
  %83 = vmatpush.msra.mxu0 %v43
  %84 = vmatpush.msra.mxu0 %v42
  %85 = vmatpush.msra.mxu0 %v41
  %86 = vmatpush.msra.mxu0 %v40
  %87 = vmatpush.msra.mxu0 %v39
  %88 = vmatpush.msra.mxu0 %v38
  %89 = vmatpush.msra.mxu0 %v37
  %90 = vmatpush.msra.mxu0 %v36
  %91 = vmatpush.msra.mxu0 %v35
  %92 = vmatpush.msra.mxu0 %v34
  %93 = vmatpush.msra.mxu0 %v33
  %94 = vmatpush.msra.mxu0 %v32
  %95 = vmatpush.msra.mxu0 %v31
  %96 = vmatpush.msra.mxu0 %v30
  %97 = vmatpush.msra.mxu0 %v29
  %98 = vmatmul.f32.gmra.mxu0 %v17
  %v99 = vpop.f32.mrf.mxu0
  %v100 = vadd.f32 %v67, %v99
  %101 = vmatmul.f32.gmra.mxu0 %v20
  %v102 = vpop.f32.mrf.mxu0
  %v103 = vadd.f32 %v67, %v102
  %104 = vmatmul.f32.gmra.mxu0 %v23
  %v105 = vpop.f32.mrf.mxu0
  %v106 = vadd.f32 %v67, %v105
  %107 = vmatmul.f32.gmra.mxu0 %v26
  %v108 = vpop.f32.mrf.mxu0
  %v109 = vadd.f32 %v67, %v108
  %110 = vdwg.mxu0
  %111 = vmatpush.msra.mxu0 %v60
  %112 = vmatpush.msra.mxu0 %v59
  %113 = vmatpush.msra.mxu0 %v58
  %114 = vmatpush.msra.mxu0 %v57
  %115 = vmatpush.msra.mxu0 %v56
  %116 = vmatpush.msra.mxu0 %v55
  %117 = vmatpush.msra.mxu0 %v54
  %118 = vmatpush.msra.mxu0 %v53
  %119 = vmatpush.msra.mxu0 %v52
  %120 = vmatpush.msra.mxu0 %v51
  %121 = vmatpush.msra.mxu0 %v50
  %122 = vmatpush.msra.mxu0 %v49
  %123 = vmatpush.msra.mxu0 %v48
  %124 = vmatpush.msra.mxu0 %v47
  %125 = vmatpush.msra.mxu0 %v46
  %126 = vmatpush.msra.mxu0 %v45
  %127 = vmatmul.f32.gmra.mxu0 %v18
  %v128 = vpop.f32.mrf.mxu0
  %v129 = vadd.f32 %v100, %v128
  %130 = vmatmul.f32.gmra.mxu0 %v21
  %v131 = vpop.f32.mrf.mxu0
  %v132 = vadd.f32 %v103, %v131
  %133 = vmatmul.f32.gmra.mxu0 %v24
  %v134 = vpop.f32.mrf.mxu0
  %v135 = vadd.f32 %v106, %v134
  %136 = vmatmul.f32.gmra.mxu0 %v27
  %v137 = vpop.f32.mrf.mxu0
  %v138 = vadd.f32 %v109, %v137
  %139 = vdwg.mxu0
  %140 = vmatpush.msra.mxu0 0.0
  %141 = vmatpush.msra.mxu0 0.0
  %142 = vmatpush.msra.mxu0 0.0
  %143 = vmatpush.msra.mxu0 0.0
  %144 = vmatpush.msra.mxu0 0.0
  %145 = vmatpush.msra.mxu0 0.0
  %146 = vmatpush.msra.mxu0 0.0
  %147 = vmatpush.msra.mxu0 0.0
  %148 = vmatpush.msra.mxu0 0.0
  %149 = vmatpush.msra.mxu0 0.0
  %150 = vmatpush.msra.mxu0 0.0
  %151 = vmatpush.msra.mxu0 0.0
  %152 = vmatpush.msra.mxu0 %v64
  %153 = vmatpush.msra.mxu0 %v63
  %154 = vmatpush.msra.mxu0 %v62
  %155 = vmatpush.msra.mxu0 %v61
  %156 = vmatmul.f32.gmra.mxu0 %v71
  %v157 = vpop.f32.mrf.mxu0
  %v158 = vadd.f32 %v129, %v157
  %159 = vmatmul.f32.gmra.mxu0 %v74
  %v160 = vpop.f32.mrf.mxu0
  %v161 = vadd.f32 %v132, %v160
  %162 = vmatmul.f32.gmra.mxu0 %v77
  %v163 = vpop.f32.mrf.mxu0
  %v164 = vadd.f32 %v135, %v163
  %165 = vmatmul.f32.gmra.mxu0 %v80
  %v166 = vpop.f32.mrf.mxu0
  %v167 = vadd.f32 %v138, %v166
  %168 = vdwg.mxu0
  %v169 = vld [vmem:[%s3] sm:$0xff]
  %v170 = vld [vmem:[%s3 + $0x8] sm:$0xff]
  %v171 = vld [vmem:[%s3 + $0x10] sm:$0xff]
  %v172 = vld [vmem:[%s3 + $0x18] sm:$0xff]
  %v173 = vadd.f32 %v158, %v169
  %v174 = vadd.f32 %v161, %v170
  %v175 = vadd.f32 %v164, %v171
  %v176 = vadd.f32 %v167, %v172
  %177 = vst.msk [vmem:[%s4] sm:$0xff] %vm69, %v173
  %178 = vst.msk [vmem:[%s4 + $0x8] sm:$0xff] %vm69, %v174
  %179 = vst.msk [vmem:[%s4 + $0x10] sm:$0xff] %vm69, %v175
  %180 = vst.msk [vmem:[%s4 + $0x18] sm:$0xff] %vm69, %v176
  // Predicated region
  $region18: #{generator_forward.14} parent=0 // pred_check
    _
  $region19: #{generator_forward.14} parent=0 // pred_check_branch
    %182 = sbr.rel (0) target = $region21
  $region20: #{generator_forward.14} parent=0 // pred_region
    _
  $region21: #{generator_forward.14} parent=0 // pred_fallthru
    _
  // Predicated region
  $region22: #{generator_forward.14} parent=0 // pred_check
    _
  $region23: #{generator_forward.14} parent=0 // pred_check_branch
    %184 = sbr.rel (0) target = $region25
  $region24: #{generator_forward.14} parent=0 // pred_region
    _
  $region25: #{generator_forward.14} parent=0 // pred_fallthru
    _

// kernel: generator_forward.15
$region0: #{generator_forward.15}
  #allocation0 [shape = 'u32[]', space=smem, size = 0x4, offset = 0x4, fixed_abs, tag = 'smem constant byte address 0x4 - core index']
  #allocation1 [shape = 'u32[72,128]{1,0:T(1,128)}', space=vmem, size = 0x9000, scoped, tag = 'internal scratch']
  %s0 = inlined_call_operand.vmem [shape: f32[128,288], index: 0, kind: input, shape index: {}]
  %s1 = inlined_call_operand.vmem [shape: f32[288,16], index: 1, kind: input, shape index: {}]
  %s2 = inlined_call_operand.vmem [shape: f32[1,16], index: 2, kind: input, shape index: {}]
  %s3 = inlined_call_operand.vmem [shape: f32[1,16], index: 3, kind: input, shape index: {}]
  %s4 = inlined_call_operand.vmem [shape: f32[1,16], index: 4, kind: input, shape index: {}]
  %s5 = inlined_call_operand.vmem [shape: f32[128,16], index: 5, kind: output, shape index: {}]
  %s6 = sld [smem:[#allocation0]]
  $region30: #{generator_forward.15} parent=0
    _
  %s8 = ssub.s32 1, %s6
  %s9 = scalar_select 0, %s8, %s6
  // Predicated region
  $region2: #{generator_forward.15} parent=0 // pred_check
    _
  $region3: #{generator_forward.15} parent=0 // pred_check_branch
    %11 = sbr.rel (0) target = $region5
  $region4: #{generator_forward.15} parent=0 // pred_region
    _
  $region5: #{generator_forward.15} parent=0 // pred_fallthru
    _
  // Predicated region
  $region6: #{generator_forward.15} parent=0 // pred_check
    _
  $region7: #{generator_forward.15} parent=0 // pred_check_branch
    %13 = sbr.rel (0) target = $region9
  $region8: #{generator_forward.15} parent=0 // pred_region
    _
  $region9: #{generator_forward.15} parent=0 // pred_fallthru
    _
  // Predicated region
  $region10: #{generator_forward.15} parent=0 // pred_check
    _
  $region11: #{generator_forward.15} parent=0 // pred_check_branch
    %15 = sbr.rel (0) target = $region13
  $region12: #{generator_forward.15} parent=0 // pred_region
    _
  $region13: #{generator_forward.15} parent=0 // pred_fallthru
    _
  // Predicated region
  $region14: #{generator_forward.15} parent=0 // pred_check
    _
  $region15: #{generator_forward.15} parent=0 // pred_check_branch
    %17 = sbr.rel (0) target = $region17
  $region16: #{generator_forward.15} parent=0 // pred_region
    _
  $region17: #{generator_forward.15} parent=0 // pred_fallthru
    _
  // Predicated region
  $region18: #{generator_forward.15} parent=0 // pred_check
    _
  $region19: #{generator_forward.15} parent=0 // pred_check_branch
    %19 = sbr.rel (0) target = $region21
  $region20: #{generator_forward.15} parent=0 // pred_region
    _
  $region21: #{generator_forward.15} parent=0 // pred_fallthru
    _
  %v20 = vld [vmem:[%s0] sm:$0xff]
  %v21 = vld [vmem:[%s0 + $0x8] sm:$0xff]
  %v22 = vld [vmem:[%s0 + $0x10] sm:$0xff]
  %v23 = vld [vmem:[%s0 + $0x18] sm:$0xff]
  %v24 = vld [vmem:[%s0 + $0x20] sm:$0xff]
  %v25 = vld [vmem:[%s0 + $0x28] sm:$0xff]
  %v26 = vld [vmem:[%s0 + $0x30] sm:$0xff]
  %v27 = vld [vmem:[%s0 + $0x38] sm:$0xff]
  %v28 = vld [vmem:[%s0 + $0x40] sm:$0xff]
  %v29 = vld [vmem:[%s0 + $0x48] sm:$0xff]
  %v30 = vld [vmem:[%s0 + $0x50] sm:$0xff]
  %v31 = vld [vmem:[%s0 + $0x58] sm:$0xff]
  %v32 = vld [vmem:[%s0 + $0x60] sm:$0xff]
  %v33 = vld [vmem:[%s0 + $0x68] sm:$0xff]
  %v34 = vld [vmem:[%s0 + $0x70] sm:$0xff]
  %v35 = vld [vmem:[%s0 + $0x78] sm:$0xff]
  %v36 = vld [vmem:[%s0 + $0x80] sm:$0xff]
  %v37 = vld [vmem:[%s0 + $0x88] sm:$0xff]
  %v38 = vld [vmem:[%s0 + $0x90] sm:$0xff]
  %v39 = vld [vmem:[%s0 + $0x98] sm:$0xff]
  %v40 = vld [vmem:[%s0 + $0xa0] sm:$0xff]
  %v41 = vld [vmem:[%s0 + $0xa8] sm:$0xff]
  %v42 = vld [vmem:[%s0 + $0xb0] sm:$0xff]
  %v43 = vld [vmem:[%s0 + $0xb8] sm:$0xff]
  %v44 = vld [vmem:[%s0 + $0xc0] sm:$0xff]
  %v45 = vld [vmem:[%s0 + $0xc8] sm:$0xff]
  %v46 = vld [vmem:[%s0 + $0xd0] sm:$0xff]
  %v47 = vld [vmem:[%s0 + $0xd8] sm:$0xff]
  %v48 = vld [vmem:[%s0 + $0xe0] sm:$0xff]
  %v49 = vld [vmem:[%s0 + $0xe8] sm:$0xff]
  %v50 = vld [vmem:[%s0 + $0xf0] sm:$0xff]
  %v51 = vld [vmem:[%s0 + $0xf8] sm:$0xff]
  %v52 = vld [vmem:[%s0 + $0x100] sm:$0xff]
  %v53 = vld [vmem:[%s0 + $0x108] sm:$0xff]
  %v54 = vld [vmem:[%s0 + $0x110] sm:$0xff]
  %v55 = vld [vmem:[%s0 + $0x118] sm:$0xff]
  %v56 = vld [vmem:[%s0 + $0x120] sm:$0xff]
  %v57 = vld [vmem:[%s0 + $0x128] sm:$0xff]
  %v58 = vld [vmem:[%s0 + $0x130] sm:$0xff]
  %v59 = vld [vmem:[%s0 + $0x138] sm:$0xff]
  %v60 = vld [vmem:[%s0 + $0x140] sm:$0xff]
  %v61 = vld [vmem:[%s0 + $0x148] sm:$0xff]
  %v62 = vld [vmem:[%s0 + $0x150] sm:$0xff]
  %v63 = vld [vmem:[%s0 + $0x158] sm:$0xff]
  %v64 = vld [vmem:[%s0 + $0x160] sm:$0xff]
  %v65 = vld [vmem:[%s0 + $0x168] sm:$0xff]
  %v66 = vld [vmem:[%s0 + $0x170] sm:$0xff]
  %v67 = vld [vmem:[%s0 + $0x178] sm:$0xff]
  %v68 = vld [vmem:[%s1] sm:$0xff]
  %v69 = vld [vmem:[%s1 + $0x8] sm:$0xff]
  %v70 = vld [vmem:[%s1 + $0x10] sm:$0xff]
  %v71 = vld [vmem:[%s1 + $0x18] sm:$0xff]
  %v72 = vld [vmem:[%s1 + $0x20] sm:$0xff]
  %v73 = vld [vmem:[%s1 + $0x28] sm:$0xff]
  %v74 = vld [vmem:[%s1 + $0x30] sm:$0xff]
  %v75 = vld [vmem:[%s1 + $0x38] sm:$0xff]
  %v76 = vld [vmem:[%s1 + $0x40] sm:$0xff]
  %v77 = vld [vmem:[%s1 + $0x48] sm:$0xff]
  %v78 = vld [vmem:[%s1 + $0x50] sm:$0xff]
  %v79 = vld [vmem:[%s1 + $0x58] sm:$0xff]
  %v80 = vld [vmem:[%s1 + $0x60] sm:$0xff]
  %v81 = vld [vmem:[%s1 + $0x68] sm:$0xff]
  %v82 = vld [vmem:[%s1 + $0x70] sm:$0xff]
  %v83 = vld [vmem:[%s1 + $0x78] sm:$0xff]
  %v84 = vld [vmem:[%s1 + $0x80] sm:$0xff]
  %v85 = vld [vmem:[%s1 + $0x88] sm:$0xff]
  %v86 = vld [vmem:[%s1 + $0x90] sm:$0xff]
  %v87 = vld [vmem:[%s1 + $0x98] sm:$0xff]
  %v88 = vld [vmem:[%s1 + $0xa0] sm:$0xff]
  %v89 = vld [vmem:[%s1 + $0xa8] sm:$0xff]
  %v90 = vld [vmem:[%s1 + $0xb0] sm:$0xff]
  %v91 = vld [vmem:[%s1 + $0xb8] sm:$0xff]
  %v92 = vld [vmem:[%s1 + $0xc0] sm:$0xff]
  %v93 = vld [vmem:[%s1 + $0xc8] sm:$0xff]
  %v94 = vld [vmem:[%s1 + $0xd0] sm:$0xff]
  %v95 = vld [vmem:[%s1 + $0xd8] sm:$0xff]
  %v96 = vld [vmem:[%s1 + $0xe0] sm:$0xff]
  %v97 = vld [vmem:[%s1 + $0xe8] sm:$0xff]
  %v98 = vld [vmem:[%s1 + $0xf0] sm:$0xff]
  %v99 = vld [vmem:[%s1 + $0xf8] sm:$0xff]
  %v100 = vld [vmem:[%s1 + $0x100] sm:$0xff]
  %v101 = vld [vmem:[%s1 + $0x108] sm:$0xff]
  %v102 = vld [vmem:[%s1 + $0x110] sm:$0xff]
  %v103 = vld [vmem:[%s1 + $0x118] sm:$0xff]
  %v104 = vld [vmem:[%s2] sm:$0x1]
  %v106 = vperm.slane %v104, 0
  %vm108 = vcmask 261120
  %v110 = vsel %vm108, %v22, 0
  %v113 = vsel %vm108, %v25, 0
  %v116 = vsel %vm108, %v28, 0
  %v119 = vsel %vm108, %v31, 0
  %v122 = vsel %vm108, %v34, 0
  %v125 = vsel %vm108, %v37, 0
  %v128 = vsel %vm108, %v40, 0
  %v131 = vsel %vm108, %v43, 0
  %v134 = vsel %vm108, %v46, 0
  %v137 = vsel %vm108, %v49, 0
  %v140 = vsel %vm108, %v52, 0
  %v143 = vsel %vm108, %v55, 0
  %v146 = vsel %vm108, %v58, 0
  %v149 = vsel %vm108, %v61, 0
  %v152 = vsel %vm108, %v64, 0
  %v155 = vsel %vm108, %v67, 0
  %157 = vmatpush.msra.mxu0 %v83
  %158 = vmatpush.msra.mxu0 %v82
  %159 = vmatpush.msra.mxu0 %v81
  %160 = vmatpush.msra.mxu0 %v80
  %161 = vmatpush.msra.mxu0 %v79
  %162 = vmatpush.msra.mxu0 %v78
  %163 = vmatpush.msra.mxu0 %v77
  %164 = vmatpush.msra.mxu0 %v76
  %165 = vmatpush.msra.mxu0 %v75
  %166 = vmatpush.msra.mxu0 %v74
  %167 = vmatpush.msra.mxu0 %v73
  %168 = vmatpush.msra.mxu0 %v72
  %169 = vmatpush.msra.mxu0 %v71
  %170 = vmatpush.msra.mxu0 %v70
  %171 = vmatpush.msra.mxu0 %v69
  %172 = vmatpush.msra.mxu0 %v68
  %173 = vmatmul.f32.gmra.mxu0 %v20
  %v174 = vpop.f32.mrf.mxu0
  %v175 = vadd.f32 %v106, %v174
  %176 = vmatmul.f32.gmra.mxu0 %v23
  %v177 = vpop.f32.mrf.mxu0
  %v178 = vadd.f32 %v106, %v177
  %179 = vmatmul.f32.gmra.mxu0 %v26
  %v180 = vpop.f32.mrf.mxu0
  %v181 = vadd.f32 %v106, %v180
  %182 = vmatmul.f32.gmra.mxu0 %v29
  %v183 = vpop.f32.mrf.mxu0
  %v184 = vadd.f32 %v106, %v183
  %185 = vmatmul.f32.gmra.mxu0 %v32
  %v186 = vpop.f32.mrf.mxu0
  %v187 = vadd.f32 %v106, %v186
  %188 = vmatmul.f32.gmra.mxu0 %v35
  %v189 = vpop.f32.mrf.mxu0
  %v190 = vadd.f32 %v106, %v189
  %191 = vmatmul.f32.gmra.mxu0 %v38
  %v192 = vpop.f32.mrf.mxu0
  %v193 = vadd.f32 %v106, %v192
  %194 = vmatmul.f32.gmra.mxu0 %v41
  %v195 = vpop.f32.mrf.mxu0
  %v196 = vadd.f32 %v106, %v195
  %197 = vmatmul.f32.gmra.mxu0 %v44
  %v198 = vpop.f32.mrf.mxu0
  %v199 = vadd.f32 %v106, %v198
  %200 = vmatmul.f32.gmra.mxu0 %v47
  %v201 = vpop.f32.mrf.mxu0
  %v202 = vadd.f32 %v106, %v201
  %203 = vmatmul.f32.gmra.mxu0 %v50
  %v204 = vpop.f32.mrf.mxu0
  %v205 = vadd.f32 %v106, %v204
  %206 = vmatmul.f32.gmra.mxu0 %v53
  %v207 = vpop.f32.mrf.mxu0
  %v208 = vadd.f32 %v106, %v207
  %209 = vmatmul.f32.gmra.mxu0 %v56
  %v210 = vpop.f32.mrf.mxu0
  %v211 = vadd.f32 %v106, %v210
  %212 = vmatmul.f32.gmra.mxu0 %v59
  %v213 = vpop.f32.mrf.mxu0
  %v214 = vadd.f32 %v106, %v213
  %215 = vmatmul.f32.gmra.mxu0 %v62
  %v216 = vpop.f32.mrf.mxu0
  %v217 = vadd.f32 %v106, %v216
  %218 = vmatmul.f32.gmra.mxu0 %v65
  %v219 = vpop.f32.mrf.mxu0
  %v220 = vadd.f32 %v106, %v219
  %221 = vdwg.mxu0
  %222 = vmatpush.msra.mxu0 %v99
  %223 = vmatpush.msra.mxu0 %v98
  %224 = vmatpush.msra.mxu0 %v97
  %225 = vmatpush.msra.mxu0 %v96
  %226 = vmatpush.msra.mxu0 %v95
  %227 = vmatpush.msra.mxu0 %v94
  %228 = vmatpush.msra.mxu0 %v93
  %229 = vmatpush.msra.mxu0 %v92
  %230 = vmatpush.msra.mxu0 %v91
  %231 = vmatpush.msra.mxu0 %v90
  %232 = vmatpush.msra.mxu0 %v89
  %233 = vmatpush.msra.mxu0 %v88
  %234 = vmatpush.msra.mxu0 %v87
  %235 = vmatpush.msra.mxu0 %v86
  %236 = vmatpush.msra.mxu0 %v85
  %237 = vmatpush.msra.mxu0 %v84
  %238 = vmatmul.f32.gmra.mxu0 %v21
  %v239 = vpop.f32.mrf.mxu0
  %v240 = vadd.f32 %v175, %v239
  %241 = vmatmul.f32.gmra.mxu0 %v24
  %v242 = vpop.f32.mrf.mxu0
  %v243 = vadd.f32 %v178, %v242
  %244 = vmatmul.f32.gmra.mxu0 %v27
  %v245 = vpop.f32.mrf.mxu0
  %v246 = vadd.f32 %v181, %v245
  %247 = vmatmul.f32.gmra.mxu0 %v30
  %v248 = vpop.f32.mrf.mxu0
  %v249 = vadd.f32 %v184, %v248
  %250 = vmatmul.f32.gmra.mxu0 %v33
  %v251 = vpop.f32.mrf.mxu0
  %v252 = vadd.f32 %v187, %v251
  %253 = vmatmul.f32.gmra.mxu0 %v36
  %v254 = vpop.f32.mrf.mxu0
  %v255 = vadd.f32 %v190, %v254
  %256 = vmatmul.f32.gmra.mxu0 %v39
  %v257 = vpop.f32.mrf.mxu0
  %v258 = vadd.f32 %v193, %v257
  %259 = vmatmul.f32.gmra.mxu0 %v42
  %v260 = vpop.f32.mrf.mxu0
  %v261 = vadd.f32 %v196, %v260
  %262 = vmatmul.f32.gmra.mxu0 %v45
  %v263 = vpop.f32.mrf.mxu0
  %v264 = vadd.f32 %v199, %v263
  %265 = vmatmul.f32.gmra.mxu0 %v48
  %v266 = vpop.f32.mrf.mxu0
  %v267 = vadd.f32 %v202, %v266
  %268 = vmatmul.f32.gmra.mxu0 %v51
  %v269 = vpop.f32.mrf.mxu0
  %v270 = vadd.f32 %v205, %v269
  %271 = vmatmul.f32.gmra.mxu0 %v54
  %v272 = vpop.f32.mrf.mxu0
  %v273 = vadd.f32 %v208, %v272
  %274 = vmatmul.f32.gmra.mxu0 %v57
  %v275 = vpop.f32.mrf.mxu0
  %v276 = vadd.f32 %v211, %v275
  %277 = vmatmul.f32.gmra.mxu0 %v60
  %v278 = vpop.f32.mrf.mxu0
  %v279 = vadd.f32 %v214, %v278
  %280 = vmatmul.f32.gmra.mxu0 %v63
  %v281 = vpop.f32.mrf.mxu0
  %v282 = vadd.f32 %v217, %v281
  %283 = vmatmul.f32.gmra.mxu0 %v66
  %v284 = vpop.f32.mrf.mxu0
  %v285 = vadd.f32 %v220, %v284
  %286 = vdwg.mxu0
  %287 = vmatpush.msra.mxu0 0.0
  %288 = vmatpush.msra.mxu0 0.0
  %289 = vmatpush.msra.mxu0 0.0
  %290 = vmatpush.msra.mxu0 0.0
  %291 = vmatpush.msra.mxu0 0.0
  %292 = vmatpush.msra.mxu0 0.0
  %293 = vmatpush.msra.mxu0 0.0
  %294 = vmatpush.msra.mxu0 0.0
  %295 = vmatpush.msra.mxu0 0.0
  %296 = vmatpush.msra.mxu0 0.0
  %297 = vmatpush.msra.mxu0 0.0
  %298 = vmatpush.msra.mxu0 0.0
  %299 = vmatpush.msra.mxu0 %v103
  %300 = vmatpush.msra.mxu0 %v102
  %301 = vmatpush.msra.mxu0 %v101
  %302 = vmatpush.msra.mxu0 %v100
  %303 = vmatmul.f32.gmra.mxu0 %v110
  %v304 = vpop.f32.mrf.mxu0
  %v305 = vadd.f32 %v240, %v304
  %306 = vmatmul.f32.gmra.mxu0 %v113
  %v307 = vpop.f32.mrf.mxu0
  %v308 = vadd.f32 %v243, %v307
  %309 = vmatmul.f32.gmra.mxu0 %v116
  %v310 = vpop.f32.mrf.mxu0
  %v311 = vadd.f32 %v246, %v310
  %312 = vmatmul.f32.gmra.mxu0 %v119
  %v313 = vpop.f32.mrf.mxu0
  %v314 = vadd.f32 %v249, %v313
  %315 = vmatmul.f32.gmra.mxu0 %v122
  %v316 = vpop.f32.mrf.mxu0
  %v317 = vadd.f32 %v252, %v316
  %318 = vmatmul.f32.gmra.mxu0 %v125
  %v319 = vpop.f32.mrf.mxu0
  %v320 = vadd.f32 %v255, %v319
  %321 = vmatmul.f32.gmra.mxu0 %v128
  %v322 = vpop.f32.mrf.mxu0
  %v323 = vadd.f32 %v258, %v322
  %324 = vmatmul.f32.gmra.mxu0 %v131
  %v325 = vpop.f32.mrf.mxu0
  %v326 = vadd.f32 %v261, %v325
  %327 = vmatmul.f32.gmra.mxu0 %v134
  %v328 = vpop.f32.mrf.mxu0
  %v329 = vadd.f32 %v264, %v328
  %330 = vmatmul.f32.gmra.mxu0 %v137
  %v331 = vpop.f32.mrf.mxu0
  %v332 = vadd.f32 %v267, %v331
  %333 = vmatmul.f32.gmra.mxu0 %v140
  %v334 = vpop.f32.mrf.mxu0
  %v335 = vadd.f32 %v270, %v334
  %336 = vmatmul.f32.gmra.mxu0 %v143
  %v337 = vpop.f32.mrf.mxu0
  %v338 = vadd.f32 %v273, %v337
  %339 = vmatmul.f32.gmra.mxu0 %v146
  %v340 = vpop.f32.mrf.mxu0
  %v341 = vadd.f32 %v276, %v340
  %342 = vmatmul.f32.gmra.mxu0 %v149
  %v343 = vpop.f32.mrf.mxu0
  %v344 = vadd.f32 %v279, %v343
  %345 = vmatmul.f32.gmra.mxu0 %v152
  %v346 = vpop.f32.mrf.mxu0
  %v347 = vadd.f32 %v282, %v346
  %348 = vmatmul.f32.gmra.mxu0 %v155
  %v349 = vpop.f32.mrf.mxu0
  %v350 = vadd.f32 %v285, %v349
  %351 = vdwg.mxu0
  %vm352 = vcmask 130048
  %v353 = vsel %vm352, %v305, 0.0
  %v354 = vsel %vm352, %v308, 0.0
  %v355 = vadd.f32 %v353, %v354
  %v356 = vsel %vm352, %v311, 0.0
  %v357 = vadd.f32 %v355, %v356
  %v358 = vsel %vm352, %v314, 0.0
  %v359 = vadd.f32 %v357, %v358
  %v360 = vsel %vm352, %v317, 0.0
  %v361 = vadd.f32 %v359, %v360
  %v362 = vsel %vm352, %v320, 0.0
  %v363 = vadd.f32 %v361, %v362
  %v364 = vsel %vm352, %v323, 0.0
  %v365 = vadd.f32 %v363, %v364
  %v366 = vsel %vm352, %v326, 0.0
  %v367 = vadd.f32 %v365, %v366
  %v368 = vsel %vm352, %v329, 0.0
  %v369 = vadd.f32 %v367, %v368
  %v370 = vsel %vm352, %v332, 0.0
  %v371 = vadd.f32 %v369, %v370
  %v372 = vsel %vm352, %v335, 0.0
  %v373 = vadd.f32 %v371, %v372
  %v374 = vsel %vm352, %v338, 0.0
  %v375 = vadd.f32 %v373, %v374
  %v376 = vsel %vm352, %v341, 0.0
  %v377 = vadd.f32 %v375, %v376
  %v378 = vsel %vm352, %v344, 0.0
  %v379 = vadd.f32 %v377, %v378
  %v380 = vsel %vm352, %v347, 0.0
  %v381 = vadd.f32 %v379, %v380
  %v382 = vsel %vm352, %v350, 0.0
  %v383 = vadd.f32 %v381, %v382
  %v384 = vrot.slane %v383, 4
  %v385 = vadd.f32 %v383, %v384
  %v386 = vrot.slane %v385, 2
  %v387 = vadd.f32 %v385, %v386
  %v388 = vrot.slane %v387, 1
  %v389 = vadd.f32 %v387, %v388
  %v390 = vrcp.pop 128.0
  %v391 = vmul.f32 128.0, %v390
  %v392 = vsub.f32 1.0, %v391
  %v393 = vmul.f32 %v390, %v392
  %v394 = vadd.f32 %v390, %v393
  %vm395 = vweird.f32 %v390
  %v396 = vsel %vm395, %v390, %v394
  %v397 = vmul.f32 %v389, %v396
  %v398 = vsub.f32 %v305, %v397
  %v399 = vsub.f32 %v308, %v397
  %v400 = vsub.f32 %v311, %v397
  %v401 = vsub.f32 %v314, %v397
  %v402 = vsub.f32 %v317, %v397
  %v403 = vsub.f32 %v320, %v397
  %v404 = vsub.f32 %v323, %v397
  %v405 = vsub.f32 %v326, %v397
  %v406 = vsub.f32 %v329, %v397
  %v407 = vsub.f32 %v332, %v397
  %v408 = vsub.f32 %v335, %v397
  %v409 = vsub.f32 %v338, %v397
  %v410 = vsub.f32 %v341, %v397
  %v411 = vsub.f32 %v344, %v397
  %v412 = vsub.f32 %v347, %v397
  %v413 = vsub.f32 %v350, %v397
  %v414 = vmul.f32 %v398, %v398
  %v415 = vmul.f32 %v399, %v399
  %v416 = vmul.f32 %v400, %v400
  %v417 = vmul.f32 %v401, %v401
  %v418 = vmul.f32 %v402, %v402
  %v419 = vmul.f32 %v403, %v403
  %v420 = vmul.f32 %v404, %v404
  %v421 = vmul.f32 %v405, %v405
  %v422 = vmul.f32 %v406, %v406
  %v423 = vmul.f32 %v407, %v407
  %v424 = vmul.f32 %v408, %v408
  %v425 = vmul.f32 %v409, %v409
  %v426 = vmul.f32 %v410, %v410
  %v427 = vmul.f32 %v411, %v411
  %v428 = vmul.f32 %v412, %v412
  %v429 = vmul.f32 %v413, %v413
  %v430 = vsel %vm352, %v414, 0.0
  %v431 = vsel %vm352, %v415, 0.0
  %v432 = vadd.f32 %v430, %v431
  %v433 = vsel %vm352, %v416, 0.0
  %v434 = vadd.f32 %v432, %v433
  %v435 = vsel %vm352, %v417, 0.0
  %v436 = vadd.f32 %v434, %v435
  %v437 = vsel %vm352, %v418, 0.0
  %v438 = vadd.f32 %v436, %v437
  %v439 = vsel %vm352, %v419, 0.0
  %v440 = vadd.f32 %v438, %v439
  %v441 = vsel %vm352, %v420, 0.0
  %v442 = vadd.f32 %v440, %v441
  %v443 = vsel %vm352, %v421, 0.0
  %v444 = vadd.f32 %v442, %v443
  %v445 = vsel %vm352, %v422, 0.0
  %v446 = vadd.f32 %v444, %v445
  %v447 = vsel %vm352, %v423, 0.0
  %v448 = vadd.f32 %v446, %v447
  %v449 = vsel %vm352, %v424, 0.0
  %v450 = vadd.f32 %v448, %v449
  %v451 = vsel %vm352, %v425, 0.0
  %v452 = vadd.f32 %v450, %v451
  %v453 = vsel %vm352, %v426, 0.0
  %v454 = vadd.f32 %v452, %v453
  %v455 = vsel %vm352, %v427, 0.0
  %v456 = vadd.f32 %v454, %v455
  %v457 = vsel %vm352, %v428, 0.0
  %v458 = vadd.f32 %v456, %v457
  %v459 = vsel %vm352, %v429, 0.0
  %v460 = vadd.f32 %v458, %v459
  %v461 = vrot.slane %v460, 4
  %v462 = vadd.f32 %v460, %v461
  %v463 = vrot.slane %v462, 2
  %v464 = vadd.f32 %v462, %v463
  %v465 = vrot.slane %v464, 1
  %v466 = vadd.f32 %v464, %v465
  %v467 = vmul.f32 %v466, %v396
  %v468 = vld [vmem:[%s3] sm:$0x1]
  %v469 = vadd.f32 %v467, 1e-05
  %v470 = vrsqrt.pop %v469
  %v471 = vmul.f32 %v470, %v469
  %v472 = vmul.f32 %v471, %v470
  %v473 = vmul.f32 0.5, %v472
  %v474 = vsub.f32 1.5, %v473
  %v475 = vmul.f32 %v470, %v474
  %vm476 = vweird.f32 %v469
  %vm477 = vweird.f32 %v470
  %vm478 = vmor %vm476, %vm477
  %v479 = vsel %vm478, %v470, %v475
  %v480 = vmul.f32 %v468, %v479
  %v482 = vperm.slane %v480, 0
  %v484 = vmul.f32 %v398, %v482
  %v485 = vmul.f32 %v399, %v482
  %v486 = vmul.f32 %v400, %v482
  %v487 = vmul.f32 %v401, %v482
  %v488 = vmul.f32 %v402, %v482
  %v489 = vmul.f32 %v403, %v482
  %v490 = vmul.f32 %v404, %v482
  %v491 = vmul.f32 %v405, %v482
  %v492 = vmul.f32 %v406, %v482
  %v493 = vmul.f32 %v407, %v482
  %v494 = vmul.f32 %v408, %v482
  %v495 = vmul.f32 %v409, %v482
  %v496 = vmul.f32 %v410, %v482
  %v497 = vmul.f32 %v411, %v482
  %v498 = vmul.f32 %v412, %v482
  %v499 = vmul.f32 %v413, %v482
  %v500 = vld [vmem:[%s4] sm:$0x1]
  %v502 = vperm.slane %v500, 0
  %v504 = vadd.f32 %v484, %v502
  %v505 = vadd.f32 %v485, %v502
  %v506 = vadd.f32 %v486, %v502
  %v507 = vadd.f32 %v487, %v502
  %v508 = vadd.f32 %v488, %v502
  %v509 = vadd.f32 %v489, %v502
  %v510 = vadd.f32 %v490, %v502
  %v511 = vadd.f32 %v491, %v502
  %v512 = vadd.f32 %v492, %v502
  %v513 = vadd.f32 %v493, %v502
  %v514 = vadd.f32 %v494, %v502
  %v515 = vadd.f32 %v495, %v502
  %v516 = vadd.f32 %v496, %v502
  %v517 = vadd.f32 %v497, %v502
  %v518 = vadd.f32 %v498, %v502
  %v519 = vadd.f32 %v499, %v502
  %v520 = vmax.f32 %v504, 0.0
  %v521 = vmax.f32 %v505, 0.0
  %v522 = vmax.f32 %v506, 0.0
  %v523 = vmax.f32 %v507, 0.0
  %v524 = vmax.f32 %v508, 0.0
  %v525 = vmax.f32 %v509, 0.0
  %v526 = vmax.f32 %v510, 0.0
  %v527 = vmax.f32 %v511, 0.0
  %v528 = vmax.f32 %v512, 0.0
  %v529 = vmax.f32 %v513, 0.0
  %v530 = vmax.f32 %v514, 0.0
  %v531 = vmax.f32 %v515, 0.0
  %v532 = vmax.f32 %v516, 0.0
  %v533 = vmax.f32 %v517, 0.0
  %v534 = vmax.f32 %v518, 0.0
  %v535 = vmax.f32 %v519, 0.0
  %536 = vst.msk [vmem:[%s5] sm:$0xff] %vm352, %v520
  %537 = vst.msk [vmem:[%s5 + $0x8] sm:$0xff] %vm352, %v521
  %538 = vst.msk [vmem:[%s5 + $0x10] sm:$0xff] %vm352, %v522
  %539 = vst.msk [vmem:[%s5 + $0x18] sm:$0xff] %vm352, %v523
  %540 = vst.msk [vmem:[%s5 + $0x20] sm:$0xff] %vm352, %v524
  %541 = vst.msk [vmem:[%s5 + $0x28] sm:$0xff] %vm352, %v525
  %542 = vst.msk [vmem:[%s5 + $0x30] sm:$0xff] %vm352, %v526
  %543 = vst.msk [vmem:[%s5 + $0x38] sm:$0xff] %vm352, %v527
  %544 = vst.msk [vmem:[%s5 + $0x40] sm:$0xff] %vm352, %v528
  %545 = vst.msk [vmem:[%s5 + $0x48] sm:$0xff] %vm352, %v529
  %546 = vst.msk [vmem:[%s5 + $0x50] sm:$0xff] %vm352, %v530
  %547 = vst.msk [vmem:[%s5 + $0x58] sm:$0xff] %vm352, %v531
  %548 = vst.msk [vmem:[%s5 + $0x60] sm:$0xff] %vm352, %v532
  %549 = vst.msk [vmem:[%s5 + $0x68] sm:$0xff] %vm352, %v533
  %550 = vst.msk [vmem:[%s5 + $0x70] sm:$0xff] %vm352, %v534
  %551 = vst.msk [vmem:[%s5 + $0x78] sm:$0xff] %vm352, %v535
  // Predicated region
  $region22: #{generator_forward.15} parent=0 // pred_check
    _
  $region23: #{generator_forward.15} parent=0 // pred_check_branch
    %553 = sbr.rel (0) target = $region25
  $region24: #{generator_forward.15} parent=0 // pred_region
    _
  $region25: #{generator_forward.15} parent=0 // pred_fallthru
    _
  // Predicated region
  $region26: #{generator_forward.15} parent=0 // pred_check
    _
  $region27: #{generator_forward.15} parent=0 // pred_check_branch
    %555 = sbr.rel (0) target = $region29
  $region28: #{generator_forward.15} parent=0 // pred_region
    _
  $region29: #{generator_forward.15} parent=0 // pred_fallthru
    _

// kernel: generator_forward.16
$region0: #{generator_forward.16}
  #allocation0 [shape = 'u32[]', space=smem, size = 0x4, offset = 0x4, fixed_abs, tag = 'smem constant byte address 0x4 - core index']
  #allocation1 [shape = 'u32[72,128]{1,0:T(1,128)}', space=vmem, size = 0x9000, scoped, tag = 'internal scratch']
  %s0 = inlined_call_operand.vmem [shape: f32[512,144], index: 0, kind: input, shape index: {}]
  %s1 = inlined_call_operand.vmem [shape: f32[144,8], index: 1, kind: input, shape index: {}]
  %s2 = inlined_call_operand.vmem [shape: f32[1,8], index: 2, kind: input, shape index: {}]
  %s3 = inlined_call_operand.vmem [shape: f32[1,8], index: 3, kind: input, shape index: {}]
  %s4 = inlined_call_operand.vmem [shape: f32[1,8], index: 4, kind: input, shape index: {}]
  %s5 = inlined_call_operand.vmem [shape: f32[512,8], index: 5, kind: output, shape index: {}]
  %s6 = sld [smem:[#allocation0]]
  $region30: #{generator_forward.16} parent=0
    _
  %s8 = ssub.s32 1, %s6
  %s9 = scalar_select 0, %s8, %s6
  // Predicated region
  $region2: #{generator_forward.16} parent=0 // pred_check
    _
  $region3: #{generator_forward.16} parent=0 // pred_check_branch
    %11 = sbr.rel (0) target = $region5
  $region4: #{generator_forward.16} parent=0 // pred_region
    _
  $region5: #{generator_forward.16} parent=0 // pred_fallthru
    _
  // Predicated region
  $region6: #{generator_forward.16} parent=0 // pred_check
    _
  $region7: #{generator_forward.16} parent=0 // pred_check_branch
    %13 = sbr.rel (0) target = $region9
  $region8: #{generator_forward.16} parent=0 // pred_region
    _
  $region9: #{generator_forward.16} parent=0 // pred_fallthru
    _
  // Predicated region
  $region10: #{generator_forward.16} parent=0 // pred_check
    _
  $region11: #{generator_forward.16} parent=0 // pred_check_branch
    %15 = sbr.rel (0) target = $region13
  $region12: #{generator_forward.16} parent=0 // pred_region
    _
  $region13: #{generator_forward.16} parent=0 // pred_fallthru
    _
  // Predicated region
  $region14: #{generator_forward.16} parent=0 // pred_check
    _
  $region15: #{generator_forward.16} parent=0 // pred_check_branch
    %17 = sbr.rel (0) target = $region17
  $region16: #{generator_forward.16} parent=0 // pred_region
    _
  $region17: #{generator_forward.16} parent=0 // pred_fallthru
    _
  // Predicated region
  $region18: #{generator_forward.16} parent=0 // pred_check
    _
  $region19: #{generator_forward.16} parent=0 // pred_check_branch
    %19 = sbr.rel (0) target = $region21
  $region20: #{generator_forward.16} parent=0 // pred_region
    _
  $region21: #{generator_forward.16} parent=0 // pred_fallthru
    _
  %v20 = vld [vmem:[%s0] sm:$0xff]
  %v21 = vld [vmem:[%s0 + $0x8] sm:$0xff]
  %v22 = vld [vmem:[%s0 + $0x10] sm:$0xff]
  %v23 = vld [vmem:[%s0 + $0x18] sm:$0xff]
  %v24 = vld [vmem:[%s0 + $0x20] sm:$0xff]
  %v25 = vld [vmem:[%s0 + $0x28] sm:$0xff]
  %v26 = vld [vmem:[%s0 + $0x30] sm:$0xff]
  %v27 = vld [vmem:[%s0 + $0x38] sm:$0xff]
  %v28 = vld [vmem:[%s0 + $0x40] sm:$0xff]
  %v29 = vld [vmem:[%s0 + $0x48] sm:$0xff]
  %v30 = vld [vmem:[%s0 + $0x50] sm:$0xff]
  %v31 = vld [vmem:[%s0 + $0x58] sm:$0xff]
  %v32 = vld [vmem:[%s0 + $0x60] sm:$0xff]
  %v33 = vld [vmem:[%s0 + $0x68] sm:$0xff]
  %v34 = vld [vmem:[%s0 + $0x70] sm:$0xff]
  %v35 = vld [vmem:[%s0 + $0x78] sm:$0xff]
  %v36 = vld [vmem:[%s0 + $0x80] sm:$0xff]
  %v37 = vld [vmem:[%s0 + $0x88] sm:$0xff]
  %v38 = vld [vmem:[%s0 + $0x90] sm:$0xff]
  %v39 = vld [vmem:[%s0 + $0x98] sm:$0xff]
  %v40 = vld [vmem:[%s0 + $0xa0] sm:$0xff]
  %v41 = vld [vmem:[%s0 + $0xa8] sm:$0xff]
  %v42 = vld [vmem:[%s0 + $0xb0] sm:$0xff]
  %v43 = vld [vmem:[%s0 + $0xb8] sm:$0xff]
  %v44 = vld [vmem:[%s0 + $0xc0] sm:$0xff]
  %v45 = vld [vmem:[%s0 + $0xc8] sm:$0xff]
  %v46 = vld [vmem:[%s0 + $0xd0] sm:$0xff]
  %v47 = vld [vmem:[%s0 + $0xd8] sm:$0xff]
  %v48 = vld [vmem:[%s0 + $0xe0] sm:$0xff]
  %v49 = vld [vmem:[%s0 + $0xe8] sm:$0xff]
  %v50 = vld [vmem:[%s0 + $0xf0] sm:$0xff]
  %v51 = vld [vmem:[%s0 + $0xf8] sm:$0xff]
  %v52 = vld [vmem:[%s0 + $0x100] sm:$0xff]
  %v53 = vld [vmem:[%s0 + $0x108] sm:$0xff]
  %v54 = vld [vmem:[%s0 + $0x110] sm:$0xff]
  %v55 = vld [vmem:[%s0 + $0x118] sm:$0xff]
  %v56 = vld [vmem:[%s0 + $0x120] sm:$0xff]
  %v57 = vld [vmem:[%s0 + $0x128] sm:$0xff]
  %v58 = vld [vmem:[%s0 + $0x130] sm:$0xff]
  %v59 = vld [vmem:[%s0 + $0x138] sm:$0xff]
  %v60 = vld [vmem:[%s0 + $0x140] sm:$0xff]
  %v61 = vld [vmem:[%s0 + $0x148] sm:$0xff]
  %v62 = vld [vmem:[%s0 + $0x150] sm:$0xff]
  %v63 = vld [vmem:[%s0 + $0x158] sm:$0xff]
  %v64 = vld [vmem:[%s0 + $0x160] sm:$0xff]
  %v65 = vld [vmem:[%s0 + $0x168] sm:$0xff]
  %v66 = vld [vmem:[%s0 + $0x170] sm:$0xff]
  %v67 = vld [vmem:[%s0 + $0x178] sm:$0xff]
  %v68 = vld [vmem:[%s0 + $0x180] sm:$0xff]
  %v69 = vld [vmem:[%s0 + $0x188] sm:$0xff]
  %v70 = vld [vmem:[%s0 + $0x190] sm:$0xff]
  %v71 = vld [vmem:[%s0 + $0x198] sm:$0xff]
  %v72 = vld [vmem:[%s0 + $0x1a0] sm:$0xff]
  %v73 = vld [vmem:[%s0 + $0x1a8] sm:$0xff]
  %v74 = vld [vmem:[%s0 + $0x1b0] sm:$0xff]
  %v75 = vld [vmem:[%s0 + $0x1b8] sm:$0xff]
  %v76 = vld [vmem:[%s0 + $0x1c0] sm:$0xff]
  %v77 = vld [vmem:[%s0 + $0x1c8] sm:$0xff]
  %v78 = vld [vmem:[%s0 + $0x1d0] sm:$0xff]
  %v79 = vld [vmem:[%s0 + $0x1d8] sm:$0xff]
  %v80 = vld [vmem:[%s0 + $0x1e0] sm:$0xff]
  %v81 = vld [vmem:[%s0 + $0x1e8] sm:$0xff]
  %v82 = vld [vmem:[%s0 + $0x1f0] sm:$0xff]
  %v83 = vld [vmem:[%s0 + $0x1f8] sm:$0xff]
  %v84 = vld [vmem:[%s0 + $0x200] sm:$0xff]
  %v85 = vld [vmem:[%s0 + $0x208] sm:$0xff]
  %v86 = vld [vmem:[%s0 + $0x210] sm:$0xff]
  %v87 = vld [vmem:[%s0 + $0x218] sm:$0xff]
  %v88 = vld [vmem:[%s0 + $0x220] sm:$0xff]
  %v89 = vld [vmem:[%s0 + $0x228] sm:$0xff]
  %v90 = vld [vmem:[%s0 + $0x230] sm:$0xff]
  %v91 = vld [vmem:[%s0 + $0x238] sm:$0xff]
  %v92 = vld [vmem:[%s0 + $0x240] sm:$0xff]
  %v93 = vld [vmem:[%s0 + $0x248] sm:$0xff]
  %v94 = vld [vmem:[%s0 + $0x250] sm:$0xff]
  %v95 = vld [vmem:[%s0 + $0x258] sm:$0xff]
  %v96 = vld [vmem:[%s0 + $0x260] sm:$0xff]
  %v97 = vld [vmem:[%s0 + $0x268] sm:$0xff]
  %v98 = vld [vmem:[%s0 + $0x270] sm:$0xff]
  %v99 = vld [vmem:[%s0 + $0x278] sm:$0xff]
  %v100 = vld [vmem:[%s0 + $0x280] sm:$0xff]
  %v101 = vld [vmem:[%s0 + $0x288] sm:$0xff]
  %v102 = vld [vmem:[%s0 + $0x290] sm:$0xff]
  %v103 = vld [vmem:[%s0 + $0x298] sm:$0xff]
  %v104 = vld [vmem:[%s0 + $0x2a0] sm:$0xff]
  %v105 = vld [vmem:[%s0 + $0x2a8] sm:$0xff]
  %v106 = vld [vmem:[%s0 + $0x2b0] sm:$0xff]
  %v107 = vld [vmem:[%s0 + $0x2b8] sm:$0xff]
  %v108 = vld [vmem:[%s0 + $0x2c0] sm:$0xff]
  %v109 = vld [vmem:[%s0 + $0x2c8] sm:$0xff]
  %v110 = vld [vmem:[%s0 + $0x2d0] sm:$0xff]
  %v111 = vld [vmem:[%s0 + $0x2d8] sm:$0xff]
  %v112 = vld [vmem:[%s0 + $0x2e0] sm:$0xff]
  %v113 = vld [vmem:[%s0 + $0x2e8] sm:$0xff]
  %v114 = vld [vmem:[%s0 + $0x2f0] sm:$0xff]
  %v115 = vld [vmem:[%s0 + $0x2f8] sm:$0xff]
  %v116 = vld [vmem:[%s0 + $0x300] sm:$0xff]
  %v117 = vld [vmem:[%s0 + $0x308] sm:$0xff]
  %v118 = vld [vmem:[%s0 + $0x310] sm:$0xff]
  %v119 = vld [vmem:[%s0 + $0x318] sm:$0xff]
  %v120 = vld [vmem:[%s0 + $0x320] sm:$0xff]
  %v121 = vld [vmem:[%s0 + $0x328] sm:$0xff]
  %v122 = vld [vmem:[%s0 + $0x330] sm:$0xff]
  %v123 = vld [vmem:[%s0 + $0x338] sm:$0xff]
  %v124 = vld [vmem:[%s0 + $0x340] sm:$0xff]
  %v125 = vld [vmem:[%s0 + $0x348] sm:$0xff]
  %v126 = vld [vmem:[%s0 + $0x350] sm:$0xff]
  %v127 = vld [vmem:[%s0 + $0x358] sm:$0xff]
  %v128 = vld [vmem:[%s0 + $0x360] sm:$0xff]
  %v129 = vld [vmem:[%s0 + $0x368] sm:$0xff]
  %v130 = vld [vmem:[%s0 + $0x370] sm:$0xff]
  %v131 = vld [vmem:[%s0 + $0x378] sm:$0xff]
  %v132 = vld [vmem:[%s0 + $0x380] sm:$0xff]
  %v133 = vld [vmem:[%s0 + $0x388] sm:$0xff]
  %v134 = vld [vmem:[%s0 + $0x390] sm:$0xff]
  %v135 = vld [vmem:[%s0 + $0x398] sm:$0xff]
  %v136 = vld [vmem:[%s0 + $0x3a0] sm:$0xff]
  %v137 = vld [vmem:[%s0 + $0x3a8] sm:$0xff]
  %v138 = vld [vmem:[%s0 + $0x3b0] sm:$0xff]
  %v139 = vld [vmem:[%s0 + $0x3b8] sm:$0xff]
  %v140 = vld [vmem:[%s0 + $0x3c0] sm:$0xff]
  %v141 = vld [vmem:[%s0 + $0x3c8] sm:$0xff]
  %v142 = vld [vmem:[%s0 + $0x3d0] sm:$0xff]
  %v143 = vld [vmem:[%s0 + $0x3d8] sm:$0xff]
  %v144 = vld [vmem:[%s0 + $0x3e0] sm:$0xff]
  %v145 = vld [vmem:[%s0 + $0x3e8] sm:$0xff]
  %v146 = vld [vmem:[%s0 + $0x3f0] sm:$0xff]
  %v147 = vld [vmem:[%s0 + $0x3f8] sm:$0xff]
  %v148 = vld [vmem:[%s1] sm:$0xff]
  %v149 = vld [vmem:[%s1 + $0x8] sm:$0xff]
  %v150 = vld [vmem:[%s1 + $0x10] sm:$0xff]
  %v151 = vld [vmem:[%s1 + $0x18] sm:$0xff]
  %v152 = vld [vmem:[%s1 + $0x20] sm:$0xff]
  %v153 = vld [vmem:[%s1 + $0x28] sm:$0xff]
  %v154 = vld [vmem:[%s1 + $0x30] sm:$0xff]
  %v155 = vld [vmem:[%s1 + $0x38] sm:$0xff]
  %v156 = vld [vmem:[%s1 + $0x40] sm:$0xff]
  %v157 = vld [vmem:[%s1 + $0x48] sm:$0xff]
  %v158 = vld [vmem:[%s1 + $0x50] sm:$0xff]
  %v159 = vld [vmem:[%s1 + $0x58] sm:$0xff]
  %v160 = vld [vmem:[%s1 + $0x60] sm:$0xff]
  %v161 = vld [vmem:[%s1 + $0x68] sm:$0xff]
  %v162 = vld [vmem:[%s1 + $0x70] sm:$0xff]
  %v163 = vld [vmem:[%s1 + $0x78] sm:$0xff]
  %v164 = vld [vmem:[%s1 + $0x80] sm:$0xff]
  %v165 = vld [vmem:[%s1 + $0x88] sm:$0xff]
  %v166 = vld [vmem:[%s2] sm:$0x1]
  %v168 = vperm.slane %v166, 0
  %vm170 = vcmask 130048
  %v172 = vsel %vm170, %v21, 0
  %v175 = vsel %vm170, %v23, 0
  %v178 = vsel %vm170, %v25, 0
  %v181 = vsel %vm170, %v27, 0
  %v184 = vsel %vm170, %v29, 0
  %v187 = vsel %vm170, %v31, 0
  %v190 = vsel %vm170, %v33, 0
  %v193 = vsel %vm170, %v35, 0
  %v196 = vsel %vm170, %v37, 0
  %v199 = vsel %vm170, %v39, 0
  %v202 = vsel %vm170, %v41, 0
  %v205 = vsel %vm170, %v43, 0
  %v208 = vsel %vm170, %v45, 0
  %v211 = vsel %vm170, %v47, 0
  %v214 = vsel %vm170, %v49, 0
  %v217 = vsel %vm170, %v51, 0
  %v220 = vsel %vm170, %v53, 0
  %v223 = vsel %vm170, %v55, 0
  %v226 = vsel %vm170, %v57, 0
  %v229 = vsel %vm170, %v59, 0
  %v232 = vsel %vm170, %v61, 0
  %v235 = vsel %vm170, %v63, 0
  %v238 = vsel %vm170, %v65, 0
  %v241 = vsel %vm170, %v67, 0
  %v244 = vsel %vm170, %v69, 0
  %v247 = vsel %vm170, %v71, 0
  %v250 = vsel %vm170, %v73, 0
  %v253 = vsel %vm170, %v75, 0
  %v256 = vsel %vm170, %v77, 0
  %v259 = vsel %vm170, %v79, 0
  %v262 = vsel %vm170, %v81, 0
  %v265 = vsel %vm170, %v83, 0
  %v268 = vsel %vm170, %v85, 0
  %v271 = vsel %vm170, %v87, 0
  %v274 = vsel %vm170, %v89, 0
  %v277 = vsel %vm170, %v91, 0
  %v280 = vsel %vm170, %v93, 0
  %v283 = vsel %vm170, %v95, 0
  %v286 = vsel %vm170, %v97, 0
  %v289 = vsel %vm170, %v99, 0
  %v292 = vsel %vm170, %v101, 0
  %v295 = vsel %vm170, %v103, 0
  %v298 = vsel %vm170, %v105, 0
  %v301 = vsel %vm170, %v107, 0
  %v304 = vsel %vm170, %v109, 0
  %v307 = vsel %vm170, %v111, 0
  %v310 = vsel %vm170, %v113, 0
  %v313 = vsel %vm170, %v115, 0
  %v316 = vsel %vm170, %v117, 0
  %v319 = vsel %vm170, %v119, 0
  %v322 = vsel %vm170, %v121, 0
  %v325 = vsel %vm170, %v123, 0
  %v328 = vsel %vm170, %v125, 0
  %v331 = vsel %vm170, %v127, 0
  %v334 = vsel %vm170, %v129, 0
  %v337 = vsel %vm170, %v131, 0
  %v340 = vsel %vm170, %v133, 0
  %v343 = vsel %vm170, %v135, 0
  %v346 = vsel %vm170, %v137, 0
  %v349 = vsel %vm170, %v139, 0
  %v352 = vsel %vm170, %v141, 0
  %v355 = vsel %vm170, %v143, 0
  %v358 = vsel %vm170, %v145, 0
  %v361 = vsel %vm170, %v147, 0
  %363 = vmatpush.msra.mxu0 %v163
  %364 = vmatpush.msra.mxu0 %v162
  %365 = vmatpush.msra.mxu0 %v161
  %366 = vmatpush.msra.mxu0 %v160
  %367 = vmatpush.msra.mxu0 %v159
  %368 = vmatpush.msra.mxu0 %v158
  %369 = vmatpush.msra.mxu0 %v157
  %370 = vmatpush.msra.mxu0 %v156
  %371 = vmatpush.msra.mxu0 %v155
  %372 = vmatpush.msra.mxu0 %v154
  %373 = vmatpush.msra.mxu0 %v153
  %374 = vmatpush.msra.mxu0 %v152
  %375 = vmatpush.msra.mxu0 %v151
  %376 = vmatpush.msra.mxu0 %v150
  %377 = vmatpush.msra.mxu0 %v149
  %378 = vmatpush.msra.mxu0 %v148
  %379 = vmatmul.f32.gmra.mxu0 %v20
  %v380 = vpop.f32.mrf.mxu0
  %v381 = vadd.f32 %v168, %v380
  %382 = vmatmul.f32.gmra.mxu0 %v22
  %v383 = vpop.f32.mrf.mxu0
  %v384 = vadd.f32 %v168, %v383
  %385 = vmatmul.f32.gmra.mxu0 %v24
  %v386 = vpop.f32.mrf.mxu0
  %v387 = vadd.f32 %v168, %v386
  %388 = vmatmul.f32.gmra.mxu0 %v26
  %v389 = vpop.f32.mrf.mxu0
  %v390 = vadd.f32 %v168, %v389
  %391 = vmatmul.f32.gmra.mxu0 %v28
  %v392 = vpop.f32.mrf.mxu0
  %v393 = vadd.f32 %v168, %v392
  %394 = vmatmul.f32.gmra.mxu0 %v30
  %v395 = vpop.f32.mrf.mxu0
  %v396 = vadd.f32 %v168, %v395
  %397 = vmatmul.f32.gmra.mxu0 %v32
  %v398 = vpop.f32.mrf.mxu0
  %v399 = vadd.f32 %v168, %v398
  %400 = vmatmul.f32.gmra.mxu0 %v34
  %v401 = vpop.f32.mrf.mxu0
  %v402 = vadd.f32 %v168, %v401
  %403 = vmatmul.f32.gmra.mxu0 %v36
  %v404 = vpop.f32.mrf.mxu0
  %v405 = vadd.f32 %v168, %v404
  %406 = vmatmul.f32.gmra.mxu0 %v38
  %v407 = vpop.f32.mrf.mxu0
  %v408 = vadd.f32 %v168, %v407
  %409 = vmatmul.f32.gmra.mxu0 %v40
  %v410 = vpop.f32.mrf.mxu0
  %v411 = vadd.f32 %v168, %v410
  %412 = vmatmul.f32.gmra.mxu0 %v42
  %v413 = vpop.f32.mrf.mxu0
  %v414 = vadd.f32 %v168, %v413
  %415 = vmatmul.f32.gmra.mxu0 %v44
  %v416 = vpop.f32.mrf.mxu0
  %v417 = vadd.f32 %v168, %v416
  %418 = vmatmul.f32.gmra.mxu0 %v46
  %v419 = vpop.f32.mrf.mxu0
  %v420 = vadd.f32 %v168, %v419
  %421 = vmatmul.f32.gmra.mxu0 %v48
  %v422 = vpop.f32.mrf.mxu0
  %v423 = vadd.f32 %v168, %v422
  %424 = vmatmul.f32.gmra.mxu0 %v50
  %v425 = vpop.f32.mrf.mxu0
  %v426 = vadd.f32 %v168, %v425
  %427 = vmatmul.f32.gmra.mxu0 %v52
  %v428 = vpop.f32.mrf.mxu0
  %v429 = vadd.f32 %v168, %v428
  %430 = vmatmul.f32.gmra.mxu0 %v54
  %v431 = vpop.f32.mrf.mxu0
  %v432 = vadd.f32 %v168, %v431
  %433 = vmatmul.f32.gmra.mxu0 %v56
  %v434 = vpop.f32.mrf.mxu0
  %v435 = vadd.f32 %v168, %v434
  %436 = vmatmul.f32.gmra.mxu0 %v58
  %v437 = vpop.f32.mrf.mxu0
  %v438 = vadd.f32 %v168, %v437
  %439 = vmatmul.f32.gmra.mxu0 %v60
  %v440 = vpop.f32.mrf.mxu0
  %v441 = vadd.f32 %v168, %v440
  %442 = vmatmul.f32.gmra.mxu0 %v62
  %v443 = vpop.f32.mrf.mxu0
  %v444 = vadd.f32 %v168, %v443
  %445 = vmatmul.f32.gmra.mxu0 %v64
  %v446 = vpop.f32.mrf.mxu0
  %v447 = vadd.f32 %v168, %v446
  %448 = vmatmul.f32.gmra.mxu0 %v66
  %v449 = vpop.f32.mrf.mxu0
  %v450 = vadd.f32 %v168, %v449
  %451 = vmatmul.f32.gmra.mxu0 %v68
  %v452 = vpop.f32.mrf.mxu0
  %v453 = vadd.f32 %v168, %v452
  %454 = vmatmul.f32.gmra.mxu0 %v70
  %v455 = vpop.f32.mrf.mxu0
  %v456 = vadd.f32 %v168, %v455
  %457 = vmatmul.f32.gmra.mxu0 %v72
  %v458 = vpop.f32.mrf.mxu0
  %v459 = vadd.f32 %v168, %v458
  %460 = vmatmul.f32.gmra.mxu0 %v74
  %v461 = vpop.f32.mrf.mxu0
  %v462 = vadd.f32 %v168, %v461
  %463 = vmatmul.f32.gmra.mxu0 %v76
  %v464 = vpop.f32.mrf.mxu0
  %v465 = vadd.f32 %v168, %v464
  %466 = vmatmul.f32.gmra.mxu0 %v78
  %v467 = vpop.f32.mrf.mxu0
  %v468 = vadd.f32 %v168, %v467
  %469 = vmatmul.f32.gmra.mxu0 %v80
  %v470 = vpop.f32.mrf.mxu0
  %v471 = vadd.f32 %v168, %v470
  %472 = vmatmul.f32.gmra.mxu0 %v82
  %v473 = vpop.f32.mrf.mxu0
  %v474 = vadd.f32 %v168, %v473
  %475 = vmatmul.f32.gmra.mxu0 %v84
  %v476 = vpop.f32.mrf.mxu0
  %v477 = vadd.f32 %v168, %v476
  %478 = vmatmul.f32.gmra.mxu0 %v86
  %v479 = vpop.f32.mrf.mxu0
  %v480 = vadd.f32 %v168, %v479
  %481 = vmatmul.f32.gmra.mxu0 %v88
  %v482 = vpop.f32.mrf.mxu0
  %v483 = vadd.f32 %v168, %v482
  %484 = vmatmul.f32.gmra.mxu0 %v90
  %v485 = vpop.f32.mrf.mxu0
  %v486 = vadd.f32 %v168, %v485
  %487 = vmatmul.f32.gmra.mxu0 %v92
  %v488 = vpop.f32.mrf.mxu0
  %v489 = vadd.f32 %v168, %v488
  %490 = vmatmul.f32.gmra.mxu0 %v94
  %v491 = vpop.f32.mrf.mxu0
  %v492 = vadd.f32 %v168, %v491
  %493 = vmatmul.f32.gmra.mxu0 %v96
  %v494 = vpop.f32.mrf.mxu0
  %v495 = vadd.f32 %v168, %v494
  %496 = vmatmul.f32.gmra.mxu0 %v98
  %v497 = vpop.f32.mrf.mxu0
  %v498 = vadd.f32 %v168, %v497
  %499 = vmatmul.f32.gmra.mxu0 %v100
  %v500 = vpop.f32.mrf.mxu0
  %v501 = vadd.f32 %v168, %v500
  %502 = vmatmul.f32.gmra.mxu0 %v102
  %v503 = vpop.f32.mrf.mxu0
  %v504 = vadd.f32 %v168, %v503
  %505 = vmatmul.f32.gmra.mxu0 %v104
  %v506 = vpop.f32.mrf.mxu0
  %v507 = vadd.f32 %v168, %v506
  %508 = vmatmul.f32.gmra.mxu0 %v106
  %v509 = vpop.f32.mrf.mxu0
  %v510 = vadd.f32 %v168, %v509
  %511 = vmatmul.f32.gmra.mxu0 %v108
  %v512 = vpop.f32.mrf.mxu0
  %v513 = vadd.f32 %v168, %v512
  %514 = vmatmul.f32.gmra.mxu0 %v110
  %v515 = vpop.f32.mrf.mxu0
  %v516 = vadd.f32 %v168, %v515
  %517 = vmatmul.f32.gmra.mxu0 %v112
  %v518 = vpop.f32.mrf.mxu0
  %v519 = vadd.f32 %v168, %v518
  %520 = vmatmul.f32.gmra.mxu0 %v114
  %v521 = vpop.f32.mrf.mxu0
  %v522 = vadd.f32 %v168, %v521
  %523 = vmatmul.f32.gmra.mxu0 %v116
  %v524 = vpop.f32.mrf.mxu0
  %v525 = vadd.f32 %v168, %v524
  %526 = vmatmul.f32.gmra.mxu0 %v118
  %v527 = vpop.f32.mrf.mxu0
  %v528 = vadd.f32 %v168, %v527
  %529 = vmatmul.f32.gmra.mxu0 %v120
  %v530 = vpop.f32.mrf.mxu0
  %v531 = vadd.f32 %v168, %v530
  %532 = vmatmul.f32.gmra.mxu0 %v122
  %v533 = vpop.f32.mrf.mxu0
  %v534 = vadd.f32 %v168, %v533
  %535 = vmatmul.f32.gmra.mxu0 %v124
  %v536 = vpop.f32.mrf.mxu0
  %v537 = vadd.f32 %v168, %v536
  %538 = vmatmul.f32.gmra.mxu0 %v126
  %v539 = vpop.f32.mrf.mxu0
  %v540 = vadd.f32 %v168, %v539
  %541 = vmatmul.f32.gmra.mxu0 %v128
  %v542 = vpop.f32.mrf.mxu0
  %v543 = vadd.f32 %v168, %v542
  %544 = vmatmul.f32.gmra.mxu0 %v130
  %v545 = vpop.f32.mrf.mxu0
  %v546 = vadd.f32 %v168, %v545
  %547 = vmatmul.f32.gmra.mxu0 %v132
  %v548 = vpop.f32.mrf.mxu0
  %v549 = vadd.f32 %v168, %v548
  %550 = vmatmul.f32.gmra.mxu0 %v134
  %v551 = vpop.f32.mrf.mxu0
  %v552 = vadd.f32 %v168, %v551
  %553 = vmatmul.f32.gmra.mxu0 %v136
  %v554 = vpop.f32.mrf.mxu0
  %v555 = vadd.f32 %v168, %v554
  %556 = vmatmul.f32.gmra.mxu0 %v138
  %v557 = vpop.f32.mrf.mxu0
  %v558 = vadd.f32 %v168, %v557
  %559 = vmatmul.f32.gmra.mxu0 %v140
  %v560 = vpop.f32.mrf.mxu0
  %v561 = vadd.f32 %v168, %v560
  %562 = vmatmul.f32.gmra.mxu0 %v142
  %v563 = vpop.f32.mrf.mxu0
  %v564 = vadd.f32 %v168, %v563
  %565 = vmatmul.f32.gmra.mxu0 %v144
  %v566 = vpop.f32.mrf.mxu0
  %v567 = vadd.f32 %v168, %v566
  %568 = vmatmul.f32.gmra.mxu0 %v146
  %v569 = vpop.f32.mrf.mxu0
  %v570 = vadd.f32 %v168, %v569
  %571 = vdwg.mxu0
  %572 = vmatpush.msra.mxu0 0.0
  %573 = vmatpush.msra.mxu0 0.0
  %574 = vmatpush.msra.mxu0 0.0
  %575 = vmatpush.msra.mxu0 0.0
  %576 = vmatpush.msra.mxu0 0.0
  %577 = vmatpush.msra.mxu0 0.0
  %578 = vmatpush.msra.mxu0 0.0
  %579 = vmatpush.msra.mxu0 0.0
  %580 = vmatpush.msra.mxu0 0.0
  %581 = vmatpush.msra.mxu0 0.0
  %582 = vmatpush.msra.mxu0 0.0
  %583 = vmatpush.msra.mxu0 0.0
  %584 = vmatpush.msra.mxu0 0.0
  %585 = vmatpush.msra.mxu0 0.0
  %586 = vmatpush.msra.mxu0 %v165
  %587 = vmatpush.msra.mxu0 %v164
  %588 = vmatmul.f32.gmra.mxu0 %v172
  %v589 = vpop.f32.mrf.mxu0
  %v590 = vadd.f32 %v381, %v589
  %591 = vmatmul.f32.gmra.mxu0 %v175
  %v592 = vpop.f32.mrf.mxu0
  %v593 = vadd.f32 %v384, %v592
  %594 = vmatmul.f32.gmra.mxu0 %v178
  %v595 = vpop.f32.mrf.mxu0
  %v596 = vadd.f32 %v387, %v595
  %597 = vmatmul.f32.gmra.mxu0 %v181
  %v598 = vpop.f32.mrf.mxu0
  %v599 = vadd.f32 %v390, %v598
  %600 = vmatmul.f32.gmra.mxu0 %v184
  %v601 = vpop.f32.mrf.mxu0
  %v602 = vadd.f32 %v393, %v601
  %603 = vmatmul.f32.gmra.mxu0 %v187
  %v604 = vpop.f32.mrf.mxu0
  %v605 = vadd.f32 %v396, %v604
  %606 = vmatmul.f32.gmra.mxu0 %v190
  %v607 = vpop.f32.mrf.mxu0
  %v608 = vadd.f32 %v399, %v607
  %609 = vmatmul.f32.gmra.mxu0 %v193
  %v610 = vpop.f32.mrf.mxu0
  %v611 = vadd.f32 %v402, %v610
  %612 = vmatmul.f32.gmra.mxu0 %v196
  %v613 = vpop.f32.mrf.mxu0
  %v614 = vadd.f32 %v405, %v613
  %615 = vmatmul.f32.gmra.mxu0 %v199
  %v616 = vpop.f32.mrf.mxu0
  %v617 = vadd.f32 %v408, %v616
  %618 = vmatmul.f32.gmra.mxu0 %v202
  %v619 = vpop.f32.mrf.mxu0
  %v620 = vadd.f32 %v411, %v619
  %621 = vmatmul.f32.gmra.mxu0 %v205
  %v622 = vpop.f32.mrf.mxu0
  %v623 = vadd.f32 %v414, %v622
  %624 = vmatmul.f32.gmra.mxu0 %v208
  %v625 = vpop.f32.mrf.mxu0
  %v626 = vadd.f32 %v417, %v625
  %627 = vmatmul.f32.gmra.mxu0 %v211
  %v628 = vpop.f32.mrf.mxu0
  %v629 = vadd.f32 %v420, %v628
  %630 = vmatmul.f32.gmra.mxu0 %v214
  %v631 = vpop.f32.mrf.mxu0
  %v632 = vadd.f32 %v423, %v631
  %633 = vmatmul.f32.gmra.mxu0 %v217
  %v634 = vpop.f32.mrf.mxu0
  %v635 = vadd.f32 %v426, %v634
  %636 = vmatmul.f32.gmra.mxu0 %v220
  %v637 = vpop.f32.mrf.mxu0
  %v638 = vadd.f32 %v429, %v637
  %639 = vmatmul.f32.gmra.mxu0 %v223
  %v640 = vpop.f32.mrf.mxu0
  %v641 = vadd.f32 %v432, %v640
  %642 = vmatmul.f32.gmra.mxu0 %v226
  %v643 = vpop.f32.mrf.mxu0
  %v644 = vadd.f32 %v435, %v643
  %645 = vmatmul.f32.gmra.mxu0 %v229
  %v646 = vpop.f32.mrf.mxu0
  %v647 = vadd.f32 %v438, %v646
  %648 = vmatmul.f32.gmra.mxu0 %v232
  %v649 = vpop.f32.mrf.mxu0
  %v650 = vadd.f32 %v441, %v649
  %651 = vmatmul.f32.gmra.mxu0 %v235
  %v652 = vpop.f32.mrf.mxu0
  %v653 = vadd.f32 %v444, %v652
  %654 = vmatmul.f32.gmra.mxu0 %v238
  %v655 = vpop.f32.mrf.mxu0
  %v656 = vadd.f32 %v447, %v655
  %657 = vmatmul.f32.gmra.mxu0 %v241
  %v658 = vpop.f32.mrf.mxu0
  %v659 = vadd.f32 %v450, %v658
  %660 = vmatmul.f32.gmra.mxu0 %v244
  %v661 = vpop.f32.mrf.mxu0
  %v662 = vadd.f32 %v453, %v661
  %663 = vmatmul.f32.gmra.mxu0 %v247
  %v664 = vpop.f32.mrf.mxu0
  %v665 = vadd.f32 %v456, %v664
  %666 = vmatmul.f32.gmra.mxu0 %v250
  %v667 = vpop.f32.mrf.mxu0
  %v668 = vadd.f32 %v459, %v667
  %669 = vmatmul.f32.gmra.mxu0 %v253
  %v670 = vpop.f32.mrf.mxu0
  %v671 = vadd.f32 %v462, %v670
  %672 = vmatmul.f32.gmra.mxu0 %v256
  %v673 = vpop.f32.mrf.mxu0
  %v674 = vadd.f32 %v465, %v673
  %675 = vmatmul.f32.gmra.mxu0 %v259
  %v676 = vpop.f32.mrf.mxu0
  %v677 = vadd.f32 %v468, %v676
  %678 = vmatmul.f32.gmra.mxu0 %v262
  %v679 = vpop.f32.mrf.mxu0
  %v680 = vadd.f32 %v471, %v679
  %681 = vmatmul.f32.gmra.mxu0 %v265
  %v682 = vpop.f32.mrf.mxu0
  %v683 = vadd.f32 %v474, %v682
  %684 = vmatmul.f32.gmra.mxu0 %v268
  %v685 = vpop.f32.mrf.mxu0
  %v686 = vadd.f32 %v477, %v685
  %687 = vmatmul.f32.gmra.mxu0 %v271
  %v688 = vpop.f32.mrf.mxu0
  %v689 = vadd.f32 %v480, %v688
  %690 = vmatmul.f32.gmra.mxu0 %v274
  %v691 = vpop.f32.mrf.mxu0
  %v692 = vadd.f32 %v483, %v691
  %693 = vmatmul.f32.gmra.mxu0 %v277
  %v694 = vpop.f32.mrf.mxu0
  %v695 = vadd.f32 %v486, %v694
  %696 = vmatmul.f32.gmra.mxu0 %v280
  %v697 = vpop.f32.mrf.mxu0
  %v698 = vadd.f32 %v489, %v697
  %699 = vmatmul.f32.gmra.mxu0 %v283
  %v700 = vpop.f32.mrf.mxu0
  %v701 = vadd.f32 %v492, %v700
  %702 = vmatmul.f32.gmra.mxu0 %v286
  %v703 = vpop.f32.mrf.mxu0
  %v704 = vadd.f32 %v495, %v703
  %705 = vmatmul.f32.gmra.mxu0 %v289
  %v706 = vpop.f32.mrf.mxu0
  %v707 = vadd.f32 %v498, %v706
  %708 = vmatmul.f32.gmra.mxu0 %v292
  %v709 = vpop.f32.mrf.mxu0
  %v710 = vadd.f32 %v501, %v709
  %711 = vmatmul.f32.gmra.mxu0 %v295
  %v712 = vpop.f32.mrf.mxu0
  %v713 = vadd.f32 %v504, %v712
  %714 = vmatmul.f32.gmra.mxu0 %v298
  %v715 = vpop.f32.mrf.mxu0
  %v716 = vadd.f32 %v507, %v715
  %717 = vmatmul.f32.gmra.mxu0 %v301
  %v718 = vpop.f32.mrf.mxu0
  %v719 = vadd.f32 %v510, %v718
  %720 = vmatmul.f32.gmra.mxu0 %v304
  %v721 = vpop.f32.mrf.mxu0
  %v722 = vadd.f32 %v513, %v721
  %723 = vmatmul.f32.gmra.mxu0 %v307
  %v724 = vpop.f32.mrf.mxu0
  %v725 = vadd.f32 %v516, %v724
  %726 = vmatmul.f32.gmra.mxu0 %v310
  %v727 = vpop.f32.mrf.mxu0
  %v728 = vadd.f32 %v519, %v727
  %729 = vmatmul.f32.gmra.mxu0 %v313
  %v730 = vpop.f32.mrf.mxu0
  %v731 = vadd.f32 %v522, %v730
  %732 = vmatmul.f32.gmra.mxu0 %v316
  %v733 = vpop.f32.mrf.mxu0
  %v734 = vadd.f32 %v525, %v733
  %735 = vmatmul.f32.gmra.mxu0 %v319
  %v736 = vpop.f32.mrf.mxu0
  %v737 = vadd.f32 %v528, %v736
  %738 = vmatmul.f32.gmra.mxu0 %v322
  %v739 = vpop.f32.mrf.mxu0
  %v740 = vadd.f32 %v531, %v739
  %741 = vmatmul.f32.gmra.mxu0 %v325
  %v742 = vpop.f32.mrf.mxu0
  %v743 = vadd.f32 %v534, %v742
  %744 = vmatmul.f32.gmra.mxu0 %v328
  %v745 = vpop.f32.mrf.mxu0
  %v746 = vadd.f32 %v537, %v745
  %747 = vmatmul.f32.gmra.mxu0 %v331
  %v748 = vpop.f32.mrf.mxu0
  %v749 = vadd.f32 %v540, %v748
  %750 = vmatmul.f32.gmra.mxu0 %v334
  %v751 = vpop.f32.mrf.mxu0
  %v752 = vadd.f32 %v543, %v751
  %753 = vmatmul.f32.gmra.mxu0 %v337
  %v754 = vpop.f32.mrf.mxu0
  %v755 = vadd.f32 %v546, %v754
  %756 = vmatmul.f32.gmra.mxu0 %v340
  %v757 = vpop.f32.mrf.mxu0
  %v758 = vadd.f32 %v549, %v757
  %759 = vmatmul.f32.gmra.mxu0 %v343
  %v760 = vpop.f32.mrf.mxu0
  %v761 = vadd.f32 %v552, %v760
  %762 = vmatmul.f32.gmra.mxu0 %v346
  %v763 = vpop.f32.mrf.mxu0
  %v764 = vadd.f32 %v555, %v763
  %765 = vmatmul.f32.gmra.mxu0 %v349
  %v766 = vpop.f32.mrf.mxu0
  %v767 = vadd.f32 %v558, %v766
  %768 = vmatmul.f32.gmra.mxu0 %v352
  %v769 = vpop.f32.mrf.mxu0
  %v770 = vadd.f32 %v561, %v769
  %771 = vmatmul.f32.gmra.mxu0 %v355
  %v772 = vpop.f32.mrf.mxu0
  %v773 = vadd.f32 %v564, %v772
  %774 = vmatmul.f32.gmra.mxu0 %v358
  %v775 = vpop.f32.mrf.mxu0
  %v776 = vadd.f32 %v567, %v775
  %777 = vmatmul.f32.gmra.mxu0 %v361
  %v778 = vpop.f32.mrf.mxu0
  %v779 = vadd.f32 %v570, %v778
  %780 = vdwg.mxu0
  %vm781 = vcmask 64512
  %v782 = vsel %vm781, %v590, 0.0
  %v783 = vsel %vm781, %v593, 0.0
  %v784 = vadd.f32 %v782, %v783
  %v785 = vsel %vm781, %v596, 0.0
  %v786 = vadd.f32 %v784, %v785
  %v787 = vsel %vm781, %v599, 0.0
  %v788 = vadd.f32 %v786, %v787
  %v789 = vsel %vm781, %v602, 0.0
  %v790 = vadd.f32 %v788, %v789
  %v791 = vsel %vm781, %v605, 0.0
  %v792 = vadd.f32 %v790, %v791
  %v793 = vsel %vm781, %v608, 0.0
  %v794 = vadd.f32 %v792, %v793
  %v795 = vsel %vm781, %v611, 0.0
  %v796 = vadd.f32 %v794, %v795
  %v797 = vsel %vm781, %v614, 0.0
  %v798 = vadd.f32 %v796, %v797
  %v799 = vsel %vm781, %v617, 0.0
  %v800 = vadd.f32 %v798, %v799
  %v801 = vsel %vm781, %v620, 0.0
  %v802 = vadd.f32 %v800, %v801
  %v803 = vsel %vm781, %v623, 0.0
  %v804 = vadd.f32 %v802, %v803
  %v805 = vsel %vm781, %v626, 0.0
  %v806 = vadd.f32 %v804, %v805
  %v807 = vsel %vm781, %v629, 0.0
  %v808 = vadd.f32 %v806, %v807
  %v809 = vsel %vm781, %v632, 0.0
  %v810 = vadd.f32 %v808, %v809
  %v811 = vsel %vm781, %v635, 0.0
  %v812 = vadd.f32 %v810, %v811
  %v813 = vsel %vm781, %v638, 0.0
  %v814 = vadd.f32 %v812, %v813
  %v815 = vsel %vm781, %v641, 0.0
  %v816 = vadd.f32 %v814, %v815
  %v817 = vsel %vm781, %v644, 0.0
  %v818 = vadd.f32 %v816, %v817
  %v819 = vsel %vm781, %v647, 0.0
  %v820 = vadd.f32 %v818, %v819
  %v821 = vsel %vm781, %v650, 0.0
  %v822 = vadd.f32 %v820, %v821
  %v823 = vsel %vm781, %v653, 0.0
  %v824 = vadd.f32 %v822, %v823
  %v825 = vsel %vm781, %v656, 0.0
  %v826 = vadd.f32 %v824, %v825
  %v827 = vsel %vm781, %v659, 0.0
  %v828 = vadd.f32 %v826, %v827
  %v829 = vsel %vm781, %v662, 0.0
  %v830 = vadd.f32 %v828, %v829
  %v831 = vsel %vm781, %v665, 0.0
  %v832 = vadd.f32 %v830, %v831
  %v833 = vsel %vm781, %v668, 0.0
  %v834 = vadd.f32 %v832, %v833
  %v835 = vsel %vm781, %v671, 0.0
  %v836 = vadd.f32 %v834, %v835
  %v837 = vsel %vm781, %v674, 0.0
  %v838 = vadd.f32 %v836, %v837
  %v839 = vsel %vm781, %v677, 0.0
  %v840 = vadd.f32 %v838, %v839
  %v841 = vsel %vm781, %v680, 0.0
  %v842 = vadd.f32 %v840, %v841
  %v843 = vsel %vm781, %v683, 0.0
  %v844 = vadd.f32 %v842, %v843
  %v845 = vsel %vm781, %v686, 0.0
  %v846 = vadd.f32 %v844, %v845
  %v847 = vsel %vm781, %v689, 0.0
  %v848 = vadd.f32 %v846, %v847
  %v849 = vsel %vm781, %v692, 0.0
  %v850 = vadd.f32 %v848, %v849
  %v851 = vsel %vm781, %v695, 0.0
  %v852 = vadd.f32 %v850, %v851
  %v853 = vsel %vm781, %v698, 0.0
  %v854 = vadd.f32 %v852, %v853
  %v855 = vsel %vm781, %v701, 0.0
  %v856 = vadd.f32 %v854, %v855
  %v857 = vsel %vm781, %v704, 0.0
  %v858 = vadd.f32 %v856, %v857
  %v859 = vsel %vm781, %v707, 0.0
  %v860 = vadd.f32 %v858, %v859
  %v861 = vsel %vm781, %v710, 0.0
  %v862 = vadd.f32 %v860, %v861
  %v863 = vsel %vm781, %v713, 0.0
  %v864 = vadd.f32 %v862, %v863
  %v865 = vsel %vm781, %v716, 0.0
  %v866 = vadd.f32 %v864, %v865
  %v867 = vsel %vm781, %v719, 0.0
  %v868 = vadd.f32 %v866, %v867
  %v869 = vsel %vm781, %v722, 0.0
  %v870 = vadd.f32 %v868, %v869
  %v871 = vsel %vm781, %v725, 0.0
  %v872 = vadd.f32 %v870, %v871
  %v873 = vsel %vm781, %v728, 0.0
  %v874 = vadd.f32 %v872, %v873
  %v875 = vsel %vm781, %v731, 0.0
  %v876 = vadd.f32 %v874, %v875
  %v877 = vsel %vm781, %v734, 0.0
  %v878 = vadd.f32 %v876, %v877
  %v879 = vsel %vm781, %v737, 0.0
  %v880 = vadd.f32 %v878, %v879
  %v881 = vsel %vm781, %v740, 0.0
  %v882 = vadd.f32 %v880, %v881
  %v883 = vsel %vm781, %v743, 0.0
  %v884 = vadd.f32 %v882, %v883
  %v885 = vsel %vm781, %v746, 0.0
  %v886 = vadd.f32 %v884, %v885
  %v887 = vsel %vm781, %v749, 0.0
  %v888 = vadd.f32 %v886, %v887
  %v889 = vsel %vm781, %v752, 0.0
  %v890 = vadd.f32 %v888, %v889
  %v891 = vsel %vm781, %v755, 0.0
  %v892 = vadd.f32 %v890, %v891
  %v893 = vsel %vm781, %v758, 0.0
  %v894 = vadd.f32 %v892, %v893
  %v895 = vsel %vm781, %v761, 0.0
  %v896 = vadd.f32 %v894, %v895
  %v897 = vsel %vm781, %v764, 0.0
  %v898 = vadd.f32 %v896, %v897
  %v899 = vsel %vm781, %v767, 0.0
  %v900 = vadd.f32 %v898, %v899
  %v901 = vsel %vm781, %v770, 0.0
  %v902 = vadd.f32 %v900, %v901
  %v903 = vsel %vm781, %v773, 0.0
  %v904 = vadd.f32 %v902, %v903
  %v905 = vsel %vm781, %v776, 0.0
  %v906 = vadd.f32 %v904, %v905
  %v907 = vsel %vm781, %v779, 0.0
  %v908 = vadd.f32 %v906, %v907
  %v909 = vrot.slane %v908, 4
  %v910 = vadd.f32 %v908, %v909
  %v911 = vrot.slane %v910, 2
  %v912 = vadd.f32 %v910, %v911
  %v913 = vrot.slane %v912, 1
  %v914 = vadd.f32 %v912, %v913
  %v915 = vrcp.pop 512.0
  %v916 = vmul.f32 512.0, %v915
  %v917 = vsub.f32 1.0, %v916
  %v918 = vmul.f32 %v915, %v917
  %v919 = vadd.f32 %v915, %v918
  %vm920 = vweird.f32 %v915
  %v921 = vsel %vm920, %v915, %v919
  %v922 = vmul.f32 %v914, %v921
  %v923 = vsub.f32 %v590, %v922
  %v924 = vsub.f32 %v593, %v922
  %v925 = vsub.f32 %v596, %v922
  %v926 = vsub.f32 %v599, %v922
  %v927 = vsub.f32 %v602, %v922
  %v928 = vsub.f32 %v605, %v922
  %v929 = vsub.f32 %v608, %v922
  %v930 = vsub.f32 %v611, %v922
  %v931 = vsub.f32 %v614, %v922
  %v932 = vsub.f32 %v617, %v922
  %v933 = vsub.f32 %v620, %v922
  %v934 = vsub.f32 %v623, %v922
  %v935 = vsub.f32 %v626, %v922
  %v936 = vsub.f32 %v629, %v922
  %v937 = vsub.f32 %v632, %v922
  %v938 = vsub.f32 %v635, %v922
  %v939 = vsub.f32 %v638, %v922
  %v940 = vsub.f32 %v641, %v922
  %v941 = vsub.f32 %v644, %v922
  %v942 = vsub.f32 %v647, %v922
  %v943 = vsub.f32 %v650, %v922
  %v944 = vsub.f32 %v653, %v922
  %v945 = vsub.f32 %v656, %v922
  %v946 = vsub.f32 %v659, %v922
  %v947 = vsub.f32 %v662, %v922
  %v948 = vsub.f32 %v665, %v922
  %v949 = vsub.f32 %v668, %v922
  %v950 = vsub.f32 %v671, %v922
  %v951 = vsub.f32 %v674, %v922
  %v952 = vsub.f32 %v677, %v922
  %v953 = vsub.f32 %v680, %v922
  %v954 = vsub.f32 %v683, %v922
  %v955 = vsub.f32 %v686, %v922
  %v956 = vsub.f32 %v689, %v922
  %v957 = vsub.f32 %v692, %v922
  %v958 = vsub.f32 %v695, %v922
  %v959 = vsub.f32 %v698, %v922
  %v960 = vsub.f32 %v701, %v922
  %v961 = vsub.f32 %v704, %v922
  %v962 = vsub.f32 %v707, %v922
  %v963 = vsub.f32 %v710, %v922
  %v964 = vsub.f32 %v713, %v922
  %v965 = vsub.f32 %v716, %v922
  %v966 = vsub.f32 %v719, %v922
  %v967 = vsub.f32 %v722, %v922
  %v968 = vsub.f32 %v725, %v922
  %v969 = vsub.f32 %v728, %v922
  %v970 = vsub.f32 %v731, %v922
  %v971 = vsub.f32 %v734, %v922
  %v972 = vsub.f32 %v737, %v922
  %v973 = vsub.f32 %v740, %v922
  %v974 = vsub.f32 %v743, %v922
  %v975 = vsub.f32 %v746, %v922
  %v976 = vsub.f32 %v749, %v922
  %v977 = vsub.f32 %v752, %v922
  %v978 = vsub.f32 %v755, %v922
  %v979 = vsub.f32 %v758, %v922
  %v980 = vsub.f32 %v761, %v922
  %v981 = vsub.f32 %v764, %v922
  %v982 = vsub.f32 %v767, %v922
  %v983 = vsub.f32 %v770, %v922
  %v984 = vsub.f32 %v773, %v922
  %v985 = vsub.f32 %v776, %v922
  %v986 = vsub.f32 %v779, %v922
  %v987 = vmul.f32 %v923, %v923
  %v988 = vmul.f32 %v924, %v924
  %v989 = vmul.f32 %v925, %v925
  %v990 = vmul.f32 %v926, %v926
  %v991 = vmul.f32 %v927, %v927
  %v992 = vmul.f32 %v928, %v928
  %v993 = vmul.f32 %v929, %v929
  %v994 = vmul.f32 %v930, %v930
  %v995 = vmul.f32 %v931, %v931
  %v996 = vmul.f32 %v932, %v932
  %v997 = vmul.f32 %v933, %v933
  %v998 = vmul.f32 %v934, %v934
  %v999 = vmul.f32 %v935, %v935
  %v1000 = vmul.f32 %v936, %v936
  %v1001 = vmul.f32 %v937, %v937
  %v1002 = vmul.f32 %v938, %v938
  %v1003 = vmul.f32 %v939, %v939
  %v1004 = vmul.f32 %v940, %v940
  %v1005 = vmul.f32 %v941, %v941
  %v1006 = vmul.f32 %v942, %v942
  %v1007 = vmul.f32 %v943, %v943
  %v1008 = vmul.f32 %v944, %v944
  %v1009 = vmul.f32 %v945, %v945
  %v1010 = vmul.f32 %v946, %v946
  %v1011 = vmul.f32 %v947, %v947
  %v1012 = vmul.f32 %v948, %v948
  %v1013 = vmul.f32 %v949, %v949
  %v1014 = vmul.f32 %v950, %v950
  %v1015 = vmul.f32 %v951, %v951
  %v1016 = vmul.f32 %v952, %v952
  %v1017 = vmul.f32 %v953, %v953
  %v1018 = vmul.f32 %v954, %v954
  %v1019 = vmul.f32 %v955, %v955
  %v1020 = vmul.f32 %v956, %v956
  %v1021 = vmul.f32 %v957, %v957
  %v1022 = vmul.f32 %v958, %v958
  %v1023 = vmul.f32 %v959, %v959
  %v1024 = vmul.f32 %v960, %v960
  %v1025 = vmul.f32 %v961, %v961
  %v1026 = vmul.f32 %v962, %v962
  %v1027 = vmul.f32 %v963, %v963
  %v1028 = vmul.f32 %v964, %v964
  %v1029 = vmul.f32 %v965, %v965
  %v1030 = vmul.f32 %v966, %v966
  %v1031 = vmul.f32 %v967, %v967
  %v1032 = vmul.f32 %v968, %v968
  %v1033 = vmul.f32 %v969, %v969
  %v1034 = vmul.f32 %v970, %v970
  %v1035 = vmul.f32 %v971, %v971
  %v1036 = vmul.f32 %v972, %v972
  %v1037 = vmul.f32 %v973, %v973
  %v1038 = vmul.f32 %v974, %v974
  %v1039 = vmul.f32 %v975, %v975
  %v1040 = vmul.f32 %v976, %v976
  %v1041 = vmul.f32 %v977, %v977
  %v1042 = vmul.f32 %v978, %v978
  %v1043 = vmul.f32 %v979, %v979
  %v1044 = vmul.f32 %v980, %v980
  %v1045 = vmul.f32 %v981, %v981
  %v1046 = vmul.f32 %v982, %v982
  %v1047 = vmul.f32 %v983, %v983
  %v1048 = vmul.f32 %v984, %v984
  %v1049 = vmul.f32 %v985, %v985
  %v1050 = vmul.f32 %v986, %v986
  %v1051 = vsel %vm781, %v987, 0.0
  %v1052 = vsel %vm781, %v988, 0.0
  %v1053 = vadd.f32 %v1051, %v1052
  %v1054 = vsel %vm781, %v989, 0.0
  %v1055 = vadd.f32 %v1053, %v1054
  %v1056 = vsel %vm781, %v990, 0.0
  %v1057 = vadd.f32 %v1055, %v1056
  %v1058 = vsel %vm781, %v991, 0.0
  %v1059 = vadd.f32 %v1057, %v1058
  %v1060 = vsel %vm781, %v992, 0.0
  %v1061 = vadd.f32 %v1059, %v1060
  %v1062 = vsel %vm781, %v993, 0.0
  %v1063 = vadd.f32 %v1061, %v1062
  %v1064 = vsel %vm781, %v994, 0.0
  %v1065 = vadd.f32 %v1063, %v1064
  %v1066 = vsel %vm781, %v995, 0.0
  %v1067 = vadd.f32 %v1065, %v1066
  %v1068 = vsel %vm781, %v996, 0.0
  %v1069 = vadd.f32 %v1067, %v1068
  %v1070 = vsel %vm781, %v997, 0.0
  %v1071 = vadd.f32 %v1069, %v1070
  %v1072 = vsel %vm781, %v998, 0.0
  %v1073 = vadd.f32 %v1071, %v1072
  %v1074 = vsel %vm781, %v999, 0.0
  %v1075 = vadd.f32 %v1073, %v1074
  %v1076 = vsel %vm781, %v1000, 0.0
  %v1077 = vadd.f32 %v1075, %v1076
  %v1078 = vsel %vm781, %v1001, 0.0
  %v1079 = vadd.f32 %v1077, %v1078
  %v1080 = vsel %vm781, %v1002, 0.0
  %v1081 = vadd.f32 %v1079, %v1080
  %v1082 = vsel %vm781, %v1003, 0.0
  %v1083 = vadd.f32 %v1081, %v1082
  %v1084 = vsel %vm781, %v1004, 0.0
  %v1085 = vadd.f32 %v1083, %v1084
  %v1086 = vsel %vm781, %v1005, 0.0
  %v1087 = vadd.f32 %v1085, %v1086
  %v1088 = vsel %vm781, %v1006, 0.0
  %v1089 = vadd.f32 %v1087, %v1088
  %v1090 = vsel %vm781, %v1007, 0.0
  %v1091 = vadd.f32 %v1089, %v1090
  %v1092 = vsel %vm781, %v1008, 0.0
  %v1093 = vadd.f32 %v1091, %v1092
  %v1094 = vsel %vm781, %v1009, 0.0
  %v1095 = vadd.f32 %v1093, %v1094
  %v1096 = vsel %vm781, %v1010, 0.0
  %v1097 = vadd.f32 %v1095, %v1096
  %v1098 = vsel %vm781, %v1011, 0.0
  %v1099 = vadd.f32 %v1097, %v1098
  %v1100 = vsel %vm781, %v1012, 0.0
  %v1101 = vadd.f32 %v1099, %v1100
  %v1102 = vsel %vm781, %v1013, 0.0
  %v1103 = vadd.f32 %v1101, %v1102
  %v1104 = vsel %vm781, %v1014, 0.0
  %v1105 = vadd.f32 %v1103, %v1104
  %v1106 = vsel %vm781, %v1015, 0.0
  %v1107 = vadd.f32 %v1105, %v1106
  %v1108 = vsel %vm781, %v1016, 0.0
  %v1109 = vadd.f32 %v1107, %v1108
  %v1110 = vsel %vm781, %v1017, 0.0
  %v1111 = vadd.f32 %v1109, %v1110
  %v1112 = vsel %vm781, %v1018, 0.0
  %v1113 = vadd.f32 %v1111, %v1112
  %v1114 = vsel %vm781, %v1019, 0.0
  %v1115 = vadd.f32 %v1113, %v1114
  %v1116 = vsel %vm781, %v1020, 0.0
  %v1117 = vadd.f32 %v1115, %v1116
  %v1118 = vsel %vm781, %v1021, 0.0
  %v1119 = vadd.f32 %v1117, %v1118
  %v1120 = vsel %vm781, %v1022, 0.0
  %v1121 = vadd.f32 %v1119, %v1120
  %v1122 = vsel %vm781, %v1023, 0.0
  %v1123 = vadd.f32 %v1121, %v1122
  %v1124 = vsel %vm781, %v1024, 0.0
  %v1125 = vadd.f32 %v1123, %v1124
  %v1126 = vsel %vm781, %v1025, 0.0
  %v1127 = vadd.f32 %v1125, %v1126
  %v1128 = vsel %vm781, %v1026, 0.0
  %v1129 = vadd.f32 %v1127, %v1128
  %v1130 = vsel %vm781, %v1027, 0.0
  %v1131 = vadd.f32 %v1129, %v1130
  %v1132 = vsel %vm781, %v1028, 0.0
  %v1133 = vadd.f32 %v1131, %v1132
  %v1134 = vsel %vm781, %v1029, 0.0
  %v1135 = vadd.f32 %v1133, %v1134
  %v1136 = vsel %vm781, %v1030, 0.0
  %v1137 = vadd.f32 %v1135, %v1136
  %v1138 = vsel %vm781, %v1031, 0.0
  %v1139 = vadd.f32 %v1137, %v1138
  %v1140 = vsel %vm781, %v1032, 0.0
  %v1141 = vadd.f32 %v1139, %v1140
  %v1142 = vsel %vm781, %v1033, 0.0
  %v1143 = vadd.f32 %v1141, %v1142
  %v1144 = vsel %vm781, %v1034, 0.0
  %v1145 = vadd.f32 %v1143, %v1144
  %v1146 = vsel %vm781, %v1035, 0.0
  %v1147 = vadd.f32 %v1145, %v1146
  %v1148 = vsel %vm781, %v1036, 0.0
  %v1149 = vadd.f32 %v1147, %v1148
  %v1150 = vsel %vm781, %v1037, 0.0
  %v1151 = vadd.f32 %v1149, %v1150
  %v1152 = vsel %vm781, %v1038, 0.0
  %v1153 = vadd.f32 %v1151, %v1152
  %v1154 = vsel %vm781, %v1039, 0.0
  %v1155 = vadd.f32 %v1153, %v1154
  %v1156 = vsel %vm781, %v1040, 0.0
  %v1157 = vadd.f32 %v1155, %v1156
  %v1158 = vsel %vm781, %v1041, 0.0
  %v1159 = vadd.f32 %v1157, %v1158
  %v1160 = vsel %vm781, %v1042, 0.0
  %v1161 = vadd.f32 %v1159, %v1160
  %v1162 = vsel %vm781, %v1043, 0.0
  %v1163 = vadd.f32 %v1161, %v1162
  %v1164 = vsel %vm781, %v1044, 0.0
  %v1165 = vadd.f32 %v1163, %v1164
  %v1166 = vsel %vm781, %v1045, 0.0
  %v1167 = vadd.f32 %v1165, %v1166
  %v1168 = vsel %vm781, %v1046, 0.0
  %v1169 = vadd.f32 %v1167, %v1168
  %v1170 = vsel %vm781, %v1047, 0.0
  %v1171 = vadd.f32 %v1169, %v1170
  %v1172 = vsel %vm781, %v1048, 0.0
  %v1173 = vadd.f32 %v1171, %v1172
  %v1174 = vsel %vm781, %v1049, 0.0
  %v1175 = vadd.f32 %v1173, %v1174
  %v1176 = vsel %vm781, %v1050, 0.0
  %v1177 = vadd.f32 %v1175, %v1176
  %v1178 = vrot.slane %v1177, 4
  %v1179 = vadd.f32 %v1177, %v1178
  %v1180 = vrot.slane %v1179, 2
  %v1181 = vadd.f32 %v1179, %v1180
  %v1182 = vrot.slane %v1181, 1
  %v1183 = vadd.f32 %v1181, %v1182
  %v1184 = vmul.f32 %v1183, %v921
  %v1185 = vld [vmem:[%s3] sm:$0x1]
  %v1186 = vadd.f32 %v1184, 1e-05
  %v1187 = vrsqrt.pop %v1186
  %v1188 = vmul.f32 %v1187, %v1186
  %v1189 = vmul.f32 %v1188, %v1187
  %v1190 = vmul.f32 0.5, %v1189
  %v1191 = vsub.f32 1.5, %v1190
  %v1192 = vmul.f32 %v1187, %v1191
  %vm1193 = vweird.f32 %v1186
  %vm1194 = vweird.f32 %v1187
  %vm1195 = vmor %vm1193, %vm1194
  %v1196 = vsel %vm1195, %v1187, %v1192
  %v1197 = vmul.f32 %v1185, %v1196
  %v1199 = vperm.slane %v1197, 0
  %v1201 = vmul.f32 %v923, %v1199
  %v1202 = vmul.f32 %v924, %v1199
  %v1203 = vmul.f32 %v925, %v1199
  %v1204 = vmul.f32 %v926, %v1199
  %v1205 = vmul.f32 %v927, %v1199
  %v1206 = vmul.f32 %v928, %v1199
  %v1207 = vmul.f32 %v929, %v1199
  %v1208 = vmul.f32 %v930, %v1199
  %v1209 = vmul.f32 %v931, %v1199
  %v1210 = vmul.f32 %v932, %v1199
  %v1211 = vmul.f32 %v933, %v1199
  %v1212 = vmul.f32 %v934, %v1199
  %v1213 = vmul.f32 %v935, %v1199
  %v1214 = vmul.f32 %v936, %v1199
  %v1215 = vmul.f32 %v937, %v1199
  %v1216 = vmul.f32 %v938, %v1199
  %v1217 = vmul.f32 %v939, %v1199
  %v1218 = vmul.f32 %v940, %v1199
  %v1219 = vmul.f32 %v941, %v1199
  %v1220 = vmul.f32 %v942, %v1199
  %v1221 = vmul.f32 %v943, %v1199
  %v1222 = vmul.f32 %v944, %v1199
  %v1223 = vmul.f32 %v945, %v1199
  %v1224 = vmul.f32 %v946, %v1199
  %v1225 = vmul.f32 %v947, %v1199
  %v1226 = vmul.f32 %v948, %v1199
  %v1227 = vmul.f32 %v949, %v1199
  %v1228 = vmul.f32 %v950, %v1199
  %v1229 = vmul.f32 %v951, %v1199
  %v1230 = vmul.f32 %v952, %v1199
  %v1231 = vmul.f32 %v953, %v1199
  %v1232 = vmul.f32 %v954, %v1199
  %v1233 = vmul.f32 %v955, %v1199
  %v1234 = vmul.f32 %v956, %v1199
  %v1235 = vmul.f32 %v957, %v1199
  %v1236 = vmul.f32 %v958, %v1199
  %v1237 = vmul.f32 %v959, %v1199
  %v1238 = vmul.f32 %v960, %v1199
  %v1239 = vmul.f32 %v961, %v1199
  %v1240 = vmul.f32 %v962, %v1199
  %v1241 = vmul.f32 %v963, %v1199
  %v1242 = vmul.f32 %v964, %v1199
  %v1243 = vmul.f32 %v965, %v1199
  %v1244 = vmul.f32 %v966, %v1199
  %v1245 = vmul.f32 %v967, %v1199
  %v1246 = vmul.f32 %v968, %v1199
  %v1247 = vmul.f32 %v969, %v1199
  %v1248 = vmul.f32 %v970, %v1199
  %v1249 = vmul.f32 %v971, %v1199
  %v1250 = vmul.f32 %v972, %v1199
  %v1251 = vmul.f32 %v973, %v1199
  %v1252 = vmul.f32 %v974, %v1199
  %v1253 = vmul.f32 %v975, %v1199
  %v1254 = vmul.f32 %v976, %v1199
  %v1255 = vmul.f32 %v977, %v1199
  %v1256 = vmul.f32 %v978, %v1199
  %v1257 = vmul.f32 %v979, %v1199
  %v1258 = vmul.f32 %v980, %v1199
  %v1259 = vmul.f32 %v981, %v1199
  %v1260 = vmul.f32 %v982, %v1199
  %v1261 = vmul.f32 %v983, %v1199
  %v1262 = vmul.f32 %v984, %v1199
  %v1263 = vmul.f32 %v985, %v1199
  %v1264 = vmul.f32 %v986, %v1199
  %v1265 = vld [vmem:[%s4] sm:$0x1]
  %v1267 = vperm.slane %v1265, 0
  %v1269 = vadd.f32 %v1201, %v1267
  %v1270 = vadd.f32 %v1202, %v1267
  %v1271 = vadd.f32 %v1203, %v1267
  %v1272 = vadd.f32 %v1204, %v1267
  %v1273 = vadd.f32 %v1205, %v1267
  %v1274 = vadd.f32 %v1206, %v1267
  %v1275 = vadd.f32 %v1207, %v1267
  %v1276 = vadd.f32 %v1208, %v1267
  %v1277 = vadd.f32 %v1209, %v1267
  %v1278 = vadd.f32 %v1210, %v1267
  %v1279 = vadd.f32 %v1211, %v1267
  %v1280 = vadd.f32 %v1212, %v1267
  %v1281 = vadd.f32 %v1213, %v1267
  %v1282 = vadd.f32 %v1214, %v1267
  %v1283 = vadd.f32 %v1215, %v1267
  %v1284 = vadd.f32 %v1216, %v1267
  %v1285 = vadd.f32 %v1217, %v1267
  %v1286 = vadd.f32 %v1218, %v1267
  %v1287 = vadd.f32 %v1219, %v1267
  %v1288 = vadd.f32 %v1220, %v1267
  %v1289 = vadd.f32 %v1221, %v1267
  %v1290 = vadd.f32 %v1222, %v1267
  %v1291 = vadd.f32 %v1223, %v1267
  %v1292 = vadd.f32 %v1224, %v1267
  %v1293 = vadd.f32 %v1225, %v1267
  %v1294 = vadd.f32 %v1226, %v1267
  %v1295 = vadd.f32 %v1227, %v1267
  %v1296 = vadd.f32 %v1228, %v1267
  %v1297 = vadd.f32 %v1229, %v1267
  %v1298 = vadd.f32 %v1230, %v1267
  %v1299 = vadd.f32 %v1231, %v1267
  %v1300 = vadd.f32 %v1232, %v1267
  %v1301 = vadd.f32 %v1233, %v1267
  %v1302 = vadd.f32 %v1234, %v1267
  %v1303 = vadd.f32 %v1235, %v1267
  %v1304 = vadd.f32 %v1236, %v1267
  %v1305 = vadd.f32 %v1237, %v1267
  %v1306 = vadd.f32 %v1238, %v1267
  %v1307 = vadd.f32 %v1239, %v1267
  %v1308 = vadd.f32 %v1240, %v1267
  %v1309 = vadd.f32 %v1241, %v1267
  %v1310 = vadd.f32 %v1242, %v1267
  %v1311 = vadd.f32 %v1243, %v1267
  %v1312 = vadd.f32 %v1244, %v1267
  %v1313 = vadd.f32 %v1245, %v1267
  %v1314 = vadd.f32 %v1246, %v1267
  %v1315 = vadd.f32 %v1247, %v1267
  %v1316 = vadd.f32 %v1248, %v1267
  %v1317 = vadd.f32 %v1249, %v1267
  %v1318 = vadd.f32 %v1250, %v1267
  %v1319 = vadd.f32 %v1251, %v1267
  %v1320 = vadd.f32 %v1252, %v1267
  %v1321 = vadd.f32 %v1253, %v1267
  %v1322 = vadd.f32 %v1254, %v1267
  %v1323 = vadd.f32 %v1255, %v1267
  %v1324 = vadd.f32 %v1256, %v1267
  %v1325 = vadd.f32 %v1257, %v1267
  %v1326 = vadd.f32 %v1258, %v1267
  %v1327 = vadd.f32 %v1259, %v1267
  %v1328 = vadd.f32 %v1260, %v1267
  %v1329 = vadd.f32 %v1261, %v1267
  %v1330 = vadd.f32 %v1262, %v1267
  %v1331 = vadd.f32 %v1263, %v1267
  %v1332 = vadd.f32 %v1264, %v1267
  %v1333 = vmax.f32 %v1269, 0.0
  %v1334 = vmax.f32 %v1270, 0.0
  %v1335 = vmax.f32 %v1271, 0.0
  %v1336 = vmax.f32 %v1272, 0.0
  %v1337 = vmax.f32 %v1273, 0.0
  %v1338 = vmax.f32 %v1274, 0.0
  %v1339 = vmax.f32 %v1275, 0.0
  %v1340 = vmax.f32 %v1276, 0.0
  %v1341 = vmax.f32 %v1277, 0.0
  %v1342 = vmax.f32 %v1278, 0.0
  %v1343 = vmax.f32 %v1279, 0.0
  %v1344 = vmax.f32 %v1280, 0.0
  %v1345 = vmax.f32 %v1281, 0.0
  %v1346 = vmax.f32 %v1282, 0.0
  %v1347 = vmax.f32 %v1283, 0.0
  %v1348 = vmax.f32 %v1284, 0.0
  %v1349 = vmax.f32 %v1285, 0.0
  %v1350 = vmax.f32 %v1286, 0.0
  %v1351 = vmax.f32 %v1287, 0.0
  %v1352 = vmax.f32 %v1288, 0.0
  %v1353 = vmax.f32 %v1289, 0.0
  %v1354 = vmax.f32 %v1290, 0.0
  %v1355 = vmax.f32 %v1291, 0.0
  %v1356 = vmax.f32 %v1292, 0.0
  %v1357 = vmax.f32 %v1293, 0.0
  %v1358 = vmax.f32 %v1294, 0.0
  %v1359 = vmax.f32 %v1295, 0.0
  %v1360 = vmax.f32 %v1296, 0.0
  %v1361 = vmax.f32 %v1297, 0.0
  %v1362 = vmax.f32 %v1298, 0.0
  %v1363 = vmax.f32 %v1299, 0.0
  %v1364 = vmax.f32 %v1300, 0.0
  %v1365 = vmax.f32 %v1301, 0.0
  %v1366 = vmax.f32 %v1302, 0.0
  %v1367 = vmax.f32 %v1303, 0.0
  %v1368 = vmax.f32 %v1304, 0.0
  %v1369 = vmax.f32 %v1305, 0.0
  %v1370 = vmax.f32 %v1306, 0.0
  %v1371 = vmax.f32 %v1307, 0.0
  %v1372 = vmax.f32 %v1308, 0.0
  %v1373 = vmax.f32 %v1309, 0.0
  %v1374 = vmax.f32 %v1310, 0.0
  %v1375 = vmax.f32 %v1311, 0.0
  %v1376 = vmax.f32 %v1312, 0.0
  %v1377 = vmax.f32 %v1313, 0.0
  %v1378 = vmax.f32 %v1314, 0.0
  %v1379 = vmax.f32 %v1315, 0.0
  %v1380 = vmax.f32 %v1316, 0.0
  %v1381 = vmax.f32 %v1317, 0.0
  %v1382 = vmax.f32 %v1318, 0.0
  %v1383 = vmax.f32 %v1319, 0.0
  %v1384 = vmax.f32 %v1320, 0.0
  %v1385 = vmax.f32 %v1321, 0.0
  %v1386 = vmax.f32 %v1322, 0.0
  %v1387 = vmax.f32 %v1323, 0.0
  %v1388 = vmax.f32 %v1324, 0.0
  %v1389 = vmax.f32 %v1325, 0.0
  %v1390 = vmax.f32 %v1326, 0.0
  %v1391 = vmax.f32 %v1327, 0.0
  %v1392 = vmax.f32 %v1328, 0.0
  %v1393 = vmax.f32 %v1329, 0.0
  %v1394 = vmax.f32 %v1330, 0.0
  %v1395 = vmax.f32 %v1331, 0.0
  %v1396 = vmax.f32 %v1332, 0.0
  %1397 = vst.msk [vmem:[%s5] sm:$0xff] %vm781, %v1333
  %1398 = vst.msk [vmem:[%s5 + $0x8] sm:$0xff] %vm781, %v1334
  %1399 = vst.msk [vmem:[%s5 + $0x10] sm:$0xff] %vm781, %v1335
  %1400 = vst.msk [vmem:[%s5 + $0x18] sm:$0xff] %vm781, %v1336
  %1401 = vst.msk [vmem:[%s5 + $0x20] sm:$0xff] %vm781, %v1337
  %1402 = vst.msk [vmem:[%s5 + $0x28] sm:$0xff] %vm781, %v1338
  %1403 = vst.msk [vmem:[%s5 + $0x30] sm:$0xff] %vm781, %v1339
  %1404 = vst.msk [vmem:[%s5 + $0x38] sm:$0xff] %vm781, %v1340
  %1405 = vst.msk [vmem:[%s5 + $0x40] sm:$0xff] %vm781, %v1341
  %1406 = vst.msk [vmem:[%s5 + $0x48] sm:$0xff] %vm781, %v1342
  %1407 = vst.msk [vmem:[%s5 + $0x50] sm:$0xff] %vm781, %v1343
  %1408 = vst.msk [vmem:[%s5 + $0x58] sm:$0xff] %vm781, %v1344
  %1409 = vst.msk [vmem:[%s5 + $0x60] sm:$0xff] %vm781, %v1345
  %1410 = vst.msk [vmem:[%s5 + $0x68] sm:$0xff] %vm781, %v1346
  %1411 = vst.msk [vmem:[%s5 + $0x70] sm:$0xff] %vm781, %v1347
  %1412 = vst.msk [vmem:[%s5 + $0x78] sm:$0xff] %vm781, %v1348
  %1413 = vst.msk [vmem:[%s5 + $0x80] sm:$0xff] %vm781, %v1349
  %1414 = vst.msk [vmem:[%s5 + $0x88] sm:$0xff] %vm781, %v1350
  %1415 = vst.msk [vmem:[%s5 + $0x90] sm:$0xff] %vm781, %v1351
  %1416 = vst.msk [vmem:[%s5 + $0x98] sm:$0xff] %vm781, %v1352
  %1417 = vst.msk [vmem:[%s5 + $0xa0] sm:$0xff] %vm781, %v1353
  %1418 = vst.msk [vmem:[%s5 + $0xa8] sm:$0xff] %vm781, %v1354
  %1419 = vst.msk [vmem:[%s5 + $0xb0] sm:$0xff] %vm781, %v1355
  %1420 = vst.msk [vmem:[%s5 + $0xb8] sm:$0xff] %vm781, %v1356
  %1421 = vst.msk [vmem:[%s5 + $0xc0] sm:$0xff] %vm781, %v1357
  %1422 = vst.msk [vmem:[%s5 + $0xc8] sm:$0xff] %vm781, %v1358
  %1423 = vst.msk [vmem:[%s5 + $0xd0] sm:$0xff] %vm781, %v1359
  %1424 = vst.msk [vmem:[%s5 + $0xd8] sm:$0xff] %vm781, %v1360
  %1425 = vst.msk [vmem:[%s5 + $0xe0] sm:$0xff] %vm781, %v1361
  %1426 = vst.msk [vmem:[%s5 + $0xe8] sm:$0xff] %vm781, %v1362
  %1427 = vst.msk [vmem:[%s5 + $0xf0] sm:$0xff] %vm781, %v1363
  %1428 = vst.msk [vmem:[%s5 + $0xf8] sm:$0xff] %vm781, %v1364
  %1429 = vst.msk [vmem:[%s5 + $0x100] sm:$0xff] %vm781, %v1365
  %1430 = vst.msk [vmem:[%s5 + $0x108] sm:$0xff] %vm781, %v1366
  %1431 = vst.msk [vmem:[%s5 + $0x110] sm:$0xff] %vm781, %v1367
  %1432 = vst.msk [vmem:[%s5 + $0x118] sm:$0xff] %vm781, %v1368
  %1433 = vst.msk [vmem:[%s5 + $0x120] sm:$0xff] %vm781, %v1369
  %1434 = vst.msk [vmem:[%s5 + $0x128] sm:$0xff] %vm781, %v1370
  %1435 = vst.msk [vmem:[%s5 + $0x130] sm:$0xff] %vm781, %v1371
  %1436 = vst.msk [vmem:[%s5 + $0x138] sm:$0xff] %vm781, %v1372
  %1437 = vst.msk [vmem:[%s5 + $0x140] sm:$0xff] %vm781, %v1373
  %1438 = vst.msk [vmem:[%s5 + $0x148] sm:$0xff] %vm781, %v1374
  %1439 = vst.msk [vmem:[%s5 + $0x150] sm:$0xff] %vm781, %v1375
  %1440 = vst.msk [vmem:[%s5 + $0x158] sm:$0xff] %vm781, %v1376
  %1441 = vst.msk [vmem:[%s5 + $0x160] sm:$0xff] %vm781, %v1377
  %1442 = vst.msk [vmem:[%s5 + $0x168] sm:$0xff] %vm781, %v1378
  %1443 = vst.msk [vmem:[%s5 + $0x170] sm:$0xff] %vm781, %v1379
  %1444 = vst.msk [vmem:[%s5 + $0x178] sm:$0xff] %vm781, %v1380
  %1445 = vst.msk [vmem:[%s5 + $0x180] sm:$0xff] %vm781, %v1381
  %1446 = vst.msk [vmem:[%s5 + $0x188] sm:$0xff] %vm781, %v1382
  %1447 = vst.msk [vmem:[%s5 + $0x190] sm:$0xff] %vm781, %v1383
  %1448 = vst.msk [vmem:[%s5 + $0x198] sm:$0xff] %vm781, %v1384
  %1449 = vst.msk [vmem:[%s5 + $0x1a0] sm:$0xff] %vm781, %v1385
  %1450 = vst.msk [vmem:[%s5 + $0x1a8] sm:$0xff] %vm781, %v1386
  %1451 = vst.msk [vmem:[%s5 + $0x1b0] sm:$0xff] %vm781, %v1387
  %1452 = vst.msk [vmem:[%s5 + $0x1b8] sm:$0xff] %vm781, %v1388
  %1453 = vst.msk [vmem:[%s5 + $0x1c0] sm:$0xff] %vm781, %v1389
  %1454 = vst.msk [vmem:[%s5 + $0x1c8] sm:$0xff] %vm781, %v1390
  %1455 = vst.msk [vmem:[%s5 + $0x1d0] sm:$0xff] %vm781, %v1391
  %1456 = vst.msk [vmem:[%s5 + $0x1d8] sm:$0xff] %vm781, %v1392
  %1457 = vst.msk [vmem:[%s5 + $0x1e0] sm:$0xff] %vm781, %v1393
  %1458 = vst.msk [vmem:[%s5 + $0x1e8] sm:$0xff] %vm781, %v1394
  %1459 = vst.msk [vmem:[%s5 + $0x1f0] sm:$0xff] %vm781, %v1395
  %1460 = vst.msk [vmem:[%s5 + $0x1f8] sm:$0xff] %vm781, %v1396
  // Predicated region
  $region22: #{generator_forward.16} parent=0 // pred_check
    _
  $region23: #{generator_forward.16} parent=0 // pred_check_branch
    %1462 = sbr.rel (0) target = $region25
  $region24: #{generator_forward.16} parent=0 // pred_region
    _
  $region25: #{generator_forward.16} parent=0 // pred_fallthru
    _
  // Predicated region
  $region26: #{generator_forward.16} parent=0 // pred_check
    _
  $region27: #{generator_forward.16} parent=0 // pred_check_branch
    %1464 = sbr.rel (0) target = $region29
  $region28: #{generator_forward.16} parent=0 // pred_region
    _
  $region29: #{generator_forward.16} parent=0 // pred_fallthru
    _

// kernel: generator_forward.17
$region0: #{generator_forward.17}
  #allocation0 [shape = 'u32[]', space=smem, size = 0x4, offset = 0x4, fixed_abs, tag = 'smem constant byte address 0x4 - core index']
  #allocation1 [shape = 'u32[72,128]{1,0:T(1,128)}', space=vmem, size = 0x9000, scoped, tag = 'internal scratch']
  %s0 = inlined_call_operand.vmem [shape: f32[512,392], index: 0, kind: input, shape index: {}]
  %s1 = inlined_call_operand.vmem [shape: f32[392,3], index: 1, kind: input, shape index: {}]
  %s2 = inlined_call_operand.vmem [shape: f32[1,3], index: 2, kind: input, shape index: {}]
  %s3 = inlined_call_operand.vmem [shape: f32[512,3], index: 3, kind: output, shape index: {}]
  %s4 = sld [smem:[#allocation0]]
  $region22: #{generator_forward.17} parent=0
    _
  %s6 = ssub.s32 1, %s4
  %s7 = scalar_select 0, %s6, %s4
  // Predicated region
  $region2: #{generator_forward.17} parent=0 // pred_check
    _
  $region3: #{generator_forward.17} parent=0 // pred_check_branch
    %9 = sbr.rel (0) target = $region5
  $region4: #{generator_forward.17} parent=0 // pred_region
    _
  $region5: #{generator_forward.17} parent=0 // pred_fallthru
    _
  // Predicated region
  $region6: #{generator_forward.17} parent=0 // pred_check
    _
  $region7: #{generator_forward.17} parent=0 // pred_check_branch
    %11 = sbr.rel (0) target = $region9
  $region8: #{generator_forward.17} parent=0 // pred_region
    _
  $region9: #{generator_forward.17} parent=0 // pred_fallthru
    _
  // Predicated region
  $region10: #{generator_forward.17} parent=0 // pred_check
    _
  $region11: #{generator_forward.17} parent=0 // pred_check_branch
    %13 = sbr.rel (0) target = $region13
  $region12: #{generator_forward.17} parent=0 // pred_region
    _
  $region13: #{generator_forward.17} parent=0 // pred_fallthru
    _
  %v14 = vld [vmem:[%s0] sm:$0xff]
  %v15 = vld [vmem:[%s0 + $0x8] sm:$0xff]
  %v16 = vld [vmem:[%s0 + $0x10] sm:$0xff]
  %v17 = vld [vmem:[%s0 + $0x18] sm:$0xff]
  %v18 = vld [vmem:[%s0 + $0x20] sm:$0xff]
  %v19 = vld [vmem:[%s0 + $0x28] sm:$0xff]
  %v20 = vld [vmem:[%s0 + $0x30] sm:$0xff]
  %v21 = vld [vmem:[%s0 + $0x38] sm:$0xff]
  %v22 = vld [vmem:[%s0 + $0x40] sm:$0xff]
  %v23 = vld [vmem:[%s0 + $0x48] sm:$0xff]
  %v24 = vld [vmem:[%s0 + $0x50] sm:$0xff]
  %v25 = vld [vmem:[%s0 + $0x58] sm:$0xff]
  %v26 = vld [vmem:[%s0 + $0x60] sm:$0xff]
  %v27 = vld [vmem:[%s0 + $0x68] sm:$0xff]
  %v28 = vld [vmem:[%s0 + $0x70] sm:$0xff]
  %v29 = vld [vmem:[%s0 + $0x78] sm:$0xff]
  %v30 = vld [vmem:[%s0 + $0x80] sm:$0xff]
  %v31 = vld [vmem:[%s0 + $0x88] sm:$0xff]
  %v32 = vld [vmem:[%s0 + $0x90] sm:$0xff]
  %v33 = vld [vmem:[%s0 + $0x98] sm:$0xff]
  %v34 = vld [vmem:[%s0 + $0xa0] sm:$0xff]
  %v35 = vld [vmem:[%s0 + $0xa8] sm:$0xff]
  %v36 = vld [vmem:[%s0 + $0xb0] sm:$0xff]
  %v37 = vld [vmem:[%s0 + $0xb8] sm:$0xff]
  %v38 = vld [vmem:[%s0 + $0xc0] sm:$0xff]
  %v39 = vld [vmem:[%s0 + $0xc8] sm:$0xff]
  %v40 = vld [vmem:[%s0 + $0xd0] sm:$0xff]
  %v41 = vld [vmem:[%s0 + $0xd8] sm:$0xff]
  %v42 = vld [vmem:[%s0 + $0xe0] sm:$0xff]
  %v43 = vld [vmem:[%s0 + $0xe8] sm:$0xff]
  %v44 = vld [vmem:[%s0 + $0xf0] sm:$0xff]
  %v45 = vld [vmem:[%s0 + $0xf8] sm:$0xff]
  %v46 = vld [vmem:[%s0 + $0x100] sm:$0xff]
  %v47 = vld [vmem:[%s0 + $0x108] sm:$0xff]
  %v48 = vld [vmem:[%s0 + $0x110] sm:$0xff]
  %v49 = vld [vmem:[%s0 + $0x118] sm:$0xff]
  %v50 = vld [vmem:[%s0 + $0x120] sm:$0xff]
  %v51 = vld [vmem:[%s0 + $0x128] sm:$0xff]
  %v52 = vld [vmem:[%s0 + $0x130] sm:$0xff]
  %v53 = vld [vmem:[%s0 + $0x138] sm:$0xff]
  %v54 = vld [vmem:[%s0 + $0x140] sm:$0xff]
  %v55 = vld [vmem:[%s0 + $0x148] sm:$0xff]
  %v56 = vld [vmem:[%s0 + $0x150] sm:$0xff]
  %v57 = vld [vmem:[%s0 + $0x158] sm:$0xff]
  %v58 = vld [vmem:[%s0 + $0x160] sm:$0xff]
  %v59 = vld [vmem:[%s0 + $0x168] sm:$0xff]
  %v60 = vld [vmem:[%s0 + $0x170] sm:$0xff]
  %v61 = vld [vmem:[%s0 + $0x178] sm:$0xff]
  %v62 = vld [vmem:[%s0 + $0x180] sm:$0xff]
  %v63 = vld [vmem:[%s0 + $0x188] sm:$0xff]
  %v64 = vld [vmem:[%s0 + $0x190] sm:$0xff]
  %v65 = vld [vmem:[%s0 + $0x198] sm:$0xff]
  %v66 = vld [vmem:[%s0 + $0x1a0] sm:$0xff]
  %v67 = vld [vmem:[%s0 + $0x1a8] sm:$0xff]
  %v68 = vld [vmem:[%s0 + $0x1b0] sm:$0xff]
  %v69 = vld [vmem:[%s0 + $0x1b8] sm:$0xff]
  %v70 = vld [vmem:[%s0 + $0x1c0] sm:$0xff]
  %v71 = vld [vmem:[%s0 + $0x1c8] sm:$0xff]
  %v72 = vld [vmem:[%s0 + $0x1d0] sm:$0xff]
  %v73 = vld [vmem:[%s0 + $0x1d8] sm:$0xff]
  %v74 = vld [vmem:[%s0 + $0x1e0] sm:$0xff]
  %v75 = vld [vmem:[%s0 + $0x1e8] sm:$0xff]
  %v76 = vld [vmem:[%s0 + $0x1f0] sm:$0xff]
  %v77 = vld [vmem:[%s0 + $0x1f8] sm:$0xff]
  %v78 = vld [vmem:[%s0 + $0x200] sm:$0xff]
  %v79 = vld [vmem:[%s0 + $0x208] sm:$0xff]
  %v80 = vld [vmem:[%s0 + $0x210] sm:$0xff]
  %v81 = vld [vmem:[%s0 + $0x218] sm:$0xff]
  %v82 = vld [vmem:[%s0 + $0x220] sm:$0xff]
  %v83 = vld [vmem:[%s0 + $0x228] sm:$0xff]
  %v84 = vld [vmem:[%s0 + $0x230] sm:$0xff]
  %v85 = vld [vmem:[%s0 + $0x238] sm:$0xff]
  %v86 = vld [vmem:[%s0 + $0x240] sm:$0xff]
  %v87 = vld [vmem:[%s0 + $0x248] sm:$0xff]
  %v88 = vld [vmem:[%s0 + $0x250] sm:$0xff]
  %v89 = vld [vmem:[%s0 + $0x258] sm:$0xff]
  %v90 = vld [vmem:[%s0 + $0x260] sm:$0xff]
  %v91 = vld [vmem:[%s0 + $0x268] sm:$0xff]
  %v92 = vld [vmem:[%s0 + $0x270] sm:$0xff]
  %v93 = vld [vmem:[%s0 + $0x278] sm:$0xff]
  %v94 = vld [vmem:[%s0 + $0x280] sm:$0xff]
  %v95 = vld [vmem:[%s0 + $0x288] sm:$0xff]
  %v96 = vld [vmem:[%s0 + $0x290] sm:$0xff]
  %v97 = vld [vmem:[%s0 + $0x298] sm:$0xff]
  %v98 = vld [vmem:[%s0 + $0x2a0] sm:$0xff]
  %v99 = vld [vmem:[%s0 + $0x2a8] sm:$0xff]
  %v100 = vld [vmem:[%s0 + $0x2b0] sm:$0xff]
  %v101 = vld [vmem:[%s0 + $0x2b8] sm:$0xff]
  %v102 = vld [vmem:[%s0 + $0x2c0] sm:$0xff]
  %v103 = vld [vmem:[%s0 + $0x2c8] sm:$0xff]
  %v104 = vld [vmem:[%s0 + $0x2d0] sm:$0xff]
  %v105 = vld [vmem:[%s0 + $0x2d8] sm:$0xff]
  %v106 = vld [vmem:[%s0 + $0x2e0] sm:$0xff]
  %v107 = vld [vmem:[%s0 + $0x2e8] sm:$0xff]
  %v108 = vld [vmem:[%s0 + $0x2f0] sm:$0xff]
  %v109 = vld [vmem:[%s0 + $0x2f8] sm:$0xff]
  %v110 = vld [vmem:[%s0 + $0x300] sm:$0xff]
  %v111 = vld [vmem:[%s0 + $0x308] sm:$0xff]
  %v112 = vld [vmem:[%s0 + $0x310] sm:$0xff]
  %v113 = vld [vmem:[%s0 + $0x318] sm:$0xff]
  %v114 = vld [vmem:[%s0 + $0x320] sm:$0xff]
  %v115 = vld [vmem:[%s0 + $0x328] sm:$0xff]
  %v116 = vld [vmem:[%s0 + $0x330] sm:$0xff]
  %v117 = vld [vmem:[%s0 + $0x338] sm:$0xff]
  %v118 = vld [vmem:[%s0 + $0x340] sm:$0xff]
  %v119 = vld [vmem:[%s0 + $0x348] sm:$0xff]
  %v120 = vld [vmem:[%s0 + $0x350] sm:$0xff]
  %v121 = vld [vmem:[%s0 + $0x358] sm:$0xff]
  %v122 = vld [vmem:[%s0 + $0x360] sm:$0xff]
  %v123 = vld [vmem:[%s0 + $0x368] sm:$0xff]
  %v124 = vld [vmem:[%s0 + $0x370] sm:$0xff]
  %v125 = vld [vmem:[%s0 + $0x378] sm:$0xff]
  %v126 = vld [vmem:[%s0 + $0x380] sm:$0xff]
  %v127 = vld [vmem:[%s0 + $0x388] sm:$0xff]
  %v128 = vld [vmem:[%s0 + $0x390] sm:$0xff]
  %v129 = vld [vmem:[%s0 + $0x398] sm:$0xff]
  %v130 = vld [vmem:[%s0 + $0x3a0] sm:$0xff]
  %v131 = vld [vmem:[%s0 + $0x3a8] sm:$0xff]
  %v132 = vld [vmem:[%s0 + $0x3b0] sm:$0xff]
  %v133 = vld [vmem:[%s0 + $0x3b8] sm:$0xff]
  %v134 = vld [vmem:[%s0 + $0x3c0] sm:$0xff]
  %v135 = vld [vmem:[%s0 + $0x3c8] sm:$0xff]
  %v136 = vld [vmem:[%s0 + $0x3d0] sm:$0xff]
  %v137 = vld [vmem:[%s0 + $0x3d8] sm:$0xff]
  %v138 = vld [vmem:[%s0 + $0x3e0] sm:$0xff]
  %v139 = vld [vmem:[%s0 + $0x3e8] sm:$0xff]
  %v140 = vld [vmem:[%s0 + $0x3f0] sm:$0xff]
  %v141 = vld [vmem:[%s0 + $0x3f8] sm:$0xff]
  %v142 = vld [vmem:[%s0 + $0x400] sm:$0xff]
  %v143 = vld [vmem:[%s0 + $0x408] sm:$0xff]
  %v144 = vld [vmem:[%s0 + $0x410] sm:$0xff]
  %v145 = vld [vmem:[%s0 + $0x418] sm:$0xff]
  %v146 = vld [vmem:[%s0 + $0x420] sm:$0xff]
  %v147 = vld [vmem:[%s0 + $0x428] sm:$0xff]
  %v148 = vld [vmem:[%s0 + $0x430] sm:$0xff]
  %v149 = vld [vmem:[%s0 + $0x438] sm:$0xff]
  %v150 = vld [vmem:[%s0 + $0x440] sm:$0xff]
  %v151 = vld [vmem:[%s0 + $0x448] sm:$0xff]
  %v152 = vld [vmem:[%s0 + $0x450] sm:$0xff]
  %v153 = vld [vmem:[%s0 + $0x458] sm:$0xff]
  %v154 = vld [vmem:[%s0 + $0x460] sm:$0xff]
  %v155 = vld [vmem:[%s0 + $0x468] sm:$0xff]
  %v156 = vld [vmem:[%s0 + $0x470] sm:$0xff]
  %v157 = vld [vmem:[%s0 + $0x478] sm:$0xff]
  %v158 = vld [vmem:[%s0 + $0x480] sm:$0xff]
  %v159 = vld [vmem:[%s0 + $0x488] sm:$0xff]
  %v160 = vld [vmem:[%s0 + $0x490] sm:$0xff]
  %v161 = vld [vmem:[%s0 + $0x498] sm:$0xff]
  %v162 = vld [vmem:[%s0 + $0x4a0] sm:$0xff]
  %v163 = vld [vmem:[%s0 + $0x4a8] sm:$0xff]
  %v164 = vld [vmem:[%s0 + $0x4b0] sm:$0xff]
  %v165 = vld [vmem:[%s0 + $0x4b8] sm:$0xff]
  %v166 = vld [vmem:[%s0 + $0x4c0] sm:$0xff]
  %v167 = vld [vmem:[%s0 + $0x4c8] sm:$0xff]
  %v168 = vld [vmem:[%s0 + $0x4d0] sm:$0xff]
  %v169 = vld [vmem:[%s0 + $0x4d8] sm:$0xff]
  %v170 = vld [vmem:[%s0 + $0x4e0] sm:$0xff]
  %v171 = vld [vmem:[%s0 + $0x4e8] sm:$0xff]
  %v172 = vld [vmem:[%s0 + $0x4f0] sm:$0xff]
  %v173 = vld [vmem:[%s0 + $0x4f8] sm:$0xff]
  %v174 = vld [vmem:[%s0 + $0x500] sm:$0xff]
  %v175 = vld [vmem:[%s0 + $0x508] sm:$0xff]
  %v176 = vld [vmem:[%s0 + $0x510] sm:$0xff]
  %v177 = vld [vmem:[%s0 + $0x518] sm:$0xff]
  %v178 = vld [vmem:[%s0 + $0x520] sm:$0xff]
  %v179 = vld [vmem:[%s0 + $0x528] sm:$0xff]
  %v180 = vld [vmem:[%s0 + $0x530] sm:$0xff]
  %v181 = vld [vmem:[%s0 + $0x538] sm:$0xff]
  %v182 = vld [vmem:[%s0 + $0x540] sm:$0xff]
  %v183 = vld [vmem:[%s0 + $0x548] sm:$0xff]
  %v184 = vld [vmem:[%s0 + $0x550] sm:$0xff]
  %v185 = vld [vmem:[%s0 + $0x558] sm:$0xff]
  %v186 = vld [vmem:[%s0 + $0x560] sm:$0xff]
  %v187 = vld [vmem:[%s0 + $0x568] sm:$0xff]
  %v188 = vld [vmem:[%s0 + $0x570] sm:$0xff]
  %v189 = vld [vmem:[%s0 + $0x578] sm:$0xff]
  %v190 = vld [vmem:[%s0 + $0x580] sm:$0xff]
  %v191 = vld [vmem:[%s0 + $0x588] sm:$0xff]
  %v192 = vld [vmem:[%s0 + $0x590] sm:$0xff]
  %v193 = vld [vmem:[%s0 + $0x598] sm:$0xff]
  %v194 = vld [vmem:[%s0 + $0x5a0] sm:$0xff]
  %v195 = vld [vmem:[%s0 + $0x5a8] sm:$0xff]
  %v196 = vld [vmem:[%s0 + $0x5b0] sm:$0xff]
  %v197 = vld [vmem:[%s0 + $0x5b8] sm:$0xff]
  %v198 = vld [vmem:[%s0 + $0x5c0] sm:$0xff]
  %v199 = vld [vmem:[%s0 + $0x5c8] sm:$0xff]
  %v200 = vld [vmem:[%s0 + $0x5d0] sm:$0xff]
  %v201 = vld [vmem:[%s0 + $0x5d8] sm:$0xff]
  %v202 = vld [vmem:[%s0 + $0x5e0] sm:$0xff]
  %v203 = vld [vmem:[%s0 + $0x5e8] sm:$0xff]
  %v204 = vld [vmem:[%s0 + $0x5f0] sm:$0xff]
  %v205 = vld [vmem:[%s0 + $0x5f8] sm:$0xff]
  %v206 = vld [vmem:[%s0 + $0x600] sm:$0xff]
  %v207 = vld [vmem:[%s0 + $0x608] sm:$0xff]
  %v208 = vld [vmem:[%s0 + $0x610] sm:$0xff]
  %v209 = vld [vmem:[%s0 + $0x618] sm:$0xff]
  %v210 = vld [vmem:[%s0 + $0x620] sm:$0xff]
  %v211 = vld [vmem:[%s0 + $0x628] sm:$0xff]
  %v212 = vld [vmem:[%s0 + $0x630] sm:$0xff]
  %v213 = vld [vmem:[%s0 + $0x638] sm:$0xff]
  %v214 = vld [vmem:[%s0 + $0x640] sm:$0xff]
  %v215 = vld [vmem:[%s0 + $0x648] sm:$0xff]
  %v216 = vld [vmem:[%s0 + $0x650] sm:$0xff]
  %v217 = vld [vmem:[%s0 + $0x658] sm:$0xff]
  %v218 = vld [vmem:[%s0 + $0x660] sm:$0xff]
  %v219 = vld [vmem:[%s0 + $0x668] sm:$0xff]
  %v220 = vld [vmem:[%s0 + $0x670] sm:$0xff]
  %v221 = vld [vmem:[%s0 + $0x678] sm:$0xff]
  %v222 = vld [vmem:[%s0 + $0x680] sm:$0xff]
  %v223 = vld [vmem:[%s0 + $0x688] sm:$0xff]
  %v224 = vld [vmem:[%s0 + $0x690] sm:$0xff]
  %v225 = vld [vmem:[%s0 + $0x698] sm:$0xff]
  %v226 = vld [vmem:[%s0 + $0x6a0] sm:$0xff]
  %v227 = vld [vmem:[%s0 + $0x6a8] sm:$0xff]
  %v228 = vld [vmem:[%s0 + $0x6b0] sm:$0xff]
  %v229 = vld [vmem:[%s0 + $0x6b8] sm:$0xff]
  %v230 = vld [vmem:[%s0 + $0x6c0] sm:$0xff]
  %v231 = vld [vmem:[%s0 + $0x6c8] sm:$0xff]
  %v232 = vld [vmem:[%s0 + $0x6d0] sm:$0xff]
  %v233 = vld [vmem:[%s0 + $0x6d8] sm:$0xff]
  %v234 = vld [vmem:[%s0 + $0x6e0] sm:$0xff]
  %v235 = vld [vmem:[%s0 + $0x6e8] sm:$0xff]
  %v236 = vld [vmem:[%s0 + $0x6f0] sm:$0xff]
  %v237 = vld [vmem:[%s0 + $0x6f8] sm:$0xff]
  %v238 = vld [vmem:[%s0 + $0x700] sm:$0xff]
  %v239 = vld [vmem:[%s0 + $0x708] sm:$0xff]
  %v240 = vld [vmem:[%s0 + $0x710] sm:$0xff]
  %v241 = vld [vmem:[%s0 + $0x718] sm:$0xff]
  %v242 = vld [vmem:[%s0 + $0x720] sm:$0xff]
  %v243 = vld [vmem:[%s0 + $0x728] sm:$0xff]
  %v244 = vld [vmem:[%s0 + $0x730] sm:$0xff]
  %v245 = vld [vmem:[%s0 + $0x738] sm:$0xff]
  %v246 = vld [vmem:[%s0 + $0x740] sm:$0xff]
  %v247 = vld [vmem:[%s0 + $0x748] sm:$0xff]
  %v248 = vld [vmem:[%s0 + $0x750] sm:$0xff]
  %v249 = vld [vmem:[%s0 + $0x758] sm:$0xff]
  %v250 = vld [vmem:[%s0 + $0x760] sm:$0xff]
  %v251 = vld [vmem:[%s0 + $0x768] sm:$0xff]
  %v252 = vld [vmem:[%s0 + $0x770] sm:$0xff]
  %v253 = vld [vmem:[%s0 + $0x778] sm:$0xff]
  %v254 = vld [vmem:[%s0 + $0x780] sm:$0xff]
  %v255 = vld [vmem:[%s0 + $0x788] sm:$0xff]
  %v256 = vld [vmem:[%s0 + $0x790] sm:$0xff]
  %v257 = vld [vmem:[%s0 + $0x798] sm:$0xff]
  %v258 = vld [vmem:[%s0 + $0x7a0] sm:$0xff]
  %v259 = vld [vmem:[%s0 + $0x7a8] sm:$0xff]
  %v260 = vld [vmem:[%s0 + $0x7b0] sm:$0xff]
  %v261 = vld [vmem:[%s0 + $0x7b8] sm:$0xff]
  %v262 = vld [vmem:[%s0 + $0x7c0] sm:$0xff]
  %v263 = vld [vmem:[%s0 + $0x7c8] sm:$0xff]
  %v264 = vld [vmem:[%s0 + $0x7d0] sm:$0xff]
  %v265 = vld [vmem:[%s0 + $0x7d8] sm:$0xff]
  %v266 = vld [vmem:[%s0 + $0x7e0] sm:$0xff]
  %v267 = vld [vmem:[%s0 + $0x7e8] sm:$0xff]
  %v268 = vld [vmem:[%s0 + $0x7f0] sm:$0xff]
  %v269 = vld [vmem:[%s0 + $0x7f8] sm:$0xff]
  %v270 = vld [vmem:[%s1] sm:$0xff]
  %v271 = vld [vmem:[%s1 + $0x8] sm:$0xff]
  %v272 = vld [vmem:[%s1 + $0x10] sm:$0xff]
  %v273 = vld [vmem:[%s1 + $0x18] sm:$0xff]
  %v274 = vld [vmem:[%s1 + $0x20] sm:$0xff]
  %v275 = vld [vmem:[%s1 + $0x28] sm:$0xff]
  %v276 = vld [vmem:[%s1 + $0x30] sm:$0xff]
  %v277 = vld [vmem:[%s1 + $0x38] sm:$0xff]
  %v278 = vld [vmem:[%s1 + $0x40] sm:$0xff]
  %v279 = vld [vmem:[%s1 + $0x48] sm:$0xff]
  %v280 = vld [vmem:[%s1 + $0x50] sm:$0xff]
  %v281 = vld [vmem:[%s1 + $0x58] sm:$0xff]
  %v282 = vld [vmem:[%s1 + $0x60] sm:$0xff]
  %v283 = vld [vmem:[%s1 + $0x68] sm:$0xff]
  %v284 = vld [vmem:[%s1 + $0x70] sm:$0xff]
  %v285 = vld [vmem:[%s1 + $0x78] sm:$0xff]
  %v286 = vld [vmem:[%s1 + $0x80] sm:$0xff]
  %v287 = vld [vmem:[%s1 + $0x88] sm:$0xff]
  %v288 = vld [vmem:[%s1 + $0x90] sm:$0xff]
  %v289 = vld [vmem:[%s1 + $0x98] sm:$0xff]
  %v290 = vld [vmem:[%s1 + $0xa0] sm:$0xff]
  %v291 = vld [vmem:[%s1 + $0xa8] sm:$0xff]
  %v292 = vld [vmem:[%s1 + $0xb0] sm:$0xff]
  %v293 = vld [vmem:[%s1 + $0xb8] sm:$0xff]
  %v294 = vld [vmem:[%s1 + $0xc0] sm:$0xff]
  %v295 = vld [vmem:[%s1 + $0xc8] sm:$0xff]
  %v296 = vld [vmem:[%s1 + $0xd0] sm:$0xff]
  %v297 = vld [vmem:[%s1 + $0xd8] sm:$0xff]
  %v298 = vld [vmem:[%s1 + $0xe0] sm:$0xff]
  %v299 = vld [vmem:[%s1 + $0xe8] sm:$0xff]
  %v300 = vld [vmem:[%s1 + $0xf0] sm:$0xff]
  %v301 = vld [vmem:[%s1 + $0xf8] sm:$0xff]
  %v302 = vld [vmem:[%s1 + $0x100] sm:$0xff]
  %v303 = vld [vmem:[%s1 + $0x108] sm:$0xff]
  %v304 = vld [vmem:[%s1 + $0x110] sm:$0xff]
  %v305 = vld [vmem:[%s1 + $0x118] sm:$0xff]
  %v306 = vld [vmem:[%s1 + $0x120] sm:$0xff]
  %v307 = vld [vmem:[%s1 + $0x128] sm:$0xff]
  %v308 = vld [vmem:[%s1 + $0x130] sm:$0xff]
  %v309 = vld [vmem:[%s1 + $0x138] sm:$0xff]
  %v310 = vld [vmem:[%s1 + $0x140] sm:$0xff]
  %v311 = vld [vmem:[%s1 + $0x148] sm:$0xff]
  %v312 = vld [vmem:[%s1 + $0x150] sm:$0xff]
  %v313 = vld [vmem:[%s1 + $0x158] sm:$0xff]
  %v314 = vld [vmem:[%s1 + $0x160] sm:$0xff]
  %v315 = vld [vmem:[%s1 + $0x168] sm:$0xff]
  %v316 = vld [vmem:[%s1 + $0x170] sm:$0xff]
  %v317 = vld [vmem:[%s1 + $0x178] sm:$0xff]
  %v318 = vld [vmem:[%s1 + $0x180] sm:$0xff]
  %v319 = vld [vmem:[%s2] sm:$0x1]
  %v321 = vperm.slane %v319, 0
  %vm323 = vcmask 64512
  %v325 = vsel %vm323, %v17, 0
  %v328 = vsel %vm323, %v21, 0
  %v331 = vsel %vm323, %v25, 0
  %v334 = vsel %vm323, %v29, 0
  %v337 = vsel %vm323, %v33, 0
  %v340 = vsel %vm323, %v37, 0
  %v343 = vsel %vm323, %v41, 0
  %v346 = vsel %vm323, %v45, 0
  %v349 = vsel %vm323, %v49, 0
  %v352 = vsel %vm323, %v53, 0
  %v355 = vsel %vm323, %v57, 0
  %v358 = vsel %vm323, %v61, 0
  %v361 = vsel %vm323, %v65, 0
  %v364 = vsel %vm323, %v69, 0
  %v367 = vsel %vm323, %v73, 0
  %v370 = vsel %vm323, %v77, 0
  %v373 = vsel %vm323, %v81, 0
  %v376 = vsel %vm323, %v85, 0
  %v379 = vsel %vm323, %v89, 0
  %v382 = vsel %vm323, %v93, 0
  %v385 = vsel %vm323, %v97, 0
  %v388 = vsel %vm323, %v101, 0
  %v391 = vsel %vm323, %v105, 0
  %v394 = vsel %vm323, %v109, 0
  %v397 = vsel %vm323, %v113, 0
  %v400 = vsel %vm323, %v117, 0
  %v403 = vsel %vm323, %v121, 0
  %v406 = vsel %vm323, %v125, 0
  %v409 = vsel %vm323, %v129, 0
  %v412 = vsel %vm323, %v133, 0
  %v415 = vsel %vm323, %v137, 0
  %v418 = vsel %vm323, %v141, 0
  %v421 = vsel %vm323, %v145, 0
  %v424 = vsel %vm323, %v149, 0
  %v427 = vsel %vm323, %v153, 0
  %v430 = vsel %vm323, %v157, 0
  %v433 = vsel %vm323, %v161, 0
  %v436 = vsel %vm323, %v165, 0
  %v439 = vsel %vm323, %v169, 0
  %v442 = vsel %vm323, %v173, 0
  %v445 = vsel %vm323, %v177, 0
  %v448 = vsel %vm323, %v181, 0
  %v451 = vsel %vm323, %v185, 0
  %v454 = vsel %vm323, %v189, 0
  %v457 = vsel %vm323, %v193, 0
  %v460 = vsel %vm323, %v197, 0
  %v463 = vsel %vm323, %v201, 0
  %v466 = vsel %vm323, %v205, 0
  %v469 = vsel %vm323, %v209, 0
  %v472 = vsel %vm323, %v213, 0
  %v475 = vsel %vm323, %v217, 0
  %v478 = vsel %vm323, %v221, 0
  %v481 = vsel %vm323, %v225, 0
  %v484 = vsel %vm323, %v229, 0
  %v487 = vsel %vm323, %v233, 0
  %v490 = vsel %vm323, %v237, 0
  %v493 = vsel %vm323, %v241, 0
  %v496 = vsel %vm323, %v245, 0
  %v499 = vsel %vm323, %v249, 0
  %v502 = vsel %vm323, %v253, 0
  %v505 = vsel %vm323, %v257, 0
  %v508 = vsel %vm323, %v261, 0
  %v511 = vsel %vm323, %v265, 0
  %v514 = vsel %vm323, %v269, 0
  %516 = vmatpush.msra.mxu0 %v285
  %517 = vmatpush.msra.mxu0 %v284
  %518 = vmatpush.msra.mxu0 %v283
  %519 = vmatpush.msra.mxu0 %v282
  %520 = vmatpush.msra.mxu0 %v281
  %521 = vmatpush.msra.mxu0 %v280
  %522 = vmatpush.msra.mxu0 %v279
  %523 = vmatpush.msra.mxu0 %v278
  %524 = vmatpush.msra.mxu0 %v277
  %525 = vmatpush.msra.mxu0 %v276
  %526 = vmatpush.msra.mxu0 %v275
  %527 = vmatpush.msra.mxu0 %v274
  %528 = vmatpush.msra.mxu0 %v273
  %529 = vmatpush.msra.mxu0 %v272
  %530 = vmatpush.msra.mxu0 %v271
  %531 = vmatpush.msra.mxu0 %v270
  %532 = vmatmul.f32.gmra.mxu0 %v14
  %v533 = vpop.f32.mrf.mxu0
  %v534 = vadd.f32 %v321, %v533
  %535 = vmatmul.f32.gmra.mxu0 %v18
  %v536 = vpop.f32.mrf.mxu0
  %v537 = vadd.f32 %v321, %v536
  %538 = vmatmul.f32.gmra.mxu0 %v22
  %v539 = vpop.f32.mrf.mxu0
  %v540 = vadd.f32 %v321, %v539
  %541 = vmatmul.f32.gmra.mxu0 %v26
  %v542 = vpop.f32.mrf.mxu0
  %v543 = vadd.f32 %v321, %v542
  %544 = vmatmul.f32.gmra.mxu0 %v30
  %v545 = vpop.f32.mrf.mxu0
  %v546 = vadd.f32 %v321, %v545
  %547 = vmatmul.f32.gmra.mxu0 %v34
  %v548 = vpop.f32.mrf.mxu0
  %v549 = vadd.f32 %v321, %v548
  %550 = vmatmul.f32.gmra.mxu0 %v38
  %v551 = vpop.f32.mrf.mxu0
  %v552 = vadd.f32 %v321, %v551
  %553 = vmatmul.f32.gmra.mxu0 %v42
  %v554 = vpop.f32.mrf.mxu0
  %v555 = vadd.f32 %v321, %v554
  %556 = vmatmul.f32.gmra.mxu0 %v46
  %v557 = vpop.f32.mrf.mxu0
  %v558 = vadd.f32 %v321, %v557
  %559 = vmatmul.f32.gmra.mxu0 %v50
  %v560 = vpop.f32.mrf.mxu0
  %v561 = vadd.f32 %v321, %v560
  %562 = vmatmul.f32.gmra.mxu0 %v54
  %v563 = vpop.f32.mrf.mxu0
  %v564 = vadd.f32 %v321, %v563
  %565 = vmatmul.f32.gmra.mxu0 %v58
  %v566 = vpop.f32.mrf.mxu0
  %v567 = vadd.f32 %v321, %v566
  %568 = vmatmul.f32.gmra.mxu0 %v62
  %v569 = vpop.f32.mrf.mxu0
  %v570 = vadd.f32 %v321, %v569
  %571 = vmatmul.f32.gmra.mxu0 %v66
  %v572 = vpop.f32.mrf.mxu0
  %v573 = vadd.f32 %v321, %v572
  %574 = vmatmul.f32.gmra.mxu0 %v70
  %v575 = vpop.f32.mrf.mxu0
  %v576 = vadd.f32 %v321, %v575
  %577 = vmatmul.f32.gmra.mxu0 %v74
  %v578 = vpop.f32.mrf.mxu0
  %v579 = vadd.f32 %v321, %v578
  %580 = vmatmul.f32.gmra.mxu0 %v78
  %v581 = vpop.f32.mrf.mxu0
  %v582 = vadd.f32 %v321, %v581
  %583 = vmatmul.f32.gmra.mxu0 %v82
  %v584 = vpop.f32.mrf.mxu0
  %v585 = vadd.f32 %v321, %v584
  %586 = vmatmul.f32.gmra.mxu0 %v86
  %v587 = vpop.f32.mrf.mxu0
  %v588 = vadd.f32 %v321, %v587
  %589 = vmatmul.f32.gmra.mxu0 %v90
  %v590 = vpop.f32.mrf.mxu0
  %v591 = vadd.f32 %v321, %v590
  %592 = vmatmul.f32.gmra.mxu0 %v94
  %v593 = vpop.f32.mrf.mxu0
  %v594 = vadd.f32 %v321, %v593
  %595 = vmatmul.f32.gmra.mxu0 %v98
  %v596 = vpop.f32.mrf.mxu0
  %v597 = vadd.f32 %v321, %v596
  %598 = vmatmul.f32.gmra.mxu0 %v102
  %v599 = vpop.f32.mrf.mxu0
  %v600 = vadd.f32 %v321, %v599
  %601 = vmatmul.f32.gmra.mxu0 %v106
  %v602 = vpop.f32.mrf.mxu0
  %v603 = vadd.f32 %v321, %v602
  %604 = vmatmul.f32.gmra.mxu0 %v110
  %v605 = vpop.f32.mrf.mxu0
  %v606 = vadd.f32 %v321, %v605
  %607 = vmatmul.f32.gmra.mxu0 %v114
  %v608 = vpop.f32.mrf.mxu0
  %v609 = vadd.f32 %v321, %v608
  %610 = vmatmul.f32.gmra.mxu0 %v118
  %v611 = vpop.f32.mrf.mxu0
  %v612 = vadd.f32 %v321, %v611
  %613 = vmatmul.f32.gmra.mxu0 %v122
  %v614 = vpop.f32.mrf.mxu0
  %v615 = vadd.f32 %v321, %v614
  %616 = vmatmul.f32.gmra.mxu0 %v126
  %v617 = vpop.f32.mrf.mxu0
  %v618 = vadd.f32 %v321, %v617
  %619 = vmatmul.f32.gmra.mxu0 %v130
  %v620 = vpop.f32.mrf.mxu0
  %v621 = vadd.f32 %v321, %v620
  %622 = vmatmul.f32.gmra.mxu0 %v134
  %v623 = vpop.f32.mrf.mxu0
  %v624 = vadd.f32 %v321, %v623
  %625 = vmatmul.f32.gmra.mxu0 %v138
  %v626 = vpop.f32.mrf.mxu0
  %v627 = vadd.f32 %v321, %v626
  %628 = vmatmul.f32.gmra.mxu0 %v142
  %v629 = vpop.f32.mrf.mxu0
  %v630 = vadd.f32 %v321, %v629
  %631 = vmatmul.f32.gmra.mxu0 %v146
  %v632 = vpop.f32.mrf.mxu0
  %v633 = vadd.f32 %v321, %v632
  %634 = vmatmul.f32.gmra.mxu0 %v150
  %v635 = vpop.f32.mrf.mxu0
  %v636 = vadd.f32 %v321, %v635
  %637 = vmatmul.f32.gmra.mxu0 %v154
  %v638 = vpop.f32.mrf.mxu0
  %v639 = vadd.f32 %v321, %v638
  %640 = vmatmul.f32.gmra.mxu0 %v158
  %v641 = vpop.f32.mrf.mxu0
  %v642 = vadd.f32 %v321, %v641
  %643 = vmatmul.f32.gmra.mxu0 %v162
  %v644 = vpop.f32.mrf.mxu0
  %v645 = vadd.f32 %v321, %v644
  %646 = vmatmul.f32.gmra.mxu0 %v166
  %v647 = vpop.f32.mrf.mxu0
  %v648 = vadd.f32 %v321, %v647
  %649 = vmatmul.f32.gmra.mxu0 %v170
  %v650 = vpop.f32.mrf.mxu0
  %v651 = vadd.f32 %v321, %v650
  %652 = vmatmul.f32.gmra.mxu0 %v174
  %v653 = vpop.f32.mrf.mxu0
  %v654 = vadd.f32 %v321, %v653
  %655 = vmatmul.f32.gmra.mxu0 %v178
  %v656 = vpop.f32.mrf.mxu0
  %v657 = vadd.f32 %v321, %v656
  %658 = vmatmul.f32.gmra.mxu0 %v182
  %v659 = vpop.f32.mrf.mxu0
  %v660 = vadd.f32 %v321, %v659
  %661 = vmatmul.f32.gmra.mxu0 %v186
  %v662 = vpop.f32.mrf.mxu0
  %v663 = vadd.f32 %v321, %v662
  %664 = vmatmul.f32.gmra.mxu0 %v190
  %v665 = vpop.f32.mrf.mxu0
  %v666 = vadd.f32 %v321, %v665
  %667 = vmatmul.f32.gmra.mxu0 %v194
  %v668 = vpop.f32.mrf.mxu0
  %v669 = vadd.f32 %v321, %v668
  %670 = vmatmul.f32.gmra.mxu0 %v198
  %v671 = vpop.f32.mrf.mxu0
  %v672 = vadd.f32 %v321, %v671
  %673 = vmatmul.f32.gmra.mxu0 %v202
  %v674 = vpop.f32.mrf.mxu0
  %v675 = vadd.f32 %v321, %v674
  %676 = vmatmul.f32.gmra.mxu0 %v206
  %v677 = vpop.f32.mrf.mxu0
  %v678 = vadd.f32 %v321, %v677
  %679 = vmatmul.f32.gmra.mxu0 %v210
  %v680 = vpop.f32.mrf.mxu0
  %v681 = vadd.f32 %v321, %v680
  %682 = vmatmul.f32.gmra.mxu0 %v214
  %v683 = vpop.f32.mrf.mxu0
  %v684 = vadd.f32 %v321, %v683
  %685 = vmatmul.f32.gmra.mxu0 %v218
  %v686 = vpop.f32.mrf.mxu0
  %v687 = vadd.f32 %v321, %v686
  %688 = vmatmul.f32.gmra.mxu0 %v222
  %v689 = vpop.f32.mrf.mxu0
  %v690 = vadd.f32 %v321, %v689
  %691 = vmatmul.f32.gmra.mxu0 %v226
  %v692 = vpop.f32.mrf.mxu0
  %v693 = vadd.f32 %v321, %v692
  %694 = vmatmul.f32.gmra.mxu0 %v230
  %v695 = vpop.f32.mrf.mxu0
  %v696 = vadd.f32 %v321, %v695
  %697 = vmatmul.f32.gmra.mxu0 %v234
  %v698 = vpop.f32.mrf.mxu0
  %v699 = vadd.f32 %v321, %v698
  %700 = vmatmul.f32.gmra.mxu0 %v238
  %v701 = vpop.f32.mrf.mxu0
  %v702 = vadd.f32 %v321, %v701
  %703 = vmatmul.f32.gmra.mxu0 %v242
  %v704 = vpop.f32.mrf.mxu0
  %v705 = vadd.f32 %v321, %v704
  %706 = vmatmul.f32.gmra.mxu0 %v246
  %v707 = vpop.f32.mrf.mxu0
  %v708 = vadd.f32 %v321, %v707
  %709 = vmatmul.f32.gmra.mxu0 %v250
  %v710 = vpop.f32.mrf.mxu0
  %v711 = vadd.f32 %v321, %v710
  %712 = vmatmul.f32.gmra.mxu0 %v254
  %v713 = vpop.f32.mrf.mxu0
  %v714 = vadd.f32 %v321, %v713
  %715 = vmatmul.f32.gmra.mxu0 %v258
  %v716 = vpop.f32.mrf.mxu0
  %v717 = vadd.f32 %v321, %v716
  %718 = vmatmul.f32.gmra.mxu0 %v262
  %v719 = vpop.f32.mrf.mxu0
  %v720 = vadd.f32 %v321, %v719
  %721 = vmatmul.f32.gmra.mxu0 %v266
  %v722 = vpop.f32.mrf.mxu0
  %v723 = vadd.f32 %v321, %v722
  %724 = vdwg.mxu0
  %725 = vmatpush.msra.mxu0 %v301
  %726 = vmatpush.msra.mxu0 %v300
  %727 = vmatpush.msra.mxu0 %v299
  %728 = vmatpush.msra.mxu0 %v298
  %729 = vmatpush.msra.mxu0 %v297
  %730 = vmatpush.msra.mxu0 %v296
  %731 = vmatpush.msra.mxu0 %v295
  %732 = vmatpush.msra.mxu0 %v294
  %733 = vmatpush.msra.mxu0 %v293
  %734 = vmatpush.msra.mxu0 %v292
  %735 = vmatpush.msra.mxu0 %v291
  %736 = vmatpush.msra.mxu0 %v290
  %737 = vmatpush.msra.mxu0 %v289
  %738 = vmatpush.msra.mxu0 %v288
  %739 = vmatpush.msra.mxu0 %v287
  %740 = vmatpush.msra.mxu0 %v286
  %741 = vmatmul.f32.gmra.mxu0 %v15
  %v742 = vpop.f32.mrf.mxu0
  %v743 = vadd.f32 %v534, %v742
  %744 = vmatmul.f32.gmra.mxu0 %v19
  %v745 = vpop.f32.mrf.mxu0
  %v746 = vadd.f32 %v537, %v745
  %747 = vmatmul.f32.gmra.mxu0 %v23
  %v748 = vpop.f32.mrf.mxu0
  %v749 = vadd.f32 %v540, %v748
  %750 = vmatmul.f32.gmra.mxu0 %v27
  %v751 = vpop.f32.mrf.mxu0
  %v752 = vadd.f32 %v543, %v751
  %753 = vmatmul.f32.gmra.mxu0 %v31
  %v754 = vpop.f32.mrf.mxu0
  %v755 = vadd.f32 %v546, %v754
  %756 = vmatmul.f32.gmra.mxu0 %v35
  %v757 = vpop.f32.mrf.mxu0
  %v758 = vadd.f32 %v549, %v757
  %759 = vmatmul.f32.gmra.mxu0 %v39
  %v760 = vpop.f32.mrf.mxu0
  %v761 = vadd.f32 %v552, %v760
  %762 = vmatmul.f32.gmra.mxu0 %v43
  %v763 = vpop.f32.mrf.mxu0
  %v764 = vadd.f32 %v555, %v763
  %765 = vmatmul.f32.gmra.mxu0 %v47
  %v766 = vpop.f32.mrf.mxu0
  %v767 = vadd.f32 %v558, %v766
  %768 = vmatmul.f32.gmra.mxu0 %v51
  %v769 = vpop.f32.mrf.mxu0
  %v770 = vadd.f32 %v561, %v769
  %771 = vmatmul.f32.gmra.mxu0 %v55
  %v772 = vpop.f32.mrf.mxu0
  %v773 = vadd.f32 %v564, %v772
  %774 = vmatmul.f32.gmra.mxu0 %v59
  %v775 = vpop.f32.mrf.mxu0
  %v776 = vadd.f32 %v567, %v775
  %777 = vmatmul.f32.gmra.mxu0 %v63
  %v778 = vpop.f32.mrf.mxu0
  %v779 = vadd.f32 %v570, %v778
  %780 = vmatmul.f32.gmra.mxu0 %v67
  %v781 = vpop.f32.mrf.mxu0
  %v782 = vadd.f32 %v573, %v781
  %783 = vmatmul.f32.gmra.mxu0 %v71
  %v784 = vpop.f32.mrf.mxu0
  %v785 = vadd.f32 %v576, %v784
  %786 = vmatmul.f32.gmra.mxu0 %v75
  %v787 = vpop.f32.mrf.mxu0
  %v788 = vadd.f32 %v579, %v787
  %789 = vmatmul.f32.gmra.mxu0 %v79
  %v790 = vpop.f32.mrf.mxu0
  %v791 = vadd.f32 %v582, %v790
  %792 = vmatmul.f32.gmra.mxu0 %v83
  %v793 = vpop.f32.mrf.mxu0
  %v794 = vadd.f32 %v585, %v793
  %795 = vmatmul.f32.gmra.mxu0 %v87
  %v796 = vpop.f32.mrf.mxu0
  %v797 = vadd.f32 %v588, %v796
  %798 = vmatmul.f32.gmra.mxu0 %v91
  %v799 = vpop.f32.mrf.mxu0
  %v800 = vadd.f32 %v591, %v799
  %801 = vmatmul.f32.gmra.mxu0 %v95
  %v802 = vpop.f32.mrf.mxu0
  %v803 = vadd.f32 %v594, %v802
  %804 = vmatmul.f32.gmra.mxu0 %v99
  %v805 = vpop.f32.mrf.mxu0
  %v806 = vadd.f32 %v597, %v805
  %807 = vmatmul.f32.gmra.mxu0 %v103
  %v808 = vpop.f32.mrf.mxu0
  %v809 = vadd.f32 %v600, %v808
  %810 = vmatmul.f32.gmra.mxu0 %v107
  %v811 = vpop.f32.mrf.mxu0
  %v812 = vadd.f32 %v603, %v811
  %813 = vmatmul.f32.gmra.mxu0 %v111
  %v814 = vpop.f32.mrf.mxu0
  %v815 = vadd.f32 %v606, %v814
  %816 = vmatmul.f32.gmra.mxu0 %v115
  %v817 = vpop.f32.mrf.mxu0
  %v818 = vadd.f32 %v609, %v817
  %819 = vmatmul.f32.gmra.mxu0 %v119
  %v820 = vpop.f32.mrf.mxu0
  %v821 = vadd.f32 %v612, %v820
  %822 = vmatmul.f32.gmra.mxu0 %v123
  %v823 = vpop.f32.mrf.mxu0
  %v824 = vadd.f32 %v615, %v823
  %825 = vmatmul.f32.gmra.mxu0 %v127
  %v826 = vpop.f32.mrf.mxu0
  %v827 = vadd.f32 %v618, %v826
  %828 = vmatmul.f32.gmra.mxu0 %v131
  %v829 = vpop.f32.mrf.mxu0
  %v830 = vadd.f32 %v621, %v829
  %831 = vmatmul.f32.gmra.mxu0 %v135
  %v832 = vpop.f32.mrf.mxu0
  %v833 = vadd.f32 %v624, %v832
  %834 = vmatmul.f32.gmra.mxu0 %v139
  %v835 = vpop.f32.mrf.mxu0
  %v836 = vadd.f32 %v627, %v835
  %837 = vmatmul.f32.gmra.mxu0 %v143
  %v838 = vpop.f32.mrf.mxu0
  %v839 = vadd.f32 %v630, %v838
  %840 = vmatmul.f32.gmra.mxu0 %v147
  %v841 = vpop.f32.mrf.mxu0
  %v842 = vadd.f32 %v633, %v841
  %843 = vmatmul.f32.gmra.mxu0 %v151
  %v844 = vpop.f32.mrf.mxu0
  %v845 = vadd.f32 %v636, %v844
  %846 = vmatmul.f32.gmra.mxu0 %v155
  %v847 = vpop.f32.mrf.mxu0
  %v848 = vadd.f32 %v639, %v847
  %849 = vmatmul.f32.gmra.mxu0 %v159
  %v850 = vpop.f32.mrf.mxu0
  %v851 = vadd.f32 %v642, %v850
  %852 = vmatmul.f32.gmra.mxu0 %v163
  %v853 = vpop.f32.mrf.mxu0
  %v854 = vadd.f32 %v645, %v853
  %855 = vmatmul.f32.gmra.mxu0 %v167
  %v856 = vpop.f32.mrf.mxu0
  %v857 = vadd.f32 %v648, %v856
  %858 = vmatmul.f32.gmra.mxu0 %v171
  %v859 = vpop.f32.mrf.mxu0
  %v860 = vadd.f32 %v651, %v859
  %861 = vmatmul.f32.gmra.mxu0 %v175
  %v862 = vpop.f32.mrf.mxu0
  %v863 = vadd.f32 %v654, %v862
  %864 = vmatmul.f32.gmra.mxu0 %v179
  %v865 = vpop.f32.mrf.mxu0
  %v866 = vadd.f32 %v657, %v865
  %867 = vmatmul.f32.gmra.mxu0 %v183
  %v868 = vpop.f32.mrf.mxu0
  %v869 = vadd.f32 %v660, %v868
  %870 = vmatmul.f32.gmra.mxu0 %v187
  %v871 = vpop.f32.mrf.mxu0
  %v872 = vadd.f32 %v663, %v871
  %873 = vmatmul.f32.gmra.mxu0 %v191
  %v874 = vpop.f32.mrf.mxu0
  %v875 = vadd.f32 %v666, %v874
  %876 = vmatmul.f32.gmra.mxu0 %v195
  %v877 = vpop.f32.mrf.mxu0
  %v878 = vadd.f32 %v669, %v877
  %879 = vmatmul.f32.gmra.mxu0 %v199
  %v880 = vpop.f32.mrf.mxu0
  %v881 = vadd.f32 %v672, %v880
  %882 = vmatmul.f32.gmra.mxu0 %v203
  %v883 = vpop.f32.mrf.mxu0
  %v884 = vadd.f32 %v675, %v883
  %885 = vmatmul.f32.gmra.mxu0 %v207
  %v886 = vpop.f32.mrf.mxu0
  %v887 = vadd.f32 %v678, %v886
  %888 = vmatmul.f32.gmra.mxu0 %v211
  %v889 = vpop.f32.mrf.mxu0
  %v890 = vadd.f32 %v681, %v889
  %891 = vmatmul.f32.gmra.mxu0 %v215
  %v892 = vpop.f32.mrf.mxu0
  %v893 = vadd.f32 %v684, %v892
  %894 = vmatmul.f32.gmra.mxu0 %v219
  %v895 = vpop.f32.mrf.mxu0
  %v896 = vadd.f32 %v687, %v895
  %897 = vmatmul.f32.gmra.mxu0 %v223
  %v898 = vpop.f32.mrf.mxu0
  %v899 = vadd.f32 %v690, %v898
  %900 = vmatmul.f32.gmra.mxu0 %v227
  %v901 = vpop.f32.mrf.mxu0
  %v902 = vadd.f32 %v693, %v901
  %903 = vmatmul.f32.gmra.mxu0 %v231
  %v904 = vpop.f32.mrf.mxu0
  %v905 = vadd.f32 %v696, %v904
  %906 = vmatmul.f32.gmra.mxu0 %v235
  %v907 = vpop.f32.mrf.mxu0
  %v908 = vadd.f32 %v699, %v907
  %909 = vmatmul.f32.gmra.mxu0 %v239
  %v910 = vpop.f32.mrf.mxu0
  %v911 = vadd.f32 %v702, %v910
  %912 = vmatmul.f32.gmra.mxu0 %v243
  %v913 = vpop.f32.mrf.mxu0
  %v914 = vadd.f32 %v705, %v913
  %915 = vmatmul.f32.gmra.mxu0 %v247
  %v916 = vpop.f32.mrf.mxu0
  %v917 = vadd.f32 %v708, %v916
  %918 = vmatmul.f32.gmra.mxu0 %v251
  %v919 = vpop.f32.mrf.mxu0
  %v920 = vadd.f32 %v711, %v919
  %921 = vmatmul.f32.gmra.mxu0 %v255
  %v922 = vpop.f32.mrf.mxu0
  %v923 = vadd.f32 %v714, %v922
  %924 = vmatmul.f32.gmra.mxu0 %v259
  %v925 = vpop.f32.mrf.mxu0
  %v926 = vadd.f32 %v717, %v925
  %927 = vmatmul.f32.gmra.mxu0 %v263
  %v928 = vpop.f32.mrf.mxu0
  %v929 = vadd.f32 %v720, %v928
  %930 = vmatmul.f32.gmra.mxu0 %v267
  %v931 = vpop.f32.mrf.mxu0
  %v932 = vadd.f32 %v723, %v931
  %933 = vdwg.mxu0
  %934 = vmatpush.msra.mxu0 %v317
  %935 = vmatpush.msra.mxu0 %v316
  %936 = vmatpush.msra.mxu0 %v315
  %937 = vmatpush.msra.mxu0 %v314
  %938 = vmatpush.msra.mxu0 %v313
  %939 = vmatpush.msra.mxu0 %v312
  %940 = vmatpush.msra.mxu0 %v311
  %941 = vmatpush.msra.mxu0 %v310
  %942 = vmatpush.msra.mxu0 %v309
  %943 = vmatpush.msra.mxu0 %v308
  %944 = vmatpush.msra.mxu0 %v307
  %945 = vmatpush.msra.mxu0 %v306
  %946 = vmatpush.msra.mxu0 %v305
  %947 = vmatpush.msra.mxu0 %v304
  %948 = vmatpush.msra.mxu0 %v303
  %949 = vmatpush.msra.mxu0 %v302
  %950 = vmatmul.f32.gmra.mxu0 %v16
  %v951 = vpop.f32.mrf.mxu0
  %v952 = vadd.f32 %v743, %v951
  %953 = vmatmul.f32.gmra.mxu0 %v20
  %v954 = vpop.f32.mrf.mxu0
  %v955 = vadd.f32 %v746, %v954
  %956 = vmatmul.f32.gmra.mxu0 %v24
  %v957 = vpop.f32.mrf.mxu0
  %v958 = vadd.f32 %v749, %v957
  %959 = vmatmul.f32.gmra.mxu0 %v28
  %v960 = vpop.f32.mrf.mxu0
  %v961 = vadd.f32 %v752, %v960
  %962 = vmatmul.f32.gmra.mxu0 %v32
  %v963 = vpop.f32.mrf.mxu0
  %v964 = vadd.f32 %v755, %v963
  %965 = vmatmul.f32.gmra.mxu0 %v36
  %v966 = vpop.f32.mrf.mxu0
  %v967 = vadd.f32 %v758, %v966
  %968 = vmatmul.f32.gmra.mxu0 %v40
  %v969 = vpop.f32.mrf.mxu0
  %v970 = vadd.f32 %v761, %v969
  %971 = vmatmul.f32.gmra.mxu0 %v44
  %v972 = vpop.f32.mrf.mxu0
  %v973 = vadd.f32 %v764, %v972
  %974 = vmatmul.f32.gmra.mxu0 %v48
  %v975 = vpop.f32.mrf.mxu0
  %v976 = vadd.f32 %v767, %v975
  %977 = vmatmul.f32.gmra.mxu0 %v52
  %v978 = vpop.f32.mrf.mxu0
  %v979 = vadd.f32 %v770, %v978
  %980 = vmatmul.f32.gmra.mxu0 %v56
  %v981 = vpop.f32.mrf.mxu0
  %v982 = vadd.f32 %v773, %v981
  %983 = vmatmul.f32.gmra.mxu0 %v60
  %v984 = vpop.f32.mrf.mxu0
  %v985 = vadd.f32 %v776, %v984
  %986 = vmatmul.f32.gmra.mxu0 %v64
  %v987 = vpop.f32.mrf.mxu0
  %v988 = vadd.f32 %v779, %v987
  %989 = vmatmul.f32.gmra.mxu0 %v68
  %v990 = vpop.f32.mrf.mxu0
  %v991 = vadd.f32 %v782, %v990
  %992 = vmatmul.f32.gmra.mxu0 %v72
  %v993 = vpop.f32.mrf.mxu0
  %v994 = vadd.f32 %v785, %v993
  %995 = vmatmul.f32.gmra.mxu0 %v76
  %v996 = vpop.f32.mrf.mxu0
  %v997 = vadd.f32 %v788, %v996
  %998 = vmatmul.f32.gmra.mxu0 %v80
  %v999 = vpop.f32.mrf.mxu0
  %v1000 = vadd.f32 %v791, %v999
  %1001 = vmatmul.f32.gmra.mxu0 %v84
  %v1002 = vpop.f32.mrf.mxu0
  %v1003 = vadd.f32 %v794, %v1002
  %1004 = vmatmul.f32.gmra.mxu0 %v88
  %v1005 = vpop.f32.mrf.mxu0
  %v1006 = vadd.f32 %v797, %v1005
  %1007 = vmatmul.f32.gmra.mxu0 %v92
  %v1008 = vpop.f32.mrf.mxu0
  %v1009 = vadd.f32 %v800, %v1008
  %1010 = vmatmul.f32.gmra.mxu0 %v96
  %v1011 = vpop.f32.mrf.mxu0
  %v1012 = vadd.f32 %v803, %v1011
  %1013 = vmatmul.f32.gmra.mxu0 %v100
  %v1014 = vpop.f32.mrf.mxu0
  %v1015 = vadd.f32 %v806, %v1014
  %1016 = vmatmul.f32.gmra.mxu0 %v104
  %v1017 = vpop.f32.mrf.mxu0
  %v1018 = vadd.f32 %v809, %v1017
  %1019 = vmatmul.f32.gmra.mxu0 %v108
  %v1020 = vpop.f32.mrf.mxu0
  %v1021 = vadd.f32 %v812, %v1020
  %1022 = vmatmul.f32.gmra.mxu0 %v112
  %v1023 = vpop.f32.mrf.mxu0
  %v1024 = vadd.f32 %v815, %v1023
  %1025 = vmatmul.f32.gmra.mxu0 %v116
  %v1026 = vpop.f32.mrf.mxu0
  %v1027 = vadd.f32 %v818, %v1026
  %1028 = vmatmul.f32.gmra.mxu0 %v120
  %v1029 = vpop.f32.mrf.mxu0
  %v1030 = vadd.f32 %v821, %v1029
  %1031 = vmatmul.f32.gmra.mxu0 %v124
  %v1032 = vpop.f32.mrf.mxu0
  %v1033 = vadd.f32 %v824, %v1032
  %1034 = vmatmul.f32.gmra.mxu0 %v128
  %v1035 = vpop.f32.mrf.mxu0
  %v1036 = vadd.f32 %v827, %v1035
  %1037 = vmatmul.f32.gmra.mxu0 %v132
  %v1038 = vpop.f32.mrf.mxu0
  %v1039 = vadd.f32 %v830, %v1038
  %1040 = vmatmul.f32.gmra.mxu0 %v136
  %v1041 = vpop.f32.mrf.mxu0
  %v1042 = vadd.f32 %v833, %v1041
  %1043 = vmatmul.f32.gmra.mxu0 %v140
  %v1044 = vpop.f32.mrf.mxu0
  %v1045 = vadd.f32 %v836, %v1044
  %1046 = vmatmul.f32.gmra.mxu0 %v144
  %v1047 = vpop.f32.mrf.mxu0
  %v1048 = vadd.f32 %v839, %v1047
  %1049 = vmatmul.f32.gmra.mxu0 %v148
  %v1050 = vpop.f32.mrf.mxu0
  %v1051 = vadd.f32 %v842, %v1050
  %1052 = vmatmul.f32.gmra.mxu0 %v152
  %v1053 = vpop.f32.mrf.mxu0
  %v1054 = vadd.f32 %v845, %v1053
  %1055 = vmatmul.f32.gmra.mxu0 %v156
  %v1056 = vpop.f32.mrf.mxu0
  %v1057 = vadd.f32 %v848, %v1056
  %1058 = vmatmul.f32.gmra.mxu0 %v160
  %v1059 = vpop.f32.mrf.mxu0
  %v1060 = vadd.f32 %v851, %v1059
  %1061 = vmatmul.f32.gmra.mxu0 %v164
  %v1062 = vpop.f32.mrf.mxu0
  %v1063 = vadd.f32 %v854, %v1062
  %1064 = vmatmul.f32.gmra.mxu0 %v168
  %v1065 = vpop.f32.mrf.mxu0
  %v1066 = vadd.f32 %v857, %v1065
  %1067 = vmatmul.f32.gmra.mxu0 %v172
  %v1068 = vpop.f32.mrf.mxu0
  %v1069 = vadd.f32 %v860, %v1068
  %1070 = vmatmul.f32.gmra.mxu0 %v176
  %v1071 = vpop.f32.mrf.mxu0
  %v1072 = vadd.f32 %v863, %v1071
  %1073 = vmatmul.f32.gmra.mxu0 %v180
  %v1074 = vpop.f32.mrf.mxu0
  %v1075 = vadd.f32 %v866, %v1074
  %1076 = vmatmul.f32.gmra.mxu0 %v184
  %v1077 = vpop.f32.mrf.mxu0
  %v1078 = vadd.f32 %v869, %v1077
  %1079 = vmatmul.f32.gmra.mxu0 %v188
  %v1080 = vpop.f32.mrf.mxu0
  %v1081 = vadd.f32 %v872, %v1080
  %1082 = vmatmul.f32.gmra.mxu0 %v192
  %v1083 = vpop.f32.mrf.mxu0
  %v1084 = vadd.f32 %v875, %v1083
  %1085 = vmatmul.f32.gmra.mxu0 %v196
  %v1086 = vpop.f32.mrf.mxu0
  %v1087 = vadd.f32 %v878, %v1086
  %1088 = vmatmul.f32.gmra.mxu0 %v200
  %v1089 = vpop.f32.mrf.mxu0
  %v1090 = vadd.f32 %v881, %v1089
  %1091 = vmatmul.f32.gmra.mxu0 %v204
  %v1092 = vpop.f32.mrf.mxu0
  %v1093 = vadd.f32 %v884, %v1092
  %1094 = vmatmul.f32.gmra.mxu0 %v208
  %v1095 = vpop.f32.mrf.mxu0
  %v1096 = vadd.f32 %v887, %v1095
  %1097 = vmatmul.f32.gmra.mxu0 %v212
  %v1098 = vpop.f32.mrf.mxu0
  %v1099 = vadd.f32 %v890, %v1098
  %1100 = vmatmul.f32.gmra.mxu0 %v216
  %v1101 = vpop.f32.mrf.mxu0
  %v1102 = vadd.f32 %v893, %v1101
  %1103 = vmatmul.f32.gmra.mxu0 %v220
  %v1104 = vpop.f32.mrf.mxu0
  %v1105 = vadd.f32 %v896, %v1104
  %1106 = vmatmul.f32.gmra.mxu0 %v224
  %v1107 = vpop.f32.mrf.mxu0
  %v1108 = vadd.f32 %v899, %v1107
  %1109 = vmatmul.f32.gmra.mxu0 %v228
  %v1110 = vpop.f32.mrf.mxu0
  %v1111 = vadd.f32 %v902, %v1110
  %1112 = vmatmul.f32.gmra.mxu0 %v232
  %v1113 = vpop.f32.mrf.mxu0
  %v1114 = vadd.f32 %v905, %v1113
  %1115 = vmatmul.f32.gmra.mxu0 %v236
  %v1116 = vpop.f32.mrf.mxu0
  %v1117 = vadd.f32 %v908, %v1116
  %1118 = vmatmul.f32.gmra.mxu0 %v240
  %v1119 = vpop.f32.mrf.mxu0
  %v1120 = vadd.f32 %v911, %v1119
  %1121 = vmatmul.f32.gmra.mxu0 %v244
  %v1122 = vpop.f32.mrf.mxu0
  %v1123 = vadd.f32 %v914, %v1122
  %1124 = vmatmul.f32.gmra.mxu0 %v248
  %v1125 = vpop.f32.mrf.mxu0
  %v1126 = vadd.f32 %v917, %v1125
  %1127 = vmatmul.f32.gmra.mxu0 %v252
  %v1128 = vpop.f32.mrf.mxu0
  %v1129 = vadd.f32 %v920, %v1128
  %1130 = vmatmul.f32.gmra.mxu0 %v256
  %v1131 = vpop.f32.mrf.mxu0
  %v1132 = vadd.f32 %v923, %v1131
  %1133 = vmatmul.f32.gmra.mxu0 %v260
  %v1134 = vpop.f32.mrf.mxu0
  %v1135 = vadd.f32 %v926, %v1134
  %1136 = vmatmul.f32.gmra.mxu0 %v264
  %v1137 = vpop.f32.mrf.mxu0
  %v1138 = vadd.f32 %v929, %v1137
  %1139 = vmatmul.f32.gmra.mxu0 %v268
  %v1140 = vpop.f32.mrf.mxu0
  %v1141 = vadd.f32 %v932, %v1140
  %1142 = vdwg.mxu0
  %1143 = vmatpush.msra.mxu0 0.0
  %1144 = vmatpush.msra.mxu0 0.0
  %1145 = vmatpush.msra.mxu0 0.0
  %1146 = vmatpush.msra.mxu0 0.0
  %1147 = vmatpush.msra.mxu0 0.0
  %1148 = vmatpush.msra.mxu0 0.0
  %1149 = vmatpush.msra.mxu0 0.0
  %1150 = vmatpush.msra.mxu0 0.0
  %1151 = vmatpush.msra.mxu0 0.0
  %1152 = vmatpush.msra.mxu0 0.0
  %1153 = vmatpush.msra.mxu0 0.0
  %1154 = vmatpush.msra.mxu0 0.0
  %1155 = vmatpush.msra.mxu0 0.0
  %1156 = vmatpush.msra.mxu0 0.0
  %1157 = vmatpush.msra.mxu0 0.0
  %1158 = vmatpush.msra.mxu0 %v318
  %1159 = vmatmul.f32.gmra.mxu0 %v325
  %v1160 = vpop.f32.mrf.mxu0
  %v1161 = vadd.f32 %v952, %v1160
  %1162 = vmatmul.f32.gmra.mxu0 %v328
  %v1163 = vpop.f32.mrf.mxu0
  %v1164 = vadd.f32 %v955, %v1163
  %1165 = vmatmul.f32.gmra.mxu0 %v331
  %v1166 = vpop.f32.mrf.mxu0
  %v1167 = vadd.f32 %v958, %v1166
  %1168 = vmatmul.f32.gmra.mxu0 %v334
  %v1169 = vpop.f32.mrf.mxu0
  %v1170 = vadd.f32 %v961, %v1169
  %1171 = vmatmul.f32.gmra.mxu0 %v337
  %v1172 = vpop.f32.mrf.mxu0
  %v1173 = vadd.f32 %v964, %v1172
  %1174 = vmatmul.f32.gmra.mxu0 %v340
  %v1175 = vpop.f32.mrf.mxu0
  %v1176 = vadd.f32 %v967, %v1175
  %1177 = vmatmul.f32.gmra.mxu0 %v343
  %v1178 = vpop.f32.mrf.mxu0
  %v1179 = vadd.f32 %v970, %v1178
  %1180 = vmatmul.f32.gmra.mxu0 %v346
  %v1181 = vpop.f32.mrf.mxu0
  %v1182 = vadd.f32 %v973, %v1181
  %1183 = vmatmul.f32.gmra.mxu0 %v349
  %v1184 = vpop.f32.mrf.mxu0
  %v1185 = vadd.f32 %v976, %v1184
  %1186 = vmatmul.f32.gmra.mxu0 %v352
  %v1187 = vpop.f32.mrf.mxu0
  %v1188 = vadd.f32 %v979, %v1187
  %1189 = vmatmul.f32.gmra.mxu0 %v355
  %v1190 = vpop.f32.mrf.mxu0
  %v1191 = vadd.f32 %v982, %v1190
  %1192 = vmatmul.f32.gmra.mxu0 %v358
  %v1193 = vpop.f32.mrf.mxu0
  %v1194 = vadd.f32 %v985, %v1193
  %1195 = vmatmul.f32.gmra.mxu0 %v361
  %v1196 = vpop.f32.mrf.mxu0
  %v1197 = vadd.f32 %v988, %v1196
  %1198 = vmatmul.f32.gmra.mxu0 %v364
  %v1199 = vpop.f32.mrf.mxu0
  %v1200 = vadd.f32 %v991, %v1199
  %1201 = vmatmul.f32.gmra.mxu0 %v367
  %v1202 = vpop.f32.mrf.mxu0
  %v1203 = vadd.f32 %v994, %v1202
  %1204 = vmatmul.f32.gmra.mxu0 %v370
  %v1205 = vpop.f32.mrf.mxu0
  %v1206 = vadd.f32 %v997, %v1205
  %1207 = vmatmul.f32.gmra.mxu0 %v373
  %v1208 = vpop.f32.mrf.mxu0
  %v1209 = vadd.f32 %v1000, %v1208
  %1210 = vmatmul.f32.gmra.mxu0 %v376
  %v1211 = vpop.f32.mrf.mxu0
  %v1212 = vadd.f32 %v1003, %v1211
  %1213 = vmatmul.f32.gmra.mxu0 %v379
  %v1214 = vpop.f32.mrf.mxu0
  %v1215 = vadd.f32 %v1006, %v1214
  %1216 = vmatmul.f32.gmra.mxu0 %v382
  %v1217 = vpop.f32.mrf.mxu0
  %v1218 = vadd.f32 %v1009, %v1217
  %1219 = vmatmul.f32.gmra.mxu0 %v385
  %v1220 = vpop.f32.mrf.mxu0
  %v1221 = vadd.f32 %v1012, %v1220
  %1222 = vmatmul.f32.gmra.mxu0 %v388
  %v1223 = vpop.f32.mrf.mxu0
  %v1224 = vadd.f32 %v1015, %v1223
  %1225 = vmatmul.f32.gmra.mxu0 %v391
  %v1226 = vpop.f32.mrf.mxu0
  %v1227 = vadd.f32 %v1018, %v1226
  %1228 = vmatmul.f32.gmra.mxu0 %v394
  %v1229 = vpop.f32.mrf.mxu0
  %v1230 = vadd.f32 %v1021, %v1229
  %1231 = vmatmul.f32.gmra.mxu0 %v397
  %v1232 = vpop.f32.mrf.mxu0
  %v1233 = vadd.f32 %v1024, %v1232
  %1234 = vmatmul.f32.gmra.mxu0 %v400
  %v1235 = vpop.f32.mrf.mxu0
  %v1236 = vadd.f32 %v1027, %v1235
  %1237 = vmatmul.f32.gmra.mxu0 %v403
  %v1238 = vpop.f32.mrf.mxu0
  %v1239 = vadd.f32 %v1030, %v1238
  %1240 = vmatmul.f32.gmra.mxu0 %v406
  %v1241 = vpop.f32.mrf.mxu0
  %v1242 = vadd.f32 %v1033, %v1241
  %1243 = vmatmul.f32.gmra.mxu0 %v409
  %v1244 = vpop.f32.mrf.mxu0
  %v1245 = vadd.f32 %v1036, %v1244
  %1246 = vmatmul.f32.gmra.mxu0 %v412
  %v1247 = vpop.f32.mrf.mxu0
  %v1248 = vadd.f32 %v1039, %v1247
  %1249 = vmatmul.f32.gmra.mxu0 %v415
  %v1250 = vpop.f32.mrf.mxu0
  %v1251 = vadd.f32 %v1042, %v1250
  %1252 = vmatmul.f32.gmra.mxu0 %v418
  %v1253 = vpop.f32.mrf.mxu0
  %v1254 = vadd.f32 %v1045, %v1253
  %1255 = vmatmul.f32.gmra.mxu0 %v421
  %v1256 = vpop.f32.mrf.mxu0
  %v1257 = vadd.f32 %v1048, %v1256
  %1258 = vmatmul.f32.gmra.mxu0 %v424
  %v1259 = vpop.f32.mrf.mxu0
  %v1260 = vadd.f32 %v1051, %v1259
  %1261 = vmatmul.f32.gmra.mxu0 %v427
  %v1262 = vpop.f32.mrf.mxu0
  %v1263 = vadd.f32 %v1054, %v1262
  %1264 = vmatmul.f32.gmra.mxu0 %v430
  %v1265 = vpop.f32.mrf.mxu0
  %v1266 = vadd.f32 %v1057, %v1265
  %1267 = vmatmul.f32.gmra.mxu0 %v433
  %v1268 = vpop.f32.mrf.mxu0
  %v1269 = vadd.f32 %v1060, %v1268
  %1270 = vmatmul.f32.gmra.mxu0 %v436
  %v1271 = vpop.f32.mrf.mxu0
  %v1272 = vadd.f32 %v1063, %v1271
  %1273 = vmatmul.f32.gmra.mxu0 %v439
  %v1274 = vpop.f32.mrf.mxu0
  %v1275 = vadd.f32 %v1066, %v1274
  %1276 = vmatmul.f32.gmra.mxu0 %v442
  %v1277 = vpop.f32.mrf.mxu0
  %v1278 = vadd.f32 %v1069, %v1277
  %1279 = vmatmul.f32.gmra.mxu0 %v445
  %v1280 = vpop.f32.mrf.mxu0
  %v1281 = vadd.f32 %v1072, %v1280
  %1282 = vmatmul.f32.gmra.mxu0 %v448
  %v1283 = vpop.f32.mrf.mxu0
  %v1284 = vadd.f32 %v1075, %v1283
  %1285 = vmatmul.f32.gmra.mxu0 %v451
  %v1286 = vpop.f32.mrf.mxu0
  %v1287 = vadd.f32 %v1078, %v1286
  %1288 = vmatmul.f32.gmra.mxu0 %v454
  %v1289 = vpop.f32.mrf.mxu0
  %v1290 = vadd.f32 %v1081, %v1289
  %1291 = vmatmul.f32.gmra.mxu0 %v457
  %v1292 = vpop.f32.mrf.mxu0
  %v1293 = vadd.f32 %v1084, %v1292
  %1294 = vmatmul.f32.gmra.mxu0 %v460
  %v1295 = vpop.f32.mrf.mxu0
  %v1296 = vadd.f32 %v1087, %v1295
  %1297 = vmatmul.f32.gmra.mxu0 %v463
  %v1298 = vpop.f32.mrf.mxu0
  %v1299 = vadd.f32 %v1090, %v1298
  %1300 = vmatmul.f32.gmra.mxu0 %v466
  %v1301 = vpop.f32.mrf.mxu0
  %v1302 = vadd.f32 %v1093, %v1301
  %1303 = vmatmul.f32.gmra.mxu0 %v469
  %v1304 = vpop.f32.mrf.mxu0
  %v1305 = vadd.f32 %v1096, %v1304
  %1306 = vmatmul.f32.gmra.mxu0 %v472
  %v1307 = vpop.f32.mrf.mxu0
  %v1308 = vadd.f32 %v1099, %v1307
  %1309 = vmatmul.f32.gmra.mxu0 %v475
  %v1310 = vpop.f32.mrf.mxu0
  %v1311 = vadd.f32 %v1102, %v1310
  %1312 = vmatmul.f32.gmra.mxu0 %v478
  %v1313 = vpop.f32.mrf.mxu0
  %v1314 = vadd.f32 %v1105, %v1313
  %1315 = vmatmul.f32.gmra.mxu0 %v481
  %v1316 = vpop.f32.mrf.mxu0
  %v1317 = vadd.f32 %v1108, %v1316
  %1318 = vmatmul.f32.gmra.mxu0 %v484
  %v1319 = vpop.f32.mrf.mxu0
  %v1320 = vadd.f32 %v1111, %v1319
  %1321 = vmatmul.f32.gmra.mxu0 %v487
  %v1322 = vpop.f32.mrf.mxu0
  %v1323 = vadd.f32 %v1114, %v1322
  %1324 = vmatmul.f32.gmra.mxu0 %v490
  %v1325 = vpop.f32.mrf.mxu0
  %v1326 = vadd.f32 %v1117, %v1325
  %1327 = vmatmul.f32.gmra.mxu0 %v493
  %v1328 = vpop.f32.mrf.mxu0
  %v1329 = vadd.f32 %v1120, %v1328
  %1330 = vmatmul.f32.gmra.mxu0 %v496
  %v1331 = vpop.f32.mrf.mxu0
  %v1332 = vadd.f32 %v1123, %v1331
  %1333 = vmatmul.f32.gmra.mxu0 %v499
  %v1334 = vpop.f32.mrf.mxu0
  %v1335 = vadd.f32 %v1126, %v1334
  %1336 = vmatmul.f32.gmra.mxu0 %v502
  %v1337 = vpop.f32.mrf.mxu0
  %v1338 = vadd.f32 %v1129, %v1337
  %1339 = vmatmul.f32.gmra.mxu0 %v505
  %v1340 = vpop.f32.mrf.mxu0
  %v1341 = vadd.f32 %v1132, %v1340
  %1342 = vmatmul.f32.gmra.mxu0 %v508
  %v1343 = vpop.f32.mrf.mxu0
  %v1344 = vadd.f32 %v1135, %v1343
  %1345 = vmatmul.f32.gmra.mxu0 %v511
  %v1346 = vpop.f32.mrf.mxu0
  %v1347 = vadd.f32 %v1138, %v1346
  %1348 = vmatmul.f32.gmra.mxu0 %v514
  %v1349 = vpop.f32.mrf.mxu0
  %v1350 = vadd.f32 %v1141, %v1349
  %1351 = vdwg.mxu0
  %v1352 = vxor.u32 %v1161, 2147483648
  %v1353 = vxor.u32 %v1164, 2147483648
  %v1354 = vxor.u32 %v1167, 2147483648
  %v1355 = vxor.u32 %v1170, 2147483648
  %v1356 = vxor.u32 %v1173, 2147483648
  %v1357 = vxor.u32 %v1176, 2147483648
  %v1358 = vxor.u32 %v1179, 2147483648
  %v1359 = vxor.u32 %v1182, 2147483648
  %v1360 = vxor.u32 %v1185, 2147483648
  %v1361 = vxor.u32 %v1188, 2147483648
  %v1362 = vxor.u32 %v1191, 2147483648
  %v1363 = vxor.u32 %v1194, 2147483648
  %v1364 = vxor.u32 %v1197, 2147483648
  %v1365 = vxor.u32 %v1200, 2147483648
  %v1366 = vxor.u32 %v1203, 2147483648
  %v1367 = vxor.u32 %v1206, 2147483648
  %v1368 = vxor.u32 %v1209, 2147483648
  %v1369 = vxor.u32 %v1212, 2147483648
  %v1370 = vxor.u32 %v1215, 2147483648
  %v1371 = vxor.u32 %v1218, 2147483648
  %v1372 = vxor.u32 %v1221, 2147483648
  %v1373 = vxor.u32 %v1224, 2147483648
  %v1374 = vxor.u32 %v1227, 2147483648
  %v1375 = vxor.u32 %v1230, 2147483648
  %v1376 = vxor.u32 %v1233, 2147483648
  %v1377 = vxor.u32 %v1236, 2147483648
  %v1378 = vxor.u32 %v1239, 2147483648
  %v1379 = vxor.u32 %v1242, 2147483648
  %v1380 = vxor.u32 %v1245, 2147483648
  %v1381 = vxor.u32 %v1248, 2147483648
  %v1382 = vxor.u32 %v1251, 2147483648
  %v1383 = vxor.u32 %v1254, 2147483648
  %v1384 = vxor.u32 %v1257, 2147483648
  %v1385 = vxor.u32 %v1260, 2147483648
  %v1386 = vxor.u32 %v1263, 2147483648
  %v1387 = vxor.u32 %v1266, 2147483648
  %v1388 = vxor.u32 %v1269, 2147483648
  %v1389 = vxor.u32 %v1272, 2147483648
  %v1390 = vxor.u32 %v1275, 2147483648
  %v1391 = vxor.u32 %v1278, 2147483648
  %v1392 = vxor.u32 %v1281, 2147483648
  %v1393 = vxor.u32 %v1284, 2147483648
  %v1394 = vxor.u32 %v1287, 2147483648
  %v1395 = vxor.u32 %v1290, 2147483648
  %v1396 = vxor.u32 %v1293, 2147483648
  %v1397 = vxor.u32 %v1296, 2147483648
  %v1398 = vxor.u32 %v1299, 2147483648
  %v1399 = vxor.u32 %v1302, 2147483648
  %v1400 = vxor.u32 %v1305, 2147483648
  %v1401 = vxor.u32 %v1308, 2147483648
  %v1402 = vxor.u32 %v1311, 2147483648
  %v1403 = vxor.u32 %v1314, 2147483648
  %v1404 = vxor.u32 %v1317, 2147483648
  %v1405 = vxor.u32 %v1320, 2147483648
  %v1406 = vxor.u32 %v1323, 2147483648
  %v1407 = vxor.u32 %v1326, 2147483648
  %v1408 = vxor.u32 %v1329, 2147483648
  %v1409 = vxor.u32 %v1332, 2147483648
  %v1410 = vxor.u32 %v1335, 2147483648
  %v1411 = vxor.u32 %v1338, 2147483648
  %v1412 = vxor.u32 %v1341, 2147483648
  %v1413 = vxor.u32 %v1344, 2147483648
  %v1414 = vxor.u32 %v1347, 2147483648
  %v1415 = vxor.u32 %v1350, 2147483648
  %v1416 = vmul.f32 %v1352, 1.442695
  %v1417 = vpow.pop %v1416
  %v1418 = vmul.f32 %v1353, 1.442695
  %v1419 = vpow.pop %v1418
  %v1420 = vmul.f32 %v1354, 1.442695
  %v1421 = vpow.pop %v1420
  %v1422 = vmul.f32 %v1355, 1.442695
  %v1423 = vpow.pop %v1422
  %v1424 = vmul.f32 %v1356, 1.442695
  %v1425 = vpow.pop %v1424
  %v1426 = vmul.f32 %v1357, 1.442695
  %v1427 = vpow.pop %v1426
  %v1428 = vmul.f32 %v1358, 1.442695
  %v1429 = vpow.pop %v1428
  %v1430 = vmul.f32 %v1359, 1.442695
  %v1431 = vpow.pop %v1430
  %v1432 = vmul.f32 %v1360, 1.442695
  %v1433 = vpow.pop %v1432
  %v1434 = vmul.f32 %v1361, 1.442695
  %v1435 = vpow.pop %v1434
  %v1436 = vmul.f32 %v1362, 1.442695
  %v1437 = vpow.pop %v1436
  %v1438 = vmul.f32 %v1363, 1.442695
  %v1439 = vpow.pop %v1438
  %v1440 = vmul.f32 %v1364, 1.442695
  %v1441 = vpow.pop %v1440
  %v1442 = vmul.f32 %v1365, 1.442695
  %v1443 = vpow.pop %v1442
  %v1444 = vmul.f32 %v1366, 1.442695
  %v1445 = vpow.pop %v1444
  %v1446 = vmul.f32 %v1367, 1.442695
  %v1447 = vpow.pop %v1446
  %v1448 = vmul.f32 %v1368, 1.442695
  %v1449 = vpow.pop %v1448
  %v1450 = vmul.f32 %v1369, 1.442695
  %v1451 = vpow.pop %v1450
  %v1452 = vmul.f32 %v1370, 1.442695
  %v1453 = vpow.pop %v1452
  %v1454 = vmul.f32 %v1371, 1.442695
  %v1455 = vpow.pop %v1454
  %v1456 = vmul.f32 %v1372, 1.442695
  %v1457 = vpow.pop %v1456
  %v1458 = vmul.f32 %v1373, 1.442695
  %v1459 = vpow.pop %v1458
  %v1460 = vmul.f32 %v1374, 1.442695
  %v1461 = vpow.pop %v1460
  %v1462 = vmul.f32 %v1375, 1.442695
  %v1463 = vpow.pop %v1462
  %v1464 = vmul.f32 %v1376, 1.442695
  %v1465 = vpow.pop %v1464
  %v1466 = vmul.f32 %v1377, 1.442695
  %v1467 = vpow.pop %v1466
  %v1468 = vmul.f32 %v1378, 1.442695
  %v1469 = vpow.pop %v1468
  %v1470 = vmul.f32 %v1379, 1.442695
  %v1471 = vpow.pop %v1470
  %v1472 = vmul.f32 %v1380, 1.442695
  %v1473 = vpow.pop %v1472
  %v1474 = vmul.f32 %v1381, 1.442695
  %v1475 = vpow.pop %v1474
  %v1476 = vmul.f32 %v1382, 1.442695
  %v1477 = vpow.pop %v1476
  %v1478 = vmul.f32 %v1383, 1.442695
  %v1479 = vpow.pop %v1478
  %v1480 = vmul.f32 %v1384, 1.442695
  %v1481 = vpow.pop %v1480
  %v1482 = vmul.f32 %v1385, 1.442695
  %v1483 = vpow.pop %v1482
  %v1484 = vmul.f32 %v1386, 1.442695
  %v1485 = vpow.pop %v1484
  %v1486 = vmul.f32 %v1387, 1.442695
  %v1487 = vpow.pop %v1486
  %v1488 = vmul.f32 %v1388, 1.442695
  %v1489 = vpow.pop %v1488
  %v1490 = vmul.f32 %v1389, 1.442695
  %v1491 = vpow.pop %v1490
  %v1492 = vmul.f32 %v1390, 1.442695
  %v1493 = vpow.pop %v1492
  %v1494 = vmul.f32 %v1391, 1.442695
  %v1495 = vpow.pop %v1494
  %v1496 = vmul.f32 %v1392, 1.442695
  %v1497 = vpow.pop %v1496
  %v1498 = vmul.f32 %v1393, 1.442695
  %v1499 = vpow.pop %v1498
  %v1500 = vmul.f32 %v1394, 1.442695
  %v1501 = vpow.pop %v1500
  %v1502 = vmul.f32 %v1395, 1.442695
  %v1503 = vpow.pop %v1502
  %v1504 = vmul.f32 %v1396, 1.442695
  %v1505 = vpow.pop %v1504
  %v1506 = vmul.f32 %v1397, 1.442695
  %v1507 = vpow.pop %v1506
  %v1508 = vmul.f32 %v1398, 1.442695
  %v1509 = vpow.pop %v1508
  %v1510 = vmul.f32 %v1399, 1.442695
  %v1511 = vpow.pop %v1510
  %v1512 = vmul.f32 %v1400, 1.442695
  %v1513 = vpow.pop %v1512
  %v1514 = vmul.f32 %v1401, 1.442695
  %v1515 = vpow.pop %v1514
  %v1516 = vmul.f32 %v1402, 1.442695
  %v1517 = vpow.pop %v1516
  %v1518 = vmul.f32 %v1403, 1.442695
  %v1519 = vpow.pop %v1518
  %v1520 = vmul.f32 %v1404, 1.442695
  %v1521 = vpow.pop %v1520
  %v1522 = vmul.f32 %v1405, 1.442695
  %v1523 = vpow.pop %v1522
  %v1524 = vmul.f32 %v1406, 1.442695
  %v1525 = vpow.pop %v1524
  %v1526 = vmul.f32 %v1407, 1.442695
  %v1527 = vpow.pop %v1526
  %v1528 = vmul.f32 %v1408, 1.442695
  %v1529 = vpow.pop %v1528
  %v1530 = vmul.f32 %v1409, 1.442695
  %v1531 = vpow.pop %v1530
  %v1532 = vmul.f32 %v1410, 1.442695
  %v1533 = vpow.pop %v1532
  %v1534 = vmul.f32 %v1411, 1.442695
  %v1535 = vpow.pop %v1534
  %v1536 = vmul.f32 %v1412, 1.442695
  %v1537 = vpow.pop %v1536
  %v1538 = vmul.f32 %v1413, 1.442695
  %v1539 = vpow.pop %v1538
  %v1540 = vmul.f32 %v1414, 1.442695
  %v1541 = vpow.pop %v1540
  %v1542 = vmul.f32 %v1415, 1.442695
  %v1543 = vpow.pop %v1542
  %v1544 = vadd.f32 %v1417, 1.0
  %v1545 = vadd.f32 %v1419, 1.0
  %v1546 = vadd.f32 %v1421, 1.0
  %v1547 = vadd.f32 %v1423, 1.0
  %v1548 = vadd.f32 %v1425, 1.0
  %v1549 = vadd.f32 %v1427, 1.0
  %v1550 = vadd.f32 %v1429, 1.0
  %v1551 = vadd.f32 %v1431, 1.0
  %v1552 = vadd.f32 %v1433, 1.0
  %v1553 = vadd.f32 %v1435, 1.0
  %v1554 = vadd.f32 %v1437, 1.0
  %v1555 = vadd.f32 %v1439, 1.0
  %v1556 = vadd.f32 %v1441, 1.0
  %v1557 = vadd.f32 %v1443, 1.0
  %v1558 = vadd.f32 %v1445, 1.0
  %v1559 = vadd.f32 %v1447, 1.0
  %v1560 = vadd.f32 %v1449, 1.0
  %v1561 = vadd.f32 %v1451, 1.0
  %v1562 = vadd.f32 %v1453, 1.0
  %v1563 = vadd.f32 %v1455, 1.0
  %v1564 = vadd.f32 %v1457, 1.0
  %v1565 = vadd.f32 %v1459, 1.0
  %v1566 = vadd.f32 %v1461, 1.0
  %v1567 = vadd.f32 %v1463, 1.0
  %v1568 = vadd.f32 %v1465, 1.0
  %v1569 = vadd.f32 %v1467, 1.0
  %v1570 = vadd.f32 %v1469, 1.0
  %v1571 = vadd.f32 %v1471, 1.0
  %v1572 = vadd.f32 %v1473, 1.0
  %v1573 = vadd.f32 %v1475, 1.0
  %v1574 = vadd.f32 %v1477, 1.0
  %v1575 = vadd.f32 %v1479, 1.0
  %v1576 = vadd.f32 %v1481, 1.0
  %v1577 = vadd.f32 %v1483, 1.0
  %v1578 = vadd.f32 %v1485, 1.0
  %v1579 = vadd.f32 %v1487, 1.0
  %v1580 = vadd.f32 %v1489, 1.0
  %v1581 = vadd.f32 %v1491, 1.0
  %v1582 = vadd.f32 %v1493, 1.0
  %v1583 = vadd.f32 %v1495, 1.0
  %v1584 = vadd.f32 %v1497, 1.0
  %v1585 = vadd.f32 %v1499, 1.0
  %v1586 = vadd.f32 %v1501, 1.0
  %v1587 = vadd.f32 %v1503, 1.0
  %v1588 = vadd.f32 %v1505, 1.0
  %v1589 = vadd.f32 %v1507, 1.0
  %v1590 = vadd.f32 %v1509, 1.0
  %v1591 = vadd.f32 %v1511, 1.0
  %v1592 = vadd.f32 %v1513, 1.0
  %v1593 = vadd.f32 %v1515, 1.0
  %v1594 = vadd.f32 %v1517, 1.0
  %v1595 = vadd.f32 %v1519, 1.0
  %v1596 = vadd.f32 %v1521, 1.0
  %v1597 = vadd.f32 %v1523, 1.0
  %v1598 = vadd.f32 %v1525, 1.0
  %v1599 = vadd.f32 %v1527, 1.0
  %v1600 = vadd.f32 %v1529, 1.0
  %v1601 = vadd.f32 %v1531, 1.0
  %v1602 = vadd.f32 %v1533, 1.0
  %v1603 = vadd.f32 %v1535, 1.0
  %v1604 = vadd.f32 %v1537, 1.0
  %v1605 = vadd.f32 %v1539, 1.0
  %v1606 = vadd.f32 %v1541, 1.0
  %v1607 = vadd.f32 %v1543, 1.0
  %v1608 = vrcp.pop %v1544
  %v1609 = vmul.f32 %v1544, %v1608
  %v1610 = vsub.f32 1.0, %v1609
  %v1611 = vmul.f32 %v1608, %v1610
  %v1612 = vadd.f32 %v1608, %v1611
  %vm1613 = vweird.f32 %v1544
  %vm1614 = vweird.f32 %v1608
  %vm1615 = vmor %vm1613, %vm1614
  %v1616 = vsel %vm1615, %v1608, %v1612
  %v1617 = vand.u32 2147483647, %v1544
  %vm1618 = vcmp.eq.f32.partialorder %v1617, 8.507059e+37
  %v1619 = vand.u32 %v1544, 2147483648
  %v1620 = vor.u32 1.1754944e-38, %v1619
  %v1621 = vsel %vm1618, %v1620, %v1616
  %v1622 = vmul.f32 1.0, %v1621
  %v1623 = vrcp.pop %v1545
  %v1624 = vmul.f32 %v1545, %v1623
  %v1625 = vsub.f32 1.0, %v1624
  %v1626 = vmul.f32 %v1623, %v1625
  %v1627 = vadd.f32 %v1623, %v1626
  %vm1628 = vweird.f32 %v1545
  %vm1629 = vweird.f32 %v1623
  %vm1630 = vmor %vm1628, %vm1629
  %v1631 = vsel %vm1630, %v1623, %v1627
  %v1632 = vand.u32 2147483647, %v1545
  %vm1633 = vcmp.eq.f32.partialorder %v1632, 8.507059e+37
  %v1634 = vand.u32 %v1545, 2147483648
  %v1635 = vor.u32 1.1754944e-38, %v1634
  %v1636 = vsel %vm1633, %v1635, %v1631
  %v1637 = vmul.f32 1.0, %v1636
  %v1638 = vrcp.pop %v1546
  %v1639 = vmul.f32 %v1546, %v1638
  %v1640 = vsub.f32 1.0, %v1639
  %v1641 = vmul.f32 %v1638, %v1640
  %v1642 = vadd.f32 %v1638, %v1641
  %vm1643 = vweird.f32 %v1546
  %vm1644 = vweird.f32 %v1638
  %vm1645 = vmor %vm1643, %vm1644
  %v1646 = vsel %vm1645, %v1638, %v1642
  %v1647 = vand.u32 2147483647, %v1546
  %vm1648 = vcmp.eq.f32.partialorder %v1647, 8.507059e+37
  %v1649 = vand.u32 %v1546, 2147483648
  %v1650 = vor.u32 1.1754944e-38, %v1649
  %v1651 = vsel %vm1648, %v1650, %v1646
  %v1652 = vmul.f32 1.0, %v1651
  %v1653 = vrcp.pop %v1547
  %v1654 = vmul.f32 %v1547, %v1653
  %v1655 = vsub.f32 1.0, %v1654
  %v1656 = vmul.f32 %v1653, %v1655
  %v1657 = vadd.f32 %v1653, %v1656
  %vm1658 = vweird.f32 %v1547
  %vm1659 = vweird.f32 %v1653
  %vm1660 = vmor %vm1658, %vm1659
  %v1661 = vsel %vm1660, %v1653, %v1657
  %v1662 = vand.u32 2147483647, %v1547
  %vm1663 = vcmp.eq.f32.partialorder %v1662, 8.507059e+37
  %v1664 = vand.u32 %v1547, 2147483648
  %v1665 = vor.u32 1.1754944e-38, %v1664
  %v1666 = vsel %vm1663, %v1665, %v1661
  %v1667 = vmul.f32 1.0, %v1666
  %v1668 = vrcp.pop %v1548
  %v1669 = vmul.f32 %v1548, %v1668
  %v1670 = vsub.f32 1.0, %v1669
  %v1671 = vmul.f32 %v1668, %v1670
  %v1672 = vadd.f32 %v1668, %v1671
  %vm1673 = vweird.f32 %v1548
  %vm1674 = vweird.f32 %v1668
  %vm1675 = vmor %vm1673, %vm1674
  %v1676 = vsel %vm1675, %v1668, %v1672
  %v1677 = vand.u32 2147483647, %v1548
  %vm1678 = vcmp.eq.f32.partialorder %v1677, 8.507059e+37
  %v1679 = vand.u32 %v1548, 2147483648
  %v1680 = vor.u32 1.1754944e-38, %v1679
  %v1681 = vsel %vm1678, %v1680, %v1676
  %v1682 = vmul.f32 1.0, %v1681
  %v1683 = vrcp.pop %v1549
  %v1684 = vmul.f32 %v1549, %v1683
  %v1685 = vsub.f32 1.0, %v1684
  %v1686 = vmul.f32 %v1683, %v1685
  %v1687 = vadd.f32 %v1683, %v1686
  %vm1688 = vweird.f32 %v1549
  %vm1689 = vweird.f32 %v1683
  %vm1690 = vmor %vm1688, %vm1689
  %v1691 = vsel %vm1690, %v1683, %v1687
  %v1692 = vand.u32 2147483647, %v1549
  %vm1693 = vcmp.eq.f32.partialorder %v1692, 8.507059e+37
  %v1694 = vand.u32 %v1549, 2147483648
  %v1695 = vor.u32 1.1754944e-38, %v1694
  %v1696 = vsel %vm1693, %v1695, %v1691
  %v1697 = vmul.f32 1.0, %v1696
  %v1698 = vrcp.pop %v1550
  %v1699 = vmul.f32 %v1550, %v1698
  %v1700 = vsub.f32 1.0, %v1699
  %v1701 = vmul.f32 %v1698, %v1700
  %v1702 = vadd.f32 %v1698, %v1701
  %vm1703 = vweird.f32 %v1550
  %vm1704 = vweird.f32 %v1698
  %vm1705 = vmor %vm1703, %vm1704
  %v1706 = vsel %vm1705, %v1698, %v1702
  %v1707 = vand.u32 2147483647, %v1550
  %vm1708 = vcmp.eq.f32.partialorder %v1707, 8.507059e+37
  %v1709 = vand.u32 %v1550, 2147483648
  %v1710 = vor.u32 1.1754944e-38, %v1709
  %v1711 = vsel %vm1708, %v1710, %v1706
  %v1712 = vmul.f32 1.0, %v1711
  %v1713 = vrcp.pop %v1551
  %v1714 = vmul.f32 %v1551, %v1713
  %v1715 = vsub.f32 1.0, %v1714
  %v1716 = vmul.f32 %v1713, %v1715
  %v1717 = vadd.f32 %v1713, %v1716
  %vm1718 = vweird.f32 %v1551
  %vm1719 = vweird.f32 %v1713
  %vm1720 = vmor %vm1718, %vm1719
  %v1721 = vsel %vm1720, %v1713, %v1717
  %v1722 = vand.u32 2147483647, %v1551
  %vm1723 = vcmp.eq.f32.partialorder %v1722, 8.507059e+37
  %v1724 = vand.u32 %v1551, 2147483648
  %v1725 = vor.u32 1.1754944e-38, %v1724
  %v1726 = vsel %vm1723, %v1725, %v1721
  %v1727 = vmul.f32 1.0, %v1726
  %v1728 = vrcp.pop %v1552
  %v1729 = vmul.f32 %v1552, %v1728
  %v1730 = vsub.f32 1.0, %v1729
  %v1731 = vmul.f32 %v1728, %v1730
  %v1732 = vadd.f32 %v1728, %v1731
  %vm1733 = vweird.f32 %v1552
  %vm1734 = vweird.f32 %v1728
  %vm1735 = vmor %vm1733, %vm1734
  %v1736 = vsel %vm1735, %v1728, %v1732
  %v1737 = vand.u32 2147483647, %v1552
  %vm1738 = vcmp.eq.f32.partialorder %v1737, 8.507059e+37
  %v1739 = vand.u32 %v1552, 2147483648
  %v1740 = vor.u32 1.1754944e-38, %v1739
  %v1741 = vsel %vm1738, %v1740, %v1736
  %v1742 = vmul.f32 1.0, %v1741
  %v1743 = vrcp.pop %v1553
  %v1744 = vmul.f32 %v1553, %v1743
  %v1745 = vsub.f32 1.0, %v1744
  %v1746 = vmul.f32 %v1743, %v1745
  %v1747 = vadd.f32 %v1743, %v1746
  %vm1748 = vweird.f32 %v1553
  %vm1749 = vweird.f32 %v1743
  %vm1750 = vmor %vm1748, %vm1749
  %v1751 = vsel %vm1750, %v1743, %v1747
  %v1752 = vand.u32 2147483647, %v1553
  %vm1753 = vcmp.eq.f32.partialorder %v1752, 8.507059e+37
  %v1754 = vand.u32 %v1553, 2147483648
  %v1755 = vor.u32 1.1754944e-38, %v1754
  %v1756 = vsel %vm1753, %v1755, %v1751
  %v1757 = vmul.f32 1.0, %v1756
  %v1758 = vrcp.pop %v1554
  %v1759 = vmul.f32 %v1554, %v1758
  %v1760 = vsub.f32 1.0, %v1759
  %v1761 = vmul.f32 %v1758, %v1760
  %v1762 = vadd.f32 %v1758, %v1761
  %vm1763 = vweird.f32 %v1554
  %vm1764 = vweird.f32 %v1758
  %vm1765 = vmor %vm1763, %vm1764
  %v1766 = vsel %vm1765, %v1758, %v1762
  %v1767 = vand.u32 2147483647, %v1554
  %vm1768 = vcmp.eq.f32.partialorder %v1767, 8.507059e+37
  %v1769 = vand.u32 %v1554, 2147483648
  %v1770 = vor.u32 1.1754944e-38, %v1769
  %v1771 = vsel %vm1768, %v1770, %v1766
  %v1772 = vmul.f32 1.0, %v1771
  %v1773 = vrcp.pop %v1555
  %v1774 = vmul.f32 %v1555, %v1773
  %v1775 = vsub.f32 1.0, %v1774
  %v1776 = vmul.f32 %v1773, %v1775
  %v1777 = vadd.f32 %v1773, %v1776
  %vm1778 = vweird.f32 %v1555
  %vm1779 = vweird.f32 %v1773
  %vm1780 = vmor %vm1778, %vm1779
  %v1781 = vsel %vm1780, %v1773, %v1777
  %v1782 = vand.u32 2147483647, %v1555
  %vm1783 = vcmp.eq.f32.partialorder %v1782, 8.507059e+37
  %v1784 = vand.u32 %v1555, 2147483648
  %v1785 = vor.u32 1.1754944e-38, %v1784
  %v1786 = vsel %vm1783, %v1785, %v1781
  %v1787 = vmul.f32 1.0, %v1786
  %v1788 = vrcp.pop %v1556
  %v1789 = vmul.f32 %v1556, %v1788
  %v1790 = vsub.f32 1.0, %v1789
  %v1791 = vmul.f32 %v1788, %v1790
  %v1792 = vadd.f32 %v1788, %v1791
  %vm1793 = vweird.f32 %v1556
  %vm1794 = vweird.f32 %v1788
  %vm1795 = vmor %vm1793, %vm1794
  %v1796 = vsel %vm1795, %v1788, %v1792
  %v1797 = vand.u32 2147483647, %v1556
  %vm1798 = vcmp.eq.f32.partialorder %v1797, 8.507059e+37
  %v1799 = vand.u32 %v1556, 2147483648
  %v1800 = vor.u32 1.1754944e-38, %v1799
  %v1801 = vsel %vm1798, %v1800, %v1796
  %v1802 = vmul.f32 1.0, %v1801
  %v1803 = vrcp.pop %v1557
  %v1804 = vmul.f32 %v1557, %v1803
  %v1805 = vsub.f32 1.0, %v1804
  %v1806 = vmul.f32 %v1803, %v1805
  %v1807 = vadd.f32 %v1803, %v1806
  %vm1808 = vweird.f32 %v1557
  %vm1809 = vweird.f32 %v1803
  %vm1810 = vmor %vm1808, %vm1809
  %v1811 = vsel %vm1810, %v1803, %v1807
  %v1812 = vand.u32 2147483647, %v1557
  %vm1813 = vcmp.eq.f32.partialorder %v1812, 8.507059e+37
  %v1814 = vand.u32 %v1557, 2147483648
  %v1815 = vor.u32 1.1754944e-38, %v1814
  %v1816 = vsel %vm1813, %v1815, %v1811
  %v1817 = vmul.f32 1.0, %v1816
  %v1818 = vrcp.pop %v1558
  %v1819 = vmul.f32 %v1558, %v1818
  %v1820 = vsub.f32 1.0, %v1819
  %v1821 = vmul.f32 %v1818, %v1820
  %v1822 = vadd.f32 %v1818, %v1821
  %vm1823 = vweird.f32 %v1558
  %vm1824 = vweird.f32 %v1818
  %vm1825 = vmor %vm1823, %vm1824
  %v1826 = vsel %vm1825, %v1818, %v1822
  %v1827 = vand.u32 2147483647, %v1558
  %vm1828 = vcmp.eq.f32.partialorder %v1827, 8.507059e+37
  %v1829 = vand.u32 %v1558, 2147483648
  %v1830 = vor.u32 1.1754944e-38, %v1829
  %v1831 = vsel %vm1828, %v1830, %v1826
  %v1832 = vmul.f32 1.0, %v1831
  %v1833 = vrcp.pop %v1559
  %v1834 = vmul.f32 %v1559, %v1833
  %v1835 = vsub.f32 1.0, %v1834
  %v1836 = vmul.f32 %v1833, %v1835
  %v1837 = vadd.f32 %v1833, %v1836
  %vm1838 = vweird.f32 %v1559
  %vm1839 = vweird.f32 %v1833
  %vm1840 = vmor %vm1838, %vm1839
  %v1841 = vsel %vm1840, %v1833, %v1837
  %v1842 = vand.u32 2147483647, %v1559
  %vm1843 = vcmp.eq.f32.partialorder %v1842, 8.507059e+37
  %v1844 = vand.u32 %v1559, 2147483648
  %v1845 = vor.u32 1.1754944e-38, %v1844
  %v1846 = vsel %vm1843, %v1845, %v1841
  %v1847 = vmul.f32 1.0, %v1846
  %v1848 = vrcp.pop %v1560
  %v1849 = vmul.f32 %v1560, %v1848
  %v1850 = vsub.f32 1.0, %v1849
  %v1851 = vmul.f32 %v1848, %v1850
  %v1852 = vadd.f32 %v1848, %v1851
  %vm1853 = vweird.f32 %v1560
  %vm1854 = vweird.f32 %v1848
  %vm1855 = vmor %vm1853, %vm1854
  %v1856 = vsel %vm1855, %v1848, %v1852
  %v1857 = vand.u32 2147483647, %v1560
  %vm1858 = vcmp.eq.f32.partialorder %v1857, 8.507059e+37
  %v1859 = vand.u32 %v1560, 2147483648
  %v1860 = vor.u32 1.1754944e-38, %v1859
  %v1861 = vsel %vm1858, %v1860, %v1856
  %v1862 = vmul.f32 1.0, %v1861
  %v1863 = vrcp.pop %v1561
  %v1864 = vmul.f32 %v1561, %v1863
  %v1865 = vsub.f32 1.0, %v1864
  %v1866 = vmul.f32 %v1863, %v1865
  %v1867 = vadd.f32 %v1863, %v1866
  %vm1868 = vweird.f32 %v1561
  %vm1869 = vweird.f32 %v1863
  %vm1870 = vmor %vm1868, %vm1869
  %v1871 = vsel %vm1870, %v1863, %v1867
  %v1872 = vand.u32 2147483647, %v1561
  %vm1873 = vcmp.eq.f32.partialorder %v1872, 8.507059e+37
  %v1874 = vand.u32 %v1561, 2147483648
  %v1875 = vor.u32 1.1754944e-38, %v1874
  %v1876 = vsel %vm1873, %v1875, %v1871
  %v1877 = vmul.f32 1.0, %v1876
  %v1878 = vrcp.pop %v1562
  %v1879 = vmul.f32 %v1562, %v1878
  %v1880 = vsub.f32 1.0, %v1879
  %v1881 = vmul.f32 %v1878, %v1880
  %v1882 = vadd.f32 %v1878, %v1881
  %vm1883 = vweird.f32 %v1562
  %vm1884 = vweird.f32 %v1878
  %vm1885 = vmor %vm1883, %vm1884
  %v1886 = vsel %vm1885, %v1878, %v1882
  %v1887 = vand.u32 2147483647, %v1562
  %vm1888 = vcmp.eq.f32.partialorder %v1887, 8.507059e+37
  %v1889 = vand.u32 %v1562, 2147483648
  %v1890 = vor.u32 1.1754944e-38, %v1889
  %v1891 = vsel %vm1888, %v1890, %v1886
  %v1892 = vmul.f32 1.0, %v1891
  %v1893 = vrcp.pop %v1563
  %v1894 = vmul.f32 %v1563, %v1893
  %v1895 = vsub.f32 1.0, %v1894
  %v1896 = vmul.f32 %v1893, %v1895
  %v1897 = vadd.f32 %v1893, %v1896
  %vm1898 = vweird.f32 %v1563
  %vm1899 = vweird.f32 %v1893
  %vm1900 = vmor %vm1898, %vm1899
  %v1901 = vsel %vm1900, %v1893, %v1897
  %v1902 = vand.u32 2147483647, %v1563
  %vm1903 = vcmp.eq.f32.partialorder %v1902, 8.507059e+37
  %v1904 = vand.u32 %v1563, 2147483648
  %v1905 = vor.u32 1.1754944e-38, %v1904
  %v1906 = vsel %vm1903, %v1905, %v1901
  %v1907 = vmul.f32 1.0, %v1906
  %v1908 = vrcp.pop %v1564
  %v1909 = vmul.f32 %v1564, %v1908
  %v1910 = vsub.f32 1.0, %v1909
  %v1911 = vmul.f32 %v1908, %v1910
  %v1912 = vadd.f32 %v1908, %v1911
  %vm1913 = vweird.f32 %v1564
  %vm1914 = vweird.f32 %v1908
  %vm1915 = vmor %vm1913, %vm1914
  %v1916 = vsel %vm1915, %v1908, %v1912
  %v1917 = vand.u32 2147483647, %v1564
  %vm1918 = vcmp.eq.f32.partialorder %v1917, 8.507059e+37
  %v1919 = vand.u32 %v1564, 2147483648
  %v1920 = vor.u32 1.1754944e-38, %v1919
  %v1921 = vsel %vm1918, %v1920, %v1916
  %v1922 = vmul.f32 1.0, %v1921
  %v1923 = vrcp.pop %v1565
  %v1924 = vmul.f32 %v1565, %v1923
  %v1925 = vsub.f32 1.0, %v1924
  %v1926 = vmul.f32 %v1923, %v1925
  %v1927 = vadd.f32 %v1923, %v1926
  %vm1928 = vweird.f32 %v1565
  %vm1929 = vweird.f32 %v1923
  %vm1930 = vmor %vm1928, %vm1929
  %v1931 = vsel %vm1930, %v1923, %v1927
  %v1932 = vand.u32 2147483647, %v1565
  %vm1933 = vcmp.eq.f32.partialorder %v1932, 8.507059e+37
  %v1934 = vand.u32 %v1565, 2147483648
  %v1935 = vor.u32 1.1754944e-38, %v1934
  %v1936 = vsel %vm1933, %v1935, %v1931
  %v1937 = vmul.f32 1.0, %v1936
  %v1938 = vrcp.pop %v1566
  %v1939 = vmul.f32 %v1566, %v1938
  %v1940 = vsub.f32 1.0, %v1939
  %v1941 = vmul.f32 %v1938, %v1940
  %v1942 = vadd.f32 %v1938, %v1941
  %vm1943 = vweird.f32 %v1566
  %vm1944 = vweird.f32 %v1938
  %vm1945 = vmor %vm1943, %vm1944
  %v1946 = vsel %vm1945, %v1938, %v1942
  %v1947 = vand.u32 2147483647, %v1566
  %vm1948 = vcmp.eq.f32.partialorder %v1947, 8.507059e+37
  %v1949 = vand.u32 %v1566, 2147483648
  %v1950 = vor.u32 1.1754944e-38, %v1949
  %v1951 = vsel %vm1948, %v1950, %v1946
  %v1952 = vmul.f32 1.0, %v1951
  %v1953 = vrcp.pop %v1567
  %v1954 = vmul.f32 %v1567, %v1953
  %v1955 = vsub.f32 1.0, %v1954
  %v1956 = vmul.f32 %v1953, %v1955
  %v1957 = vadd.f32 %v1953, %v1956
  %vm1958 = vweird.f32 %v1567
  %vm1959 = vweird.f32 %v1953
  %vm1960 = vmor %vm1958, %vm1959
  %v1961 = vsel %vm1960, %v1953, %v1957
  %v1962 = vand.u32 2147483647, %v1567
  %vm1963 = vcmp.eq.f32.partialorder %v1962, 8.507059e+37
  %v1964 = vand.u32 %v1567, 2147483648
  %v1965 = vor.u32 1.1754944e-38, %v1964
  %v1966 = vsel %vm1963, %v1965, %v1961
  %v1967 = vmul.f32 1.0, %v1966
  %v1968 = vrcp.pop %v1568
  %v1969 = vmul.f32 %v1568, %v1968
  %v1970 = vsub.f32 1.0, %v1969
  %v1971 = vmul.f32 %v1968, %v1970
  %v1972 = vadd.f32 %v1968, %v1971
  %vm1973 = vweird.f32 %v1568
  %vm1974 = vweird.f32 %v1968
  %vm1975 = vmor %vm1973, %vm1974
  %v1976 = vsel %vm1975, %v1968, %v1972
  %v1977 = vand.u32 2147483647, %v1568
  %vm1978 = vcmp.eq.f32.partialorder %v1977, 8.507059e+37
  %v1979 = vand.u32 %v1568, 2147483648
  %v1980 = vor.u32 1.1754944e-38, %v1979
  %v1981 = vsel %vm1978, %v1980, %v1976
  %v1982 = vmul.f32 1.0, %v1981
  %v1983 = vrcp.pop %v1569
  %v1984 = vmul.f32 %v1569, %v1983
  %v1985 = vsub.f32 1.0, %v1984
  %v1986 = vmul.f32 %v1983, %v1985
  %v1987 = vadd.f32 %v1983, %v1986
  %vm1988 = vweird.f32 %v1569
  %vm1989 = vweird.f32 %v1983
  %vm1990 = vmor %vm1988, %vm1989
  %v1991 = vsel %vm1990, %v1983, %v1987
  %v1992 = vand.u32 2147483647, %v1569
  %vm1993 = vcmp.eq.f32.partialorder %v1992, 8.507059e+37
  %v1994 = vand.u32 %v1569, 2147483648
  %v1995 = vor.u32 1.1754944e-38, %v1994
  %v1996 = vsel %vm1993, %v1995, %v1991
  %v1997 = vmul.f32 1.0, %v1996
  %v1998 = vrcp.pop %v1570
  %v1999 = vmul.f32 %v1570, %v1998
  %v2000 = vsub.f32 1.0, %v1999
  %v2001 = vmul.f32 %v1998, %v2000
  %v2002 = vadd.f32 %v1998, %v2001
  %vm2003 = vweird.f32 %v1570
  %vm2004 = vweird.f32 %v1998
  %vm2005 = vmor %vm2003, %vm2004
  %v2006 = vsel %vm2005, %v1998, %v2002
  %v2007 = vand.u32 2147483647, %v1570
  %vm2008 = vcmp.eq.f32.partialorder %v2007, 8.507059e+37
  %v2009 = vand.u32 %v1570, 2147483648
  %v2010 = vor.u32 1.1754944e-38, %v2009
  %v2011 = vsel %vm2008, %v2010, %v2006
  %v2012 = vmul.f32 1.0, %v2011
  %v2013 = vrcp.pop %v1571
  %v2014 = vmul.f32 %v1571, %v2013
  %v2015 = vsub.f32 1.0, %v2014
  %v2016 = vmul.f32 %v2013, %v2015
  %v2017 = vadd.f32 %v2013, %v2016
  %vm2018 = vweird.f32 %v1571
  %vm2019 = vweird.f32 %v2013
  %vm2020 = vmor %vm2018, %vm2019
  %v2021 = vsel %vm2020, %v2013, %v2017
  %v2022 = vand.u32 2147483647, %v1571
  %vm2023 = vcmp.eq.f32.partialorder %v2022, 8.507059e+37
  %v2024 = vand.u32 %v1571, 2147483648
  %v2025 = vor.u32 1.1754944e-38, %v2024
  %v2026 = vsel %vm2023, %v2025, %v2021
  %v2027 = vmul.f32 1.0, %v2026
  %v2028 = vrcp.pop %v1572
  %v2029 = vmul.f32 %v1572, %v2028
  %v2030 = vsub.f32 1.0, %v2029
  %v2031 = vmul.f32 %v2028, %v2030
  %v2032 = vadd.f32 %v2028, %v2031
  %vm2033 = vweird.f32 %v1572
  %vm2034 = vweird.f32 %v2028
  %vm2035 = vmor %vm2033, %vm2034
  %v2036 = vsel %vm2035, %v2028, %v2032
  %v2037 = vand.u32 2147483647, %v1572
  %vm2038 = vcmp.eq.f32.partialorder %v2037, 8.507059e+37
  %v2039 = vand.u32 %v1572, 2147483648
  %v2040 = vor.u32 1.1754944e-38, %v2039
  %v2041 = vsel %vm2038, %v2040, %v2036
  %v2042 = vmul.f32 1.0, %v2041
  %v2043 = vrcp.pop %v1573
  %v2044 = vmul.f32 %v1573, %v2043
  %v2045 = vsub.f32 1.0, %v2044
  %v2046 = vmul.f32 %v2043, %v2045
  %v2047 = vadd.f32 %v2043, %v2046
  %vm2048 = vweird.f32 %v1573
  %vm2049 = vweird.f32 %v2043
  %vm2050 = vmor %vm2048, %vm2049
  %v2051 = vsel %vm2050, %v2043, %v2047
  %v2052 = vand.u32 2147483647, %v1573
  %vm2053 = vcmp.eq.f32.partialorder %v2052, 8.507059e+37
  %v2054 = vand.u32 %v1573, 2147483648
  %v2055 = vor.u32 1.1754944e-38, %v2054
  %v2056 = vsel %vm2053, %v2055, %v2051
  %v2057 = vmul.f32 1.0, %v2056
  %v2058 = vrcp.pop %v1574
  %v2059 = vmul.f32 %v1574, %v2058
  %v2060 = vsub.f32 1.0, %v2059
  %v2061 = vmul.f32 %v2058, %v2060
  %v2062 = vadd.f32 %v2058, %v2061
  %vm2063 = vweird.f32 %v1574
  %vm2064 = vweird.f32 %v2058
  %vm2065 = vmor %vm2063, %vm2064
  %v2066 = vsel %vm2065, %v2058, %v2062
  %v2067 = vand.u32 2147483647, %v1574
  %vm2068 = vcmp.eq.f32.partialorder %v2067, 8.507059e+37
  %v2069 = vand.u32 %v1574, 2147483648
  %v2070 = vor.u32 1.1754944e-38, %v2069
  %v2071 = vsel %vm2068, %v2070, %v2066
  %v2072 = vmul.f32 1.0, %v2071
  %v2073 = vrcp.pop %v1575
  %v2074 = vmul.f32 %v1575, %v2073
  %v2075 = vsub.f32 1.0, %v2074
  %v2076 = vmul.f32 %v2073, %v2075
  %v2077 = vadd.f32 %v2073, %v2076
  %vm2078 = vweird.f32 %v1575
  %vm2079 = vweird.f32 %v2073
  %vm2080 = vmor %vm2078, %vm2079
  %v2081 = vsel %vm2080, %v2073, %v2077
  %v2082 = vand.u32 2147483647, %v1575
  %vm2083 = vcmp.eq.f32.partialorder %v2082, 8.507059e+37
  %v2084 = vand.u32 %v1575, 2147483648
  %v2085 = vor.u32 1.1754944e-38, %v2084
  %v2086 = vsel %vm2083, %v2085, %v2081
  %v2087 = vmul.f32 1.0, %v2086
  %v2088 = vrcp.pop %v1576
  %v2089 = vmul.f32 %v1576, %v2088
  %v2090 = vsub.f32 1.0, %v2089
  %v2091 = vmul.f32 %v2088, %v2090
  %v2092 = vadd.f32 %v2088, %v2091
  %vm2093 = vweird.f32 %v1576
  %vm2094 = vweird.f32 %v2088
  %vm2095 = vmor %vm2093, %vm2094
  %v2096 = vsel %vm2095, %v2088, %v2092
  %v2097 = vand.u32 2147483647, %v1576
  %vm2098 = vcmp.eq.f32.partialorder %v2097, 8.507059e+37
  %v2099 = vand.u32 %v1576, 2147483648
  %v2100 = vor.u32 1.1754944e-38, %v2099
  %v2101 = vsel %vm2098, %v2100, %v2096
  %v2102 = vmul.f32 1.0, %v2101
  %v2103 = vrcp.pop %v1577
  %v2104 = vmul.f32 %v1577, %v2103
  %v2105 = vsub.f32 1.0, %v2104
  %v2106 = vmul.f32 %v2103, %v2105
  %v2107 = vadd.f32 %v2103, %v2106
  %vm2108 = vweird.f32 %v1577
  %vm2109 = vweird.f32 %v2103
  %vm2110 = vmor %vm2108, %vm2109
  %v2111 = vsel %vm2110, %v2103, %v2107
  %v2112 = vand.u32 2147483647, %v1577
  %vm2113 = vcmp.eq.f32.partialorder %v2112, 8.507059e+37
  %v2114 = vand.u32 %v1577, 2147483648
  %v2115 = vor.u32 1.1754944e-38, %v2114
  %v2116 = vsel %vm2113, %v2115, %v2111
  %v2117 = vmul.f32 1.0, %v2116
  %v2118 = vrcp.pop %v1578
  %v2119 = vmul.f32 %v1578, %v2118
  %v2120 = vsub.f32 1.0, %v2119
  %v2121 = vmul.f32 %v2118, %v2120
  %v2122 = vadd.f32 %v2118, %v2121
  %vm2123 = vweird.f32 %v1578
  %vm2124 = vweird.f32 %v2118
  %vm2125 = vmor %vm2123, %vm2124
  %v2126 = vsel %vm2125, %v2118, %v2122
  %v2127 = vand.u32 2147483647, %v1578
  %vm2128 = vcmp.eq.f32.partialorder %v2127, 8.507059e+37
  %v2129 = vand.u32 %v1578, 2147483648
  %v2130 = vor.u32 1.1754944e-38, %v2129
  %v2131 = vsel %vm2128, %v2130, %v2126
  %v2132 = vmul.f32 1.0, %v2131
  %v2133 = vrcp.pop %v1579
  %v2134 = vmul.f32 %v1579, %v2133
  %v2135 = vsub.f32 1.0, %v2134
  %v2136 = vmul.f32 %v2133, %v2135
  %v2137 = vadd.f32 %v2133, %v2136
  %vm2138 = vweird.f32 %v1579
  %vm2139 = vweird.f32 %v2133
  %vm2140 = vmor %vm2138, %vm2139
  %v2141 = vsel %vm2140, %v2133, %v2137
  %v2142 = vand.u32 2147483647, %v1579
  %vm2143 = vcmp.eq.f32.partialorder %v2142, 8.507059e+37
  %v2144 = vand.u32 %v1579, 2147483648
  %v2145 = vor.u32 1.1754944e-38, %v2144
  %v2146 = vsel %vm2143, %v2145, %v2141
  %v2147 = vmul.f32 1.0, %v2146
  %v2148 = vrcp.pop %v1580
  %v2149 = vmul.f32 %v1580, %v2148
  %v2150 = vsub.f32 1.0, %v2149
  %v2151 = vmul.f32 %v2148, %v2150
  %v2152 = vadd.f32 %v2148, %v2151
  %vm2153 = vweird.f32 %v1580
  %vm2154 = vweird.f32 %v2148
  %vm2155 = vmor %vm2153, %vm2154
  %v2156 = vsel %vm2155, %v2148, %v2152
  %v2157 = vand.u32 2147483647, %v1580
  %vm2158 = vcmp.eq.f32.partialorder %v2157, 8.507059e+37
  %v2159 = vand.u32 %v1580, 2147483648
  %v2160 = vor.u32 1.1754944e-38, %v2159
  %v2161 = vsel %vm2158, %v2160, %v2156
  %v2162 = vmul.f32 1.0, %v2161
  %v2163 = vrcp.pop %v1581
  %v2164 = vmul.f32 %v1581, %v2163
  %v2165 = vsub.f32 1.0, %v2164
  %v2166 = vmul.f32 %v2163, %v2165
  %v2167 = vadd.f32 %v2163, %v2166
  %vm2168 = vweird.f32 %v1581
  %vm2169 = vweird.f32 %v2163
  %vm2170 = vmor %vm2168, %vm2169
  %v2171 = vsel %vm2170, %v2163, %v2167
  %v2172 = vand.u32 2147483647, %v1581
  %vm2173 = vcmp.eq.f32.partialorder %v2172, 8.507059e+37
  %v2174 = vand.u32 %v1581, 2147483648
  %v2175 = vor.u32 1.1754944e-38, %v2174
  %v2176 = vsel %vm2173, %v2175, %v2171
  %v2177 = vmul.f32 1.0, %v2176
  %v2178 = vrcp.pop %v1582
  %v2179 = vmul.f32 %v1582, %v2178
  %v2180 = vsub.f32 1.0, %v2179
  %v2181 = vmul.f32 %v2178, %v2180
  %v2182 = vadd.f32 %v2178, %v2181
  %vm2183 = vweird.f32 %v1582
  %vm2184 = vweird.f32 %v2178
  %vm2185 = vmor %vm2183, %vm2184
  %v2186 = vsel %vm2185, %v2178, %v2182
  %v2187 = vand.u32 2147483647, %v1582
  %vm2188 = vcmp.eq.f32.partialorder %v2187, 8.507059e+37
  %v2189 = vand.u32 %v1582, 2147483648
  %v2190 = vor.u32 1.1754944e-38, %v2189
  %v2191 = vsel %vm2188, %v2190, %v2186
  %v2192 = vmul.f32 1.0, %v2191
  %v2193 = vrcp.pop %v1583
  %v2194 = vmul.f32 %v1583, %v2193
  %v2195 = vsub.f32 1.0, %v2194
  %v2196 = vmul.f32 %v2193, %v2195
  %v2197 = vadd.f32 %v2193, %v2196
  %vm2198 = vweird.f32 %v1583
  %vm2199 = vweird.f32 %v2193
  %vm2200 = vmor %vm2198, %vm2199
  %v2201 = vsel %vm2200, %v2193, %v2197
  %v2202 = vand.u32 2147483647, %v1583
  %vm2203 = vcmp.eq.f32.partialorder %v2202, 8.507059e+37
  %v2204 = vand.u32 %v1583, 2147483648
  %v2205 = vor.u32 1.1754944e-38, %v2204
  %v2206 = vsel %vm2203, %v2205, %v2201
  %v2207 = vmul.f32 1.0, %v2206
  %v2208 = vrcp.pop %v1584
  %v2209 = vmul.f32 %v1584, %v2208
  %v2210 = vsub.f32 1.0, %v2209
  %v2211 = vmul.f32 %v2208, %v2210
  %v2212 = vadd.f32 %v2208, %v2211
  %vm2213 = vweird.f32 %v1584
  %vm2214 = vweird.f32 %v2208
  %vm2215 = vmor %vm2213, %vm2214
  %v2216 = vsel %vm2215, %v2208, %v2212
  %v2217 = vand.u32 2147483647, %v1584
  %vm2218 = vcmp.eq.f32.partialorder %v2217, 8.507059e+37
  %v2219 = vand.u32 %v1584, 2147483648
  %v2220 = vor.u32 1.1754944e-38, %v2219
  %v2221 = vsel %vm2218, %v2220, %v2216
  %v2222 = vmul.f32 1.0, %v2221
  %v2223 = vrcp.pop %v1585
  %v2224 = vmul.f32 %v1585, %v2223
  %v2225 = vsub.f32 1.0, %v2224
  %v2226 = vmul.f32 %v2223, %v2225
  %v2227 = vadd.f32 %v2223, %v2226
  %vm2228 = vweird.f32 %v1585
  %vm2229 = vweird.f32 %v2223
  %vm2230 = vmor %vm2228, %vm2229
  %v2231 = vsel %vm2230, %v2223, %v2227
  %v2232 = vand.u32 2147483647, %v1585
  %vm2233 = vcmp.eq.f32.partialorder %v2232, 8.507059e+37
  %v2234 = vand.u32 %v1585, 2147483648
  %v2235 = vor.u32 1.1754944e-38, %v2234
  %v2236 = vsel %vm2233, %v2235, %v2231
  %v2237 = vmul.f32 1.0, %v2236
  %v2238 = vrcp.pop %v1586
  %v2239 = vmul.f32 %v1586, %v2238
  %v2240 = vsub.f32 1.0, %v2239
  %v2241 = vmul.f32 %v2238, %v2240
  %v2242 = vadd.f32 %v2238, %v2241
  %vm2243 = vweird.f32 %v1586
  %vm2244 = vweird.f32 %v2238
  %vm2245 = vmor %vm2243, %vm2244
  %v2246 = vsel %vm2245, %v2238, %v2242
  %v2247 = vand.u32 2147483647, %v1586
  %vm2248 = vcmp.eq.f32.partialorder %v2247, 8.507059e+37
  %v2249 = vand.u32 %v1586, 2147483648
  %v2250 = vor.u32 1.1754944e-38, %v2249
  %v2251 = vsel %vm2248, %v2250, %v2246
  %v2252 = vmul.f32 1.0, %v2251
  %v2253 = vrcp.pop %v1587
  %v2254 = vmul.f32 %v1587, %v2253
  %v2255 = vsub.f32 1.0, %v2254
  %v2256 = vmul.f32 %v2253, %v2255
  %v2257 = vadd.f32 %v2253, %v2256
  %vm2258 = vweird.f32 %v1587
  %vm2259 = vweird.f32 %v2253
  %vm2260 = vmor %vm2258, %vm2259
  %v2261 = vsel %vm2260, %v2253, %v2257
  %v2262 = vand.u32 2147483647, %v1587
  %vm2263 = vcmp.eq.f32.partialorder %v2262, 8.507059e+37
  %v2264 = vand.u32 %v1587, 2147483648
  %v2265 = vor.u32 1.1754944e-38, %v2264
  %v2266 = vsel %vm2263, %v2265, %v2261
  %v2267 = vmul.f32 1.0, %v2266
  %v2268 = vrcp.pop %v1588
  %v2269 = vmul.f32 %v1588, %v2268
  %v2270 = vsub.f32 1.0, %v2269
  %v2271 = vmul.f32 %v2268, %v2270
  %v2272 = vadd.f32 %v2268, %v2271
  %vm2273 = vweird.f32 %v1588
  %vm2274 = vweird.f32 %v2268
  %vm2275 = vmor %vm2273, %vm2274
  %v2276 = vsel %vm2275, %v2268, %v2272
  %v2277 = vand.u32 2147483647, %v1588
  %vm2278 = vcmp.eq.f32.partialorder %v2277, 8.507059e+37
  %v2279 = vand.u32 %v1588, 2147483648
  %v2280 = vor.u32 1.1754944e-38, %v2279
  %v2281 = vsel %vm2278, %v2280, %v2276
  %v2282 = vmul.f32 1.0, %v2281
  %v2283 = vrcp.pop %v1589
  %v2284 = vmul.f32 %v1589, %v2283
  %v2285 = vsub.f32 1.0, %v2284
  %v2286 = vmul.f32 %v2283, %v2285
  %v2287 = vadd.f32 %v2283, %v2286
  %vm2288 = vweird.f32 %v1589
  %vm2289 = vweird.f32 %v2283
  %vm2290 = vmor %vm2288, %vm2289
  %v2291 = vsel %vm2290, %v2283, %v2287
  %v2292 = vand.u32 2147483647, %v1589
  %vm2293 = vcmp.eq.f32.partialorder %v2292, 8.507059e+37
  %v2294 = vand.u32 %v1589, 2147483648
  %v2295 = vor.u32 1.1754944e-38, %v2294
  %v2296 = vsel %vm2293, %v2295, %v2291
  %v2297 = vmul.f32 1.0, %v2296
  %v2298 = vrcp.pop %v1590
  %v2299 = vmul.f32 %v1590, %v2298
  %v2300 = vsub.f32 1.0, %v2299
  %v2301 = vmul.f32 %v2298, %v2300
  %v2302 = vadd.f32 %v2298, %v2301
  %vm2303 = vweird.f32 %v1590
  %vm2304 = vweird.f32 %v2298
  %vm2305 = vmor %vm2303, %vm2304
  %v2306 = vsel %vm2305, %v2298, %v2302
  %v2307 = vand.u32 2147483647, %v1590
  %vm2308 = vcmp.eq.f32.partialorder %v2307, 8.507059e+37
  %v2309 = vand.u32 %v1590, 2147483648
  %v2310 = vor.u32 1.1754944e-38, %v2309
  %v2311 = vsel %vm2308, %v2310, %v2306
  %v2312 = vmul.f32 1.0, %v2311
  %v2313 = vrcp.pop %v1591
  %v2314 = vmul.f32 %v1591, %v2313
  %v2315 = vsub.f32 1.0, %v2314
  %v2316 = vmul.f32 %v2313, %v2315
  %v2317 = vadd.f32 %v2313, %v2316
  %vm2318 = vweird.f32 %v1591
  %vm2319 = vweird.f32 %v2313
  %vm2320 = vmor %vm2318, %vm2319
  %v2321 = vsel %vm2320, %v2313, %v2317
  %v2322 = vand.u32 2147483647, %v1591
  %vm2323 = vcmp.eq.f32.partialorder %v2322, 8.507059e+37
  %v2324 = vand.u32 %v1591, 2147483648
  %v2325 = vor.u32 1.1754944e-38, %v2324
  %v2326 = vsel %vm2323, %v2325, %v2321
  %v2327 = vmul.f32 1.0, %v2326
  %v2328 = vrcp.pop %v1592
  %v2329 = vmul.f32 %v1592, %v2328
  %v2330 = vsub.f32 1.0, %v2329
  %v2331 = vmul.f32 %v2328, %v2330
  %v2332 = vadd.f32 %v2328, %v2331
  %vm2333 = vweird.f32 %v1592
  %vm2334 = vweird.f32 %v2328
  %vm2335 = vmor %vm2333, %vm2334
  %v2336 = vsel %vm2335, %v2328, %v2332
  %v2337 = vand.u32 2147483647, %v1592
  %vm2338 = vcmp.eq.f32.partialorder %v2337, 8.507059e+37
  %v2339 = vand.u32 %v1592, 2147483648
  %v2340 = vor.u32 1.1754944e-38, %v2339
  %v2341 = vsel %vm2338, %v2340, %v2336
  %v2342 = vmul.f32 1.0, %v2341
  %v2343 = vrcp.pop %v1593
  %v2344 = vmul.f32 %v1593, %v2343
  %v2345 = vsub.f32 1.0, %v2344
  %v2346 = vmul.f32 %v2343, %v2345
  %v2347 = vadd.f32 %v2343, %v2346
  %vm2348 = vweird.f32 %v1593
  %vm2349 = vweird.f32 %v2343
  %vm2350 = vmor %vm2348, %vm2349
  %v2351 = vsel %vm2350, %v2343, %v2347
  %v2352 = vand.u32 2147483647, %v1593
  %vm2353 = vcmp.eq.f32.partialorder %v2352, 8.507059e+37
  %v2354 = vand.u32 %v1593, 2147483648
  %v2355 = vor.u32 1.1754944e-38, %v2354
  %v2356 = vsel %vm2353, %v2355, %v2351
  %v2357 = vmul.f32 1.0, %v2356
  %v2358 = vrcp.pop %v1594
  %v2359 = vmul.f32 %v1594, %v2358
  %v2360 = vsub.f32 1.0, %v2359
  %v2361 = vmul.f32 %v2358, %v2360
  %v2362 = vadd.f32 %v2358, %v2361
  %vm2363 = vweird.f32 %v1594
  %vm2364 = vweird.f32 %v2358
  %vm2365 = vmor %vm2363, %vm2364
  %v2366 = vsel %vm2365, %v2358, %v2362
  %v2367 = vand.u32 2147483647, %v1594
  %vm2368 = vcmp.eq.f32.partialorder %v2367, 8.507059e+37
  %v2369 = vand.u32 %v1594, 2147483648
  %v2370 = vor.u32 1.1754944e-38, %v2369
  %v2371 = vsel %vm2368, %v2370, %v2366
  %v2372 = vmul.f32 1.0, %v2371
  %v2373 = vrcp.pop %v1595
  %v2374 = vmul.f32 %v1595, %v2373
  %v2375 = vsub.f32 1.0, %v2374
  %v2376 = vmul.f32 %v2373, %v2375
  %v2377 = vadd.f32 %v2373, %v2376
  %vm2378 = vweird.f32 %v1595
  %vm2379 = vweird.f32 %v2373
  %vm2380 = vmor %vm2378, %vm2379
  %v2381 = vsel %vm2380, %v2373, %v2377
  %v2382 = vand.u32 2147483647, %v1595
  %vm2383 = vcmp.eq.f32.partialorder %v2382, 8.507059e+37
  %v2384 = vand.u32 %v1595, 2147483648
  %v2385 = vor.u32 1.1754944e-38, %v2384
  %v2386 = vsel %vm2383, %v2385, %v2381
  %v2387 = vmul.f32 1.0, %v2386
  %v2388 = vrcp.pop %v1596
  %v2389 = vmul.f32 %v1596, %v2388
  %v2390 = vsub.f32 1.0, %v2389
  %v2391 = vmul.f32 %v2388, %v2390
  %v2392 = vadd.f32 %v2388, %v2391
  %vm2393 = vweird.f32 %v1596
  %vm2394 = vweird.f32 %v2388
  %vm2395 = vmor %vm2393, %vm2394
  %v2396 = vsel %vm2395, %v2388, %v2392
  %v2397 = vand.u32 2147483647, %v1596
  %vm2398 = vcmp.eq.f32.partialorder %v2397, 8.507059e+37
  %v2399 = vand.u32 %v1596, 2147483648
  %v2400 = vor.u32 1.1754944e-38, %v2399
  %v2401 = vsel %vm2398, %v2400, %v2396
  %v2402 = vmul.f32 1.0, %v2401
  %v2403 = vrcp.pop %v1597
  %v2404 = vmul.f32 %v1597, %v2403
  %v2405 = vsub.f32 1.0, %v2404
  %v2406 = vmul.f32 %v2403, %v2405
  %v2407 = vadd.f32 %v2403, %v2406
  %vm2408 = vweird.f32 %v1597
  %vm2409 = vweird.f32 %v2403
  %vm2410 = vmor %vm2408, %vm2409
  %v2411 = vsel %vm2410, %v2403, %v2407
  %v2412 = vand.u32 2147483647, %v1597
  %vm2413 = vcmp.eq.f32.partialorder %v2412, 8.507059e+37
  %v2414 = vand.u32 %v1597, 2147483648
  %v2415 = vor.u32 1.1754944e-38, %v2414
  %v2416 = vsel %vm2413, %v2415, %v2411
  %v2417 = vmul.f32 1.0, %v2416
  %v2418 = vrcp.pop %v1598
  %v2419 = vmul.f32 %v1598, %v2418
  %v2420 = vsub.f32 1.0, %v2419
  %v2421 = vmul.f32 %v2418, %v2420
  %v2422 = vadd.f32 %v2418, %v2421
  %vm2423 = vweird.f32 %v1598
  %vm2424 = vweird.f32 %v2418
  %vm2425 = vmor %vm2423, %vm2424
  %v2426 = vsel %vm2425, %v2418, %v2422
  %v2427 = vand.u32 2147483647, %v1598
  %vm2428 = vcmp.eq.f32.partialorder %v2427, 8.507059e+37
  %v2429 = vand.u32 %v1598, 2147483648
  %v2430 = vor.u32 1.1754944e-38, %v2429
  %v2431 = vsel %vm2428, %v2430, %v2426
  %v2432 = vmul.f32 1.0, %v2431
  %v2433 = vrcp.pop %v1599
  %v2434 = vmul.f32 %v1599, %v2433
  %v2435 = vsub.f32 1.0, %v2434
  %v2436 = vmul.f32 %v2433, %v2435
  %v2437 = vadd.f32 %v2433, %v2436
  %vm2438 = vweird.f32 %v1599
  %vm2439 = vweird.f32 %v2433
  %vm2440 = vmor %vm2438, %vm2439
  %v2441 = vsel %vm2440, %v2433, %v2437
  %v2442 = vand.u32 2147483647, %v1599
  %vm2443 = vcmp.eq.f32.partialorder %v2442, 8.507059e+37
  %v2444 = vand.u32 %v1599, 2147483648
  %v2445 = vor.u32 1.1754944e-38, %v2444
  %v2446 = vsel %vm2443, %v2445, %v2441
  %v2447 = vmul.f32 1.0, %v2446
  %v2448 = vrcp.pop %v1600
  %v2449 = vmul.f32 %v1600, %v2448
  %v2450 = vsub.f32 1.0, %v2449
  %v2451 = vmul.f32 %v2448, %v2450
  %v2452 = vadd.f32 %v2448, %v2451
  %vm2453 = vweird.f32 %v1600
  %vm2454 = vweird.f32 %v2448
  %vm2455 = vmor %vm2453, %vm2454
  %v2456 = vsel %vm2455, %v2448, %v2452
  %v2457 = vand.u32 2147483647, %v1600
  %vm2458 = vcmp.eq.f32.partialorder %v2457, 8.507059e+37
  %v2459 = vand.u32 %v1600, 2147483648
  %v2460 = vor.u32 1.1754944e-38, %v2459
  %v2461 = vsel %vm2458, %v2460, %v2456
  %v2462 = vmul.f32 1.0, %v2461
  %v2463 = vrcp.pop %v1601
  %v2464 = vmul.f32 %v1601, %v2463
  %v2465 = vsub.f32 1.0, %v2464
  %v2466 = vmul.f32 %v2463, %v2465
  %v2467 = vadd.f32 %v2463, %v2466
  %vm2468 = vweird.f32 %v1601
  %vm2469 = vweird.f32 %v2463
  %vm2470 = vmor %vm2468, %vm2469
  %v2471 = vsel %vm2470, %v2463, %v2467
  %v2472 = vand.u32 2147483647, %v1601
  %vm2473 = vcmp.eq.f32.partialorder %v2472, 8.507059e+37
  %v2474 = vand.u32 %v1601, 2147483648
  %v2475 = vor.u32 1.1754944e-38, %v2474
  %v2476 = vsel %vm2473, %v2475, %v2471
  %v2477 = vmul.f32 1.0, %v2476
  %v2478 = vrcp.pop %v1602
  %v2479 = vmul.f32 %v1602, %v2478
  %v2480 = vsub.f32 1.0, %v2479
  %v2481 = vmul.f32 %v2478, %v2480
  %v2482 = vadd.f32 %v2478, %v2481
  %vm2483 = vweird.f32 %v1602
  %vm2484 = vweird.f32 %v2478
  %vm2485 = vmor %vm2483, %vm2484
  %v2486 = vsel %vm2485, %v2478, %v2482
  %v2487 = vand.u32 2147483647, %v1602
  %vm2488 = vcmp.eq.f32.partialorder %v2487, 8.507059e+37
  %v2489 = vand.u32 %v1602, 2147483648
  %v2490 = vor.u32 1.1754944e-38, %v2489
  %v2491 = vsel %vm2488, %v2490, %v2486
  %v2492 = vmul.f32 1.0, %v2491
  %v2493 = vrcp.pop %v1603
  %v2494 = vmul.f32 %v1603, %v2493
  %v2495 = vsub.f32 1.0, %v2494
  %v2496 = vmul.f32 %v2493, %v2495
  %v2497 = vadd.f32 %v2493, %v2496
  %vm2498 = vweird.f32 %v1603
  %vm2499 = vweird.f32 %v2493
  %vm2500 = vmor %vm2498, %vm2499
  %v2501 = vsel %vm2500, %v2493, %v2497
  %v2502 = vand.u32 2147483647, %v1603
  %vm2503 = vcmp.eq.f32.partialorder %v2502, 8.507059e+37
  %v2504 = vand.u32 %v1603, 2147483648
  %v2505 = vor.u32 1.1754944e-38, %v2504
  %v2506 = vsel %vm2503, %v2505, %v2501
  %v2507 = vmul.f32 1.0, %v2506
  %v2508 = vrcp.pop %v1604
  %v2509 = vmul.f32 %v1604, %v2508
  %v2510 = vsub.f32 1.0, %v2509
  %v2511 = vmul.f32 %v2508, %v2510
  %v2512 = vadd.f32 %v2508, %v2511
  %vm2513 = vweird.f32 %v1604
  %vm2514 = vweird.f32 %v2508
  %vm2515 = vmor %vm2513, %vm2514
  %v2516 = vsel %vm2515, %v2508, %v2512
  %v2517 = vand.u32 2147483647, %v1604
  %vm2518 = vcmp.eq.f32.partialorder %v2517, 8.507059e+37
  %v2519 = vand.u32 %v1604, 2147483648
  %v2520 = vor.u32 1.1754944e-38, %v2519
  %v2521 = vsel %vm2518, %v2520, %v2516
  %v2522 = vmul.f32 1.0, %v2521
  %v2523 = vrcp.pop %v1605
  %v2524 = vmul.f32 %v1605, %v2523
  %v2525 = vsub.f32 1.0, %v2524
  %v2526 = vmul.f32 %v2523, %v2525
  %v2527 = vadd.f32 %v2523, %v2526
  %vm2528 = vweird.f32 %v1605
  %vm2529 = vweird.f32 %v2523
  %vm2530 = vmor %vm2528, %vm2529
  %v2531 = vsel %vm2530, %v2523, %v2527
  %v2532 = vand.u32 2147483647, %v1605
  %vm2533 = vcmp.eq.f32.partialorder %v2532, 8.507059e+37
  %v2534 = vand.u32 %v1605, 2147483648
  %v2535 = vor.u32 1.1754944e-38, %v2534
  %v2536 = vsel %vm2533, %v2535, %v2531
  %v2537 = vmul.f32 1.0, %v2536
  %v2538 = vrcp.pop %v1606
  %v2539 = vmul.f32 %v1606, %v2538
  %v2540 = vsub.f32 1.0, %v2539
  %v2541 = vmul.f32 %v2538, %v2540
  %v2542 = vadd.f32 %v2538, %v2541
  %vm2543 = vweird.f32 %v1606
  %vm2544 = vweird.f32 %v2538
  %vm2545 = vmor %vm2543, %vm2544
  %v2546 = vsel %vm2545, %v2538, %v2542
  %v2547 = vand.u32 2147483647, %v1606
  %vm2548 = vcmp.eq.f32.partialorder %v2547, 8.507059e+37
  %v2549 = vand.u32 %v1606, 2147483648
  %v2550 = vor.u32 1.1754944e-38, %v2549
  %v2551 = vsel %vm2548, %v2550, %v2546
  %v2552 = vmul.f32 1.0, %v2551
  %v2553 = vrcp.pop %v1607
  %v2554 = vmul.f32 %v1607, %v2553
  %v2555 = vsub.f32 1.0, %v2554
  %v2556 = vmul.f32 %v2553, %v2555
  %v2557 = vadd.f32 %v2553, %v2556
  %vm2558 = vweird.f32 %v1607
  %vm2559 = vweird.f32 %v2553
  %vm2560 = vmor %vm2558, %vm2559
  %v2561 = vsel %vm2560, %v2553, %v2557
  %v2562 = vand.u32 2147483647, %v1607
  %vm2563 = vcmp.eq.f32.partialorder %v2562, 8.507059e+37
  %v2564 = vand.u32 %v1607, 2147483648
  %v2565 = vor.u32 1.1754944e-38, %v2564
  %v2566 = vsel %vm2563, %v2565, %v2561
  %v2567 = vmul.f32 1.0, %v2566
  %vm2568 = vcmask 23552
  %2569 = vst.msk [vmem:[%s3] sm:$0xff] %vm2568, %v1622
  %2570 = vst.msk [vmem:[%s3 + $0x8] sm:$0xff] %vm2568, %v1637
  %2571 = vst.msk [vmem:[%s3 + $0x10] sm:$0xff] %vm2568, %v1652
  %2572 = vst.msk [vmem:[%s3 + $0x18] sm:$0xff] %vm2568, %v1667
  %2573 = vst.msk [vmem:[%s3 + $0x20] sm:$0xff] %vm2568, %v1682
  %2574 = vst.msk [vmem:[%s3 + $0x28] sm:$0xff] %vm2568, %v1697
  %2575 = vst.msk [vmem:[%s3 + $0x30] sm:$0xff] %vm2568, %v1712
  %2576 = vst.msk [vmem:[%s3 + $0x38] sm:$0xff] %vm2568, %v1727
  %2577 = vst.msk [vmem:[%s3 + $0x40] sm:$0xff] %vm2568, %v1742
  %2578 = vst.msk [vmem:[%s3 + $0x48] sm:$0xff] %vm2568, %v1757
  %2579 = vst.msk [vmem:[%s3 + $0x50] sm:$0xff] %vm2568, %v1772
  %2580 = vst.msk [vmem:[%s3 + $0x58] sm:$0xff] %vm2568, %v1787
  %2581 = vst.msk [vmem:[%s3 + $0x60] sm:$0xff] %vm2568, %v1802
  %2582 = vst.msk [vmem:[%s3 + $0x68] sm:$0xff] %vm2568, %v1817
  %2583 = vst.msk [vmem:[%s3 + $0x70] sm:$0xff] %vm2568, %v1832
  %2584 = vst.msk [vmem:[%s3 + $0x78] sm:$0xff] %vm2568, %v1847
  %2585 = vst.msk [vmem:[%s3 + $0x80] sm:$0xff] %vm2568, %v1862
  %2586 = vst.msk [vmem:[%s3 + $0x88] sm:$0xff] %vm2568, %v1877
  %2587 = vst.msk [vmem:[%s3 + $0x90] sm:$0xff] %vm2568, %v1892
  %2588 = vst.msk [vmem:[%s3 + $0x98] sm:$0xff] %vm2568, %v1907
  %2589 = vst.msk [vmem:[%s3 + $0xa0] sm:$0xff] %vm2568, %v1922
  %2590 = vst.msk [vmem:[%s3 + $0xa8] sm:$0xff] %vm2568, %v1937
  %2591 = vst.msk [vmem:[%s3 + $0xb0] sm:$0xff] %vm2568, %v1952
  %2592 = vst.msk [vmem:[%s3 + $0xb8] sm:$0xff] %vm2568, %v1967
  %2593 = vst.msk [vmem:[%s3 + $0xc0] sm:$0xff] %vm2568, %v1982
  %2594 = vst.msk [vmem:[%s3 + $0xc8] sm:$0xff] %vm2568, %v1997
  %2595 = vst.msk [vmem:[%s3 + $0xd0] sm:$0xff] %vm2568, %v2012
  %2596 = vst.msk [vmem:[%s3 + $0xd8] sm:$0xff] %vm2568, %v2027
  %2597 = vst.msk [vmem:[%s3 + $0xe0] sm:$0xff] %vm2568, %v2042
  %2598 = vst.msk [vmem:[%s3 + $0xe8] sm:$0xff] %vm2568, %v2057
  %2599 = vst.msk [vmem:[%s3 + $0xf0] sm:$0xff] %vm2568, %v2072
  %2600 = vst.msk [vmem:[%s3 + $0xf8] sm:$0xff] %vm2568, %v2087
  %2601 = vst.msk [vmem:[%s3 + $0x100] sm:$0xff] %vm2568, %v2102
  %2602 = vst.msk [vmem:[%s3 + $0x108] sm:$0xff] %vm2568, %v2117
  %2603 = vst.msk [vmem:[%s3 + $0x110] sm:$0xff] %vm2568, %v2132
  %2604 = vst.msk [vmem:[%s3 + $0x118] sm:$0xff] %vm2568, %v2147
  %2605 = vst.msk [vmem:[%s3 + $0x120] sm:$0xff] %vm2568, %v2162
  %2606 = vst.msk [vmem:[%s3 + $0x128] sm:$0xff] %vm2568, %v2177
  %2607 = vst.msk [vmem:[%s3 + $0x130] sm:$0xff] %vm2568, %v2192
  %2608 = vst.msk [vmem:[%s3 + $0x138] sm:$0xff] %vm2568, %v2207
  %2609 = vst.msk [vmem:[%s3 + $0x140] sm:$0xff] %vm2568, %v2222
  %2610 = vst.msk [vmem:[%s3 + $0x148] sm:$0xff] %vm2568, %v2237
  %2611 = vst.msk [vmem:[%s3 + $0x150] sm:$0xff] %vm2568, %v2252
  %2612 = vst.msk [vmem:[%s3 + $0x158] sm:$0xff] %vm2568, %v2267
  %2613 = vst.msk [vmem:[%s3 + $0x160] sm:$0xff] %vm2568, %v2282
  %2614 = vst.msk [vmem:[%s3 + $0x168] sm:$0xff] %vm2568, %v2297
  %2615 = vst.msk [vmem:[%s3 + $0x170] sm:$0xff] %vm2568, %v2312
  %2616 = vst.msk [vmem:[%s3 + $0x178] sm:$0xff] %vm2568, %v2327
  %2617 = vst.msk [vmem:[%s3 + $0x180] sm:$0xff] %vm2568, %v2342
  %2618 = vst.msk [vmem:[%s3 + $0x188] sm:$0xff] %vm2568, %v2357
  %2619 = vst.msk [vmem:[%s3 + $0x190] sm:$0xff] %vm2568, %v2372
  %2620 = vst.msk [vmem:[%s3 + $0x198] sm:$0xff] %vm2568, %v2387
  %2621 = vst.msk [vmem:[%s3 + $0x1a0] sm:$0xff] %vm2568, %v2402
  %2622 = vst.msk [vmem:[%s3 + $0x1a8] sm:$0xff] %vm2568, %v2417
  %2623 = vst.msk [vmem:[%s3 + $0x1b0] sm:$0xff] %vm2568, %v2432
  %2624 = vst.msk [vmem:[%s3 + $0x1b8] sm:$0xff] %vm2568, %v2447
  %2625 = vst.msk [vmem:[%s3 + $0x1c0] sm:$0xff] %vm2568, %v2462
  %2626 = vst.msk [vmem:[%s3 + $0x1c8] sm:$0xff] %vm2568, %v2477
  %2627 = vst.msk [vmem:[%s3 + $0x1d0] sm:$0xff] %vm2568, %v2492
  %2628 = vst.msk [vmem:[%s3 + $0x1d8] sm:$0xff] %vm2568, %v2507
  %2629 = vst.msk [vmem:[%s3 + $0x1e0] sm:$0xff] %vm2568, %v2522
  %2630 = vst.msk [vmem:[%s3 + $0x1e8] sm:$0xff] %vm2568, %v2537
  %2631 = vst.msk [vmem:[%s3 + $0x1f0] sm:$0xff] %vm2568, %v2552
  %2632 = vst.msk [vmem:[%s3 + $0x1f8] sm:$0xff] %vm2568, %v2567
  // Predicated region
  $region14: #{generator_forward.17} parent=0 // pred_check
    _
  $region15: #{generator_forward.17} parent=0 // pred_check_branch
    %2634 = sbr.rel (0) target = $region17
  $region16: #{generator_forward.17} parent=0 // pred_region
    _
  $region17: #{generator_forward.17} parent=0 // pred_fallthru
    _
  // Predicated region
  $region18: #{generator_forward.17} parent=0 // pred_check
    _
  $region19: #{generator_forward.17} parent=0 // pred_check_branch
    %2636 = sbr.rel (0) target = $region21
  $region20: #{generator_forward.17} parent=0 // pred_region
    _
  $region21: #{generator_forward.17} parent=0 // pred_fallthru
    _

</llo_original>
